<compile_context>
chip_gen: v6e
topology: v6e:2x2x1
jax: 0.10.0
libtpu: 0.0.40
codegen_flags: <defaults>
</compile_context>

<pallas_src>
import jax
import jax.numpy as jnp
import numpy as np
from jax.experimental import pallas as pl
from jax.experimental.pallas import tpu as pltpu


# ---------------------------------------------------------------------------
# One-time parameter repack (host side, outside the hot path)
# ---------------------------------------------------------------------------
def _band_weights(w_oihw, bias, *, w_in, w_out_pool, pad_in):
    """Fold the 3x3 taps + the horizontal-pool column split into band matrices.

    conv[h, 2*w2+dw, co] = sum_kh  X[h+kh, :] @ band[kh*2 + dw]
    where X is the activation in (H_rows, W*Cin) layout.  If pad_in=True the
    activation already contains the horizontal zero padding; otherwise the
    taps that would hit padding are simply dropped (they multiply zeros).
    """
    w = np.asarray(w_oihw, np.float32)                 # (Cout, Cin, 3, 3)
    cout, cin = w.shape[0], w.shape[1]
    w = np.transpose(w, (2, 3, 1, 0))                  # (kh, kw, ci, co)
    K, N = w_in * cin, w_out_pool * cout
    band = np.zeros((3, 2, K, N), np.float32)
    off = 0 if pad_in else -1
    for kh in range(3):
        for dw in range(2):
            for w2 in range(w_out_pool):
                wcol = 2 * w2 + dw                     # conv output column
                for kw in range(3):
                    win = wcol + kw + off              # input column index
                    if 0 <= win < w_in:
                        band[kh, dw,
                             win * cin:(win + 1) * cin,
                             w2 * cout:(w2 + 1) * cout] = w[kh, kw]
    btile = np.tile(np.asarray(bias, np.float32), w_out_pool)[None, :]
    return (jnp.asarray(band.reshape(6, K, N), dtype=jnp.bfloat16),
            jnp.asarray(btile))                        # bias stays f32


def prepare_params(params):
    """One-time repack of the PyTorch-layout parameters (bf16 MXU operands)."""
    w1, b1, w2, b2, w3, b3, w4, b4 = params
    # layer 1: input is the zero-padded (30, B, 30) image, Cin=1.
    band1, b1t = _band_weights(w1, b1, w_in=30, w_out_pool=14, pad_in=True)   # (6,30,448)
    # layer 2: input is the unpadded 14-column layer-1 output, Cin=32.
    band2, b2t = _band_weights(w2, b2, w_in=14, w_out_pool=7, pad_in=False)   # (6,448,224)
    # fc1: fold torch's (C,H,W) flatten order into per-row blocks so that
    # fc1 = sum_h  y2[h] @ w3blk[h]   with y2 lane index = w2*32 + c.
    w3 = np.asarray(w3, np.float32).reshape(500, 32, 7, 7)     # (out, c, h, w)
    w3 = np.transpose(w3, (2, 3, 1, 0)).reshape(7, 7 * 32, 500)  # (h, w*32+c, out)
    w3p = np.zeros((7, 224, 512), np.float32)
    w3p[..., :500] = w3                                         # pad hidden 500->512
    b3p = np.zeros((1, 512), np.float32)
    b3p[0, :500] = np.asarray(b3, np.float32)
    w4p = np.zeros((512, 10), np.float32)
    w4p[:500, :] = np.asarray(w4, np.float32).T
    b4p = np.asarray(b4, np.float32).reshape(1, 10)
    return (band1, b1t, band2, b2t,
            jnp.asarray(w3p, jnp.bfloat16), jnp.asarray(b3p),
            jnp.asarray(w4p, jnp.bfloat16), jnp.asarray(b4p))


# ---------------------------------------------------------------------------
# Fully fused kernel: conv1+pool -> conv2+pool -> fc1+relu -> fc2 -> log_softmax
# One grid step processes a block of `tb` images (batch lives on sublanes).
# ---------------------------------------------------------------------------
def _cnn_fused_kernel(x_ref, band1_ref, b1_ref, band2_ref, b2_ref,
                      w3_ref, b3_ref, w4_ref, b4_ref, o_ref):
    f32 = jnp.float32
    bf16 = jnp.bfloat16
    tb = x_ref.shape[1]                                # images per grid step

    def conv_pool(x3d, band_ref):
        # x3d: (2*h_out + 2, tb, K) bf16  -- rows already zero padded
        # band_ref: (6, K, N) bf16, indexed by kh*2 + dw
        h_out = (x3d.shape[0] - 2) // 2
        h_conv = 2 * h_out
        K = x3d.shape[2]
        N = band_ref.shape[2]
        # hoisted tap slices; reshape (h_conv, tb, K) -> (h_conv*tb, K) is a
        # layout-preserving view since tb is a multiple of the sublane tile.
        lhs = [x3d[kh:kh + h_conv].reshape(h_conv * tb, K) for kh in range(3)]
        pooled = None
        for dw in range(2):                            # horizontal pool partner
            acc = None
            for kh in range(3):                        # vertical conv taps (MXU)
                t = jnp.dot(lhs[kh], band_ref[2 * kh + dw],
                            preferred_element_type=f32)
                acc = t if acc is None else acc + t
            c = acc.reshape(h_out, 2 * tb, N)          # rows (2i, 2i+1) adjacent
            p = jnp.maximum(c[:, :tb, :], c[:, tb:, :])          # vertical pool (VPU)
            pooled = p if pooled is None else jnp.maximum(pooled, p)  # horizontal pool
        return pooled                                  # (h_out, tb, N) f32

    # ---- layer 1: conv(1->32) + bias + relu + 2x2 pool (input pre-padded) ---
    p1 = conv_pool(x_ref[...], band1_ref)              # (14, tb, 448)
    y1 = jnp.maximum(p1 + b1_ref[...], 0.0).astype(bf16)   # bias/relu commute with max

    # ---- layer 2: conv(32->32) + bias + relu + 2x2 pool ---------------------
    # only vertical zero padding is needed (horizontal pad folded into band2)
    zrow = jnp.zeros((1, tb, y1.shape[2]), bf16)
    x2 = jnp.concatenate([zrow, y1, zrow], axis=0)     # (16, tb, 448)
    p2 = conv_pool(x2, band2_ref)                      # (7, tb, 224)
    y2 = jnp.maximum(p2 + b2_ref[...], 0.0).astype(bf16)

    # ---- head: fc1 blocked over the 7 pooled rows (no relayout), fc2, lsm ---
    acc = None
    for hh in range(7):
        t = jnp.dot(y2[hh], w3_ref[hh], preferred_element_type=f32)   # (tb, 512)
        acc = t if acc is None else acc + t
    hfc = jnp.maximum(acc + b3_ref[...], 0.0).astype(bf16)
    z = jnp.dot(hfc, w4_ref[...], preferred_element_type=f32) + b4_ref[...]
    m = jnp.max(z, axis=1, keepdims=True)
    lse = jnp.log(jnp.sum(jnp.exp(z - m), axis=1, keepdims=True)) + m
    o_ref[...] = (z - lse).astype(o_ref.dtype)


def _cnn_pallas(xT, band1, b1t, band2, b2t, w3p, b3p, w4p, b4p, *, tb):
    Bp = xT.shape[1]
    assert Bp % tb == 0
    return pl.pallas_call(
        _cnn_fused_kernel,
        out_shape=jax.ShapeDtypeStruct((Bp, 10), jnp.float32),
        grid_spec=pl.GridSpec(
            grid=(Bp // tb,),
            in_specs=[
                # activations: (30, Bp, 30), blocked over the batch axis
                pl.BlockSpec((30, tb, 30), lambda i: (0, i, 0)),
                # repacked weights / biases: constant index map -> VMEM-resident
                pl.BlockSpec((6, 30, 448), lambda i: (0, 0, 0)),
                pl.BlockSpec((1, 448), lambda i: (0, 0)),
                pl.BlockSpec((6, 448, 224), lambda i: (0, 0, 0)),
                pl.BlockSpec((1, 224), lambda i: (0, 0)),
                pl.BlockSpec((7, 224, 512), lambda i: (0, 0, 0)),
                pl.BlockSpec((1, 512), lambda i: (0, 0)),
                pl.BlockSpec((512, 10), lambda i: (0, 0)),
                pl.BlockSpec((1, 10), lambda i: (0, 0)),
            ],
            out_specs=pl.BlockSpec((tb, 10), lambda i: (i, 0)),
        ),
        compiler_params=pltpu.CompilerParams(
            dimension_semantics=("parallel",),          # megacore-shard the batch
            vmem_limit_bytes=48 * 1024 * 1024,          # fits v7x's 64 MiB too
        ),
    )(xT, band1, b1t, band2, b2t, w3p, b3p, w4p, b4p)


# ---------------------------------------------------------------------------
# Wrapper (pads batch / spatial dims, picks the batch tile)
# ---------------------------------------------------------------------------
def _ceil_to(n, m):
    return -(-n // m) * m


def _choose_tb(B, tb_max=64):
    """Batch tile: multiple of 16 (bf16 sublane tile), <= tb_max, minimal waste.
    tb_max=64 fills the MXU on the conv matmuls (M = 14*tb >= 256) while
    keeping the per-step VMEM footprint well under the scoped limit."""
    steps = -(-B // tb_max)
    per = -(-B // steps)
    return min(tb_max, _ceil_to(per, 16))


def cnn_forward(x_nchw, prep):
    band1, b1t, band2, b2t, w3p, b3p, w4p, b4p = prep
    x = x_nchw.astype(jnp.float32)[:, 0]                     # (B, 28, 28)
    B = x.shape[0]
    tb = _choose_tb(B)
    Bp = _ceil_to(B, tb)
    # zero-pad batch to a tile multiple and spatial dims for the 3x3 conv,
    # then put the batch on the sublane axis: (30, Bp, 30), bf16 MXU operand.
    x = jnp.pad(x, ((0, Bp - B), (1, 1), (1, 1)))
    xT = jnp.transpose(x, (1, 0, 2)).astype(jnp.bfloat16)
    out = _cnn_pallas(xT, band1, b1t, band2, b2t, w3p, b3p, w4p, b4p, tb=tb)
    return out[:B]


# ---------------------------------------------------------------------------
# Pure-JAX f32 reference (matches the PyTorch module) for the correctness check
# ---------------------------------------------------------------------------
def reference_forward(x, params):
    w1, b1, w2, b2, w3, b3, w4, b4 = params

    def conv(x, w, b):
        y = jax.lax.conv_general_dilated(
            x, w, (1, 1), ((1, 1), (1, 1)),
            dimension_numbers=("NCHW", "OIHW", "NCHW"))
        return jax.nn.relu(y + b[None, :, None, None])

    def pool(x):
        return jax.lax.reduce_window(x, -jnp.inf, jax.lax.max,
                                     (1, 1, 2, 2), (1, 1, 2, 2), "VALID")

    out = pool(conv(x.astype(jnp.float32), w1, b1))
    out = pool(conv(out, w2, b2))
    out = out.reshape(out.shape[0], -1)
    out = jax.nn.relu(out @ w3.T + b3)
    out = out @ w4.T + b4
    return jax.nn.log_softmax(out, axis=1)


def init_params(key):
    """Deterministic PyTorch-style uniform(-1/sqrt(fan_in), 1/sqrt(fan_in))."""
    keys = jax.random.split(key, 8)

    def u(k, shape, fan_in):
        bound = 1.0 / np.sqrt(fan_in)
        return jax.random.uniform(k, shape, jnp.float32, -bound, bound)

    w1 = u(keys[0], (32, 1, 3, 3), 1 * 9)
    b1 = u(keys[1], (32,), 1 * 9)
    w2 = u(keys[2], (32, 32, 3, 3), 32 * 9)
    b2 = u(keys[3], (32,), 32 * 9)
    w3 = u(keys[4], (500, 7 * 7 * 32), 7 * 7 * 32)
    b3 = u(keys[5], (500,), 7 * 7 * 32)
    w4 = u(keys[6], (10, 500), 500)
    b4 = u(keys[7], (10,), 500)
    return (w1, b1, w2, b2, w3, b3, w4, b4)


if __name__ == "__main__":
    key = jax.random.PRNGKey(0)
    k_x, k_p = jax.random.split(key)
    # architecture implies 1x28x28 inputs (7*7*32 features after two 2x2 pools)
    x = jax.random.normal(k_x, (2, 1, 28, 28), dtype=jnp.float32)
    params = init_params(k_p)
    prep = prepare_params(params)            # one-time weight repack (bf16)

    fwd = jax.jit(cnn_forward)
    out = jax.block_until_ready(fwd(x, prep))

    ref = jax.block_until_ready(reference_forward(x, params))
    # bf16 MXU operands vs f32 reference: log-prob errors are O(1e-2) worst case.
    np.testing.assert_allclose(np.asarray(out), np.asarray(ref),
                               atol=5e-2, rtol=0.0)
    assert out.shape == (2, 10) and out.dtype == jnp.float32
    print("KERNEL_OK")
</pallas_src>

<mosaic_0001>
module attributes {stable_mosaic.version = 11 : i64} {
  func.func @_cnn_fused_kernel(%arg0: i32, %arg1: memref<30x16x30xbf16, #tpu.memory_space<vmem>>, %arg2: memref<6x30x448xbf16, #tpu.memory_space<vmem>>, %arg3: memref<1x448xf32, #tpu.memory_space<vmem>>, %arg4: memref<6x448x224xbf16, #tpu.memory_space<vmem>>, %arg5: memref<1x224xf32, #tpu.memory_space<vmem>>, %arg6: memref<7x224x512xbf16, #tpu.memory_space<vmem>>, %arg7: memref<1x512xf32, #tpu.memory_space<vmem>>, %arg8: memref<512x10xbf16, #tpu.memory_space<vmem>>, %arg9: memref<1x10xf32, #tpu.memory_space<vmem>>, %arg10: memref<16x10xf32, #tpu.memory_space<vmem>>) attributes {dimension_semantics = [#tpu.dimension_semantics<parallel>], iteration_bounds = array<i64: 1>, scalar_prefetch = 0 : i64, scratch_operands = 0 : i64, tpu.core_type = #tpu.core_type<tc>, window_params = [{transform_indices = @transform_0, window_bounds = array<i64: 30, 16, 30>}, {pipeline_mode = #tpu.pipeline_mode<synchronous>, transform_indices = @transform_1, window_bounds = array<i64: 6, 30, 448>}, {pipeline_mode = #tpu.pipeline_mode<synchronous>, transform_indices = @transform_2, window_bounds = array<i64: 1, 448>}, {pipeline_mode = #tpu.pipeline_mode<synchronous>, transform_indices = @transform_3, window_bounds = array<i64: 6, 448, 224>}, {pipeline_mode = #tpu.pipeline_mode<synchronous>, transform_indices = @transform_4, window_bounds = array<i64: 1, 224>}, {pipeline_mode = #tpu.pipeline_mode<synchronous>, transform_indices = @transform_5, window_bounds = array<i64: 7, 224, 512>}, {pipeline_mode = #tpu.pipeline_mode<synchronous>, transform_indices = @transform_6, window_bounds = array<i64: 1, 512>}, {pipeline_mode = #tpu.pipeline_mode<synchronous>, transform_indices = @transform_7, window_bounds = array<i64: 512, 10>}, {pipeline_mode = #tpu.pipeline_mode<synchronous>, transform_indices = @transform_8, window_bounds = array<i64: 1, 10>}, {transform_indices = @transform_9, window_bounds = array<i64: 16, 10>}]} {
    %c0 = arith.constant 0 : index
    %c0_0 = arith.constant 0 : index
    %c0_1 = arith.constant 0 : index
    %0 = vector.load %arg1[%c0, %c0_0, %c0_1] : memref<30x16x30xbf16, #tpu.memory_space<vmem>>, vector<30x16x30xbf16>
    %1 = vector.extract_strided_slice %0 {offsets = [0, 0, 0], sizes = [28, 16, 30], strides = [1, 1, 1]} : vector<30x16x30xbf16> to vector<28x16x30xbf16>
    %2 = vector.shape_cast %1 : vector<28x16x30xbf16> to vector<448x30xbf16>
    %3 = vector.extract_strided_slice %0 {offsets = [1, 0, 0], sizes = [28, 16, 30], strides = [1, 1, 1]} : vector<30x16x30xbf16> to vector<28x16x30xbf16>
    %4 = vector.shape_cast %3 : vector<28x16x30xbf16> to vector<448x30xbf16>
    %5 = vector.extract_strided_slice %0 {offsets = [2, 0, 0], sizes = [28, 16, 30], strides = [1, 1, 1]} : vector<30x16x30xbf16> to vector<28x16x30xbf16>
    %6 = vector.shape_cast %5 : vector<28x16x30xbf16> to vector<448x30xbf16>
    %c0_2 = arith.constant 0 : index
    %c0_3 = arith.constant 0 : index
    %c0_4 = arith.constant 0 : index
    %7 = vector.load %arg2[%c0_2, %c0_3, %c0_4] : memref<6x30x448xbf16, #tpu.memory_space<vmem>>, vector<1x30x448xbf16>
    %8 = vector.shape_cast %7 : vector<1x30x448xbf16> to vector<30x448xbf16>
    %cst = arith.constant dense<0.000000e+00> : vector<448x448xf32>
    %9 = tpu.matmul %2, %8, %cst {dimension_numbers = #tpu.dot_dimension_numbers<[1], [0], [0], [1], [0, 0, 1, 1], [], []>} : vector<448x30xbf16>, vector<30x448xbf16>, vector<448x448xf32> -> vector<448x448xf32>
    %c2 = arith.constant 2 : index
    %c0_5 = arith.constant 0 : index
    %c0_6 = arith.constant 0 : index
    %10 = vector.load %arg2[%c2, %c0_5, %c0_6] : memref<6x30x448xbf16, #tpu.memory_space<vmem>>, vector<1x30x448xbf16>
    %11 = vector.shape_cast %10 : vector<1x30x448xbf16> to vector<30x448xbf16>
    %cst_7 = arith.constant dense<0.000000e+00> : vector<448x448xf32>
    %12 = tpu.matmul %4, %11, %cst_7 {dimension_numbers = #tpu.dot_dimension_numbers<[1], [0], [0], [1], [0, 0, 1, 1], [], []>} : vector<448x30xbf16>, vector<30x448xbf16>, vector<448x448xf32> -> vector<448x448xf32>
    %13 = arith.addf %9, %12 : vector<448x448xf32>
    %c4 = arith.constant 4 : index
    %c0_8 = arith.constant 0 : index
    %c0_9 = arith.constant 0 : index
    %14 = vector.load %arg2[%c4, %c0_8, %c0_9] : memref<6x30x448xbf16, #tpu.memory_space<vmem>>, vector<1x30x448xbf16>
    %15 = vector.shape_cast %14 : vector<1x30x448xbf16> to vector<30x448xbf16>
    %cst_10 = arith.constant dense<0.000000e+00> : vector<448x448xf32>
    %16 = tpu.matmul %6, %15, %cst_10 {dimension_numbers = #tpu.dot_dimension_numbers<[1], [0], [0], [1], [0, 0, 1, 1], [], []>} : vector<448x30xbf16>, vector<30x448xbf16>, vector<448x448xf32> -> vector<448x448xf32>
    %17 = arith.addf %13, %16 : vector<448x448xf32>
    %18 = vector.shape_cast %17 : vector<448x448xf32> to vector<14x32x448xf32>
    %19 = vector.extract_strided_slice %18 {offsets = [0, 0, 0], sizes = [14, 16, 448], strides = [1, 1, 1]} : vector<14x32x448xf32> to vector<14x16x448xf32>
    %20 = vector.extract_strided_slice %18 {offsets = [0, 16, 0], sizes = [14, 16, 448], strides = [1, 1, 1]} : vector<14x32x448xf32> to vector<14x16x448xf32>
    %21 = arith.maximumf %19, %20 : vector<14x16x448xf32>
    %c1 = arith.constant 1 : index
    %c0_11 = arith.constant 0 : index
    %c0_12 = arith.constant 0 : index
    %22 = vector.load %arg2[%c1, %c0_11, %c0_12] : memref<6x30x448xbf16, #tpu.memory_space<vmem>>, vector<1x30x448xbf16>
    %23 = vector.shape_cast %22 : vector<1x30x448xbf16> to vector<30x448xbf16>
    %cst_13 = arith.constant dense<0.000000e+00> : vector<448x448xf32>
    %24 = tpu.matmul %2, %23, %cst_13 {dimension_numbers = #tpu.dot_dimension_numbers<[1], [0], [0], [1], [0, 0, 1, 1], [], []>} : vector<448x30xbf16>, vector<30x448xbf16>, vector<448x448xf32> -> vector<448x448xf32>
    %c3 = arith.constant 3 : index
    %c0_14 = arith.constant 0 : index
    %c0_15 = arith.constant 0 : index
    %25 = vector.load %arg2[%c3, %c0_14, %c0_15] : memref<6x30x448xbf16, #tpu.memory_space<vmem>>, vector<1x30x448xbf16>
    %26 = vector.shape_cast %25 : vector<1x30x448xbf16> to vector<30x448xbf16>
    %cst_16 = arith.constant dense<0.000000e+00> : vector<448x448xf32>
    %27 = tpu.matmul %4, %26, %cst_16 {dimension_numbers = #tpu.dot_dimension_numbers<[1], [0], [0], [1], [0, 0, 1, 1], [], []>} : vector<448x30xbf16>, vector<30x448xbf16>, vector<448x448xf32> -> vector<448x448xf32>
    %28 = arith.addf %24, %27 : vector<448x448xf32>
    %c5 = arith.constant 5 : index
    %c0_17 = arith.constant 0 : index
    %c0_18 = arith.constant 0 : index
    %29 = vector.load %arg2[%c5, %c0_17, %c0_18] : memref<6x30x448xbf16, #tpu.memory_space<vmem>>, vector<1x30x448xbf16>
    %30 = vector.shape_cast %29 : vector<1x30x448xbf16> to vector<30x448xbf16>
    %cst_19 = arith.constant dense<0.000000e+00> : vector<448x448xf32>
    %31 = tpu.matmul %6, %30, %cst_19 {dimension_numbers = #tpu.dot_dimension_numbers<[1], [0], [0], [1], [0, 0, 1, 1], [], []>} : vector<448x30xbf16>, vector<30x448xbf16>, vector<448x448xf32> -> vector<448x448xf32>
    %32 = arith.addf %28, %31 : vector<448x448xf32>
    %33 = vector.shape_cast %32 : vector<448x448xf32> to vector<14x32x448xf32>
    %34 = vector.extract_strided_slice %33 {offsets = [0, 0, 0], sizes = [14, 16, 448], strides = [1, 1, 1]} : vector<14x32x448xf32> to vector<14x16x448xf32>
    %35 = vector.extract_strided_slice %33 {offsets = [0, 16, 0], sizes = [14, 16, 448], strides = [1, 1, 1]} : vector<14x32x448xf32> to vector<14x16x448xf32>
    %36 = arith.maximumf %34, %35 : vector<14x16x448xf32>
    %37 = arith.maximumf %21, %36 : vector<14x16x448xf32>
    %c0_20 = arith.constant 0 : index
    %c0_21 = arith.constant 0 : index
    %38 = vector.load %arg3[%c0_20, %c0_21] : memref<1x448xf32, #tpu.memory_space<vmem>>, vector<1x448xf32>
    %39 = vector.shape_cast %38 : vector<1x448xf32> to vector<1x1x448xf32>
    %40 = vector.broadcast %39 : vector<1x1x448xf32> to vector<14x16x448xf32>
    %41 = arith.addf %37, %40 : vector<14x16x448xf32>
    %cst_22 = arith.constant 0.000000e+00 : f32
    %42 = vector.broadcast %cst_22 : f32 to vector<14x16x448xf32>
    %43 = arith.maximumf %41, %42 : vector<14x16x448xf32>
    %44 = arith.truncf %43 : vector<14x16x448xf32> to vector<14x16x448xbf16>
    %cst_23 = arith.constant 0.000000e+00 : bf16
    %45 = vector.broadcast %cst_23 : bf16 to vector<1x16x448xbf16>
    %46 = tpu.concatenate %45, %44, %45 in 0 : vector<1x16x448xbf16>, vector<14x16x448xbf16>, vector<1x16x448xbf16> -> vector<16x16x448xbf16>
    %47 = vector.extract_strided_slice %46 {offsets = [0, 0, 0], sizes = [14, 16, 448], strides = [1, 1, 1]} : vector<16x16x448xbf16> to vector<14x16x448xbf16>
    %48 = vector.shape_cast %47 : vector<14x16x448xbf16> to vector<224x448xbf16>
    %49 = vector.extract_strided_slice %46 {offsets = [1, 0, 0], sizes = [14, 16, 448], strides = [1, 1, 1]} : vector<16x16x448xbf16> to vector<14x16x448xbf16>
    %50 = vector.shape_cast %49 : vector<14x16x448xbf16> to vector<224x448xbf16>
    %51 = vector.extract_strided_slice %46 {offsets = [2, 0, 0], sizes = [14, 16, 448], strides = [1, 1, 1]} : vector<16x16x448xbf16> to vector<14x16x448xbf16>
    %52 = vector.shape_cast %51 : vector<14x16x448xbf16> to vector<224x448xbf16>
    %c0_24 = arith.constant 0 : index
    %c0_25 = arith.constant 0 : index
    %c0_26 = arith.constant 0 : index
    %53 = vector.load %arg4[%c0_24, %c0_25, %c0_26] : memref<6x448x224xbf16, #tpu.memory_space<vmem>>, vector<1x448x224xbf16>
    %54 = vector.shape_cast %53 : vector<1x448x224xbf16> to vector<448x224xbf16>
    %cst_27 = arith.constant dense<0.000000e+00> : vector<224x224xf32>
    %55 = tpu.matmul %48, %54, %cst_27 {dimension_numbers = #tpu.dot_dimension_numbers<[1], [0], [0], [1], [0, 0, 1, 1], [], []>} : vector<224x448xbf16>, vector<448x224xbf16>, vector<224x224xf32> -> vector<224x224xf32>
    %c2_28 = arith.constant 2 : index
    %c0_29 = arith.constant 0 : index
    %c0_30 = arith.constant 0 : index
    %56 = vector.load %arg4[%c2_28, %c0_29, %c0_30] : memref<6x448x224xbf16, #tpu.memory_space<vmem>>, vector<1x448x224xbf16>
    %57 = vector.shape_cast %56 : vector<1x448x224xbf16> to vector<448x224xbf16>
    %cst_31 = arith.constant dense<0.000000e+00> : vector<224x224xf32>
    %58 = tpu.matmul %50, %57, %cst_31 {dimension_numbers = #tpu.dot_dimension_numbers<[1], [0], [0], [1], [0, 0, 1, 1], [], []>} : vector<224x448xbf16>, vector<448x224xbf16>, vector<224x224xf32> -> vector<224x224xf32>
    %59 = arith.addf %55, %58 : vector<224x224xf32>
    %c4_32 = arith.constant 4 : index
    %c0_33 = arith.constant 0 : index
    %c0_34 = arith.constant 0 : index
    %60 = vector.load %arg4[%c4_32, %c0_33, %c0_34] : memref<6x448x224xbf16, #tpu.memory_space<vmem>>, vector<1x448x224xbf16>
    %61 = vector.shape_cast %60 : vector<1x448x224xbf16> to vector<448x224xbf16>
    %cst_35 = arith.constant dense<0.000000e+00> : vector<224x224xf32>
    %62 = tpu.matmul %52, %61, %cst_35 {dimension_numbers = #tpu.dot_dimension_numbers<[1], [0], [0], [1], [0, 0, 1, 1], [], []>} : vector<224x448xbf16>, vector<448x224xbf16>, vector<224x224xf32> -> vector<224x224xf32>
    %63 = arith.addf %59, %62 : vector<224x224xf32>
    %64 = vector.shape_cast %63 : vector<224x224xf32> to vector<7x32x224xf32>
    %65 = vector.extract_strided_slice %64 {offsets = [0, 0, 0], sizes = [7, 16, 224], strides = [1, 1, 1]} : vector<7x32x224xf32> to vector<7x16x224xf32>
    %66 = vector.extract_strided_slice %64 {offsets = [0, 16, 0], sizes = [7, 16, 224], strides = [1, 1, 1]} : vector<7x32x224xf32> to vector<7x16x224xf32>
    %67 = arith.maximumf %65, %66 : vector<7x16x224xf32>
    %c1_36 = arith.constant 1 : index
    %c0_37 = arith.constant 0 : index
    %c0_38 = arith.constant 0 : index
    %68 = vector.load %arg4[%c1_36, %c0_37, %c0_38] : memref<6x448x224xbf16, #tpu.memory_space<vmem>>, vector<1x448x224xbf16>
    %69 = vector.shape_cast %68 : vector<1x448x224xbf16> to vector<448x224xbf16>
    %cst_39 = arith.constant dense<0.000000e+00> : vector<224x224xf32>
    %70 = tpu.matmul %48, %69, %cst_39 {dimension_numbers = #tpu.dot_dimension_numbers<[1], [0], [0], [1], [0, 0, 1, 1], [], []>} : vector<224x448xbf16>, vector<448x224xbf16>, vector<224x224xf32> -> vector<224x224xf32>
    %c3_40 = arith.constant 3 : index
    %c0_41 = arith.constant 0 : index
    %c0_42 = arith.constant 0 : index
    %71 = vector.load %arg4[%c3_40, %c0_41, %c0_42] : memref<6x448x224xbf16, #tpu.memory_space<vmem>>, vector<1x448x224xbf16>
    %72 = vector.shape_cast %71 : vector<1x448x224xbf16> to vector<448x224xbf16>
    %cst_43 = arith.constant dense<0.000000e+00> : vector<224x224xf32>
    %73 = tpu.matmul %50, %72, %cst_43 {dimension_numbers = #tpu.dot_dimension_numbers<[1], [0], [0], [1], [0, 0, 1, 1], [], []>} : vector<224x448xbf16>, vector<448x224xbf16>, vector<224x224xf32> -> vector<224x224xf32>
    %74 = arith.addf %70, %73 : vector<224x224xf32>
    %c5_44 = arith.constant 5 : index
    %c0_45 = arith.constant 0 : index
    %c0_46 = arith.constant 0 : index
    %75 = vector.load %arg4[%c5_44, %c0_45, %c0_46] : memref<6x448x224xbf16, #tpu.memory_space<vmem>>, vector<1x448x224xbf16>
    %76 = vector.shape_cast %75 : vector<1x448x224xbf16> to vector<448x224xbf16>
    %cst_47 = arith.constant dense<0.000000e+00> : vector<224x224xf32>
    %77 = tpu.matmul %52, %76, %cst_47 {dimension_numbers = #tpu.dot_dimension_numbers<[1], [0], [0], [1], [0, 0, 1, 1], [], []>} : vector<224x448xbf16>, vector<448x224xbf16>, vector<224x224xf32> -> vector<224x224xf32>
    %78 = arith.addf %74, %77 : vector<224x224xf32>
    %79 = vector.shape_cast %78 : vector<224x224xf32> to vector<7x32x224xf32>
    %80 = vector.extract_strided_slice %79 {offsets = [0, 0, 0], sizes = [7, 16, 224], strides = [1, 1, 1]} : vector<7x32x224xf32> to vector<7x16x224xf32>
    %81 = vector.extract_strided_slice %79 {offsets = [0, 16, 0], sizes = [7, 16, 224], strides = [1, 1, 1]} : vector<7x32x224xf32> to vector<7x16x224xf32>
    %82 = arith.maximumf %80, %81 : vector<7x16x224xf32>
    %83 = arith.maximumf %67, %82 : vector<7x16x224xf32>
    %c0_48 = arith.constant 0 : index
    %c0_49 = arith.constant 0 : index
    %84 = vector.load %arg5[%c0_48, %c0_49] : memref<1x224xf32, #tpu.memory_space<vmem>>, vector<1x224xf32>
    %85 = vector.shape_cast %84 : vector<1x224xf32> to vector<1x1x224xf32>
    %86 = vector.broadcast %85 : vector<1x1x224xf32> to vector<7x16x224xf32>
    %87 = arith.addf %83, %86 : vector<7x16x224xf32>
    %cst_50 = arith.constant 0.000000e+00 : f32
    %88 = vector.broadcast %cst_50 : f32 to vector<7x16x224xf32>
    %89 = arith.maximumf %87, %88 : vector<7x16x224xf32>
    %90 = arith.truncf %89 : vector<7x16x224xf32> to vector<7x16x224xbf16>
    %91 = vector.extract_strided_slice %90 {offsets = [0, 0, 0], sizes = [1, 16, 224], strides = [1, 1, 1]} : vector<7x16x224xbf16> to vector<1x16x224xbf16>
    %92 = vector.shape_cast %91 : vector<1x16x224xbf16> to vector<16x224xbf16>
    %c0_51 = arith.constant 0 : index
    %c0_52 = arith.constant 0 : index
    %c0_53 = arith.constant 0 : index
    %93 = vector.load %arg6[%c0_51, %c0_52, %c0_53] : memref<7x224x512xbf16, #tpu.memory_space<vmem>>, vector<1x224x512xbf16>
    %94 = vector.shape_cast %93 : vector<1x224x512xbf16> to vector<224x512xbf16>
    %cst_54 = arith.constant dense<0.000000e+00> : vector<16x512xf32>
    %95 = tpu.matmul %92, %94, %cst_54 {dimension_numbers = #tpu.dot_dimension_numbers<[1], [0], [0], [1], [0, 0, 1, 1], [], []>} : vector<16x224xbf16>, vector<224x512xbf16>, vector<16x512xf32> -> vector<16x512xf32>
    %96 = vector.extract_strided_slice %90 {offsets = [1, 0, 0], sizes = [1, 16, 224], strides = [1, 1, 1]} : vector<7x16x224xbf16> to vector<1x16x224xbf16>
    %97 = vector.shape_cast %96 : vector<1x16x224xbf16> to vector<16x224xbf16>
    %c1_55 = arith.constant 1 : index
    %c0_56 = arith.constant 0 : index
    %c0_57 = arith.constant 0 : index
    %98 = vector.load %arg6[%c1_55, %c0_56, %c0_57] : memref<7x224x512xbf16, #tpu.memory_space<vmem>>, vector<1x224x512xbf16>
    %99 = vector.shape_cast %98 : vector<1x224x512xbf16> to vector<224x512xbf16>
    %cst_58 = arith.constant dense<0.000000e+00> : vector<16x512xf32>
    %100 = tpu.matmul %97, %99, %cst_58 {dimension_numbers = #tpu.dot_dimension_numbers<[1], [0], [0], [1], [0, 0, 1, 1], [], []>} : vector<16x224xbf16>, vector<224x512xbf16>, vector<16x512xf32> -> vector<16x512xf32>
    %101 = arith.addf %95, %100 : vector<16x512xf32>
    %102 = vector.extract_strided_slice %90 {offsets = [2, 0, 0], sizes = [1, 16, 224], strides = [1, 1, 1]} : vector<7x16x224xbf16> to vector<1x16x224xbf16>
    %103 = vector.shape_cast %102 : vector<1x16x224xbf16> to vector<16x224xbf16>
    %c2_59 = arith.constant 2 : index
    %c0_60 = arith.constant 0 : index
    %c0_61 = arith.constant 0 : index
    %104 = vector.load %arg6[%c2_59, %c0_60, %c0_61] : memref<7x224x512xbf16, #tpu.memory_space<vmem>>, vector<1x224x512xbf16>
    %105 = vector.shape_cast %104 : vector<1x224x512xbf16> to vector<224x512xbf16>
    %cst_62 = arith.constant dense<0.000000e+00> : vector<16x512xf32>
    %106 = tpu.matmul %103, %105, %cst_62 {dimension_numbers = #tpu.dot_dimension_numbers<[1], [0], [0], [1], [0, 0, 1, 1], [], []>} : vector<16x224xbf16>, vector<224x512xbf16>, vector<16x512xf32> -> vector<16x512xf32>
    %107 = arith.addf %101, %106 : vector<16x512xf32>
    %108 = vector.extract_strided_slice %90 {offsets = [3, 0, 0], sizes = [1, 16, 224], strides = [1, 1, 1]} : vector<7x16x224xbf16> to vector<1x16x224xbf16>
    %109 = vector.shape_cast %108 : vector<1x16x224xbf16> to vector<16x224xbf16>
    %c3_63 = arith.constant 3 : index
    %c0_64 = arith.constant 0 : index
    %c0_65 = arith.constant 0 : index
    %110 = vector.load %arg6[%c3_63, %c0_64, %c0_65] : memref<7x224x512xbf16, #tpu.memory_space<vmem>>, vector<1x224x512xbf16>
    %111 = vector.shape_cast %110 : vector<1x224x512xbf16> to vector<224x512xbf16>
    %cst_66 = arith.constant dense<0.000000e+00> : vector<16x512xf32>
    %112 = tpu.matmul %109, %111, %cst_66 {dimension_numbers = #tpu.dot_dimension_numbers<[1], [0], [0], [1], [0, 0, 1, 1], [], []>} : vector<16x224xbf16>, vector<224x512xbf16>, vector<16x512xf32> -> vector<16x512xf32>
    %113 = arith.addf %107, %112 : vector<16x512xf32>
    %114 = vector.extract_strided_slice %90 {offsets = [4, 0, 0], sizes = [1, 16, 224], strides = [1, 1, 1]} : vector<7x16x224xbf16> to vector<1x16x224xbf16>
    %115 = vector.shape_cast %114 : vector<1x16x224xbf16> to vector<16x224xbf16>
    %c4_67 = arith.constant 4 : index
    %c0_68 = arith.constant 0 : index
    %c0_69 = arith.constant 0 : index
    %116 = vector.load %arg6[%c4_67, %c0_68, %c0_69] : memref<7x224x512xbf16, #tpu.memory_space<vmem>>, vector<1x224x512xbf16>
    %117 = vector.shape_cast %116 : vector<1x224x512xbf16> to vector<224x512xbf16>
    %cst_70 = arith.constant dense<0.000000e+00> : vector<16x512xf32>
    %118 = tpu.matmul %115, %117, %cst_70 {dimension_numbers = #tpu.dot_dimension_numbers<[1], [0], [0], [1], [0, 0, 1, 1], [], []>} : vector<16x224xbf16>, vector<224x512xbf16>, vector<16x512xf32> -> vector<16x512xf32>
    %119 = arith.addf %113, %118 : vector<16x512xf32>
    %120 = vector.extract_strided_slice %90 {offsets = [5, 0, 0], sizes = [1, 16, 224], strides = [1, 1, 1]} : vector<7x16x224xbf16> to vector<1x16x224xbf16>
    %121 = vector.shape_cast %120 : vector<1x16x224xbf16> to vector<16x224xbf16>
    %c5_71 = arith.constant 5 : index
    %c0_72 = arith.constant 0 : index
    %c0_73 = arith.constant 0 : index
    %122 = vector.load %arg6[%c5_71, %c0_72, %c0_73] : memref<7x224x512xbf16, #tpu.memory_space<vmem>>, vector<1x224x512xbf16>
    %123 = vector.shape_cast %122 : vector<1x224x512xbf16> to vector<224x512xbf16>
    %cst_74 = arith.constant dense<0.000000e+00> : vector<16x512xf32>
    %124 = tpu.matmul %121, %123, %cst_74 {dimension_numbers = #tpu.dot_dimension_numbers<[1], [0], [0], [1], [0, 0, 1, 1], [], []>} : vector<16x224xbf16>, vector<224x512xbf16>, vector<16x512xf32> -> vector<16x512xf32>
    %125 = arith.addf %119, %124 : vector<16x512xf32>
    %126 = vector.extract_strided_slice %90 {offsets = [6, 0, 0], sizes = [1, 16, 224], strides = [1, 1, 1]} : vector<7x16x224xbf16> to vector<1x16x224xbf16>
    %127 = vector.shape_cast %126 : vector<1x16x224xbf16> to vector<16x224xbf16>
    %c6 = arith.constant 6 : index
    %c0_75 = arith.constant 0 : index
    %c0_76 = arith.constant 0 : index
    %128 = vector.load %arg6[%c6, %c0_75, %c0_76] : memref<7x224x512xbf16, #tpu.memory_space<vmem>>, vector<1x224x512xbf16>
    %129 = vector.shape_cast %128 : vector<1x224x512xbf16> to vector<224x512xbf16>
    %cst_77 = arith.constant dense<0.000000e+00> : vector<16x512xf32>
    %130 = tpu.matmul %127, %129, %cst_77 {dimension_numbers = #tpu.dot_dimension_numbers<[1], [0], [0], [1], [0, 0, 1, 1], [], []>} : vector<16x224xbf16>, vector<224x512xbf16>, vector<16x512xf32> -> vector<16x512xf32>
    %131 = arith.addf %125, %130 : vector<16x512xf32>
    %c0_78 = arith.constant 0 : index
    %c0_79 = arith.constant 0 : index
    %132 = vector.load %arg7[%c0_78, %c0_79] : memref<1x512xf32, #tpu.memory_space<vmem>>, vector<1x512xf32>
    %133 = vector.broadcast %132 : vector<1x512xf32> to vector<16x512xf32>
    %134 = arith.addf %131, %133 : vector<16x512xf32>
    %cst_80 = arith.constant 0.000000e+00 : f32
    %135 = vector.broadcast %cst_80 : f32 to vector<16x512xf32>
    %136 = arith.maximumf %134, %135 : vector<16x512xf32>
    %137 = arith.truncf %136 : vector<16x512xf32> to vector<16x512xbf16>
    %c0_81 = arith.constant 0 : index
    %c0_82 = arith.constant 0 : index
    %138 = vector.load %arg8[%c0_81, %c0_82] : memref<512x10xbf16, #tpu.memory_space<vmem>>, vector<512x10xbf16>
    %cst_83 = arith.constant dense<0.000000e+00> : vector<16x10xf32>
    %139 = tpu.matmul %137, %138, %cst_83 {dimension_numbers = #tpu.dot_dimension_numbers<[1], [0], [0], [1], [0, 0, 1, 1], [], []>} : vector<16x512xbf16>, vector<512x10xbf16>, vector<16x10xf32> -> vector<16x10xf32>
    %c0_84 = arith.constant 0 : index
    %c0_85 = arith.constant 0 : index
    %140 = vector.load %arg9[%c0_84, %c0_85] : memref<1x10xf32, #tpu.memory_space<vmem>>, vector<1x10xf32>
    %141 = vector.broadcast %140 : vector<1x10xf32> to vector<16x10xf32>
    %142 = arith.addf %139, %141 : vector<16x10xf32>
    %cst_86 = arith.constant dense<0xFF800000> : vector<16xf32>
    %143 = vector.multi_reduction <maximumf>, %142, %cst_86 [1] : vector<16x10xf32> to vector<16xf32>
    %144 = vector.shape_cast %143 : vector<16xf32> to vector<16x1xf32>
    %145 = vector.broadcast %144 : vector<16x1xf32> to vector<16x10xf32>
    %146 = arith.subf %142, %145 : vector<16x10xf32>
    %147 = math.exp %146 : vector<16x10xf32>
    %cst_87 = arith.constant dense<0.000000e+00> : vector<16xf32>
    %148 = vector.multi_reduction <add>, %147, %cst_87 [1] : vector<16x10xf32> to vector<16xf32>
    %149 = vector.shape_cast %148 : vector<16xf32> to vector<16x1xf32>
    %150 = math.log %149 : vector<16x1xf32>
    %151 = arith.addf %150, %144 : vector<16x1xf32>
    %152 = vector.broadcast %151 : vector<16x1xf32> to vector<16x10xf32>
    %153 = arith.subf %142, %152 : vector<16x10xf32>
    %c0_88 = arith.constant 0 : index
    %c0_89 = arith.constant 0 : index
    %154 = vector.load %arg10[%c0_88, %c0_89] : memref<16x10xf32, #tpu.memory_space<vmem>>, vector<16x10xf32>
    tpu.vector_store %arg10[%c0_88, %c0_89], %153 {strides = array<i32>} : memref<16x10xf32, #tpu.memory_space<vmem>>, vector<16x10xf32>,
    return
  }
  func.func @transform_0(%arg0: i32) -> (i32, i32, i32) {
    %c0_i32 = arith.constant 0 : i32
    %c0_i32_0 = arith.constant 0 : i32
    %c0_i32_1 = arith.constant 0 : i32
    return %c0_i32, %arg0, %c0_i32_0 : i32, i32, i32
  }
  func.func @transform_1(%arg0: i32) -> (i32, i32, i32) {
    %c0_i32 = arith.constant 0 : i32
    %c0_i32_0 = arith.constant 0 : i32
    %c0_i32_1 = arith.constant 0 : i32
    %c0_i32_2 = arith.constant 0 : i32
    return %c0_i32, %c0_i32_0, %c0_i32_1 : i32, i32, i32
  }
  func.func @transform_2(%arg0: i32) -> (i32, i32) {
    %c0_i32 = arith.constant 0 : i32
    %c0_i32_0 = arith.constant 0 : i32
    %c0_i32_1 = arith.constant 0 : i32
    return %c0_i32, %c0_i32_0 : i32, i32
  }
  func.func @transform_3(%arg0: i32) -> (i32, i32, i32) {
    %c0_i32 = arith.constant 0 : i32
    %c0_i32_0 = arith.constant 0 : i32
    %c0_i32_1 = arith.constant 0 : i32
    %c0_i32_2 = arith.constant 0 : i32
    return %c0_i32, %c0_i32_0, %c0_i32_1 : i32, i32, i32
  }
  func.func @transform_4(%arg0: i32) -> (i32, i32) {
    %c0_i32 = arith.constant 0 : i32
    %c0_i32_0 = arith.constant 0 : i32
    %c0_i32_1 = arith.constant 0 : i32
    return %c0_i32, %c0_i32_0 : i32, i32
  }
  func.func @transform_5(%arg0: i32) -> (i32, i32, i32) {
    %c0_i32 = arith.constant 0 : i32
    %c0_i32_0 = arith.constant 0 : i32
    %c0_i32_1 = arith.constant 0 : i32
    %c0_i32_2 = arith.constant 0 : i32
    return %c0_i32, %c0_i32_0, %c0_i32_1 : i32, i32, i32
  }
  func.func @transform_6(%arg0: i32) -> (i32, i32) {
    %c0_i32 = arith.constant 0 : i32
    %c0_i32_0 = arith.constant 0 : i32
    %c0_i32_1 = arith.constant 0 : i32
    return %c0_i32, %c0_i32_0 : i32, i32
  }
  func.func @transform_7(%arg0: i32) -> (i32, i32) {
    %c0_i32 = arith.constant 0 : i32
    %c0_i32_0 = arith.constant 0 : i32
    %c0_i32_1 = arith.constant 0 : i32
    return %c0_i32, %c0_i32_0 : i32, i32
  }
  func.func @transform_8(%arg0: i32) -> (i32, i32) {
    %c0_i32 = arith.constant 0 : i32
    %c0_i32_0 = arith.constant 0 : i32
    %c0_i32_1 = arith.constant 0 : i32
    return %c0_i32, %c0_i32_0 : i32, i32
  }
  func.func @transform_9(%arg0: i32) -> (i32, i32) {
    %c0_i32 = arith.constant 0 : i32
    %c0_i32_0 = arith.constant 0 : i32
    return %arg0, %c0_i32 : i32, i32
  }
}

</mosaic_0001>

<llo_original>
// kernel: cnn_forward.1
$region0: #{cnn_forward.1}
  #allocation0 [shape = 'u32[]', space=smem, size = 0x4, offset = 0x4, fixed_abs, tag = 'smem constant byte address 0x4 - core index']
  #allocation1 [shape = 'u32[144,128]{1,0:T(1,128)}', space=vmem, size = 0x12000, scoped, tag = 'internal scratch']
  %s0 = inlined_call_operand.vmem [shape: bf16[30,16,30], index: 0, kind: input, shape index: {}]
  %s1 = inlined_call_operand.hbm [shape: bf16[6,30,448], index: 1, kind: input, shape index: {}]
  %s2 = inlined_call_operand.hbm [shape: f32[1,448], index: 2, kind: input, shape index: {}]
  %s3 = inlined_call_operand.hbm [shape: bf16[6,448,224], index: 3, kind: input, shape index: {}]
  %s4 = inlined_call_operand.hbm [shape: f32[1,224], index: 4, kind: input, shape index: {}]
  %s5 = inlined_call_operand.hbm [shape: bf16[7,224,512], index: 5, kind: input, shape index: {}]
  %s6 = inlined_call_operand.hbm [shape: f32[1,512], index: 6, kind: input, shape index: {}]
  %s7 = inlined_call_operand.vmem [shape: bf16[512,10], index: 7, kind: input, shape index: {}]
  %s8 = inlined_call_operand.hbm [shape: f32[1,10], index: 8, kind: input, shape index: {}]
  %s9 = inlined_call_operand.vmem [shape: f32[16,10], index: 9, kind: output, shape index: {}]
  %s10 = sld [smem:[#allocation0]]
  $region74: #{cnn_forward.1} parent=0
    _
  %s12 = ssub.s32 1, %s10
  %s13 = scalar_select 0, %s12, %s10
  $region1: #{cnn_forward.1} parent=0
    #allocation2 [shape = 'u8[196608]{0}', space=vmem, size = 0x30000, scoped, tag = 'input window, operand 1, single buffered']
    #allocation3 [shape = 's32[1]{0}', space=sflag, size = 0x4, scoped, tag = 'scoped memory for cnn_forward.1']
    #allocation4 [shape = 'u8[2048]{0}', space=vmem, size = 0x800, scoped, tag = 'input window, operand 2, single buffered']
    #allocation5 [shape = 's32[1]{0}', space=sflag, size = 0x4, scoped, tag = 'scoped memory for cnn_forward.1']
    #allocation6 [shape = 'u8[1376256]{0}', space=vmem, size = 0x150000, scoped, tag = 'input window, operand 3, single buffered']
    #allocation7 [shape = 'u8[1024]{0}', space=vmem, size = 0x400, scoped, tag = 'input window, operand 4, single buffered']
    #allocation8 [shape = 's32[1]{0}', space=sflag, size = 0x4, scoped, tag = 'scoped memory for cnn_forward.1']
    #allocation9 [shape = 'u8[1605632]{0}', space=vmem, size = 0x188000, scoped, tag = 'input window, operand 5, single buffered']
    #allocation10 [shape = 'u8[2048]{0}', space=vmem, size = 0x800, scoped, tag = 'input window, operand 6, single buffered']
    #allocation11 [shape = 's32[1]{0}', space=sflag, size = 0x4, scoped, tag = 'scoped memory for cnn_forward.1']
    #allocation12 [shape = 'u8[512]{0}', space=vmem, size = 0x400, scoped, tag = 'input window, operand 8, single buffered']
    %14 = vsyncpa [#allocation3], 0
    %15 = vsyncpa [#allocation5], 0
    %16 = vsyncpa [#allocation8], 0
    %17 = vsyncpa [#allocation11], 0
    // Predicated region
    $region2: #{cnn_forward.1} parent=1 // pred_check
      _
    $region3: #{cnn_forward.1} parent=1 // pred_check_branch
      %19 = sbr.rel (0) target = $region5
    $region4: #{cnn_forward.1} parent=1 // pred_region
      _
    $region5: #{cnn_forward.1} parent=1 // pred_fallthru
      _
    // Predicated region
    $region6: #{cnn_forward.1} parent=1 // pred_check
      _
    $region7: #{cnn_forward.1} parent=1 // pred_check_branch
      %21 = sbr.rel (0) target = $region9
    $region8: #{cnn_forward.1} parent=1 // pred_region
      %s23 = ssub.s32 6144, 6144
      %24 = vsyncadd [#allocation3], %s23
      %s25 = sshll.u32 [#allocation2], 4
      %s26 = int_to_ptr.vmem [resolvable:$true] %s25
      %31 = dma.hbm_to_vmem [thread:$0]  %s1, 6144, %s26, [#allocation3], 256, 256, 16
    $region9: #{cnn_forward.1} parent=1 // pred_fallthru
      _
    // Predicated region
    $region10: #{cnn_forward.1} parent=1 // pred_check
      _
    $region11: #{cnn_forward.1} parent=1 // pred_check_branch
      %33 = sbr.rel (0) target = $region13
    $region12: #{cnn_forward.1} parent=1 // pred_region
      %s35 = ssub.s32 64, 64
      %36 = vsyncadd [#allocation5], %s35
      %s38 = sshll.u32 [#allocation4], 4
      %s39 = int_to_ptr.vmem [resolvable:$true] %s38
      %41 = dma.hbm_to_vmem [thread:$0]  %s2, 64, %s39, [#allocation5]
    $region13: #{cnn_forward.1} parent=1 // pred_fallthru
      _
    // Predicated region
    $region14: #{cnn_forward.1} parent=1 // pred_check
      _
    $region15: #{cnn_forward.1} parent=1 // pred_check_branch
      %43 = sbr.rel (0) target = $region17
    $region16: #{cnn_forward.1} parent=1 // pred_region
      %s45 = ssub.s32 43008, 43008
      %46 = vsyncadd [#allocation5], %s45
      %s47 = sshll.u32 [#allocation6], 4
      %s48 = int_to_ptr.vmem [resolvable:$true] %s47
      %53 = dma.hbm_to_vmem [thread:$0]  %s3, 43008, %s48, [#allocation5], 128, 128, 8
    $region17: #{cnn_forward.1} parent=1 // pred_fallthru
      _
    // Predicated region
    $region18: #{cnn_forward.1} parent=1 // pred_check
      _
    $region19: #{cnn_forward.1} parent=1 // pred_check_branch
      %55 = sbr.rel (0) target = $region21
    $region20: #{cnn_forward.1} parent=1 // pred_region
      %s57 = ssub.s32 32, 32
      %58 = vsyncadd [#allocation8], %s57
      %s60 = sshll.u32 [#allocation7], 4
      %s61 = int_to_ptr.vmem [resolvable:$true] %s60
      %63 = dma.hbm_to_vmem [thread:$0]  %s4, 32, %s61, [#allocation8]
    $region21: #{cnn_forward.1} parent=1 // pred_fallthru
      _
    // Predicated region
    $region22: #{cnn_forward.1} parent=1 // pred_check
      _
    $region23: #{cnn_forward.1} parent=1 // pred_check_branch
      %65 = sbr.rel (0) target = $region25
    $region24: #{cnn_forward.1} parent=1 // pred_region
      %s67 = ssub.s32 50176, 50176
      %68 = vsyncadd [#allocation8], %s67
      %s69 = sshll.u32 [#allocation9], 4
      %s70 = int_to_ptr.vmem [resolvable:$true] %s69
      %75 = dma.hbm_to_vmem [thread:$0]  %s5, 50176, %s70, [#allocation8], 256, 256, 16
    $region25: #{cnn_forward.1} parent=1 // pred_fallthru
      _
    // Predicated region
    $region26: #{cnn_forward.1} parent=1 // pred_check
      _
    $region27: #{cnn_forward.1} parent=1 // pred_check_branch
      %77 = sbr.rel (0) target = $region29
    $region28: #{cnn_forward.1} parent=1 // pred_region
      %s79 = ssub.s32 64, 64
      %80 = vsyncadd [#allocation11], %s79
      %s82 = sshll.u32 [#allocation10], 4
      %s83 = int_to_ptr.vmem [resolvable:$true] %s82
      %85 = dma.hbm_to_vmem [thread:$0]  %s6, 64, %s83, [#allocation11]
    $region29: #{cnn_forward.1} parent=1 // pred_fallthru
      _
    // Predicated region
    $region30: #{cnn_forward.1} parent=1 // pred_check
      _
    $region31: #{cnn_forward.1} parent=1 // pred_check_branch
      %87 = sbr.rel (0) target = $region33
    $region32: #{cnn_forward.1} parent=1 // pred_region
      _
    $region33: #{cnn_forward.1} parent=1 // pred_fallthru
      _
    // Predicated region
    $region34: #{cnn_forward.1} parent=1 // pred_check
      _
    $region35: #{cnn_forward.1} parent=1 // pred_check_branch
      %89 = sbr.rel (0) target = $region37
    $region36: #{cnn_forward.1} parent=1 // pred_region
      %s91 = ssub.s32 16, 16
      %92 = vsyncadd [#allocation11], %s91
      %s94 = sshll.u32 [#allocation12], 4
      %s95 = int_to_ptr.vmem [resolvable:$true] %s94
      %97 = dma.hbm_to_vmem [thread:$0]  %s8, 16, %s95, [#allocation11]
    $region37: #{cnn_forward.1} parent=1 // pred_fallthru
      _
    // Predicated region
    $region38: #{cnn_forward.1} parent=1 // pred_check
      _
    $region39: #{cnn_forward.1} parent=1 // pred_check_branch
      %99 = sbr.rel (0) target = $region41
    $region40: #{cnn_forward.1} parent=1 // pred_region
      %100 = dma.done [#allocation3], 6144
    $region41: #{cnn_forward.1} parent=1 // pred_fallthru
      _
    // Predicated region
    $region42: #{cnn_forward.1} parent=1 // pred_check
      _
    $region43: #{cnn_forward.1} parent=1 // pred_check_branch
      %102 = sbr.rel (0) target = $region45
    $region44: #{cnn_forward.1} parent=1 // pred_region
      %103 = dma.done [#allocation5], 64
    $region45: #{cnn_forward.1} parent=1 // pred_fallthru
      _
    // Predicated region
    $region46: #{cnn_forward.1} parent=1 // pred_check
      _
    $region47: #{cnn_forward.1} parent=1 // pred_check_branch
      %105 = sbr.rel (0) target = $region49
    $region48: #{cnn_forward.1} parent=1 // pred_region
      %106 = dma.done [#allocation5], 43008
    $region49: #{cnn_forward.1} parent=1 // pred_fallthru
      _
    // Predicated region
    $region50: #{cnn_forward.1} parent=1 // pred_check
      _
    $region51: #{cnn_forward.1} parent=1 // pred_check_branch
      %108 = sbr.rel (0) target = $region53
    $region52: #{cnn_forward.1} parent=1 // pred_region
      %109 = dma.done [#allocation8], 32
    $region53: #{cnn_forward.1} parent=1 // pred_fallthru
      _
    // Predicated region
    $region54: #{cnn_forward.1} parent=1 // pred_check
      _
    $region55: #{cnn_forward.1} parent=1 // pred_check_branch
      %111 = sbr.rel (0) target = $region57
    $region56: #{cnn_forward.1} parent=1 // pred_region
      %112 = dma.done [#allocation8], 50176
    $region57: #{cnn_forward.1} parent=1 // pred_fallthru
      _
    // Predicated region
    $region58: #{cnn_forward.1} parent=1 // pred_check
      _
    $region59: #{cnn_forward.1} parent=1 // pred_check_branch
      %114 = sbr.rel (0) target = $region61
    $region60: #{cnn_forward.1} parent=1 // pred_region
      %115 = dma.done [#allocation11], 64
    $region61: #{cnn_forward.1} parent=1 // pred_fallthru
      _
    // Predicated region
    $region62: #{cnn_forward.1} parent=1 // pred_check
      _
    $region63: #{cnn_forward.1} parent=1 // pred_check_branch
      %117 = sbr.rel (0) target = $region65
    $region64: #{cnn_forward.1} parent=1 // pred_region
      %118 = dma.done [#allocation11], 16
    $region65: #{cnn_forward.1} parent=1 // pred_fallthru
      _
    %v120 = vld [vmem:[%s0] sm:$0xf]
    %v121 = vld [vmem:[%s0 + $0x4] sm:$0xf]
    %v122 = vld [vmem:[%s0 + $0x8] sm:$0xf]
    %v123 = vld [vmem:[%s0 + $0xc] sm:$0xf]
    %v124 = vld [vmem:[%s0 + $0x10] sm:$0xf]
    %v125 = vld [vmem:[%s0 + $0x14] sm:$0xf]
    %v126 = vld [vmem:[%s0 + $0x18] sm:$0xf]
    %v127 = vld [vmem:[%s0 + $0x1c] sm:$0xf]
    %v128 = vld [vmem:[%s0 + $0x20] sm:$0xf]
    %v129 = vld [vmem:[%s0 + $0x24] sm:$0xf]
    %v130 = vld [vmem:[%s0 + $0x28] sm:$0xf]
    %v131 = vld [vmem:[%s0 + $0x2c] sm:$0xf]
    %v132 = vld [vmem:[%s0 + $0x30] sm:$0xf]
    %v133 = vld [vmem:[%s0 + $0x34] sm:$0xf]
    %v134 = vld [vmem:[%s0 + $0x38] sm:$0xf]
    %v135 = vld [vmem:[%s0 + $0x3c] sm:$0xf]
    %v136 = vld [vmem:[%s0 + $0x40] sm:$0xf]
    %v137 = vld [vmem:[%s0 + $0x44] sm:$0xf]
    %v138 = vld [vmem:[%s0 + $0x48] sm:$0xf]
    %v139 = vld [vmem:[%s0 + $0x4c] sm:$0xf]
    %v140 = vld [vmem:[%s0 + $0x50] sm:$0xf]
    %v141 = vld [vmem:[%s0 + $0x54] sm:$0xf]
    %v142 = vld [vmem:[%s0 + $0x58] sm:$0xf]
    %v143 = vld [vmem:[%s0 + $0x5c] sm:$0xf]
    %v144 = vld [vmem:[%s0 + $0x60] sm:$0xf]
    %v145 = vld [vmem:[%s0 + $0x64] sm:$0xf]
    %v146 = vld [vmem:[%s0 + $0x68] sm:$0xf]
    %v147 = vld [vmem:[%s0 + $0x6c] sm:$0xf]
    %v148 = vld [vmem:[%s0 + $0x70] sm:$0xf]
    %v149 = vld [vmem:[%s0 + $0x74] sm:$0xf]
    %v150 = vld [vmem:[%s0 + $0x78] sm:$0xf]
    %v151 = vld [vmem:[%s0 + $0x7c] sm:$0xf]
    %v152 = vld [vmem:[%s0 + $0x80] sm:$0xf]
    %v153 = vld [vmem:[%s0 + $0x84] sm:$0xf]
    %v154 = vld [vmem:[%s0 + $0x88] sm:$0xf]
    %v155 = vld [vmem:[%s0 + $0x8c] sm:$0xf]
    %v156 = vld [vmem:[%s0 + $0x90] sm:$0xf]
    %v157 = vld [vmem:[%s0 + $0x94] sm:$0xf]
    %v158 = vld [vmem:[%s0 + $0x98] sm:$0xf]
    %v159 = vld [vmem:[%s0 + $0x9c] sm:$0xf]
    %v160 = vld [vmem:[%s0 + $0xa0] sm:$0xf]
    %v161 = vld [vmem:[%s0 + $0xa4] sm:$0xf]
    %v162 = vld [vmem:[%s0 + $0xa8] sm:$0xf]
    %v163 = vld [vmem:[%s0 + $0xac] sm:$0xf]
    %v164 = vld [vmem:[%s0 + $0xb0] sm:$0xf]
    %v165 = vld [vmem:[%s0 + $0xb4] sm:$0xf]
    %v166 = vld [vmem:[%s0 + $0xb8] sm:$0xf]
    %v167 = vld [vmem:[%s0 + $0xbc] sm:$0xf]
    %v168 = vld [vmem:[%s0 + $0xc0] sm:$0xf]
    %v169 = vld [vmem:[%s0 + $0xc4] sm:$0xf]
    %v170 = vld [vmem:[%s0 + $0xc8] sm:$0xf]
    %v171 = vld [vmem:[%s0 + $0xcc] sm:$0xf]
    %v172 = vld [vmem:[%s0 + $0xd0] sm:$0xf]
    %v173 = vld [vmem:[%s0 + $0xd4] sm:$0xf]
    %v174 = vld [vmem:[%s0 + $0xd8] sm:$0xf]
    %v175 = vld [vmem:[%s0 + $0xdc] sm:$0xf]
    %v176 = vld [vmem:[%s0 + $0xe0] sm:$0xf]
    %v177 = vld [vmem:[%s0 + $0xe4] sm:$0xf]
    %v178 = vld [vmem:[%s0 + $0xe8] sm:$0xf]
    %v179 = vld [vmem:[%s0 + $0xec] sm:$0xf]
    %v180 = vld [vmem:[#allocation2] sm:$0xff]
    %v181 = vld [vmem:[#allocation2 + $0x8] sm:$0xff]
    %v182 = vld [vmem:[#allocation2 + $0x10] sm:$0xff]
    %v183 = vld [vmem:[#allocation2 + $0x18] sm:$0xff]
    %v184 = vld [vmem:[#allocation2 + $0x20] sm:$0xff]
    %v185 = vld [vmem:[#allocation2 + $0x28] sm:$0xff]
    %v186 = vld [vmem:[#allocation2 + $0x30] sm:$0x77]
    %v187 = vld [vmem:[#allocation2 + $0x38] sm:$0x77]
    %s188 = scalar_lea.vmem [#allocation2], 128
    %v189 = vld [vmem:[%s188] sm:$0xff]
    %v190 = vld [vmem:[%s188 + $0x8] sm:$0xff]
    %v191 = vld [vmem:[%s188 + $0x10] sm:$0xff]
    %v192 = vld [vmem:[%s188 + $0x18] sm:$0xff]
    %v193 = vld [vmem:[%s188 + $0x20] sm:$0xff]
    %v194 = vld [vmem:[%s188 + $0x28] sm:$0xff]
    %v195 = vld [vmem:[%s188 + $0x30] sm:$0x77]
    %v196 = vld [vmem:[%s188 + $0x38] sm:$0x77]
    %v253 = vunpack.c.l.b16 %v122
    %v254 = vunpack.c.l.b16 %v123
    %v255 = vunpack.c.l.b16 %v124
    %v256 = vunpack.c.l.b16 %v125
    %v257 = vunpack.c.l.b16 %v126
    %v258 = vunpack.c.l.b16 %v127
    %v259 = vunpack.c.l.b16 %v128
    %v260 = vunpack.c.l.b16 %v129
    %v261 = vunpack.c.l.b16 %v130
    %v262 = vunpack.c.l.b16 %v131
    %v263 = vunpack.c.l.b16 %v132
    %v264 = vunpack.c.l.b16 %v133
    %v265 = vunpack.c.l.b16 %v134
    %v266 = vunpack.c.l.b16 %v135
    %v267 = vunpack.c.l.b16 %v136
    %v268 = vunpack.c.l.b16 %v137
    %v269 = vunpack.c.l.b16 %v138
    %v270 = vunpack.c.l.b16 %v139
    %v271 = vunpack.c.l.b16 %v140
    %v272 = vunpack.c.l.b16 %v141
    %v273 = vunpack.c.l.b16 %v142
    %v274 = vunpack.c.l.b16 %v143
    %v275 = vunpack.c.l.b16 %v144
    %v276 = vunpack.c.l.b16 %v145
    %v277 = vunpack.c.l.b16 %v146
    %v278 = vunpack.c.l.b16 %v147
    %v279 = vunpack.c.l.b16 %v148
    %v280 = vunpack.c.l.b16 %v149
    %v281 = vunpack.c.l.b16 %v150
    %v282 = vunpack.c.l.b16 %v151
    %v283 = vunpack.c.l.b16 %v152
    %v284 = vunpack.c.l.b16 %v153
    %v285 = vunpack.c.l.b16 %v154
    %v286 = vunpack.c.l.b16 %v155
    %v287 = vunpack.c.l.b16 %v156
    %v288 = vunpack.c.l.b16 %v157
    %v289 = vunpack.c.l.b16 %v158
    %v290 = vunpack.c.l.b16 %v159
    %v291 = vunpack.c.l.b16 %v160
    %v292 = vunpack.c.l.b16 %v161
    %v293 = vunpack.c.l.b16 %v162
    %v294 = vunpack.c.l.b16 %v163
    %v295 = vunpack.c.l.b16 %v164
    %v296 = vunpack.c.l.b16 %v165
    %v297 = vunpack.c.l.b16 %v166
    %v298 = vunpack.c.l.b16 %v167
    %v299 = vunpack.c.l.b16 %v168
    %v300 = vunpack.c.l.b16 %v169
    %v301 = vunpack.c.l.b16 %v170
    %v302 = vunpack.c.l.b16 %v171
    %v303 = vunpack.c.l.b16 %v172
    %v304 = vunpack.c.l.b16 %v173
    %v305 = vunpack.c.l.b16 %v174
    %v306 = vunpack.c.l.b16 %v175
    %v307 = vunpack.c.l.b16 %v176
    %v308 = vunpack.c.l.b16 %v177
    %v309 = vpack.c.b16 %v254, %v253
    %v310 = vpack.c.b16 %v256, %v255
    %v311 = vpack.c.b16 %v258, %v257
    %v312 = vpack.c.b16 %v260, %v259
    %v313 = vpack.c.b16 %v262, %v261
    %v314 = vpack.c.b16 %v264, %v263
    %v315 = vpack.c.b16 %v266, %v265
    %v316 = vpack.c.b16 %v268, %v267
    %v317 = vpack.c.b16 %v270, %v269
    %v318 = vpack.c.b16 %v272, %v271
    %v319 = vpack.c.b16 %v274, %v273
    %v320 = vpack.c.b16 %v276, %v275
    %v321 = vpack.c.b16 %v278, %v277
    %v322 = vpack.c.b16 %v280, %v279
    %v323 = vpack.c.b16 %v282, %v281
    %v324 = vpack.c.b16 %v284, %v283
    %v325 = vpack.c.b16 %v286, %v285
    %v326 = vpack.c.b16 %v288, %v287
    %v327 = vpack.c.b16 %v290, %v289
    %v328 = vpack.c.b16 %v292, %v291
    %v329 = vpack.c.b16 %v294, %v293
    %v330 = vpack.c.b16 %v296, %v295
    %v331 = vpack.c.b16 %v298, %v297
    %v332 = vpack.c.b16 %v300, %v299
    %v333 = vpack.c.b16 %v302, %v301
    %v334 = vpack.c.b16 %v304, %v303
    %v335 = vpack.c.b16 %v306, %v305
    %v336 = vpack.c.b16 %v308, %v307
    %v345 = vunpack.c.l.b16 %v189
    %v346 = vunpack.c.h.b16 %v189
    %v347 = vunpack.c.l.b16 %v190
    %v348 = vunpack.c.h.b16 %v190
    %v349 = vunpack.c.l.b16 %v191
    %v350 = vunpack.c.h.b16 %v191
    %v351 = vunpack.c.l.b16 %v192
    %v352 = vunpack.c.h.b16 %v192
    %v353 = vunpack.c.l.b16 %v193
    %v354 = vunpack.c.h.b16 %v193
    %v355 = vunpack.c.l.b16 %v194
    %v356 = vunpack.c.h.b16 %v194
    %v357 = vunpack.c.l.b16 %v195
    %v358 = vunpack.c.h.b16 %v195
    %v359 = vunpack.c.l.b16 %v196
    %v360 = vunpack.c.h.b16 %v196
    %v361 = vpack.c.b16 %v349, %v345
    %v362 = vpack.c.b16 %v350, %v346
    %v363 = vpack.c.b16 %v351, %v347
    %v364 = vpack.c.b16 %v352, %v348
    %v365 = vpack.c.b16 %v357, %v353
    %v366 = vpack.c.b16 %v358, %v354
    %v367 = vpack.c.b16 %v359, %v355
    %v368 = vpack.c.b16 %v360, %v356
    %vm373 = vcmask 244736
    %v375 = vsel %vm373, %v309, 0
    %v378 = vsel %vm373, %v310, 0
    %v381 = vsel %vm373, %v311, 0
    %v384 = vsel %vm373, %v312, 0
    %v387 = vsel %vm373, %v313, 0
    %v390 = vsel %vm373, %v314, 0
    %v393 = vsel %vm373, %v315, 0
    %v396 = vsel %vm373, %v316, 0
    %v399 = vsel %vm373, %v317, 0
    %v402 = vsel %vm373, %v318, 0
    %v405 = vsel %vm373, %v319, 0
    %v408 = vsel %vm373, %v320, 0
    %v411 = vsel %vm373, %v321, 0
    %v414 = vsel %vm373, %v322, 0
    %v417 = vsel %vm373, %v323, 0
    %v420 = vsel %vm373, %v324, 0
    %v423 = vsel %vm373, %v325, 0
    %v426 = vsel %vm373, %v326, 0
    %v429 = vsel %vm373, %v327, 0
    %v432 = vsel %vm373, %v328, 0
    %v435 = vsel %vm373, %v329, 0
    %v438 = vsel %vm373, %v330, 0
    %v441 = vsel %vm373, %v331, 0
    %v444 = vsel %vm373, %v332, 0
    %v447 = vsel %vm373, %v333, 0
    %v450 = vsel %vm373, %v334, 0
    %v453 = vsel %vm373, %v335, 0
    %v456 = vsel %vm373, %v336, 0
    %vm458 = vcmask 1046528
    %v460 = vsel %vm458, %v365, 0
    %v463 = vsel %vm458, %v366, 0
    %v466 = vsel %vm458, %v367, 0
    %v469 = vsel %vm458, %v368, 0
    %471 = vmatprep.subr.bf16.mxu0 0
    %472 = vmatpush1.bf16.msra.mxu0 0
    %473 = vmatprep.subr.bf16.mxu0 0
    %474 = vmatpush1.bf16.msra.mxu0 0
    %475 = vmatprep.subr.bf16.mxu0 0
    %476 = vmatpush1.bf16.msra.mxu0 0
    %477 = vmatprep.subr.bf16.mxu0 0
    %478 = vmatpush1.bf16.msra.mxu0 0
    %479 = vmatprep.subr.bf16.mxu0 0
    %480 = vmatpush1.bf16.msra.mxu0 0
    %481 = vmatprep.subr.bf16.mxu0 0
    %482 = vmatpush1.bf16.msra.mxu0 0
    %483 = vmatprep.subr.bf16.mxu0 %v463
    %484 = vmatpush1.bf16.msra.mxu0 %v460
    %485 = vmatprep.subr.bf16.mxu0 %v362
    %486 = vmatpush1.bf16.msra.mxu0 %v361
    %487 = vmatprep.subr.bf16.mxu0 0
    %488 = vmatpush2.bf16.msra.mxu0 0
    %489 = vmatprep.subr.bf16.mxu0 0
    %490 = vmatpush2.bf16.msra.mxu0 0
    %491 = vmatprep.subr.bf16.mxu0 0
    %492 = vmatpush2.bf16.msra.mxu0 0
    %493 = vmatprep.subr.bf16.mxu0 0
    %494 = vmatpush2.bf16.msra.mxu0 0
    %495 = vmatprep.subr.bf16.mxu0 0
    %496 = vmatpush2.bf16.msra.mxu0 0
    %497 = vmatprep.subr.bf16.mxu0 0
    %498 = vmatpush2.bf16.msra.mxu0 0
    %499 = vmatprep.subr.bf16.mxu0 0
    %500 = vmatpush2.bf16.msra.mxu0 0
    %501 = vmatprep.subr.bf16.mxu0 0
    %502 = vmatpush2.bf16.msra.mxu0 0
    %503 = vmatprep.mubr.bf16.mxu0 0
    %504 = vmatmul.mubr.bf16.gmra.mxu0 %v375
    %v505 = vpop.f32.mrf.mxu0
    %v506 = vadd.f32 0.0, %v505
    %v507 = vpop.f32.mrf.mxu0
    %v508 = vadd.f32 0.0, %v507
    %v509 = vpop.f32.mrf.mxu0
    %v510 = vadd.f32 0.0, %v509
    %v511 = vpop.f32.mrf.mxu0
    %v512 = vadd.f32 0.0, %v511
    %513 = vmatprep.mubr.bf16.mxu0 0
    %514 = vmatmul.mubr.bf16.gmra.mxu0 %v378
    %v515 = vpop.f32.mrf.mxu0
    %v516 = vadd.f32 0.0, %v515
    %v517 = vpop.f32.mrf.mxu0
    %v518 = vadd.f32 0.0, %v517
    %v519 = vpop.f32.mrf.mxu0
    %v520 = vadd.f32 0.0, %v519
    %v521 = vpop.f32.mrf.mxu0
    %v522 = vadd.f32 0.0, %v521
    %523 = vmatprep.mubr.bf16.mxu0 0
    %524 = vmatmul.mubr.bf16.gmra.mxu0 %v381
    %v525 = vpop.f32.mrf.mxu0
    %v526 = vadd.f32 0.0, %v525
    %v527 = vpop.f32.mrf.mxu0
    %v528 = vadd.f32 0.0, %v527
    %v529 = vpop.f32.mrf.mxu0
    %v530 = vadd.f32 0.0, %v529
    %v531 = vpop.f32.mrf.mxu0
    %v532 = vadd.f32 0.0, %v531
    %533 = vmatprep.mubr.bf16.mxu0 0
    %534 = vmatmul.mubr.bf16.gmra.mxu0 %v384
    %v535 = vpop.f32.mrf.mxu0
    %v536 = vadd.f32 0.0, %v535
    %v537 = vpop.f32.mrf.mxu0
    %v538 = vadd.f32 0.0, %v537
    %v539 = vpop.f32.mrf.mxu0
    %v540 = vadd.f32 0.0, %v539
    %v541 = vpop.f32.mrf.mxu0
    %v542 = vadd.f32 0.0, %v541
    %543 = vmatprep.mubr.bf16.mxu0 0
    %544 = vmatmul.mubr.bf16.gmra.mxu0 %v387
    %v545 = vpop.f32.mrf.mxu0
    %v546 = vadd.f32 0.0, %v545
    %v547 = vpop.f32.mrf.mxu0
    %v548 = vadd.f32 0.0, %v547
    %v549 = vpop.f32.mrf.mxu0
    %v550 = vadd.f32 0.0, %v549
    %v551 = vpop.f32.mrf.mxu0
    %v552 = vadd.f32 0.0, %v551
    %553 = vmatprep.mubr.bf16.mxu0 0
    %554 = vmatmul.mubr.bf16.gmra.mxu0 %v390
    %v555 = vpop.f32.mrf.mxu0
    %v556 = vadd.f32 0.0, %v555
    %v557 = vpop.f32.mrf.mxu0
    %v558 = vadd.f32 0.0, %v557
    %v559 = vpop.f32.mrf.mxu0
    %v560 = vadd.f32 0.0, %v559
    %v561 = vpop.f32.mrf.mxu0
    %v562 = vadd.f32 0.0, %v561
    %563 = vmatprep.mubr.bf16.mxu0 0
    %564 = vmatmul.mubr.bf16.gmra.mxu0 %v393
    %v565 = vpop.f32.mrf.mxu0
    %v566 = vadd.f32 0.0, %v565
    %v567 = vpop.f32.mrf.mxu0
    %v568 = vadd.f32 0.0, %v567
    %v569 = vpop.f32.mrf.mxu0
    %v570 = vadd.f32 0.0, %v569
    %v571 = vpop.f32.mrf.mxu0
    %v572 = vadd.f32 0.0, %v571
    %573 = vmatprep.mubr.bf16.mxu0 0
    %574 = vmatmul.mubr.bf16.gmra.mxu0 %v396
    %v575 = vpop.f32.mrf.mxu0
    %v576 = vadd.f32 0.0, %v575
    %v577 = vpop.f32.mrf.mxu0
    %v578 = vadd.f32 0.0, %v577
    %v579 = vpop.f32.mrf.mxu0
    %v580 = vadd.f32 0.0, %v579
    %v581 = vpop.f32.mrf.mxu0
    %v582 = vadd.f32 0.0, %v581
    %583 = vmatprep.mubr.bf16.mxu0 0
    %584 = vmatmul.mubr.bf16.gmra.mxu0 %v399
    %v585 = vpop.f32.mrf.mxu0
    %v586 = vadd.f32 0.0, %v585
    %v587 = vpop.f32.mrf.mxu0
    %v588 = vadd.f32 0.0, %v587
    %v589 = vpop.f32.mrf.mxu0
    %v590 = vadd.f32 0.0, %v589
    %v591 = vpop.f32.mrf.mxu0
    %v592 = vadd.f32 0.0, %v591
    %593 = vmatprep.mubr.bf16.mxu0 0
    %594 = vmatmul.mubr.bf16.gmra.mxu0 %v402
    %v595 = vpop.f32.mrf.mxu0
    %v596 = vadd.f32 0.0, %v595
    %v597 = vpop.f32.mrf.mxu0
    %v598 = vadd.f32 0.0, %v597
    %v599 = vpop.f32.mrf.mxu0
    %v600 = vadd.f32 0.0, %v599
    %v601 = vpop.f32.mrf.mxu0
    %v602 = vadd.f32 0.0, %v601
    %603 = vmatprep.mubr.bf16.mxu0 0
    %604 = vmatmul.mubr.bf16.gmra.mxu0 %v405
    %v605 = vpop.f32.mrf.mxu0
    %v606 = vadd.f32 0.0, %v605
    %v607 = vpop.f32.mrf.mxu0
    %v608 = vadd.f32 0.0, %v607
    %v609 = vpop.f32.mrf.mxu0
    %v610 = vadd.f32 0.0, %v609
    %v611 = vpop.f32.mrf.mxu0
    %v612 = vadd.f32 0.0, %v611
    %613 = vmatprep.mubr.bf16.mxu0 0
    %614 = vmatmul.mubr.bf16.gmra.mxu0 %v408
    %v615 = vpop.f32.mrf.mxu0
    %v616 = vadd.f32 0.0, %v615
    %v617 = vpop.f32.mrf.mxu0
    %v618 = vadd.f32 0.0, %v617
    %v619 = vpop.f32.mrf.mxu0
    %v620 = vadd.f32 0.0, %v619
    %v621 = vpop.f32.mrf.mxu0
    %v622 = vadd.f32 0.0, %v621
    %623 = vmatprep.mubr.bf16.mxu0 0
    %624 = vmatmul.mubr.bf16.gmra.mxu0 %v411
    %v625 = vpop.f32.mrf.mxu0
    %v626 = vadd.f32 0.0, %v625
    %v627 = vpop.f32.mrf.mxu0
    %v628 = vadd.f32 0.0, %v627
    %v629 = vpop.f32.mrf.mxu0
    %v630 = vadd.f32 0.0, %v629
    %v631 = vpop.f32.mrf.mxu0
    %v632 = vadd.f32 0.0, %v631
    %633 = vmatprep.mubr.bf16.mxu0 0
    %634 = vmatmul.mubr.bf16.gmra.mxu0 %v414
    %v635 = vpop.f32.mrf.mxu0
    %v636 = vadd.f32 0.0, %v635
    %v637 = vpop.f32.mrf.mxu0
    %v638 = vadd.f32 0.0, %v637
    %v639 = vpop.f32.mrf.mxu0
    %v640 = vadd.f32 0.0, %v639
    %v641 = vpop.f32.mrf.mxu0
    %v642 = vadd.f32 0.0, %v641
    %643 = vmatprep.mubr.bf16.mxu0 0
    %644 = vmatmul.mubr.bf16.gmra.mxu0 %v417
    %v645 = vpop.f32.mrf.mxu0
    %v646 = vadd.f32 0.0, %v645
    %v647 = vpop.f32.mrf.mxu0
    %v648 = vadd.f32 0.0, %v647
    %v649 = vpop.f32.mrf.mxu0
    %v650 = vadd.f32 0.0, %v649
    %v651 = vpop.f32.mrf.mxu0
    %v652 = vadd.f32 0.0, %v651
    %653 = vmatprep.mubr.bf16.mxu0 0
    %654 = vmatmul.mubr.bf16.gmra.mxu0 %v420
    %v655 = vpop.f32.mrf.mxu0
    %v656 = vadd.f32 0.0, %v655
    %v657 = vpop.f32.mrf.mxu0
    %v658 = vadd.f32 0.0, %v657
    %v659 = vpop.f32.mrf.mxu0
    %v660 = vadd.f32 0.0, %v659
    %v661 = vpop.f32.mrf.mxu0
    %v662 = vadd.f32 0.0, %v661
    %663 = vmatprep.mubr.bf16.mxu0 0
    %664 = vmatmul.mubr.bf16.gmra.mxu0 %v423
    %v665 = vpop.f32.mrf.mxu0
    %v666 = vadd.f32 0.0, %v665
    %v667 = vpop.f32.mrf.mxu0
    %v668 = vadd.f32 0.0, %v667
    %v669 = vpop.f32.mrf.mxu0
    %v670 = vadd.f32 0.0, %v669
    %v671 = vpop.f32.mrf.mxu0
    %v672 = vadd.f32 0.0, %v671
    %673 = vmatprep.mubr.bf16.mxu0 0
    %674 = vmatmul.mubr.bf16.gmra.mxu0 %v426
    %v675 = vpop.f32.mrf.mxu0
    %v676 = vadd.f32 0.0, %v675
    %v677 = vpop.f32.mrf.mxu0
    %v678 = vadd.f32 0.0, %v677
    %v679 = vpop.f32.mrf.mxu0
    %v680 = vadd.f32 0.0, %v679
    %v681 = vpop.f32.mrf.mxu0
    %v682 = vadd.f32 0.0, %v681
    %683 = vmatprep.mubr.bf16.mxu0 0
    %684 = vmatmul.mubr.bf16.gmra.mxu0 %v429
    %v685 = vpop.f32.mrf.mxu0
    %v686 = vadd.f32 0.0, %v685
    %v687 = vpop.f32.mrf.mxu0
    %v688 = vadd.f32 0.0, %v687
    %v689 = vpop.f32.mrf.mxu0
    %v690 = vadd.f32 0.0, %v689
    %v691 = vpop.f32.mrf.mxu0
    %v692 = vadd.f32 0.0, %v691
    %693 = vmatprep.mubr.bf16.mxu0 0
    %694 = vmatmul.mubr.bf16.gmra.mxu0 %v432
    %v695 = vpop.f32.mrf.mxu0
    %v696 = vadd.f32 0.0, %v695
    %v697 = vpop.f32.mrf.mxu0
    %v698 = vadd.f32 0.0, %v697
    %v699 = vpop.f32.mrf.mxu0
    %v700 = vadd.f32 0.0, %v699
    %v701 = vpop.f32.mrf.mxu0
    %v702 = vadd.f32 0.0, %v701
    %703 = vmatprep.mubr.bf16.mxu0 0
    %704 = vmatmul.mubr.bf16.gmra.mxu0 %v435
    %v705 = vpop.f32.mrf.mxu0
    %v706 = vadd.f32 0.0, %v705
    %v707 = vpop.f32.mrf.mxu0
    %v708 = vadd.f32 0.0, %v707
    %v709 = vpop.f32.mrf.mxu0
    %v710 = vadd.f32 0.0, %v709
    %v711 = vpop.f32.mrf.mxu0
    %v712 = vadd.f32 0.0, %v711
    %713 = vmatprep.mubr.bf16.mxu0 0
    %714 = vmatmul.mubr.bf16.gmra.mxu0 %v438
    %v715 = vpop.f32.mrf.mxu0
    %v716 = vadd.f32 0.0, %v715
    %v717 = vpop.f32.mrf.mxu0
    %v718 = vadd.f32 0.0, %v717
    %v719 = vpop.f32.mrf.mxu0
    %v720 = vadd.f32 0.0, %v719
    %v721 = vpop.f32.mrf.mxu0
    %v722 = vadd.f32 0.0, %v721
    %723 = vmatprep.mubr.bf16.mxu0 0
    %724 = vmatmul.mubr.bf16.gmra.mxu0 %v441
    %v725 = vpop.f32.mrf.mxu0
    %v726 = vadd.f32 0.0, %v725
    %v727 = vpop.f32.mrf.mxu0
    %v728 = vadd.f32 0.0, %v727
    %v729 = vpop.f32.mrf.mxu0
    %v730 = vadd.f32 0.0, %v729
    %v731 = vpop.f32.mrf.mxu0
    %v732 = vadd.f32 0.0, %v731
    %733 = vmatprep.mubr.bf16.mxu0 0
    %734 = vmatmul.mubr.bf16.gmra.mxu0 %v444
    %v735 = vpop.f32.mrf.mxu0
    %v736 = vadd.f32 0.0, %v735
    %v737 = vpop.f32.mrf.mxu0
    %v738 = vadd.f32 0.0, %v737
    %v739 = vpop.f32.mrf.mxu0
    %v740 = vadd.f32 0.0, %v739
    %v741 = vpop.f32.mrf.mxu0
    %v742 = vadd.f32 0.0, %v741
    %743 = vmatprep.mubr.bf16.mxu0 0
    %744 = vmatmul.mubr.bf16.gmra.mxu0 %v447
    %v745 = vpop.f32.mrf.mxu0
    %v746 = vadd.f32 0.0, %v745
    %v747 = vpop.f32.mrf.mxu0
    %v748 = vadd.f32 0.0, %v747
    %v749 = vpop.f32.mrf.mxu0
    %v750 = vadd.f32 0.0, %v749
    %v751 = vpop.f32.mrf.mxu0
    %v752 = vadd.f32 0.0, %v751
    %753 = vmatprep.mubr.bf16.mxu0 0
    %754 = vmatmul.mubr.bf16.gmra.mxu0 %v450
    %v755 = vpop.f32.mrf.mxu0
    %v756 = vadd.f32 0.0, %v755
    %v757 = vpop.f32.mrf.mxu0
    %v758 = vadd.f32 0.0, %v757
    %v759 = vpop.f32.mrf.mxu0
    %v760 = vadd.f32 0.0, %v759
    %v761 = vpop.f32.mrf.mxu0
    %v762 = vadd.f32 0.0, %v761
    %763 = vmatprep.mubr.bf16.mxu0 0
    %764 = vmatmul.mubr.bf16.gmra.mxu0 %v453
    %v765 = vpop.f32.mrf.mxu0
    %v766 = vadd.f32 0.0, %v765
    %v767 = vpop.f32.mrf.mxu0
    %v768 = vadd.f32 0.0, %v767
    %v769 = vpop.f32.mrf.mxu0
    %v770 = vadd.f32 0.0, %v769
    %v771 = vpop.f32.mrf.mxu0
    %v772 = vadd.f32 0.0, %v771
    %773 = vmatprep.mubr.bf16.mxu0 0
    %774 = vmatmul.mubr.bf16.gmra.mxu0 %v456
    %v775 = vpop.f32.mrf.mxu0
    %v776 = vadd.f32 0.0, %v775
    %v777 = vpop.f32.mrf.mxu0
    %v778 = vadd.f32 0.0, %v777
    %v779 = vpop.f32.mrf.mxu0
    %v780 = vadd.f32 0.0, %v779
    %v781 = vpop.f32.mrf.mxu0
    %v782 = vadd.f32 0.0, %v781
    %783 = vdwg.mxu0
    %784 = vmatprep.subr.bf16.mxu0 0
    %785 = vmatpush1.bf16.msra.mxu0 0
    %786 = vmatprep.subr.bf16.mxu0 0
    %787 = vmatpush1.bf16.msra.mxu0 0
    %788 = vmatprep.subr.bf16.mxu0 0
    %789 = vmatpush1.bf16.msra.mxu0 0
    %790 = vmatprep.subr.bf16.mxu0 0
    %791 = vmatpush1.bf16.msra.mxu0 0
    %792 = vmatprep.subr.bf16.mxu0 0
    %793 = vmatpush1.bf16.msra.mxu0 0
    %794 = vmatprep.subr.bf16.mxu0 0
    %795 = vmatpush1.bf16.msra.mxu0 0
    %796 = vmatprep.subr.bf16.mxu0 %v469
    %797 = vmatpush1.bf16.msra.mxu0 %v466
    %798 = vmatprep.subr.bf16.mxu0 %v364
    %799 = vmatpush1.bf16.msra.mxu0 %v363
    %800 = vmatprep.subr.bf16.mxu0 0
    %801 = vmatpush2.bf16.msra.mxu0 0
    %802 = vmatprep.subr.bf16.mxu0 0
    %803 = vmatpush2.bf16.msra.mxu0 0
    %804 = vmatprep.subr.bf16.mxu0 0
    %805 = vmatpush2.bf16.msra.mxu0 0
    %806 = vmatprep.subr.bf16.mxu0 0
    %807 = vmatpush2.bf16.msra.mxu0 0
    %808 = vmatprep.subr.bf16.mxu0 0
    %809 = vmatpush2.bf16.msra.mxu0 0
    %810 = vmatprep.subr.bf16.mxu0 0
    %811 = vmatpush2.bf16.msra.mxu0 0
    %812 = vmatprep.subr.bf16.mxu0 0
    %813 = vmatpush2.bf16.msra.mxu0 0
    %814 = vmatprep.subr.bf16.mxu0 0
    %815 = vmatpush2.bf16.msra.mxu0 0
    %816 = vmatprep.mubr.bf16.mxu0 0
    %817 = vmatmul.mubr.bf16.gmra.mxu0 %v375
    %v818 = vpop.f32.mrf.mxu0
    %v819 = vadd.f32 0.0, %v818
    %v820 = vpop.f32.mrf.mxu0
    %v821 = vadd.f32 0.0, %v820
    %v822 = vpop.f32.mrf.mxu0
    %v823 = vadd.f32 0.0, %v822
    %v824 = vpop.f32.mrf.mxu0
    %v825 = vadd.f32 0.0, %v824
    %826 = vmatprep.mubr.bf16.mxu0 0
    %827 = vmatmul.mubr.bf16.gmra.mxu0 %v378
    %v828 = vpop.f32.mrf.mxu0
    %v829 = vadd.f32 0.0, %v828
    %v830 = vpop.f32.mrf.mxu0
    %v831 = vadd.f32 0.0, %v830
    %v832 = vpop.f32.mrf.mxu0
    %v833 = vadd.f32 0.0, %v832
    %v834 = vpop.f32.mrf.mxu0
    %v835 = vadd.f32 0.0, %v834
    %836 = vmatprep.mubr.bf16.mxu0 0
    %837 = vmatmul.mubr.bf16.gmra.mxu0 %v381
    %v838 = vpop.f32.mrf.mxu0
    %v839 = vadd.f32 0.0, %v838
    %v840 = vpop.f32.mrf.mxu0
    %v841 = vadd.f32 0.0, %v840
    %v842 = vpop.f32.mrf.mxu0
    %v843 = vadd.f32 0.0, %v842
    %v844 = vpop.f32.mrf.mxu0
    %v845 = vadd.f32 0.0, %v844
    %846 = vmatprep.mubr.bf16.mxu0 0
    %847 = vmatmul.mubr.bf16.gmra.mxu0 %v384
    %v848 = vpop.f32.mrf.mxu0
    %v849 = vadd.f32 0.0, %v848
    %v850 = vpop.f32.mrf.mxu0
    %v851 = vadd.f32 0.0, %v850
    %v852 = vpop.f32.mrf.mxu0
    %v853 = vadd.f32 0.0, %v852
    %v854 = vpop.f32.mrf.mxu0
    %v855 = vadd.f32 0.0, %v854
    %856 = vmatprep.mubr.bf16.mxu0 0
    %857 = vmatmul.mubr.bf16.gmra.mxu0 %v387
    %v858 = vpop.f32.mrf.mxu0
    %v859 = vadd.f32 0.0, %v858
    %v860 = vpop.f32.mrf.mxu0
    %v861 = vadd.f32 0.0, %v860
    %v862 = vpop.f32.mrf.mxu0
    %v863 = vadd.f32 0.0, %v862
    %v864 = vpop.f32.mrf.mxu0
    %v865 = vadd.f32 0.0, %v864
    %866 = vmatprep.mubr.bf16.mxu0 0
    %867 = vmatmul.mubr.bf16.gmra.mxu0 %v390
    %v868 = vpop.f32.mrf.mxu0
    %v869 = vadd.f32 0.0, %v868
    %v870 = vpop.f32.mrf.mxu0
    %v871 = vadd.f32 0.0, %v870
    %v872 = vpop.f32.mrf.mxu0
    %v873 = vadd.f32 0.0, %v872
    %v874 = vpop.f32.mrf.mxu0
    %v875 = vadd.f32 0.0, %v874
    %876 = vmatprep.mubr.bf16.mxu0 0
    %877 = vmatmul.mubr.bf16.gmra.mxu0 %v393
    %v878 = vpop.f32.mrf.mxu0
    %v879 = vadd.f32 0.0, %v878
    %v880 = vpop.f32.mrf.mxu0
    %v881 = vadd.f32 0.0, %v880
    %v882 = vpop.f32.mrf.mxu0
    %v883 = vadd.f32 0.0, %v882
    %v884 = vpop.f32.mrf.mxu0
    %v885 = vadd.f32 0.0, %v884
    %886 = vmatprep.mubr.bf16.mxu0 0
    %887 = vmatmul.mubr.bf16.gmra.mxu0 %v396
    %v888 = vpop.f32.mrf.mxu0
    %v889 = vadd.f32 0.0, %v888
    %v890 = vpop.f32.mrf.mxu0
    %v891 = vadd.f32 0.0, %v890
    %v892 = vpop.f32.mrf.mxu0
    %v893 = vadd.f32 0.0, %v892
    %v894 = vpop.f32.mrf.mxu0
    %v895 = vadd.f32 0.0, %v894
    %896 = vmatprep.mubr.bf16.mxu0 0
    %897 = vmatmul.mubr.bf16.gmra.mxu0 %v399
    %v898 = vpop.f32.mrf.mxu0
    %v899 = vadd.f32 0.0, %v898
    %v900 = vpop.f32.mrf.mxu0
    %v901 = vadd.f32 0.0, %v900
    %v902 = vpop.f32.mrf.mxu0
    %v903 = vadd.f32 0.0, %v902
    %v904 = vpop.f32.mrf.mxu0
    %v905 = vadd.f32 0.0, %v904
    %906 = vmatprep.mubr.bf16.mxu0 0
    %907 = vmatmul.mubr.bf16.gmra.mxu0 %v402
    %v908 = vpop.f32.mrf.mxu0
    %v909 = vadd.f32 0.0, %v908
    %v910 = vpop.f32.mrf.mxu0
    %v911 = vadd.f32 0.0, %v910
    %v912 = vpop.f32.mrf.mxu0
    %v913 = vadd.f32 0.0, %v912
    %v914 = vpop.f32.mrf.mxu0
    %v915 = vadd.f32 0.0, %v914
    %916 = vmatprep.mubr.bf16.mxu0 0
    %917 = vmatmul.mubr.bf16.gmra.mxu0 %v405
    %v918 = vpop.f32.mrf.mxu0
    %v919 = vadd.f32 0.0, %v918
    %v920 = vpop.f32.mrf.mxu0
    %v921 = vadd.f32 0.0, %v920
    %v922 = vpop.f32.mrf.mxu0
    %v923 = vadd.f32 0.0, %v922
    %v924 = vpop.f32.mrf.mxu0
    %v925 = vadd.f32 0.0, %v924
    %926 = vmatprep.mubr.bf16.mxu0 0
    %927 = vmatmul.mubr.bf16.gmra.mxu0 %v408
    %v928 = vpop.f32.mrf.mxu0
    %v929 = vadd.f32 0.0, %v928
    %v930 = vpop.f32.mrf.mxu0
    %v931 = vadd.f32 0.0, %v930
    %v932 = vpop.f32.mrf.mxu0
    %v933 = vadd.f32 0.0, %v932
    %v934 = vpop.f32.mrf.mxu0
    %v935 = vadd.f32 0.0, %v934
    %936 = vmatprep.mubr.bf16.mxu0 0
    %937 = vmatmul.mubr.bf16.gmra.mxu0 %v411
    %v938 = vpop.f32.mrf.mxu0
    %v939 = vadd.f32 0.0, %v938
    %v940 = vpop.f32.mrf.mxu0
    %v941 = vadd.f32 0.0, %v940
    %v942 = vpop.f32.mrf.mxu0
    %v943 = vadd.f32 0.0, %v942
    %v944 = vpop.f32.mrf.mxu0
    %v945 = vadd.f32 0.0, %v944
    %946 = vmatprep.mubr.bf16.mxu0 0
    %947 = vmatmul.mubr.bf16.gmra.mxu0 %v414
    %v948 = vpop.f32.mrf.mxu0
    %v949 = vadd.f32 0.0, %v948
    %v950 = vpop.f32.mrf.mxu0
    %v951 = vadd.f32 0.0, %v950
    %v952 = vpop.f32.mrf.mxu0
    %v953 = vadd.f32 0.0, %v952
    %v954 = vpop.f32.mrf.mxu0
    %v955 = vadd.f32 0.0, %v954
    %956 = vmatprep.mubr.bf16.mxu0 0
    %957 = vmatmul.mubr.bf16.gmra.mxu0 %v417
    %v958 = vpop.f32.mrf.mxu0
    %v959 = vadd.f32 0.0, %v958
    %v960 = vpop.f32.mrf.mxu0
    %v961 = vadd.f32 0.0, %v960
    %v962 = vpop.f32.mrf.mxu0
    %v963 = vadd.f32 0.0, %v962
    %v964 = vpop.f32.mrf.mxu0
    %v965 = vadd.f32 0.0, %v964
    %966 = vmatprep.mubr.bf16.mxu0 0
    %967 = vmatmul.mubr.bf16.gmra.mxu0 %v420
    %v968 = vpop.f32.mrf.mxu0
    %v969 = vadd.f32 0.0, %v968
    %v970 = vpop.f32.mrf.mxu0
    %v971 = vadd.f32 0.0, %v970
    %v972 = vpop.f32.mrf.mxu0
    %v973 = vadd.f32 0.0, %v972
    %v974 = vpop.f32.mrf.mxu0
    %v975 = vadd.f32 0.0, %v974
    %976 = vmatprep.mubr.bf16.mxu0 0
    %977 = vmatmul.mubr.bf16.gmra.mxu0 %v423
    %v978 = vpop.f32.mrf.mxu0
    %v979 = vadd.f32 0.0, %v978
    %v980 = vpop.f32.mrf.mxu0
    %v981 = vadd.f32 0.0, %v980
    %v982 = vpop.f32.mrf.mxu0
    %v983 = vadd.f32 0.0, %v982
    %v984 = vpop.f32.mrf.mxu0
    %v985 = vadd.f32 0.0, %v984
    %986 = vmatprep.mubr.bf16.mxu0 0
    %987 = vmatmul.mubr.bf16.gmra.mxu0 %v426
    %v988 = vpop.f32.mrf.mxu0
    %v989 = vadd.f32 0.0, %v988
    %v990 = vpop.f32.mrf.mxu0
    %v991 = vadd.f32 0.0, %v990
    %v992 = vpop.f32.mrf.mxu0
    %v993 = vadd.f32 0.0, %v992
    %v994 = vpop.f32.mrf.mxu0
    %v995 = vadd.f32 0.0, %v994
    %996 = vmatprep.mubr.bf16.mxu0 0
    %997 = vmatmul.mubr.bf16.gmra.mxu0 %v429
    %v998 = vpop.f32.mrf.mxu0
    %v999 = vadd.f32 0.0, %v998
    %v1000 = vpop.f32.mrf.mxu0
    %v1001 = vadd.f32 0.0, %v1000
    %v1002 = vpop.f32.mrf.mxu0
    %v1003 = vadd.f32 0.0, %v1002
    %v1004 = vpop.f32.mrf.mxu0
    %v1005 = vadd.f32 0.0, %v1004
    %1006 = vmatprep.mubr.bf16.mxu0 0
    %1007 = vmatmul.mubr.bf16.gmra.mxu0 %v432
    %v1008 = vpop.f32.mrf.mxu0
    %v1009 = vadd.f32 0.0, %v1008
    %v1010 = vpop.f32.mrf.mxu0
    %v1011 = vadd.f32 0.0, %v1010
    %v1012 = vpop.f32.mrf.mxu0
    %v1013 = vadd.f32 0.0, %v1012
    %v1014 = vpop.f32.mrf.mxu0
    %v1015 = vadd.f32 0.0, %v1014
    %1016 = vmatprep.mubr.bf16.mxu0 0
    %1017 = vmatmul.mubr.bf16.gmra.mxu0 %v435
    %v1018 = vpop.f32.mrf.mxu0
    %v1019 = vadd.f32 0.0, %v1018
    %v1020 = vpop.f32.mrf.mxu0
    %v1021 = vadd.f32 0.0, %v1020
    %v1022 = vpop.f32.mrf.mxu0
    %v1023 = vadd.f32 0.0, %v1022
    %v1024 = vpop.f32.mrf.mxu0
    %v1025 = vadd.f32 0.0, %v1024
    %1026 = vmatprep.mubr.bf16.mxu0 0
    %1027 = vmatmul.mubr.bf16.gmra.mxu0 %v438
    %v1028 = vpop.f32.mrf.mxu0
    %v1029 = vadd.f32 0.0, %v1028
    %v1030 = vpop.f32.mrf.mxu0
    %v1031 = vadd.f32 0.0, %v1030
    %v1032 = vpop.f32.mrf.mxu0
    %v1033 = vadd.f32 0.0, %v1032
    %v1034 = vpop.f32.mrf.mxu0
    %v1035 = vadd.f32 0.0, %v1034
    %1036 = vmatprep.mubr.bf16.mxu0 0
    %1037 = vmatmul.mubr.bf16.gmra.mxu0 %v441
    %v1038 = vpop.f32.mrf.mxu0
    %v1039 = vadd.f32 0.0, %v1038
    %v1040 = vpop.f32.mrf.mxu0
    %v1041 = vadd.f32 0.0, %v1040
    %v1042 = vpop.f32.mrf.mxu0
    %v1043 = vadd.f32 0.0, %v1042
    %v1044 = vpop.f32.mrf.mxu0
    %v1045 = vadd.f32 0.0, %v1044
    %1046 = vmatprep.mubr.bf16.mxu0 0
    %1047 = vmatmul.mubr.bf16.gmra.mxu0 %v444
    %v1048 = vpop.f32.mrf.mxu0
    %v1049 = vadd.f32 0.0, %v1048
    %v1050 = vpop.f32.mrf.mxu0
    %v1051 = vadd.f32 0.0, %v1050
    %v1052 = vpop.f32.mrf.mxu0
    %v1053 = vadd.f32 0.0, %v1052
    %v1054 = vpop.f32.mrf.mxu0
    %v1055 = vadd.f32 0.0, %v1054
    %1056 = vmatprep.mubr.bf16.mxu0 0
    %1057 = vmatmul.mubr.bf16.gmra.mxu0 %v447
    %v1058 = vpop.f32.mrf.mxu0
    %v1059 = vadd.f32 0.0, %v1058
    %v1060 = vpop.f32.mrf.mxu0
    %v1061 = vadd.f32 0.0, %v1060
    %v1062 = vpop.f32.mrf.mxu0
    %v1063 = vadd.f32 0.0, %v1062
    %v1064 = vpop.f32.mrf.mxu0
    %v1065 = vadd.f32 0.0, %v1064
    %1066 = vmatprep.mubr.bf16.mxu0 0
    %1067 = vmatmul.mubr.bf16.gmra.mxu0 %v450
    %v1068 = vpop.f32.mrf.mxu0
    %v1069 = vadd.f32 0.0, %v1068
    %v1070 = vpop.f32.mrf.mxu0
    %v1071 = vadd.f32 0.0, %v1070
    %v1072 = vpop.f32.mrf.mxu0
    %v1073 = vadd.f32 0.0, %v1072
    %v1074 = vpop.f32.mrf.mxu0
    %v1075 = vadd.f32 0.0, %v1074
    %1076 = vmatprep.mubr.bf16.mxu0 0
    %1077 = vmatmul.mubr.bf16.gmra.mxu0 %v453
    %v1078 = vpop.f32.mrf.mxu0
    %v1079 = vadd.f32 0.0, %v1078
    %v1080 = vpop.f32.mrf.mxu0
    %v1081 = vadd.f32 0.0, %v1080
    %v1082 = vpop.f32.mrf.mxu0
    %v1083 = vadd.f32 0.0, %v1082
    %v1084 = vpop.f32.mrf.mxu0
    %v1085 = vadd.f32 0.0, %v1084
    %1086 = vmatprep.mubr.bf16.mxu0 0
    %1087 = vmatmul.mubr.bf16.gmra.mxu0 %v456
    %v1088 = vpop.f32.mrf.mxu0
    %v1089 = vadd.f32 0.0, %v1088
    %v1090 = vpop.f32.mrf.mxu0
    %v1091 = vadd.f32 0.0, %v1090
    %v1092 = vpop.f32.mrf.mxu0
    %v1093 = vadd.f32 0.0, %v1092
    %v1094 = vpop.f32.mrf.mxu0
    %v1095 = vadd.f32 0.0, %v1094
    %1096 = vdwg.mxu0
    %v1099 = vunpack.c.l.b16 %v120
    %v1100 = vunpack.c.l.b16 %v121
    %v1101 = vpack.c.b16 %v1100, %v1099
    %v1110 = vunpack.c.l.b16 %v180
    %v1111 = vunpack.c.h.b16 %v180
    %v1112 = vunpack.c.l.b16 %v181
    %v1113 = vunpack.c.h.b16 %v181
    %v1114 = vunpack.c.l.b16 %v182
    %v1115 = vunpack.c.h.b16 %v182
    %v1116 = vunpack.c.l.b16 %v183
    %v1117 = vunpack.c.h.b16 %v183
    %v1118 = vunpack.c.l.b16 %v184
    %v1119 = vunpack.c.h.b16 %v184
    %v1120 = vunpack.c.l.b16 %v185
    %v1121 = vunpack.c.h.b16 %v185
    %v1122 = vunpack.c.l.b16 %v186
    %v1123 = vunpack.c.h.b16 %v186
    %v1124 = vunpack.c.l.b16 %v187
    %v1125 = vunpack.c.h.b16 %v187
    %v1126 = vpack.c.b16 %v1114, %v1110
    %v1127 = vpack.c.b16 %v1115, %v1111
    %v1128 = vpack.c.b16 %v1116, %v1112
    %v1129 = vpack.c.b16 %v1117, %v1113
    %v1130 = vpack.c.b16 %v1122, %v1118
    %v1131 = vpack.c.b16 %v1123, %v1119
    %v1132 = vpack.c.b16 %v1124, %v1120
    %v1133 = vpack.c.b16 %v1125, %v1121
    %v1139 = vsel %vm373, %v1101, 0
    %v1142 = vsel %vm458, %v1130, 0
    %v1145 = vsel %vm458, %v1131, 0
    %v1148 = vsel %vm458, %v1132, 0
    %v1151 = vsel %vm458, %v1133, 0
    %1153 = vmatprep.subr.bf16.mxu0 0
    %1154 = vmatpush1.bf16.msra.mxu0 0
    %1155 = vmatprep.subr.bf16.mxu0 0
    %1156 = vmatpush1.bf16.msra.mxu0 0
    %1157 = vmatprep.subr.bf16.mxu0 0
    %1158 = vmatpush1.bf16.msra.mxu0 0
    %1159 = vmatprep.subr.bf16.mxu0 0
    %1160 = vmatpush1.bf16.msra.mxu0 0
    %1161 = vmatprep.subr.bf16.mxu0 0
    %1162 = vmatpush1.bf16.msra.mxu0 0
    %1163 = vmatprep.subr.bf16.mxu0 0
    %1164 = vmatpush1.bf16.msra.mxu0 0
    %1165 = vmatprep.subr.bf16.mxu0 %v1145
    %1166 = vmatpush1.bf16.msra.mxu0 %v1142
    %1167 = vmatprep.subr.bf16.mxu0 %v1127
    %1168 = vmatpush1.bf16.msra.mxu0 %v1126
    %1169 = vmatprep.subr.bf16.mxu0 0
    %1170 = vmatpush2.bf16.msra.mxu0 0
    %1171 = vmatprep.subr.bf16.mxu0 0
    %1172 = vmatpush2.bf16.msra.mxu0 0
    %1173 = vmatprep.subr.bf16.mxu0 0
    %1174 = vmatpush2.bf16.msra.mxu0 0
    %1175 = vmatprep.subr.bf16.mxu0 0
    %1176 = vmatpush2.bf16.msra.mxu0 0
    %1177 = vmatprep.subr.bf16.mxu0 0
    %1178 = vmatpush2.bf16.msra.mxu0 0
    %1179 = vmatprep.subr.bf16.mxu0 0
    %1180 = vmatpush2.bf16.msra.mxu0 0
    %1181 = vmatprep.subr.bf16.mxu0 0
    %1182 = vmatpush2.bf16.msra.mxu0 0
    %1183 = vmatprep.subr.bf16.mxu0 0
    %1184 = vmatpush2.bf16.msra.mxu0 0
    %1185 = vmatprep.mubr.bf16.mxu0 0
    %1186 = vmatmul.mubr.bf16.gmra.mxu0 %v1139
    %v1187 = vpop.f32.mrf.mxu0
    %v1188 = vadd.f32 %v506, %v1187
    %v1189 = vpop.f32.mrf.mxu0
    %v1190 = vadd.f32 %v508, %v1189
    %v1191 = vpop.f32.mrf.mxu0
    %v1192 = vadd.f32 %v510, %v1191
    %v1193 = vpop.f32.mrf.mxu0
    %v1194 = vadd.f32 %v512, %v1193
    %1195 = vmatprep.mubr.bf16.mxu0 0
    %1196 = vmatmul.mubr.bf16.gmra.mxu0 %v375
    %v1197 = vpop.f32.mrf.mxu0
    %v1198 = vadd.f32 %v516, %v1197
    %v1199 = vpop.f32.mrf.mxu0
    %v1200 = vadd.f32 %v518, %v1199
    %v1201 = vpop.f32.mrf.mxu0
    %v1202 = vadd.f32 %v520, %v1201
    %v1203 = vpop.f32.mrf.mxu0
    %v1204 = vadd.f32 %v522, %v1203
    %1205 = vmatprep.mubr.bf16.mxu0 0
    %1206 = vmatmul.mubr.bf16.gmra.mxu0 %v378
    %v1207 = vpop.f32.mrf.mxu0
    %v1208 = vadd.f32 %v526, %v1207
    %v1209 = vpop.f32.mrf.mxu0
    %v1210 = vadd.f32 %v528, %v1209
    %v1211 = vpop.f32.mrf.mxu0
    %v1212 = vadd.f32 %v530, %v1211
    %v1213 = vpop.f32.mrf.mxu0
    %v1214 = vadd.f32 %v532, %v1213
    %1215 = vmatprep.mubr.bf16.mxu0 0
    %1216 = vmatmul.mubr.bf16.gmra.mxu0 %v381
    %v1217 = vpop.f32.mrf.mxu0
    %v1218 = vadd.f32 %v536, %v1217
    %v1219 = vpop.f32.mrf.mxu0
    %v1220 = vadd.f32 %v538, %v1219
    %v1221 = vpop.f32.mrf.mxu0
    %v1222 = vadd.f32 %v540, %v1221
    %v1223 = vpop.f32.mrf.mxu0
    %v1224 = vadd.f32 %v542, %v1223
    %1225 = vmatprep.mubr.bf16.mxu0 0
    %1226 = vmatmul.mubr.bf16.gmra.mxu0 %v384
    %v1227 = vpop.f32.mrf.mxu0
    %v1228 = vadd.f32 %v546, %v1227
    %v1229 = vpop.f32.mrf.mxu0
    %v1230 = vadd.f32 %v548, %v1229
    %v1231 = vpop.f32.mrf.mxu0
    %v1232 = vadd.f32 %v550, %v1231
    %v1233 = vpop.f32.mrf.mxu0
    %v1234 = vadd.f32 %v552, %v1233
    %1235 = vmatprep.mubr.bf16.mxu0 0
    %1236 = vmatmul.mubr.bf16.gmra.mxu0 %v387
    %v1237 = vpop.f32.mrf.mxu0
    %v1238 = vadd.f32 %v556, %v1237
    %v1239 = vpop.f32.mrf.mxu0
    %v1240 = vadd.f32 %v558, %v1239
    %v1241 = vpop.f32.mrf.mxu0
    %v1242 = vadd.f32 %v560, %v1241
    %v1243 = vpop.f32.mrf.mxu0
    %v1244 = vadd.f32 %v562, %v1243
    %1245 = vmatprep.mubr.bf16.mxu0 0
    %1246 = vmatmul.mubr.bf16.gmra.mxu0 %v390
    %v1247 = vpop.f32.mrf.mxu0
    %v1248 = vadd.f32 %v566, %v1247
    %v1249 = vpop.f32.mrf.mxu0
    %v1250 = vadd.f32 %v568, %v1249
    %v1251 = vpop.f32.mrf.mxu0
    %v1252 = vadd.f32 %v570, %v1251
    %v1253 = vpop.f32.mrf.mxu0
    %v1254 = vadd.f32 %v572, %v1253
    %1255 = vmatprep.mubr.bf16.mxu0 0
    %1256 = vmatmul.mubr.bf16.gmra.mxu0 %v393
    %v1257 = vpop.f32.mrf.mxu0
    %v1258 = vadd.f32 %v576, %v1257
    %v1259 = vpop.f32.mrf.mxu0
    %v1260 = vadd.f32 %v578, %v1259
    %v1261 = vpop.f32.mrf.mxu0
    %v1262 = vadd.f32 %v580, %v1261
    %v1263 = vpop.f32.mrf.mxu0
    %v1264 = vadd.f32 %v582, %v1263
    %1265 = vmatprep.mubr.bf16.mxu0 0
    %1266 = vmatmul.mubr.bf16.gmra.mxu0 %v396
    %v1267 = vpop.f32.mrf.mxu0
    %v1268 = vadd.f32 %v586, %v1267
    %v1269 = vpop.f32.mrf.mxu0
    %v1270 = vadd.f32 %v588, %v1269
    %v1271 = vpop.f32.mrf.mxu0
    %v1272 = vadd.f32 %v590, %v1271
    %v1273 = vpop.f32.mrf.mxu0
    %v1274 = vadd.f32 %v592, %v1273
    %1275 = vmatprep.mubr.bf16.mxu0 0
    %1276 = vmatmul.mubr.bf16.gmra.mxu0 %v399
    %v1277 = vpop.f32.mrf.mxu0
    %v1278 = vadd.f32 %v596, %v1277
    %v1279 = vpop.f32.mrf.mxu0
    %v1280 = vadd.f32 %v598, %v1279
    %v1281 = vpop.f32.mrf.mxu0
    %v1282 = vadd.f32 %v600, %v1281
    %v1283 = vpop.f32.mrf.mxu0
    %v1284 = vadd.f32 %v602, %v1283
    %1285 = vmatprep.mubr.bf16.mxu0 0
    %1286 = vmatmul.mubr.bf16.gmra.mxu0 %v402
    %v1287 = vpop.f32.mrf.mxu0
    %v1288 = vadd.f32 %v606, %v1287
    %v1289 = vpop.f32.mrf.mxu0
    %v1290 = vadd.f32 %v608, %v1289
    %v1291 = vpop.f32.mrf.mxu0
    %v1292 = vadd.f32 %v610, %v1291
    %v1293 = vpop.f32.mrf.mxu0
    %v1294 = vadd.f32 %v612, %v1293
    %1295 = vmatprep.mubr.bf16.mxu0 0
    %1296 = vmatmul.mubr.bf16.gmra.mxu0 %v405
    %v1297 = vpop.f32.mrf.mxu0
    %v1298 = vadd.f32 %v616, %v1297
    %v1299 = vpop.f32.mrf.mxu0
    %v1300 = vadd.f32 %v618, %v1299
    %v1301 = vpop.f32.mrf.mxu0
    %v1302 = vadd.f32 %v620, %v1301
    %v1303 = vpop.f32.mrf.mxu0
    %v1304 = vadd.f32 %v622, %v1303
    %1305 = vmatprep.mubr.bf16.mxu0 0
    %1306 = vmatmul.mubr.bf16.gmra.mxu0 %v408
    %v1307 = vpop.f32.mrf.mxu0
    %v1308 = vadd.f32 %v626, %v1307
    %v1309 = vpop.f32.mrf.mxu0
    %v1310 = vadd.f32 %v628, %v1309
    %v1311 = vpop.f32.mrf.mxu0
    %v1312 = vadd.f32 %v630, %v1311
    %v1313 = vpop.f32.mrf.mxu0
    %v1314 = vadd.f32 %v632, %v1313
    %1315 = vmatprep.mubr.bf16.mxu0 0
    %1316 = vmatmul.mubr.bf16.gmra.mxu0 %v411
    %v1317 = vpop.f32.mrf.mxu0
    %v1318 = vadd.f32 %v636, %v1317
    %v1319 = vpop.f32.mrf.mxu0
    %v1320 = vadd.f32 %v638, %v1319
    %v1321 = vpop.f32.mrf.mxu0
    %v1322 = vadd.f32 %v640, %v1321
    %v1323 = vpop.f32.mrf.mxu0
    %v1324 = vadd.f32 %v642, %v1323
    %1325 = vmatprep.mubr.bf16.mxu0 0
    %1326 = vmatmul.mubr.bf16.gmra.mxu0 %v414
    %v1327 = vpop.f32.mrf.mxu0
    %v1328 = vadd.f32 %v646, %v1327
    %v1329 = vpop.f32.mrf.mxu0
    %v1330 = vadd.f32 %v648, %v1329
    %v1331 = vpop.f32.mrf.mxu0
    %v1332 = vadd.f32 %v650, %v1331
    %v1333 = vpop.f32.mrf.mxu0
    %v1334 = vadd.f32 %v652, %v1333
    %1335 = vmatprep.mubr.bf16.mxu0 0
    %1336 = vmatmul.mubr.bf16.gmra.mxu0 %v417
    %v1337 = vpop.f32.mrf.mxu0
    %v1338 = vadd.f32 %v656, %v1337
    %v1339 = vpop.f32.mrf.mxu0
    %v1340 = vadd.f32 %v658, %v1339
    %v1341 = vpop.f32.mrf.mxu0
    %v1342 = vadd.f32 %v660, %v1341
    %v1343 = vpop.f32.mrf.mxu0
    %v1344 = vadd.f32 %v662, %v1343
    %1345 = vmatprep.mubr.bf16.mxu0 0
    %1346 = vmatmul.mubr.bf16.gmra.mxu0 %v420
    %v1347 = vpop.f32.mrf.mxu0
    %v1348 = vadd.f32 %v666, %v1347
    %v1349 = vpop.f32.mrf.mxu0
    %v1350 = vadd.f32 %v668, %v1349
    %v1351 = vpop.f32.mrf.mxu0
    %v1352 = vadd.f32 %v670, %v1351
    %v1353 = vpop.f32.mrf.mxu0
    %v1354 = vadd.f32 %v672, %v1353
    %1355 = vmatprep.mubr.bf16.mxu0 0
    %1356 = vmatmul.mubr.bf16.gmra.mxu0 %v423
    %v1357 = vpop.f32.mrf.mxu0
    %v1358 = vadd.f32 %v676, %v1357
    %v1359 = vpop.f32.mrf.mxu0
    %v1360 = vadd.f32 %v678, %v1359
    %v1361 = vpop.f32.mrf.mxu0
    %v1362 = vadd.f32 %v680, %v1361
    %v1363 = vpop.f32.mrf.mxu0
    %v1364 = vadd.f32 %v682, %v1363
    %1365 = vmatprep.mubr.bf16.mxu0 0
    %1366 = vmatmul.mubr.bf16.gmra.mxu0 %v426
    %v1367 = vpop.f32.mrf.mxu0
    %v1368 = vadd.f32 %v686, %v1367
    %v1369 = vpop.f32.mrf.mxu0
    %v1370 = vadd.f32 %v688, %v1369
    %v1371 = vpop.f32.mrf.mxu0
    %v1372 = vadd.f32 %v690, %v1371
    %v1373 = vpop.f32.mrf.mxu0
    %v1374 = vadd.f32 %v692, %v1373
    %1375 = vmatprep.mubr.bf16.mxu0 0
    %1376 = vmatmul.mubr.bf16.gmra.mxu0 %v429
    %v1377 = vpop.f32.mrf.mxu0
    %v1378 = vadd.f32 %v696, %v1377
    %v1379 = vpop.f32.mrf.mxu0
    %v1380 = vadd.f32 %v698, %v1379
    %v1381 = vpop.f32.mrf.mxu0
    %v1382 = vadd.f32 %v700, %v1381
    %v1383 = vpop.f32.mrf.mxu0
    %v1384 = vadd.f32 %v702, %v1383
    %1385 = vmatprep.mubr.bf16.mxu0 0
    %1386 = vmatmul.mubr.bf16.gmra.mxu0 %v432
    %v1387 = vpop.f32.mrf.mxu0
    %v1388 = vadd.f32 %v706, %v1387
    %v1389 = vpop.f32.mrf.mxu0
    %v1390 = vadd.f32 %v708, %v1389
    %v1391 = vpop.f32.mrf.mxu0
    %v1392 = vadd.f32 %v710, %v1391
    %v1393 = vpop.f32.mrf.mxu0
    %v1394 = vadd.f32 %v712, %v1393
    %1395 = vmatprep.mubr.bf16.mxu0 0
    %1396 = vmatmul.mubr.bf16.gmra.mxu0 %v435
    %v1397 = vpop.f32.mrf.mxu0
    %v1398 = vadd.f32 %v716, %v1397
    %v1399 = vpop.f32.mrf.mxu0
    %v1400 = vadd.f32 %v718, %v1399
    %v1401 = vpop.f32.mrf.mxu0
    %v1402 = vadd.f32 %v720, %v1401
    %v1403 = vpop.f32.mrf.mxu0
    %v1404 = vadd.f32 %v722, %v1403
    %1405 = vmatprep.mubr.bf16.mxu0 0
    %1406 = vmatmul.mubr.bf16.gmra.mxu0 %v438
    %v1407 = vpop.f32.mrf.mxu0
    %v1408 = vadd.f32 %v726, %v1407
    %v1409 = vpop.f32.mrf.mxu0
    %v1410 = vadd.f32 %v728, %v1409
    %v1411 = vpop.f32.mrf.mxu0
    %v1412 = vadd.f32 %v730, %v1411
    %v1413 = vpop.f32.mrf.mxu0
    %v1414 = vadd.f32 %v732, %v1413
    %1415 = vmatprep.mubr.bf16.mxu0 0
    %1416 = vmatmul.mubr.bf16.gmra.mxu0 %v441
    %v1417 = vpop.f32.mrf.mxu0
    %v1418 = vadd.f32 %v736, %v1417
    %v1419 = vpop.f32.mrf.mxu0
    %v1420 = vadd.f32 %v738, %v1419
    %v1421 = vpop.f32.mrf.mxu0
    %v1422 = vadd.f32 %v740, %v1421
    %v1423 = vpop.f32.mrf.mxu0
    %v1424 = vadd.f32 %v742, %v1423
    %1425 = vmatprep.mubr.bf16.mxu0 0
    %1426 = vmatmul.mubr.bf16.gmra.mxu0 %v444
    %v1427 = vpop.f32.mrf.mxu0
    %v1428 = vadd.f32 %v746, %v1427
    %v1429 = vpop.f32.mrf.mxu0
    %v1430 = vadd.f32 %v748, %v1429
    %v1431 = vpop.f32.mrf.mxu0
    %v1432 = vadd.f32 %v750, %v1431
    %v1433 = vpop.f32.mrf.mxu0
    %v1434 = vadd.f32 %v752, %v1433
    %1435 = vmatprep.mubr.bf16.mxu0 0
    %1436 = vmatmul.mubr.bf16.gmra.mxu0 %v447
    %v1437 = vpop.f32.mrf.mxu0
    %v1438 = vadd.f32 %v756, %v1437
    %v1439 = vpop.f32.mrf.mxu0
    %v1440 = vadd.f32 %v758, %v1439
    %v1441 = vpop.f32.mrf.mxu0
    %v1442 = vadd.f32 %v760, %v1441
    %v1443 = vpop.f32.mrf.mxu0
    %v1444 = vadd.f32 %v762, %v1443
    %1445 = vmatprep.mubr.bf16.mxu0 0
    %1446 = vmatmul.mubr.bf16.gmra.mxu0 %v450
    %v1447 = vpop.f32.mrf.mxu0
    %v1448 = vadd.f32 %v766, %v1447
    %v1449 = vpop.f32.mrf.mxu0
    %v1450 = vadd.f32 %v768, %v1449
    %v1451 = vpop.f32.mrf.mxu0
    %v1452 = vadd.f32 %v770, %v1451
    %v1453 = vpop.f32.mrf.mxu0
    %v1454 = vadd.f32 %v772, %v1453
    %1455 = vmatprep.mubr.bf16.mxu0 0
    %1456 = vmatmul.mubr.bf16.gmra.mxu0 %v453
    %v1457 = vpop.f32.mrf.mxu0
    %v1458 = vadd.f32 %v776, %v1457
    %v1459 = vpop.f32.mrf.mxu0
    %v1460 = vadd.f32 %v778, %v1459
    %v1461 = vpop.f32.mrf.mxu0
    %v1462 = vadd.f32 %v780, %v1461
    %v1463 = vpop.f32.mrf.mxu0
    %v1464 = vadd.f32 %v782, %v1463
    %1465 = vdwg.mxu0
    %1466 = vmatprep.subr.bf16.mxu0 0
    %1467 = vmatpush1.bf16.msra.mxu0 0
    %1468 = vmatprep.subr.bf16.mxu0 0
    %1469 = vmatpush1.bf16.msra.mxu0 0
    %1470 = vmatprep.subr.bf16.mxu0 0
    %1471 = vmatpush1.bf16.msra.mxu0 0
    %1472 = vmatprep.subr.bf16.mxu0 0
    %1473 = vmatpush1.bf16.msra.mxu0 0
    %1474 = vmatprep.subr.bf16.mxu0 0
    %1475 = vmatpush1.bf16.msra.mxu0 0
    %1476 = vmatprep.subr.bf16.mxu0 0
    %1477 = vmatpush1.bf16.msra.mxu0 0
    %1478 = vmatprep.subr.bf16.mxu0 %v1151
    %1479 = vmatpush1.bf16.msra.mxu0 %v1148
    %1480 = vmatprep.subr.bf16.mxu0 %v1129
    %1481 = vmatpush1.bf16.msra.mxu0 %v1128
    %1482 = vmatprep.subr.bf16.mxu0 0
    %1483 = vmatpush2.bf16.msra.mxu0 0
    %1484 = vmatprep.subr.bf16.mxu0 0
    %1485 = vmatpush2.bf16.msra.mxu0 0
    %1486 = vmatprep.subr.bf16.mxu0 0
    %1487 = vmatpush2.bf16.msra.mxu0 0
    %1488 = vmatprep.subr.bf16.mxu0 0
    %1489 = vmatpush2.bf16.msra.mxu0 0
    %1490 = vmatprep.subr.bf16.mxu0 0
    %1491 = vmatpush2.bf16.msra.mxu0 0
    %1492 = vmatprep.subr.bf16.mxu0 0
    %1493 = vmatpush2.bf16.msra.mxu0 0
    %1494 = vmatprep.subr.bf16.mxu0 0
    %1495 = vmatpush2.bf16.msra.mxu0 0
    %1496 = vmatprep.subr.bf16.mxu0 0
    %1497 = vmatpush2.bf16.msra.mxu0 0
    %1498 = vmatprep.mubr.bf16.mxu0 0
    %1499 = vmatmul.mubr.bf16.gmra.mxu0 %v1139
    %v1500 = vpop.f32.mrf.mxu0
    %v1501 = vadd.f32 %v819, %v1500
    %v1502 = vpop.f32.mrf.mxu0
    %v1503 = vadd.f32 %v821, %v1502
    %v1504 = vpop.f32.mrf.mxu0
    %v1505 = vadd.f32 %v823, %v1504
    %v1506 = vpop.f32.mrf.mxu0
    %v1507 = vadd.f32 %v825, %v1506
    %1508 = vmatprep.mubr.bf16.mxu0 0
    %1509 = vmatmul.mubr.bf16.gmra.mxu0 %v375
    %v1510 = vpop.f32.mrf.mxu0
    %v1511 = vadd.f32 %v829, %v1510
    %v1512 = vpop.f32.mrf.mxu0
    %v1513 = vadd.f32 %v831, %v1512
    %v1514 = vpop.f32.mrf.mxu0
    %v1515 = vadd.f32 %v833, %v1514
    %v1516 = vpop.f32.mrf.mxu0
    %v1517 = vadd.f32 %v835, %v1516
    %1518 = vmatprep.mubr.bf16.mxu0 0
    %1519 = vmatmul.mubr.bf16.gmra.mxu0 %v378
    %v1520 = vpop.f32.mrf.mxu0
    %v1521 = vadd.f32 %v839, %v1520
    %v1522 = vpop.f32.mrf.mxu0
    %v1523 = vadd.f32 %v841, %v1522
    %v1524 = vpop.f32.mrf.mxu0
    %v1525 = vadd.f32 %v843, %v1524
    %v1526 = vpop.f32.mrf.mxu0
    %v1527 = vadd.f32 %v845, %v1526
    %1528 = vmatprep.mubr.bf16.mxu0 0
    %1529 = vmatmul.mubr.bf16.gmra.mxu0 %v381
    %v1530 = vpop.f32.mrf.mxu0
    %v1531 = vadd.f32 %v849, %v1530
    %v1532 = vpop.f32.mrf.mxu0
    %v1533 = vadd.f32 %v851, %v1532
    %v1534 = vpop.f32.mrf.mxu0
    %v1535 = vadd.f32 %v853, %v1534
    %v1536 = vpop.f32.mrf.mxu0
    %v1537 = vadd.f32 %v855, %v1536
    %1538 = vmatprep.mubr.bf16.mxu0 0
    %1539 = vmatmul.mubr.bf16.gmra.mxu0 %v384
    %v1540 = vpop.f32.mrf.mxu0
    %v1541 = vadd.f32 %v859, %v1540
    %v1542 = vpop.f32.mrf.mxu0
    %v1543 = vadd.f32 %v861, %v1542
    %v1544 = vpop.f32.mrf.mxu0
    %v1545 = vadd.f32 %v863, %v1544
    %v1546 = vpop.f32.mrf.mxu0
    %v1547 = vadd.f32 %v865, %v1546
    %1548 = vmatprep.mubr.bf16.mxu0 0
    %1549 = vmatmul.mubr.bf16.gmra.mxu0 %v387
    %v1550 = vpop.f32.mrf.mxu0
    %v1551 = vadd.f32 %v869, %v1550
    %v1552 = vpop.f32.mrf.mxu0
    %v1553 = vadd.f32 %v871, %v1552
    %v1554 = vpop.f32.mrf.mxu0
    %v1555 = vadd.f32 %v873, %v1554
    %v1556 = vpop.f32.mrf.mxu0
    %v1557 = vadd.f32 %v875, %v1556
    %1558 = vmatprep.mubr.bf16.mxu0 0
    %1559 = vmatmul.mubr.bf16.gmra.mxu0 %v390
    %v1560 = vpop.f32.mrf.mxu0
    %v1561 = vadd.f32 %v879, %v1560
    %v1562 = vpop.f32.mrf.mxu0
    %v1563 = vadd.f32 %v881, %v1562
    %v1564 = vpop.f32.mrf.mxu0
    %v1565 = vadd.f32 %v883, %v1564
    %v1566 = vpop.f32.mrf.mxu0
    %v1567 = vadd.f32 %v885, %v1566
    %1568 = vmatprep.mubr.bf16.mxu0 0
    %1569 = vmatmul.mubr.bf16.gmra.mxu0 %v393
    %v1570 = vpop.f32.mrf.mxu0
    %v1571 = vadd.f32 %v889, %v1570
    %v1572 = vpop.f32.mrf.mxu0
    %v1573 = vadd.f32 %v891, %v1572
    %v1574 = vpop.f32.mrf.mxu0
    %v1575 = vadd.f32 %v893, %v1574
    %v1576 = vpop.f32.mrf.mxu0
    %v1577 = vadd.f32 %v895, %v1576
    %1578 = vmatprep.mubr.bf16.mxu0 0
    %1579 = vmatmul.mubr.bf16.gmra.mxu0 %v396
    %v1580 = vpop.f32.mrf.mxu0
    %v1581 = vadd.f32 %v899, %v1580
    %v1582 = vpop.f32.mrf.mxu0
    %v1583 = vadd.f32 %v901, %v1582
    %v1584 = vpop.f32.mrf.mxu0
    %v1585 = vadd.f32 %v903, %v1584
    %v1586 = vpop.f32.mrf.mxu0
    %v1587 = vadd.f32 %v905, %v1586
    %1588 = vmatprep.mubr.bf16.mxu0 0
    %1589 = vmatmul.mubr.bf16.gmra.mxu0 %v399
    %v1590 = vpop.f32.mrf.mxu0
    %v1591 = vadd.f32 %v909, %v1590
    %v1592 = vpop.f32.mrf.mxu0
    %v1593 = vadd.f32 %v911, %v1592
    %v1594 = vpop.f32.mrf.mxu0
    %v1595 = vadd.f32 %v913, %v1594
    %v1596 = vpop.f32.mrf.mxu0
    %v1597 = vadd.f32 %v915, %v1596
    %1598 = vmatprep.mubr.bf16.mxu0 0
    %1599 = vmatmul.mubr.bf16.gmra.mxu0 %v402
    %v1600 = vpop.f32.mrf.mxu0
    %v1601 = vadd.f32 %v919, %v1600
    %v1602 = vpop.f32.mrf.mxu0
    %v1603 = vadd.f32 %v921, %v1602
    %v1604 = vpop.f32.mrf.mxu0
    %v1605 = vadd.f32 %v923, %v1604
    %v1606 = vpop.f32.mrf.mxu0
    %v1607 = vadd.f32 %v925, %v1606
    %1608 = vmatprep.mubr.bf16.mxu0 0
    %1609 = vmatmul.mubr.bf16.gmra.mxu0 %v405
    %v1610 = vpop.f32.mrf.mxu0
    %v1611 = vadd.f32 %v929, %v1610
    %v1612 = vpop.f32.mrf.mxu0
    %v1613 = vadd.f32 %v931, %v1612
    %v1614 = vpop.f32.mrf.mxu0
    %v1615 = vadd.f32 %v933, %v1614
    %v1616 = vpop.f32.mrf.mxu0
    %v1617 = vadd.f32 %v935, %v1616
    %1618 = vmatprep.mubr.bf16.mxu0 0
    %1619 = vmatmul.mubr.bf16.gmra.mxu0 %v408
    %v1620 = vpop.f32.mrf.mxu0
    %v1621 = vadd.f32 %v939, %v1620
    %v1622 = vpop.f32.mrf.mxu0
    %v1623 = vadd.f32 %v941, %v1622
    %v1624 = vpop.f32.mrf.mxu0
    %v1625 = vadd.f32 %v943, %v1624
    %v1626 = vpop.f32.mrf.mxu0
    %v1627 = vadd.f32 %v945, %v1626
    %1628 = vmatprep.mubr.bf16.mxu0 0
    %1629 = vmatmul.mubr.bf16.gmra.mxu0 %v411
    %v1630 = vpop.f32.mrf.mxu0
    %v1631 = vadd.f32 %v949, %v1630
    %v1632 = vpop.f32.mrf.mxu0
    %v1633 = vadd.f32 %v951, %v1632
    %v1634 = vpop.f32.mrf.mxu0
    %v1635 = vadd.f32 %v953, %v1634
    %v1636 = vpop.f32.mrf.mxu0
    %v1637 = vadd.f32 %v955, %v1636
    %1638 = vmatprep.mubr.bf16.mxu0 0
    %1639 = vmatmul.mubr.bf16.gmra.mxu0 %v414
    %v1640 = vpop.f32.mrf.mxu0
    %v1641 = vadd.f32 %v959, %v1640
    %v1642 = vpop.f32.mrf.mxu0
    %v1643 = vadd.f32 %v961, %v1642
    %v1644 = vpop.f32.mrf.mxu0
    %v1645 = vadd.f32 %v963, %v1644
    %v1646 = vpop.f32.mrf.mxu0
    %v1647 = vadd.f32 %v965, %v1646
    %1648 = vmatprep.mubr.bf16.mxu0 0
    %1649 = vmatmul.mubr.bf16.gmra.mxu0 %v417
    %v1650 = vpop.f32.mrf.mxu0
    %v1651 = vadd.f32 %v969, %v1650
    %v1652 = vpop.f32.mrf.mxu0
    %v1653 = vadd.f32 %v971, %v1652
    %v1654 = vpop.f32.mrf.mxu0
    %v1655 = vadd.f32 %v973, %v1654
    %v1656 = vpop.f32.mrf.mxu0
    %v1657 = vadd.f32 %v975, %v1656
    %1658 = vmatprep.mubr.bf16.mxu0 0
    %1659 = vmatmul.mubr.bf16.gmra.mxu0 %v420
    %v1660 = vpop.f32.mrf.mxu0
    %v1661 = vadd.f32 %v979, %v1660
    %v1662 = vpop.f32.mrf.mxu0
    %v1663 = vadd.f32 %v981, %v1662
    %v1664 = vpop.f32.mrf.mxu0
    %v1665 = vadd.f32 %v983, %v1664
    %v1666 = vpop.f32.mrf.mxu0
    %v1667 = vadd.f32 %v985, %v1666
    %1668 = vmatprep.mubr.bf16.mxu0 0
    %1669 = vmatmul.mubr.bf16.gmra.mxu0 %v423
    %v1670 = vpop.f32.mrf.mxu0
    %v1671 = vadd.f32 %v989, %v1670
    %v1672 = vpop.f32.mrf.mxu0
    %v1673 = vadd.f32 %v991, %v1672
    %v1674 = vpop.f32.mrf.mxu0
    %v1675 = vadd.f32 %v993, %v1674
    %v1676 = vpop.f32.mrf.mxu0
    %v1677 = vadd.f32 %v995, %v1676
    %1678 = vmatprep.mubr.bf16.mxu0 0
    %1679 = vmatmul.mubr.bf16.gmra.mxu0 %v426
    %v1680 = vpop.f32.mrf.mxu0
    %v1681 = vadd.f32 %v999, %v1680
    %v1682 = vpop.f32.mrf.mxu0
    %v1683 = vadd.f32 %v1001, %v1682
    %v1684 = vpop.f32.mrf.mxu0
    %v1685 = vadd.f32 %v1003, %v1684
    %v1686 = vpop.f32.mrf.mxu0
    %v1687 = vadd.f32 %v1005, %v1686
    %1688 = vmatprep.mubr.bf16.mxu0 0
    %1689 = vmatmul.mubr.bf16.gmra.mxu0 %v429
    %v1690 = vpop.f32.mrf.mxu0
    %v1691 = vadd.f32 %v1009, %v1690
    %v1692 = vpop.f32.mrf.mxu0
    %v1693 = vadd.f32 %v1011, %v1692
    %v1694 = vpop.f32.mrf.mxu0
    %v1695 = vadd.f32 %v1013, %v1694
    %v1696 = vpop.f32.mrf.mxu0
    %v1697 = vadd.f32 %v1015, %v1696
    %1698 = vmatprep.mubr.bf16.mxu0 0
    %1699 = vmatmul.mubr.bf16.gmra.mxu0 %v432
    %v1700 = vpop.f32.mrf.mxu0
    %v1701 = vadd.f32 %v1019, %v1700
    %v1702 = vpop.f32.mrf.mxu0
    %v1703 = vadd.f32 %v1021, %v1702
    %v1704 = vpop.f32.mrf.mxu0
    %v1705 = vadd.f32 %v1023, %v1704
    %v1706 = vpop.f32.mrf.mxu0
    %v1707 = vadd.f32 %v1025, %v1706
    %1708 = vmatprep.mubr.bf16.mxu0 0
    %1709 = vmatmul.mubr.bf16.gmra.mxu0 %v435
    %v1710 = vpop.f32.mrf.mxu0
    %v1711 = vadd.f32 %v1029, %v1710
    %v1712 = vpop.f32.mrf.mxu0
    %v1713 = vadd.f32 %v1031, %v1712
    %v1714 = vpop.f32.mrf.mxu0
    %v1715 = vadd.f32 %v1033, %v1714
    %v1716 = vpop.f32.mrf.mxu0
    %v1717 = vadd.f32 %v1035, %v1716
    %1718 = vmatprep.mubr.bf16.mxu0 0
    %1719 = vmatmul.mubr.bf16.gmra.mxu0 %v438
    %v1720 = vpop.f32.mrf.mxu0
    %v1721 = vadd.f32 %v1039, %v1720
    %v1722 = vpop.f32.mrf.mxu0
    %v1723 = vadd.f32 %v1041, %v1722
    %v1724 = vpop.f32.mrf.mxu0
    %v1725 = vadd.f32 %v1043, %v1724
    %v1726 = vpop.f32.mrf.mxu0
    %v1727 = vadd.f32 %v1045, %v1726
    %1728 = vmatprep.mubr.bf16.mxu0 0
    %1729 = vmatmul.mubr.bf16.gmra.mxu0 %v441
    %v1730 = vpop.f32.mrf.mxu0
    %v1731 = vadd.f32 %v1049, %v1730
    %v1732 = vpop.f32.mrf.mxu0
    %v1733 = vadd.f32 %v1051, %v1732
    %v1734 = vpop.f32.mrf.mxu0
    %v1735 = vadd.f32 %v1053, %v1734
    %v1736 = vpop.f32.mrf.mxu0
    %v1737 = vadd.f32 %v1055, %v1736
    %1738 = vmatprep.mubr.bf16.mxu0 0
    %1739 = vmatmul.mubr.bf16.gmra.mxu0 %v444
    %v1740 = vpop.f32.mrf.mxu0
    %v1741 = vadd.f32 %v1059, %v1740
    %v1742 = vpop.f32.mrf.mxu0
    %v1743 = vadd.f32 %v1061, %v1742
    %v1744 = vpop.f32.mrf.mxu0
    %v1745 = vadd.f32 %v1063, %v1744
    %v1746 = vpop.f32.mrf.mxu0
    %v1747 = vadd.f32 %v1065, %v1746
    %1748 = vmatprep.mubr.bf16.mxu0 0
    %1749 = vmatmul.mubr.bf16.gmra.mxu0 %v447
    %v1750 = vpop.f32.mrf.mxu0
    %v1751 = vadd.f32 %v1069, %v1750
    %v1752 = vpop.f32.mrf.mxu0
    %v1753 = vadd.f32 %v1071, %v1752
    %v1754 = vpop.f32.mrf.mxu0
    %v1755 = vadd.f32 %v1073, %v1754
    %v1756 = vpop.f32.mrf.mxu0
    %v1757 = vadd.f32 %v1075, %v1756
    %1758 = vmatprep.mubr.bf16.mxu0 0
    %1759 = vmatmul.mubr.bf16.gmra.mxu0 %v450
    %v1760 = vpop.f32.mrf.mxu0
    %v1761 = vadd.f32 %v1079, %v1760
    %v1762 = vpop.f32.mrf.mxu0
    %v1763 = vadd.f32 %v1081, %v1762
    %v1764 = vpop.f32.mrf.mxu0
    %v1765 = vadd.f32 %v1083, %v1764
    %v1766 = vpop.f32.mrf.mxu0
    %v1767 = vadd.f32 %v1085, %v1766
    %1768 = vmatprep.mubr.bf16.mxu0 0
    %1769 = vmatmul.mubr.bf16.gmra.mxu0 %v453
    %v1770 = vpop.f32.mrf.mxu0
    %v1771 = vadd.f32 %v1089, %v1770
    %v1772 = vpop.f32.mrf.mxu0
    %v1773 = vadd.f32 %v1091, %v1772
    %v1774 = vpop.f32.mrf.mxu0
    %v1775 = vadd.f32 %v1093, %v1774
    %v1776 = vpop.f32.mrf.mxu0
    %v1777 = vadd.f32 %v1095, %v1776
    %1778 = vdwg.mxu0
    %s1779 = scalar_lea.vmem [#allocation2], 256
    %v1780 = vld [vmem:[%s1779] sm:$0xff]
    %v1781 = vld [vmem:[%s1779 + $0x8] sm:$0xff]
    %v1782 = vld [vmem:[%s1779 + $0x10] sm:$0xff]
    %v1783 = vld [vmem:[%s1779 + $0x18] sm:$0xff]
    %v1784 = vld [vmem:[%s1779 + $0x20] sm:$0xff]
    %v1785 = vld [vmem:[%s1779 + $0x28] sm:$0xff]
    %v1786 = vld [vmem:[%s1779 + $0x30] sm:$0x77]
    %v1787 = vld [vmem:[%s1779 + $0x38] sm:$0x77]
    %v1790 = vunpack.c.l.b16 %v178
    %v1791 = vunpack.c.l.b16 %v179
    %v1792 = vpack.c.b16 %v1791, %v1790
    %v1801 = vunpack.c.l.b16 %v1780
    %v1802 = vunpack.c.h.b16 %v1780
    %v1803 = vunpack.c.l.b16 %v1781
    %v1804 = vunpack.c.h.b16 %v1781
    %v1805 = vunpack.c.l.b16 %v1782
    %v1806 = vunpack.c.h.b16 %v1782
    %v1807 = vunpack.c.l.b16 %v1783
    %v1808 = vunpack.c.h.b16 %v1783
    %v1809 = vunpack.c.l.b16 %v1784
    %v1810 = vunpack.c.h.b16 %v1784
    %v1811 = vunpack.c.l.b16 %v1785
    %v1812 = vunpack.c.h.b16 %v1785
    %v1813 = vunpack.c.l.b16 %v1786
    %v1814 = vunpack.c.h.b16 %v1786
    %v1815 = vunpack.c.l.b16 %v1787
    %v1816 = vunpack.c.h.b16 %v1787
    %v1817 = vpack.c.b16 %v1805, %v1801
    %v1818 = vpack.c.b16 %v1806, %v1802
    %v1819 = vpack.c.b16 %v1807, %v1803
    %v1820 = vpack.c.b16 %v1808, %v1804
    %v1821 = vpack.c.b16 %v1813, %v1809
    %v1822 = vpack.c.b16 %v1814, %v1810
    %v1823 = vpack.c.b16 %v1815, %v1811
    %v1824 = vpack.c.b16 %v1816, %v1812
    %v1830 = vsel %vm373, %v1792, 0
    %v1833 = vsel %vm458, %v1821, 0
    %v1836 = vsel %vm458, %v1822, 0
    %v1839 = vsel %vm458, %v1823, 0
    %v1842 = vsel %vm458, %v1824, 0
    %1844 = vmatprep.subr.bf16.mxu0 0
    %1845 = vmatpush1.bf16.msra.mxu0 0
    %1846 = vmatprep.subr.bf16.mxu0 0
    %1847 = vmatpush1.bf16.msra.mxu0 0
    %1848 = vmatprep.subr.bf16.mxu0 0
    %1849 = vmatpush1.bf16.msra.mxu0 0
    %1850 = vmatprep.subr.bf16.mxu0 0
    %1851 = vmatpush1.bf16.msra.mxu0 0
    %1852 = vmatprep.subr.bf16.mxu0 0
    %1853 = vmatpush1.bf16.msra.mxu0 0
    %1854 = vmatprep.subr.bf16.mxu0 0
    %1855 = vmatpush1.bf16.msra.mxu0 0
    %1856 = vmatprep.subr.bf16.mxu0 %v1836
    %1857 = vmatpush1.bf16.msra.mxu0 %v1833
    %1858 = vmatprep.subr.bf16.mxu0 %v1818
    %1859 = vmatpush1.bf16.msra.mxu0 %v1817
    %1860 = vmatprep.subr.bf16.mxu0 0
    %1861 = vmatpush2.bf16.msra.mxu0 0
    %1862 = vmatprep.subr.bf16.mxu0 0
    %1863 = vmatpush2.bf16.msra.mxu0 0
    %1864 = vmatprep.subr.bf16.mxu0 0
    %1865 = vmatpush2.bf16.msra.mxu0 0
    %1866 = vmatprep.subr.bf16.mxu0 0
    %1867 = vmatpush2.bf16.msra.mxu0 0
    %1868 = vmatprep.subr.bf16.mxu0 0
    %1869 = vmatpush2.bf16.msra.mxu0 0
    %1870 = vmatprep.subr.bf16.mxu0 0
    %1871 = vmatpush2.bf16.msra.mxu0 0
    %1872 = vmatprep.subr.bf16.mxu0 0
    %1873 = vmatpush2.bf16.msra.mxu0 0
    %1874 = vmatprep.subr.bf16.mxu0 0
    %1875 = vmatpush2.bf16.msra.mxu0 0
    %1876 = vmatprep.mubr.bf16.mxu0 0
    %1877 = vmatmul.mubr.bf16.gmra.mxu0 %v378
    %v1878 = vpop.f32.mrf.mxu0
    %v1879 = vadd.f32 0.0, %v1878
    %v1880 = vpop.f32.mrf.mxu0
    %v1881 = vadd.f32 0.0, %v1880
    %v1882 = vpop.f32.mrf.mxu0
    %v1883 = vadd.f32 0.0, %v1882
    %v1884 = vpop.f32.mrf.mxu0
    %v1885 = vadd.f32 0.0, %v1884
    %1886 = vmatprep.mubr.bf16.mxu0 0
    %1887 = vmatmul.mubr.bf16.gmra.mxu0 %v381
    %v1888 = vpop.f32.mrf.mxu0
    %v1889 = vadd.f32 0.0, %v1888
    %v1890 = vpop.f32.mrf.mxu0
    %v1891 = vadd.f32 0.0, %v1890
    %v1892 = vpop.f32.mrf.mxu0
    %v1893 = vadd.f32 0.0, %v1892
    %v1894 = vpop.f32.mrf.mxu0
    %v1895 = vadd.f32 0.0, %v1894
    %1896 = vmatprep.mubr.bf16.mxu0 0
    %1897 = vmatmul.mubr.bf16.gmra.mxu0 %v384
    %v1898 = vpop.f32.mrf.mxu0
    %v1899 = vadd.f32 0.0, %v1898
    %v1900 = vpop.f32.mrf.mxu0
    %v1901 = vadd.f32 0.0, %v1900
    %v1902 = vpop.f32.mrf.mxu0
    %v1903 = vadd.f32 0.0, %v1902
    %v1904 = vpop.f32.mrf.mxu0
    %v1905 = vadd.f32 0.0, %v1904
    %1906 = vmatprep.mubr.bf16.mxu0 0
    %1907 = vmatmul.mubr.bf16.gmra.mxu0 %v387
    %v1908 = vpop.f32.mrf.mxu0
    %v1909 = vadd.f32 0.0, %v1908
    %v1910 = vpop.f32.mrf.mxu0
    %v1911 = vadd.f32 0.0, %v1910
    %v1912 = vpop.f32.mrf.mxu0
    %v1913 = vadd.f32 0.0, %v1912
    %v1914 = vpop.f32.mrf.mxu0
    %v1915 = vadd.f32 0.0, %v1914
    %1916 = vmatprep.mubr.bf16.mxu0 0
    %1917 = vmatmul.mubr.bf16.gmra.mxu0 %v390
    %v1918 = vpop.f32.mrf.mxu0
    %v1919 = vadd.f32 0.0, %v1918
    %v1920 = vpop.f32.mrf.mxu0
    %v1921 = vadd.f32 0.0, %v1920
    %v1922 = vpop.f32.mrf.mxu0
    %v1923 = vadd.f32 0.0, %v1922
    %v1924 = vpop.f32.mrf.mxu0
    %v1925 = vadd.f32 0.0, %v1924
    %1926 = vmatprep.mubr.bf16.mxu0 0
    %1927 = vmatmul.mubr.bf16.gmra.mxu0 %v393
    %v1928 = vpop.f32.mrf.mxu0
    %v1929 = vadd.f32 0.0, %v1928
    %v1930 = vpop.f32.mrf.mxu0
    %v1931 = vadd.f32 0.0, %v1930
    %v1932 = vpop.f32.mrf.mxu0
    %v1933 = vadd.f32 0.0, %v1932
    %v1934 = vpop.f32.mrf.mxu0
    %v1935 = vadd.f32 0.0, %v1934
    %1936 = vmatprep.mubr.bf16.mxu0 0
    %1937 = vmatmul.mubr.bf16.gmra.mxu0 %v396
    %v1938 = vpop.f32.mrf.mxu0
    %v1939 = vadd.f32 0.0, %v1938
    %v1940 = vpop.f32.mrf.mxu0
    %v1941 = vadd.f32 0.0, %v1940
    %v1942 = vpop.f32.mrf.mxu0
    %v1943 = vadd.f32 0.0, %v1942
    %v1944 = vpop.f32.mrf.mxu0
    %v1945 = vadd.f32 0.0, %v1944
    %1946 = vmatprep.mubr.bf16.mxu0 0
    %1947 = vmatmul.mubr.bf16.gmra.mxu0 %v399
    %v1948 = vpop.f32.mrf.mxu0
    %v1949 = vadd.f32 0.0, %v1948
    %v1950 = vpop.f32.mrf.mxu0
    %v1951 = vadd.f32 0.0, %v1950
    %v1952 = vpop.f32.mrf.mxu0
    %v1953 = vadd.f32 0.0, %v1952
    %v1954 = vpop.f32.mrf.mxu0
    %v1955 = vadd.f32 0.0, %v1954
    %1956 = vmatprep.mubr.bf16.mxu0 0
    %1957 = vmatmul.mubr.bf16.gmra.mxu0 %v402
    %v1958 = vpop.f32.mrf.mxu0
    %v1959 = vadd.f32 0.0, %v1958
    %v1960 = vpop.f32.mrf.mxu0
    %v1961 = vadd.f32 0.0, %v1960
    %v1962 = vpop.f32.mrf.mxu0
    %v1963 = vadd.f32 0.0, %v1962
    %v1964 = vpop.f32.mrf.mxu0
    %v1965 = vadd.f32 0.0, %v1964
    %1966 = vmatprep.mubr.bf16.mxu0 0
    %1967 = vmatmul.mubr.bf16.gmra.mxu0 %v405
    %v1968 = vpop.f32.mrf.mxu0
    %v1969 = vadd.f32 0.0, %v1968
    %v1970 = vpop.f32.mrf.mxu0
    %v1971 = vadd.f32 0.0, %v1970
    %v1972 = vpop.f32.mrf.mxu0
    %v1973 = vadd.f32 0.0, %v1972
    %v1974 = vpop.f32.mrf.mxu0
    %v1975 = vadd.f32 0.0, %v1974
    %1976 = vmatprep.mubr.bf16.mxu0 0
    %1977 = vmatmul.mubr.bf16.gmra.mxu0 %v408
    %v1978 = vpop.f32.mrf.mxu0
    %v1979 = vadd.f32 0.0, %v1978
    %v1980 = vpop.f32.mrf.mxu0
    %v1981 = vadd.f32 0.0, %v1980
    %v1982 = vpop.f32.mrf.mxu0
    %v1983 = vadd.f32 0.0, %v1982
    %v1984 = vpop.f32.mrf.mxu0
    %v1985 = vadd.f32 0.0, %v1984
    %1986 = vmatprep.mubr.bf16.mxu0 0
    %1987 = vmatmul.mubr.bf16.gmra.mxu0 %v411
    %v1988 = vpop.f32.mrf.mxu0
    %v1989 = vadd.f32 0.0, %v1988
    %v1990 = vpop.f32.mrf.mxu0
    %v1991 = vadd.f32 0.0, %v1990
    %v1992 = vpop.f32.mrf.mxu0
    %v1993 = vadd.f32 0.0, %v1992
    %v1994 = vpop.f32.mrf.mxu0
    %v1995 = vadd.f32 0.0, %v1994
    %1996 = vmatprep.mubr.bf16.mxu0 0
    %1997 = vmatmul.mubr.bf16.gmra.mxu0 %v414
    %v1998 = vpop.f32.mrf.mxu0
    %v1999 = vadd.f32 0.0, %v1998
    %v2000 = vpop.f32.mrf.mxu0
    %v2001 = vadd.f32 0.0, %v2000
    %v2002 = vpop.f32.mrf.mxu0
    %v2003 = vadd.f32 0.0, %v2002
    %v2004 = vpop.f32.mrf.mxu0
    %v2005 = vadd.f32 0.0, %v2004
    %2006 = vmatprep.mubr.bf16.mxu0 0
    %2007 = vmatmul.mubr.bf16.gmra.mxu0 %v417
    %v2008 = vpop.f32.mrf.mxu0
    %v2009 = vadd.f32 0.0, %v2008
    %v2010 = vpop.f32.mrf.mxu0
    %v2011 = vadd.f32 0.0, %v2010
    %v2012 = vpop.f32.mrf.mxu0
    %v2013 = vadd.f32 0.0, %v2012
    %v2014 = vpop.f32.mrf.mxu0
    %v2015 = vadd.f32 0.0, %v2014
    %2016 = vmatprep.mubr.bf16.mxu0 0
    %2017 = vmatmul.mubr.bf16.gmra.mxu0 %v420
    %v2018 = vpop.f32.mrf.mxu0
    %v2019 = vadd.f32 0.0, %v2018
    %v2020 = vpop.f32.mrf.mxu0
    %v2021 = vadd.f32 0.0, %v2020
    %v2022 = vpop.f32.mrf.mxu0
    %v2023 = vadd.f32 0.0, %v2022
    %v2024 = vpop.f32.mrf.mxu0
    %v2025 = vadd.f32 0.0, %v2024
    %2026 = vmatprep.mubr.bf16.mxu0 0
    %2027 = vmatmul.mubr.bf16.gmra.mxu0 %v423
    %v2028 = vpop.f32.mrf.mxu0
    %v2029 = vadd.f32 0.0, %v2028
    %v2030 = vpop.f32.mrf.mxu0
    %v2031 = vadd.f32 0.0, %v2030
    %v2032 = vpop.f32.mrf.mxu0
    %v2033 = vadd.f32 0.0, %v2032
    %v2034 = vpop.f32.mrf.mxu0
    %v2035 = vadd.f32 0.0, %v2034
    %2036 = vmatprep.mubr.bf16.mxu0 0
    %2037 = vmatmul.mubr.bf16.gmra.mxu0 %v426
    %v2038 = vpop.f32.mrf.mxu0
    %v2039 = vadd.f32 0.0, %v2038
    %v2040 = vpop.f32.mrf.mxu0
    %v2041 = vadd.f32 0.0, %v2040
    %v2042 = vpop.f32.mrf.mxu0
    %v2043 = vadd.f32 0.0, %v2042
    %v2044 = vpop.f32.mrf.mxu0
    %v2045 = vadd.f32 0.0, %v2044
    %2046 = vmatprep.mubr.bf16.mxu0 0
    %2047 = vmatmul.mubr.bf16.gmra.mxu0 %v429
    %v2048 = vpop.f32.mrf.mxu0
    %v2049 = vadd.f32 0.0, %v2048
    %v2050 = vpop.f32.mrf.mxu0
    %v2051 = vadd.f32 0.0, %v2050
    %v2052 = vpop.f32.mrf.mxu0
    %v2053 = vadd.f32 0.0, %v2052
    %v2054 = vpop.f32.mrf.mxu0
    %v2055 = vadd.f32 0.0, %v2054
    %2056 = vmatprep.mubr.bf16.mxu0 0
    %2057 = vmatmul.mubr.bf16.gmra.mxu0 %v432
    %v2058 = vpop.f32.mrf.mxu0
    %v2059 = vadd.f32 0.0, %v2058
    %v2060 = vpop.f32.mrf.mxu0
    %v2061 = vadd.f32 0.0, %v2060
    %v2062 = vpop.f32.mrf.mxu0
    %v2063 = vadd.f32 0.0, %v2062
    %v2064 = vpop.f32.mrf.mxu0
    %v2065 = vadd.f32 0.0, %v2064
    %2066 = vmatprep.mubr.bf16.mxu0 0
    %2067 = vmatmul.mubr.bf16.gmra.mxu0 %v435
    %v2068 = vpop.f32.mrf.mxu0
    %v2069 = vadd.f32 0.0, %v2068
    %v2070 = vpop.f32.mrf.mxu0
    %v2071 = vadd.f32 0.0, %v2070
    %v2072 = vpop.f32.mrf.mxu0
    %v2073 = vadd.f32 0.0, %v2072
    %v2074 = vpop.f32.mrf.mxu0
    %v2075 = vadd.f32 0.0, %v2074
    %2076 = vmatprep.mubr.bf16.mxu0 0
    %2077 = vmatmul.mubr.bf16.gmra.mxu0 %v438
    %v2078 = vpop.f32.mrf.mxu0
    %v2079 = vadd.f32 0.0, %v2078
    %v2080 = vpop.f32.mrf.mxu0
    %v2081 = vadd.f32 0.0, %v2080
    %v2082 = vpop.f32.mrf.mxu0
    %v2083 = vadd.f32 0.0, %v2082
    %v2084 = vpop.f32.mrf.mxu0
    %v2085 = vadd.f32 0.0, %v2084
    %2086 = vmatprep.mubr.bf16.mxu0 0
    %2087 = vmatmul.mubr.bf16.gmra.mxu0 %v441
    %v2088 = vpop.f32.mrf.mxu0
    %v2089 = vadd.f32 0.0, %v2088
    %v2090 = vpop.f32.mrf.mxu0
    %v2091 = vadd.f32 0.0, %v2090
    %v2092 = vpop.f32.mrf.mxu0
    %v2093 = vadd.f32 0.0, %v2092
    %v2094 = vpop.f32.mrf.mxu0
    %v2095 = vadd.f32 0.0, %v2094
    %2096 = vmatprep.mubr.bf16.mxu0 0
    %2097 = vmatmul.mubr.bf16.gmra.mxu0 %v444
    %v2098 = vpop.f32.mrf.mxu0
    %v2099 = vadd.f32 0.0, %v2098
    %v2100 = vpop.f32.mrf.mxu0
    %v2101 = vadd.f32 0.0, %v2100
    %v2102 = vpop.f32.mrf.mxu0
    %v2103 = vadd.f32 0.0, %v2102
    %v2104 = vpop.f32.mrf.mxu0
    %v2105 = vadd.f32 0.0, %v2104
    %2106 = vmatprep.mubr.bf16.mxu0 0
    %2107 = vmatmul.mubr.bf16.gmra.mxu0 %v447
    %v2108 = vpop.f32.mrf.mxu0
    %v2109 = vadd.f32 0.0, %v2108
    %v2110 = vpop.f32.mrf.mxu0
    %v2111 = vadd.f32 0.0, %v2110
    %v2112 = vpop.f32.mrf.mxu0
    %v2113 = vadd.f32 0.0, %v2112
    %v2114 = vpop.f32.mrf.mxu0
    %v2115 = vadd.f32 0.0, %v2114
    %2116 = vmatprep.mubr.bf16.mxu0 0
    %2117 = vmatmul.mubr.bf16.gmra.mxu0 %v450
    %v2118 = vpop.f32.mrf.mxu0
    %v2119 = vadd.f32 0.0, %v2118
    %v2120 = vpop.f32.mrf.mxu0
    %v2121 = vadd.f32 0.0, %v2120
    %v2122 = vpop.f32.mrf.mxu0
    %v2123 = vadd.f32 0.0, %v2122
    %v2124 = vpop.f32.mrf.mxu0
    %v2125 = vadd.f32 0.0, %v2124
    %2126 = vmatprep.mubr.bf16.mxu0 0
    %2127 = vmatmul.mubr.bf16.gmra.mxu0 %v453
    %v2128 = vpop.f32.mrf.mxu0
    %v2129 = vadd.f32 0.0, %v2128
    %v2130 = vpop.f32.mrf.mxu0
    %v2131 = vadd.f32 0.0, %v2130
    %v2132 = vpop.f32.mrf.mxu0
    %v2133 = vadd.f32 0.0, %v2132
    %v2134 = vpop.f32.mrf.mxu0
    %v2135 = vadd.f32 0.0, %v2134
    %2136 = vmatprep.mubr.bf16.mxu0 0
    %2137 = vmatmul.mubr.bf16.gmra.mxu0 %v456
    %v2138 = vpop.f32.mrf.mxu0
    %v2139 = vadd.f32 0.0, %v2138
    %v2140 = vpop.f32.mrf.mxu0
    %v2141 = vadd.f32 0.0, %v2140
    %v2142 = vpop.f32.mrf.mxu0
    %v2143 = vadd.f32 0.0, %v2142
    %v2144 = vpop.f32.mrf.mxu0
    %v2145 = vadd.f32 0.0, %v2144
    %2146 = vmatprep.mubr.bf16.mxu0 0
    %2147 = vmatmul.mubr.bf16.gmra.mxu0 %v1830
    %v2148 = vpop.f32.mrf.mxu0
    %v2149 = vadd.f32 0.0, %v2148
    %v2150 = vpop.f32.mrf.mxu0
    %v2151 = vadd.f32 0.0, %v2150
    %v2152 = vpop.f32.mrf.mxu0
    %v2153 = vadd.f32 0.0, %v2152
    %v2154 = vpop.f32.mrf.mxu0
    %v2155 = vadd.f32 0.0, %v2154
    %2156 = vdwg.mxu0
    %2157 = vmatprep.subr.bf16.mxu0 0
    %2158 = vmatpush1.bf16.msra.mxu0 0
    %2159 = vmatprep.subr.bf16.mxu0 0
    %2160 = vmatpush1.bf16.msra.mxu0 0
    %2161 = vmatprep.subr.bf16.mxu0 0
    %2162 = vmatpush1.bf16.msra.mxu0 0
    %2163 = vmatprep.subr.bf16.mxu0 0
    %2164 = vmatpush1.bf16.msra.mxu0 0
    %2165 = vmatprep.subr.bf16.mxu0 0
    %2166 = vmatpush1.bf16.msra.mxu0 0
    %2167 = vmatprep.subr.bf16.mxu0 0
    %2168 = vmatpush1.bf16.msra.mxu0 0
    %2169 = vmatprep.subr.bf16.mxu0 %v1842
    %2170 = vmatpush1.bf16.msra.mxu0 %v1839
    %2171 = vmatprep.subr.bf16.mxu0 %v1820
    %2172 = vmatpush1.bf16.msra.mxu0 %v1819
    %2173 = vmatprep.subr.bf16.mxu0 0
    %2174 = vmatpush2.bf16.msra.mxu0 0
    %2175 = vmatprep.subr.bf16.mxu0 0
    %2176 = vmatpush2.bf16.msra.mxu0 0
    %2177 = vmatprep.subr.bf16.mxu0 0
    %2178 = vmatpush2.bf16.msra.mxu0 0
    %2179 = vmatprep.subr.bf16.mxu0 0
    %2180 = vmatpush2.bf16.msra.mxu0 0
    %2181 = vmatprep.subr.bf16.mxu0 0
    %2182 = vmatpush2.bf16.msra.mxu0 0
    %2183 = vmatprep.subr.bf16.mxu0 0
    %2184 = vmatpush2.bf16.msra.mxu0 0
    %2185 = vmatprep.subr.bf16.mxu0 0
    %2186 = vmatpush2.bf16.msra.mxu0 0
    %2187 = vmatprep.subr.bf16.mxu0 0
    %2188 = vmatpush2.bf16.msra.mxu0 0
    %2189 = vmatprep.mubr.bf16.mxu0 0
    %2190 = vmatmul.mubr.bf16.gmra.mxu0 %v378
    %v2191 = vpop.f32.mrf.mxu0
    %v2192 = vadd.f32 0.0, %v2191
    %v2193 = vpop.f32.mrf.mxu0
    %v2194 = vadd.f32 0.0, %v2193
    %v2195 = vpop.f32.mrf.mxu0
    %v2196 = vadd.f32 0.0, %v2195
    %v2197 = vpop.f32.mrf.mxu0
    %v2198 = vadd.f32 0.0, %v2197
    %2199 = vmatprep.mubr.bf16.mxu0 0
    %2200 = vmatmul.mubr.bf16.gmra.mxu0 %v381
    %v2201 = vpop.f32.mrf.mxu0
    %v2202 = vadd.f32 0.0, %v2201
    %v2203 = vpop.f32.mrf.mxu0
    %v2204 = vadd.f32 0.0, %v2203
    %v2205 = vpop.f32.mrf.mxu0
    %v2206 = vadd.f32 0.0, %v2205
    %v2207 = vpop.f32.mrf.mxu0
    %v2208 = vadd.f32 0.0, %v2207
    %2209 = vmatprep.mubr.bf16.mxu0 0
    %2210 = vmatmul.mubr.bf16.gmra.mxu0 %v384
    %v2211 = vpop.f32.mrf.mxu0
    %v2212 = vadd.f32 0.0, %v2211
    %v2213 = vpop.f32.mrf.mxu0
    %v2214 = vadd.f32 0.0, %v2213
    %v2215 = vpop.f32.mrf.mxu0
    %v2216 = vadd.f32 0.0, %v2215
    %v2217 = vpop.f32.mrf.mxu0
    %v2218 = vadd.f32 0.0, %v2217
    %2219 = vmatprep.mubr.bf16.mxu0 0
    %2220 = vmatmul.mubr.bf16.gmra.mxu0 %v387
    %v2221 = vpop.f32.mrf.mxu0
    %v2222 = vadd.f32 0.0, %v2221
    %v2223 = vpop.f32.mrf.mxu0
    %v2224 = vadd.f32 0.0, %v2223
    %v2225 = vpop.f32.mrf.mxu0
    %v2226 = vadd.f32 0.0, %v2225
    %v2227 = vpop.f32.mrf.mxu0
    %v2228 = vadd.f32 0.0, %v2227
    %2229 = vmatprep.mubr.bf16.mxu0 0
    %2230 = vmatmul.mubr.bf16.gmra.mxu0 %v390
    %v2231 = vpop.f32.mrf.mxu0
    %v2232 = vadd.f32 0.0, %v2231
    %v2233 = vpop.f32.mrf.mxu0
    %v2234 = vadd.f32 0.0, %v2233
    %v2235 = vpop.f32.mrf.mxu0
    %v2236 = vadd.f32 0.0, %v2235
    %v2237 = vpop.f32.mrf.mxu0
    %v2238 = vadd.f32 0.0, %v2237
    %2239 = vmatprep.mubr.bf16.mxu0 0
    %2240 = vmatmul.mubr.bf16.gmra.mxu0 %v393
    %v2241 = vpop.f32.mrf.mxu0
    %v2242 = vadd.f32 0.0, %v2241
    %v2243 = vpop.f32.mrf.mxu0
    %v2244 = vadd.f32 0.0, %v2243
    %v2245 = vpop.f32.mrf.mxu0
    %v2246 = vadd.f32 0.0, %v2245
    %v2247 = vpop.f32.mrf.mxu0
    %v2248 = vadd.f32 0.0, %v2247
    %2249 = vmatprep.mubr.bf16.mxu0 0
    %2250 = vmatmul.mubr.bf16.gmra.mxu0 %v396
    %v2251 = vpop.f32.mrf.mxu0
    %v2252 = vadd.f32 0.0, %v2251
    %v2253 = vpop.f32.mrf.mxu0
    %v2254 = vadd.f32 0.0, %v2253
    %v2255 = vpop.f32.mrf.mxu0
    %v2256 = vadd.f32 0.0, %v2255
    %v2257 = vpop.f32.mrf.mxu0
    %v2258 = vadd.f32 0.0, %v2257
    %2259 = vmatprep.mubr.bf16.mxu0 0
    %2260 = vmatmul.mubr.bf16.gmra.mxu0 %v399
    %v2261 = vpop.f32.mrf.mxu0
    %v2262 = vadd.f32 0.0, %v2261
    %v2263 = vpop.f32.mrf.mxu0
    %v2264 = vadd.f32 0.0, %v2263
    %v2265 = vpop.f32.mrf.mxu0
    %v2266 = vadd.f32 0.0, %v2265
    %v2267 = vpop.f32.mrf.mxu0
    %v2268 = vadd.f32 0.0, %v2267
    %2269 = vmatprep.mubr.bf16.mxu0 0
    %2270 = vmatmul.mubr.bf16.gmra.mxu0 %v402
    %v2271 = vpop.f32.mrf.mxu0
    %v2272 = vadd.f32 0.0, %v2271
    %v2273 = vpop.f32.mrf.mxu0
    %v2274 = vadd.f32 0.0, %v2273
    %v2275 = vpop.f32.mrf.mxu0
    %v2276 = vadd.f32 0.0, %v2275
    %v2277 = vpop.f32.mrf.mxu0
    %v2278 = vadd.f32 0.0, %v2277
    %2279 = vmatprep.mubr.bf16.mxu0 0
    %2280 = vmatmul.mubr.bf16.gmra.mxu0 %v405
    %v2281 = vpop.f32.mrf.mxu0
    %v2282 = vadd.f32 0.0, %v2281
    %v2283 = vpop.f32.mrf.mxu0
    %v2284 = vadd.f32 0.0, %v2283
    %v2285 = vpop.f32.mrf.mxu0
    %v2286 = vadd.f32 0.0, %v2285
    %v2287 = vpop.f32.mrf.mxu0
    %v2288 = vadd.f32 0.0, %v2287
    %2289 = vmatprep.mubr.bf16.mxu0 0
    %2290 = vmatmul.mubr.bf16.gmra.mxu0 %v408
    %v2291 = vpop.f32.mrf.mxu0
    %v2292 = vadd.f32 0.0, %v2291
    %v2293 = vpop.f32.mrf.mxu0
    %v2294 = vadd.f32 0.0, %v2293
    %v2295 = vpop.f32.mrf.mxu0
    %v2296 = vadd.f32 0.0, %v2295
    %v2297 = vpop.f32.mrf.mxu0
    %v2298 = vadd.f32 0.0, %v2297
    %2299 = vmatprep.mubr.bf16.mxu0 0
    %2300 = vmatmul.mubr.bf16.gmra.mxu0 %v411
    %v2301 = vpop.f32.mrf.mxu0
    %v2302 = vadd.f32 0.0, %v2301
    %v2303 = vpop.f32.mrf.mxu0
    %v2304 = vadd.f32 0.0, %v2303
    %v2305 = vpop.f32.mrf.mxu0
    %v2306 = vadd.f32 0.0, %v2305
    %v2307 = vpop.f32.mrf.mxu0
    %v2308 = vadd.f32 0.0, %v2307
    %2309 = vmatprep.mubr.bf16.mxu0 0
    %2310 = vmatmul.mubr.bf16.gmra.mxu0 %v414
    %v2311 = vpop.f32.mrf.mxu0
    %v2312 = vadd.f32 0.0, %v2311
    %v2313 = vpop.f32.mrf.mxu0
    %v2314 = vadd.f32 0.0, %v2313
    %v2315 = vpop.f32.mrf.mxu0
    %v2316 = vadd.f32 0.0, %v2315
    %v2317 = vpop.f32.mrf.mxu0
    %v2318 = vadd.f32 0.0, %v2317
    %2319 = vmatprep.mubr.bf16.mxu0 0
    %2320 = vmatmul.mubr.bf16.gmra.mxu0 %v417
    %v2321 = vpop.f32.mrf.mxu0
    %v2322 = vadd.f32 0.0, %v2321
    %v2323 = vpop.f32.mrf.mxu0
    %v2324 = vadd.f32 0.0, %v2323
    %v2325 = vpop.f32.mrf.mxu0
    %v2326 = vadd.f32 0.0, %v2325
    %v2327 = vpop.f32.mrf.mxu0
    %v2328 = vadd.f32 0.0, %v2327
    %2329 = vmatprep.mubr.bf16.mxu0 0
    %2330 = vmatmul.mubr.bf16.gmra.mxu0 %v420
    %v2331 = vpop.f32.mrf.mxu0
    %v2332 = vadd.f32 0.0, %v2331
    %v2333 = vpop.f32.mrf.mxu0
    %v2334 = vadd.f32 0.0, %v2333
    %v2335 = vpop.f32.mrf.mxu0
    %v2336 = vadd.f32 0.0, %v2335
    %v2337 = vpop.f32.mrf.mxu0
    %v2338 = vadd.f32 0.0, %v2337
    %2339 = vmatprep.mubr.bf16.mxu0 0
    %2340 = vmatmul.mubr.bf16.gmra.mxu0 %v423
    %v2341 = vpop.f32.mrf.mxu0
    %v2342 = vadd.f32 0.0, %v2341
    %v2343 = vpop.f32.mrf.mxu0
    %v2344 = vadd.f32 0.0, %v2343
    %v2345 = vpop.f32.mrf.mxu0
    %v2346 = vadd.f32 0.0, %v2345
    %v2347 = vpop.f32.mrf.mxu0
    %v2348 = vadd.f32 0.0, %v2347
    %2349 = vmatprep.mubr.bf16.mxu0 0
    %2350 = vmatmul.mubr.bf16.gmra.mxu0 %v426
    %v2351 = vpop.f32.mrf.mxu0
    %v2352 = vadd.f32 0.0, %v2351
    %v2353 = vpop.f32.mrf.mxu0
    %v2354 = vadd.f32 0.0, %v2353
    %v2355 = vpop.f32.mrf.mxu0
    %v2356 = vadd.f32 0.0, %v2355
    %v2357 = vpop.f32.mrf.mxu0
    %v2358 = vadd.f32 0.0, %v2357
    %2359 = vmatprep.mubr.bf16.mxu0 0
    %2360 = vmatmul.mubr.bf16.gmra.mxu0 %v429
    %v2361 = vpop.f32.mrf.mxu0
    %v2362 = vadd.f32 0.0, %v2361
    %v2363 = vpop.f32.mrf.mxu0
    %v2364 = vadd.f32 0.0, %v2363
    %v2365 = vpop.f32.mrf.mxu0
    %v2366 = vadd.f32 0.0, %v2365
    %v2367 = vpop.f32.mrf.mxu0
    %v2368 = vadd.f32 0.0, %v2367
    %2369 = vmatprep.mubr.bf16.mxu0 0
    %2370 = vmatmul.mubr.bf16.gmra.mxu0 %v432
    %v2371 = vpop.f32.mrf.mxu0
    %v2372 = vadd.f32 0.0, %v2371
    %v2373 = vpop.f32.mrf.mxu0
    %v2374 = vadd.f32 0.0, %v2373
    %v2375 = vpop.f32.mrf.mxu0
    %v2376 = vadd.f32 0.0, %v2375
    %v2377 = vpop.f32.mrf.mxu0
    %v2378 = vadd.f32 0.0, %v2377
    %2379 = vmatprep.mubr.bf16.mxu0 0
    %2380 = vmatmul.mubr.bf16.gmra.mxu0 %v435
    %v2381 = vpop.f32.mrf.mxu0
    %v2382 = vadd.f32 0.0, %v2381
    %v2383 = vpop.f32.mrf.mxu0
    %v2384 = vadd.f32 0.0, %v2383
    %v2385 = vpop.f32.mrf.mxu0
    %v2386 = vadd.f32 0.0, %v2385
    %v2387 = vpop.f32.mrf.mxu0
    %v2388 = vadd.f32 0.0, %v2387
    %2389 = vmatprep.mubr.bf16.mxu0 0
    %2390 = vmatmul.mubr.bf16.gmra.mxu0 %v438
    %v2391 = vpop.f32.mrf.mxu0
    %v2392 = vadd.f32 0.0, %v2391
    %v2393 = vpop.f32.mrf.mxu0
    %v2394 = vadd.f32 0.0, %v2393
    %v2395 = vpop.f32.mrf.mxu0
    %v2396 = vadd.f32 0.0, %v2395
    %v2397 = vpop.f32.mrf.mxu0
    %v2398 = vadd.f32 0.0, %v2397
    %2399 = vmatprep.mubr.bf16.mxu0 0
    %2400 = vmatmul.mubr.bf16.gmra.mxu0 %v441
    %v2401 = vpop.f32.mrf.mxu0
    %v2402 = vadd.f32 0.0, %v2401
    %v2403 = vpop.f32.mrf.mxu0
    %v2404 = vadd.f32 0.0, %v2403
    %v2405 = vpop.f32.mrf.mxu0
    %v2406 = vadd.f32 0.0, %v2405
    %v2407 = vpop.f32.mrf.mxu0
    %v2408 = vadd.f32 0.0, %v2407
    %2409 = vmatprep.mubr.bf16.mxu0 0
    %2410 = vmatmul.mubr.bf16.gmra.mxu0 %v444
    %v2411 = vpop.f32.mrf.mxu0
    %v2412 = vadd.f32 0.0, %v2411
    %v2413 = vpop.f32.mrf.mxu0
    %v2414 = vadd.f32 0.0, %v2413
    %v2415 = vpop.f32.mrf.mxu0
    %v2416 = vadd.f32 0.0, %v2415
    %v2417 = vpop.f32.mrf.mxu0
    %v2418 = vadd.f32 0.0, %v2417
    %2419 = vmatprep.mubr.bf16.mxu0 0
    %2420 = vmatmul.mubr.bf16.gmra.mxu0 %v447
    %v2421 = vpop.f32.mrf.mxu0
    %v2422 = vadd.f32 0.0, %v2421
    %v2423 = vpop.f32.mrf.mxu0
    %v2424 = vadd.f32 0.0, %v2423
    %v2425 = vpop.f32.mrf.mxu0
    %v2426 = vadd.f32 0.0, %v2425
    %v2427 = vpop.f32.mrf.mxu0
    %v2428 = vadd.f32 0.0, %v2427
    %2429 = vmatprep.mubr.bf16.mxu0 0
    %2430 = vmatmul.mubr.bf16.gmra.mxu0 %v450
    %v2431 = vpop.f32.mrf.mxu0
    %v2432 = vadd.f32 0.0, %v2431
    %v2433 = vpop.f32.mrf.mxu0
    %v2434 = vadd.f32 0.0, %v2433
    %v2435 = vpop.f32.mrf.mxu0
    %v2436 = vadd.f32 0.0, %v2435
    %v2437 = vpop.f32.mrf.mxu0
    %v2438 = vadd.f32 0.0, %v2437
    %2439 = vmatprep.mubr.bf16.mxu0 0
    %2440 = vmatmul.mubr.bf16.gmra.mxu0 %v453
    %v2441 = vpop.f32.mrf.mxu0
    %v2442 = vadd.f32 0.0, %v2441
    %v2443 = vpop.f32.mrf.mxu0
    %v2444 = vadd.f32 0.0, %v2443
    %v2445 = vpop.f32.mrf.mxu0
    %v2446 = vadd.f32 0.0, %v2445
    %v2447 = vpop.f32.mrf.mxu0
    %v2448 = vadd.f32 0.0, %v2447
    %2449 = vmatprep.mubr.bf16.mxu0 0
    %2450 = vmatmul.mubr.bf16.gmra.mxu0 %v456
    %v2451 = vpop.f32.mrf.mxu0
    %v2452 = vadd.f32 0.0, %v2451
    %v2453 = vpop.f32.mrf.mxu0
    %v2454 = vadd.f32 0.0, %v2453
    %v2455 = vpop.f32.mrf.mxu0
    %v2456 = vadd.f32 0.0, %v2455
    %v2457 = vpop.f32.mrf.mxu0
    %v2458 = vadd.f32 0.0, %v2457
    %2459 = vmatprep.mubr.bf16.mxu0 0
    %2460 = vmatmul.mubr.bf16.gmra.mxu0 %v1830
    %v2461 = vpop.f32.mrf.mxu0
    %v2462 = vadd.f32 0.0, %v2461
    %v2463 = vpop.f32.mrf.mxu0
    %v2464 = vadd.f32 0.0, %v2463
    %v2465 = vpop.f32.mrf.mxu0
    %v2466 = vadd.f32 0.0, %v2465
    %v2467 = vpop.f32.mrf.mxu0
    %v2468 = vadd.f32 0.0, %v2467
    %2469 = vdwg.mxu0
    %v2470 = vadd.f32 %v1188, %v1879
    %v2471 = vadd.f32 %v1190, %v1881
    %v2472 = vadd.f32 %v1501, %v2192
    %v2473 = vadd.f32 %v1503, %v2194
    %v2474 = vadd.f32 %v1192, %v1883
    %v2475 = vadd.f32 %v1194, %v1885
    %v2476 = vadd.f32 %v1505, %v2196
    %v2477 = vadd.f32 %v1507, %v2198
    %v2478 = vadd.f32 %v1198, %v1889
    %v2479 = vadd.f32 %v1200, %v1891
    %v2480 = vadd.f32 %v1511, %v2202
    %v2481 = vadd.f32 %v1513, %v2204
    %v2482 = vadd.f32 %v1202, %v1893
    %v2483 = vadd.f32 %v1204, %v1895
    %v2484 = vadd.f32 %v1515, %v2206
    %v2485 = vadd.f32 %v1517, %v2208
    %v2486 = vadd.f32 %v1208, %v1899
    %v2487 = vadd.f32 %v1210, %v1901
    %v2488 = vadd.f32 %v1521, %v2212
    %v2489 = vadd.f32 %v1523, %v2214
    %v2490 = vadd.f32 %v1212, %v1903
    %v2491 = vadd.f32 %v1214, %v1905
    %v2492 = vadd.f32 %v1525, %v2216
    %v2493 = vadd.f32 %v1527, %v2218
    %v2494 = vadd.f32 %v1218, %v1909
    %v2495 = vadd.f32 %v1220, %v1911
    %v2496 = vadd.f32 %v1531, %v2222
    %v2497 = vadd.f32 %v1533, %v2224
    %v2498 = vadd.f32 %v1222, %v1913
    %v2499 = vadd.f32 %v1224, %v1915
    %v2500 = vadd.f32 %v1535, %v2226
    %v2501 = vadd.f32 %v1537, %v2228
    %v2502 = vadd.f32 %v1228, %v1919
    %v2503 = vadd.f32 %v1230, %v1921
    %v2504 = vadd.f32 %v1541, %v2232
    %v2505 = vadd.f32 %v1543, %v2234
    %v2506 = vadd.f32 %v1232, %v1923
    %v2507 = vadd.f32 %v1234, %v1925
    %v2508 = vadd.f32 %v1545, %v2236
    %v2509 = vadd.f32 %v1547, %v2238
    %v2510 = vadd.f32 %v1238, %v1929
    %v2511 = vadd.f32 %v1240, %v1931
    %v2512 = vadd.f32 %v1551, %v2242
    %v2513 = vadd.f32 %v1553, %v2244
    %v2514 = vadd.f32 %v1242, %v1933
    %v2515 = vadd.f32 %v1244, %v1935
    %v2516 = vadd.f32 %v1555, %v2246
    %v2517 = vadd.f32 %v1557, %v2248
    %v2518 = vadd.f32 %v1248, %v1939
    %v2519 = vadd.f32 %v1250, %v1941
    %v2520 = vadd.f32 %v1561, %v2252
    %v2521 = vadd.f32 %v1563, %v2254
    %v2522 = vadd.f32 %v1252, %v1943
    %v2523 = vadd.f32 %v1254, %v1945
    %v2524 = vadd.f32 %v1565, %v2256
    %v2525 = vadd.f32 %v1567, %v2258
    %v2526 = vadd.f32 %v1258, %v1949
    %v2527 = vadd.f32 %v1260, %v1951
    %v2528 = vadd.f32 %v1571, %v2262
    %v2529 = vadd.f32 %v1573, %v2264
    %v2530 = vadd.f32 %v1262, %v1953
    %v2531 = vadd.f32 %v1264, %v1955
    %v2532 = vadd.f32 %v1575, %v2266
    %v2533 = vadd.f32 %v1577, %v2268
    %v2534 = vadd.f32 %v1268, %v1959
    %v2535 = vadd.f32 %v1270, %v1961
    %v2536 = vadd.f32 %v1581, %v2272
    %v2537 = vadd.f32 %v1583, %v2274
    %v2538 = vadd.f32 %v1272, %v1963
    %v2539 = vadd.f32 %v1274, %v1965
    %v2540 = vadd.f32 %v1585, %v2276
    %v2541 = vadd.f32 %v1587, %v2278
    %v2542 = vadd.f32 %v1278, %v1969
    %v2543 = vadd.f32 %v1280, %v1971
    %v2544 = vadd.f32 %v1591, %v2282
    %v2545 = vadd.f32 %v1593, %v2284
    %v2546 = vadd.f32 %v1282, %v1973
    %v2547 = vadd.f32 %v1284, %v1975
    %v2548 = vadd.f32 %v1595, %v2286
    %v2549 = vadd.f32 %v1597, %v2288
    %v2550 = vadd.f32 %v1288, %v1979
    %v2551 = vadd.f32 %v1290, %v1981
    %v2552 = vadd.f32 %v1601, %v2292
    %v2553 = vadd.f32 %v1603, %v2294
    %v2554 = vadd.f32 %v1292, %v1983
    %v2555 = vadd.f32 %v1294, %v1985
    %v2556 = vadd.f32 %v1605, %v2296
    %v2557 = vadd.f32 %v1607, %v2298
    %v2558 = vadd.f32 %v1298, %v1989
    %v2559 = vadd.f32 %v1300, %v1991
    %v2560 = vadd.f32 %v1611, %v2302
    %v2561 = vadd.f32 %v1613, %v2304
    %v2562 = vadd.f32 %v1302, %v1993
    %v2563 = vadd.f32 %v1304, %v1995
    %v2564 = vadd.f32 %v1615, %v2306
    %v2565 = vadd.f32 %v1617, %v2308
    %v2566 = vadd.f32 %v1308, %v1999
    %v2567 = vadd.f32 %v1310, %v2001
    %v2568 = vadd.f32 %v1621, %v2312
    %v2569 = vadd.f32 %v1623, %v2314
    %v2570 = vadd.f32 %v1312, %v2003
    %v2571 = vadd.f32 %v1314, %v2005
    %v2572 = vadd.f32 %v1625, %v2316
    %v2573 = vadd.f32 %v1627, %v2318
    %v2574 = vadd.f32 %v1318, %v2009
    %v2575 = vadd.f32 %v1320, %v2011
    %v2576 = vadd.f32 %v1631, %v2322
    %v2577 = vadd.f32 %v1633, %v2324
    %v2578 = vadd.f32 %v1322, %v2013
    %v2579 = vadd.f32 %v1324, %v2015
    %v2580 = vadd.f32 %v1635, %v2326
    %v2581 = vadd.f32 %v1637, %v2328
    %v2582 = vadd.f32 %v1328, %v2019
    %v2583 = vadd.f32 %v1330, %v2021
    %v2584 = vadd.f32 %v1641, %v2332
    %v2585 = vadd.f32 %v1643, %v2334
    %v2586 = vadd.f32 %v1332, %v2023
    %v2587 = vadd.f32 %v1334, %v2025
    %v2588 = vadd.f32 %v1645, %v2336
    %v2589 = vadd.f32 %v1647, %v2338
    %v2590 = vadd.f32 %v1338, %v2029
    %v2591 = vadd.f32 %v1340, %v2031
    %v2592 = vadd.f32 %v1651, %v2342
    %v2593 = vadd.f32 %v1653, %v2344
    %v2594 = vadd.f32 %v1342, %v2033
    %v2595 = vadd.f32 %v1344, %v2035
    %v2596 = vadd.f32 %v1655, %v2346
    %v2597 = vadd.f32 %v1657, %v2348
    %v2598 = vadd.f32 %v1348, %v2039
    %v2599 = vadd.f32 %v1350, %v2041
    %v2600 = vadd.f32 %v1661, %v2352
    %v2601 = vadd.f32 %v1663, %v2354
    %v2602 = vadd.f32 %v1352, %v2043
    %v2603 = vadd.f32 %v1354, %v2045
    %v2604 = vadd.f32 %v1665, %v2356
    %v2605 = vadd.f32 %v1667, %v2358
    %v2606 = vadd.f32 %v1358, %v2049
    %v2607 = vadd.f32 %v1360, %v2051
    %v2608 = vadd.f32 %v1671, %v2362
    %v2609 = vadd.f32 %v1673, %v2364
    %v2610 = vadd.f32 %v1362, %v2053
    %v2611 = vadd.f32 %v1364, %v2055
    %v2612 = vadd.f32 %v1675, %v2366
    %v2613 = vadd.f32 %v1677, %v2368
    %v2614 = vadd.f32 %v1368, %v2059
    %v2615 = vadd.f32 %v1370, %v2061
    %v2616 = vadd.f32 %v1681, %v2372
    %v2617 = vadd.f32 %v1683, %v2374
    %v2618 = vadd.f32 %v1372, %v2063
    %v2619 = vadd.f32 %v1374, %v2065
    %v2620 = vadd.f32 %v1685, %v2376
    %v2621 = vadd.f32 %v1687, %v2378
    %v2622 = vadd.f32 %v1378, %v2069
    %v2623 = vadd.f32 %v1380, %v2071
    %v2624 = vadd.f32 %v1691, %v2382
    %v2625 = vadd.f32 %v1693, %v2384
    %v2626 = vadd.f32 %v1382, %v2073
    %v2627 = vadd.f32 %v1384, %v2075
    %v2628 = vadd.f32 %v1695, %v2386
    %v2629 = vadd.f32 %v1697, %v2388
    %v2630 = vadd.f32 %v1388, %v2079
    %v2631 = vadd.f32 %v1390, %v2081
    %v2632 = vadd.f32 %v1701, %v2392
    %v2633 = vadd.f32 %v1703, %v2394
    %v2634 = vadd.f32 %v1392, %v2083
    %v2635 = vadd.f32 %v1394, %v2085
    %v2636 = vadd.f32 %v1705, %v2396
    %v2637 = vadd.f32 %v1707, %v2398
    %v2638 = vadd.f32 %v1398, %v2089
    %v2639 = vadd.f32 %v1400, %v2091
    %v2640 = vadd.f32 %v1711, %v2402
    %v2641 = vadd.f32 %v1713, %v2404
    %v2642 = vadd.f32 %v1402, %v2093
    %v2643 = vadd.f32 %v1404, %v2095
    %v2644 = vadd.f32 %v1715, %v2406
    %v2645 = vadd.f32 %v1717, %v2408
    %v2646 = vadd.f32 %v1408, %v2099
    %v2647 = vadd.f32 %v1410, %v2101
    %v2648 = vadd.f32 %v1721, %v2412
    %v2649 = vadd.f32 %v1723, %v2414
    %v2650 = vadd.f32 %v1412, %v2103
    %v2651 = vadd.f32 %v1414, %v2105
    %v2652 = vadd.f32 %v1725, %v2416
    %v2653 = vadd.f32 %v1727, %v2418
    %v2654 = vadd.f32 %v1418, %v2109
    %v2655 = vadd.f32 %v1420, %v2111
    %v2656 = vadd.f32 %v1731, %v2422
    %v2657 = vadd.f32 %v1733, %v2424
    %v2658 = vadd.f32 %v1422, %v2113
    %v2659 = vadd.f32 %v1424, %v2115
    %v2660 = vadd.f32 %v1735, %v2426
    %v2661 = vadd.f32 %v1737, %v2428
    %v2662 = vadd.f32 %v1428, %v2119
    %v2663 = vadd.f32 %v1430, %v2121
    %v2664 = vadd.f32 %v1741, %v2432
    %v2665 = vadd.f32 %v1743, %v2434
    %v2666 = vadd.f32 %v1432, %v2123
    %v2667 = vadd.f32 %v1434, %v2125
    %v2668 = vadd.f32 %v1745, %v2436
    %v2669 = vadd.f32 %v1747, %v2438
    %v2670 = vadd.f32 %v1438, %v2129
    %v2671 = vadd.f32 %v1440, %v2131
    %v2672 = vadd.f32 %v1751, %v2442
    %v2673 = vadd.f32 %v1753, %v2444
    %v2674 = vadd.f32 %v1442, %v2133
    %v2675 = vadd.f32 %v1444, %v2135
    %v2676 = vadd.f32 %v1755, %v2446
    %v2677 = vadd.f32 %v1757, %v2448
    %v2678 = vadd.f32 %v1448, %v2139
    %v2679 = vadd.f32 %v1450, %v2141
    %v2680 = vadd.f32 %v1761, %v2452
    %v2681 = vadd.f32 %v1763, %v2454
    %v2682 = vadd.f32 %v1452, %v2143
    %v2683 = vadd.f32 %v1454, %v2145
    %v2684 = vadd.f32 %v1765, %v2456
    %v2685 = vadd.f32 %v1767, %v2458
    %v2686 = vadd.f32 %v1458, %v2149
    %v2687 = vadd.f32 %v1460, %v2151
    %v2688 = vadd.f32 %v1771, %v2462
    %v2689 = vadd.f32 %v1773, %v2464
    %v2690 = vadd.f32 %v1462, %v2153
    %v2691 = vadd.f32 %v1464, %v2155
    %v2692 = vadd.f32 %v1775, %v2466
    %v2693 = vadd.f32 %v1777, %v2468
    %v2694 = vmax.f32 %v2470, %v2478
    %v2695 = vmax.f32 %v2471, %v2479
    %v2696 = vmax.f32 %v2472, %v2480
    %v2697 = vmax.f32 %v2473, %v2481
    %v2698 = vmax.f32 %v2474, %v2482
    %v2699 = vmax.f32 %v2475, %v2483
    %v2700 = vmax.f32 %v2476, %v2484
    %v2701 = vmax.f32 %v2477, %v2485
    %v2702 = vmax.f32 %v2486, %v2494
    %v2703 = vmax.f32 %v2487, %v2495
    %v2704 = vmax.f32 %v2488, %v2496
    %v2705 = vmax.f32 %v2489, %v2497
    %v2706 = vmax.f32 %v2490, %v2498
    %v2707 = vmax.f32 %v2491, %v2499
    %v2708 = vmax.f32 %v2492, %v2500
    %v2709 = vmax.f32 %v2493, %v2501
    %v2710 = vmax.f32 %v2502, %v2510
    %v2711 = vmax.f32 %v2503, %v2511
    %v2712 = vmax.f32 %v2504, %v2512
    %v2713 = vmax.f32 %v2505, %v2513
    %v2714 = vmax.f32 %v2506, %v2514
    %v2715 = vmax.f32 %v2507, %v2515
    %v2716 = vmax.f32 %v2508, %v2516
    %v2717 = vmax.f32 %v2509, %v2517
    %v2718 = vmax.f32 %v2518, %v2526
    %v2719 = vmax.f32 %v2519, %v2527
    %v2720 = vmax.f32 %v2520, %v2528
    %v2721 = vmax.f32 %v2521, %v2529
    %v2722 = vmax.f32 %v2522, %v2530
    %v2723 = vmax.f32 %v2523, %v2531
    %v2724 = vmax.f32 %v2524, %v2532
    %v2725 = vmax.f32 %v2525, %v2533
    %v2726 = vmax.f32 %v2534, %v2542
    %v2727 = vmax.f32 %v2535, %v2543
    %v2728 = vmax.f32 %v2536, %v2544
    %v2729 = vmax.f32 %v2537, %v2545
    %v2730 = vmax.f32 %v2538, %v2546
    %v2731 = vmax.f32 %v2539, %v2547
    %v2732 = vmax.f32 %v2540, %v2548
    %v2733 = vmax.f32 %v2541, %v2549
    %v2734 = vmax.f32 %v2550, %v2558
    %v2735 = vmax.f32 %v2551, %v2559
    %v2736 = vmax.f32 %v2552, %v2560
    %v2737 = vmax.f32 %v2553, %v2561
    %v2738 = vmax.f32 %v2554, %v2562
    %v2739 = vmax.f32 %v2555, %v2563
    %v2740 = vmax.f32 %v2556, %v2564
    %v2741 = vmax.f32 %v2557, %v2565
    %v2742 = vmax.f32 %v2566, %v2574
    %v2743 = vmax.f32 %v2567, %v2575
    %v2744 = vmax.f32 %v2568, %v2576
    %v2745 = vmax.f32 %v2569, %v2577
    %v2746 = vmax.f32 %v2570, %v2578
    %v2747 = vmax.f32 %v2571, %v2579
    %v2748 = vmax.f32 %v2572, %v2580
    %v2749 = vmax.f32 %v2573, %v2581
    %v2750 = vmax.f32 %v2582, %v2590
    %v2751 = vmax.f32 %v2583, %v2591
    %v2752 = vmax.f32 %v2584, %v2592
    %v2753 = vmax.f32 %v2585, %v2593
    %v2754 = vmax.f32 %v2586, %v2594
    %v2755 = vmax.f32 %v2587, %v2595
    %v2756 = vmax.f32 %v2588, %v2596
    %v2757 = vmax.f32 %v2589, %v2597
    %v2758 = vmax.f32 %v2598, %v2606
    %v2759 = vmax.f32 %v2599, %v2607
    %v2760 = vmax.f32 %v2600, %v2608
    %v2761 = vmax.f32 %v2601, %v2609
    %v2762 = vmax.f32 %v2602, %v2610
    %v2763 = vmax.f32 %v2603, %v2611
    %v2764 = vmax.f32 %v2604, %v2612
    %v2765 = vmax.f32 %v2605, %v2613
    %v2766 = vmax.f32 %v2614, %v2622
    %v2767 = vmax.f32 %v2615, %v2623
    %v2768 = vmax.f32 %v2616, %v2624
    %v2769 = vmax.f32 %v2617, %v2625
    %v2770 = vmax.f32 %v2618, %v2626
    %v2771 = vmax.f32 %v2619, %v2627
    %v2772 = vmax.f32 %v2620, %v2628
    %v2773 = vmax.f32 %v2621, %v2629
    %v2774 = vmax.f32 %v2630, %v2638
    %v2775 = vmax.f32 %v2631, %v2639
    %v2776 = vmax.f32 %v2632, %v2640
    %v2777 = vmax.f32 %v2633, %v2641
    %v2778 = vmax.f32 %v2634, %v2642
    %v2779 = vmax.f32 %v2635, %v2643
    %v2780 = vmax.f32 %v2636, %v2644
    %v2781 = vmax.f32 %v2637, %v2645
    %v2782 = vmax.f32 %v2646, %v2654
    %v2783 = vmax.f32 %v2647, %v2655
    %v2784 = vmax.f32 %v2648, %v2656
    %v2785 = vmax.f32 %v2649, %v2657
    %v2786 = vmax.f32 %v2650, %v2658
    %v2787 = vmax.f32 %v2651, %v2659
    %v2788 = vmax.f32 %v2652, %v2660
    %v2789 = vmax.f32 %v2653, %v2661
    %v2790 = vmax.f32 %v2662, %v2670
    %v2791 = vmax.f32 %v2663, %v2671
    %v2792 = vmax.f32 %v2664, %v2672
    %v2793 = vmax.f32 %v2665, %v2673
    %v2794 = vmax.f32 %v2666, %v2674
    %v2795 = vmax.f32 %v2667, %v2675
    %v2796 = vmax.f32 %v2668, %v2676
    %v2797 = vmax.f32 %v2669, %v2677
    %v2798 = vmax.f32 %v2678, %v2686
    %v2799 = vmax.f32 %v2679, %v2687
    %v2800 = vmax.f32 %v2680, %v2688
    %v2801 = vmax.f32 %v2681, %v2689
    %v2802 = vmax.f32 %v2682, %v2690
    %v2803 = vmax.f32 %v2683, %v2691
    %v2804 = vmax.f32 %v2684, %v2692
    %v2805 = vmax.f32 %v2685, %v2693
    %s2806 = scalar_lea.vmem [#allocation2], 64
    %v2807 = vld [vmem:[%s2806] sm:$0xff]
    %v2808 = vld [vmem:[%s2806 + $0x8] sm:$0xff]
    %v2809 = vld [vmem:[%s2806 + $0x10] sm:$0xff]
    %v2810 = vld [vmem:[%s2806 + $0x18] sm:$0xff]
    %v2811 = vld [vmem:[%s2806 + $0x20] sm:$0xff]
    %v2812 = vld [vmem:[%s2806 + $0x28] sm:$0xff]
    %v2813 = vld [vmem:[%s2806 + $0x30] sm:$0x77]
    %v2814 = vld [vmem:[%s2806 + $0x38] sm:$0x77]
    %s2815 = scalar_lea.vmem [#allocation2], 192
    %v2816 = vld [vmem:[%s2815] sm:$0xff]
    %v2817 = vld [vmem:[%s2815 + $0x8] sm:$0xff]
    %v2818 = vld [vmem:[%s2815 + $0x10] sm:$0xff]
    %v2819 = vld [vmem:[%s2815 + $0x18] sm:$0xff]
    %v2820 = vld [vmem:[%s2815 + $0x20] sm:$0xff]
    %v2821 = vld [vmem:[%s2815 + $0x28] sm:$0xff]
    %v2822 = vld [vmem:[%s2815 + $0x30] sm:$0x77]
    %v2823 = vld [vmem:[%s2815 + $0x38] sm:$0x77]
    %v2832 = vunpack.c.l.b16 %v2816
    %v2833 = vunpack.c.h.b16 %v2816
    %v2834 = vunpack.c.l.b16 %v2817
    %v2835 = vunpack.c.h.b16 %v2817
    %v2836 = vunpack.c.l.b16 %v2818
    %v2837 = vunpack.c.h.b16 %v2818
    %v2838 = vunpack.c.l.b16 %v2819
    %v2839 = vunpack.c.h.b16 %v2819
    %v2840 = vunpack.c.l.b16 %v2820
    %v2841 = vunpack.c.h.b16 %v2820
    %v2842 = vunpack.c.l.b16 %v2821
    %v2843 = vunpack.c.h.b16 %v2821
    %v2844 = vunpack.c.l.b16 %v2822
    %v2845 = vunpack.c.h.b16 %v2822
    %v2846 = vunpack.c.l.b16 %v2823
    %v2847 = vunpack.c.h.b16 %v2823
    %v2848 = vpack.c.b16 %v2836, %v2832
    %v2849 = vpack.c.b16 %v2837, %v2833
    %v2850 = vpack.c.b16 %v2838, %v2834
    %v2851 = vpack.c.b16 %v2839, %v2835
    %v2852 = vpack.c.b16 %v2844, %v2840
    %v2853 = vpack.c.b16 %v2845, %v2841
    %v2854 = vpack.c.b16 %v2846, %v2842
    %v2855 = vpack.c.b16 %v2847, %v2843
    %v2861 = vsel %vm458, %v2852, 0
    %v2864 = vsel %vm458, %v2853, 0
    %v2867 = vsel %vm458, %v2854, 0
    %v2870 = vsel %vm458, %v2855, 0
    %2872 = vmatprep.subr.bf16.mxu0 0
    %2873 = vmatpush1.bf16.msra.mxu0 0
    %2874 = vmatprep.subr.bf16.mxu0 0
    %2875 = vmatpush1.bf16.msra.mxu0 0
    %2876 = vmatprep.subr.bf16.mxu0 0
    %2877 = vmatpush1.bf16.msra.mxu0 0
    %2878 = vmatprep.subr.bf16.mxu0 0
    %2879 = vmatpush1.bf16.msra.mxu0 0
    %2880 = vmatprep.subr.bf16.mxu0 0
    %2881 = vmatpush1.bf16.msra.mxu0 0
    %2882 = vmatprep.subr.bf16.mxu0 0
    %2883 = vmatpush1.bf16.msra.mxu0 0
    %2884 = vmatprep.subr.bf16.mxu0 %v2864
    %2885 = vmatpush1.bf16.msra.mxu0 %v2861
    %2886 = vmatprep.subr.bf16.mxu0 %v2849
    %2887 = vmatpush1.bf16.msra.mxu0 %v2848
    %2888 = vmatprep.subr.bf16.mxu0 0
    %2889 = vmatpush2.bf16.msra.mxu0 0
    %2890 = vmatprep.subr.bf16.mxu0 0
    %2891 = vmatpush2.bf16.msra.mxu0 0
    %2892 = vmatprep.subr.bf16.mxu0 0
    %2893 = vmatpush2.bf16.msra.mxu0 0
    %2894 = vmatprep.subr.bf16.mxu0 0
    %2895 = vmatpush2.bf16.msra.mxu0 0
    %2896 = vmatprep.subr.bf16.mxu0 0
    %2897 = vmatpush2.bf16.msra.mxu0 0
    %2898 = vmatprep.subr.bf16.mxu0 0
    %2899 = vmatpush2.bf16.msra.mxu0 0
    %2900 = vmatprep.subr.bf16.mxu0 0
    %2901 = vmatpush2.bf16.msra.mxu0 0
    %2902 = vmatprep.subr.bf16.mxu0 0
    %2903 = vmatpush2.bf16.msra.mxu0 0
    %2904 = vmatprep.mubr.bf16.mxu0 0
    %2905 = vmatmul.mubr.bf16.gmra.mxu0 %v375
    %v2906 = vpop.f32.mrf.mxu0
    %v2907 = vadd.f32 0.0, %v2906
    %v2908 = vpop.f32.mrf.mxu0
    %v2909 = vadd.f32 0.0, %v2908
    %v2910 = vpop.f32.mrf.mxu0
    %v2911 = vadd.f32 0.0, %v2910
    %v2912 = vpop.f32.mrf.mxu0
    %v2913 = vadd.f32 0.0, %v2912
    %2914 = vmatprep.mubr.bf16.mxu0 0
    %2915 = vmatmul.mubr.bf16.gmra.mxu0 %v378
    %v2916 = vpop.f32.mrf.mxu0
    %v2917 = vadd.f32 0.0, %v2916
    %v2918 = vpop.f32.mrf.mxu0
    %v2919 = vadd.f32 0.0, %v2918
    %v2920 = vpop.f32.mrf.mxu0
    %v2921 = vadd.f32 0.0, %v2920
    %v2922 = vpop.f32.mrf.mxu0
    %v2923 = vadd.f32 0.0, %v2922
    %2924 = vmatprep.mubr.bf16.mxu0 0
    %2925 = vmatmul.mubr.bf16.gmra.mxu0 %v381
    %v2926 = vpop.f32.mrf.mxu0
    %v2927 = vadd.f32 0.0, %v2926
    %v2928 = vpop.f32.mrf.mxu0
    %v2929 = vadd.f32 0.0, %v2928
    %v2930 = vpop.f32.mrf.mxu0
    %v2931 = vadd.f32 0.0, %v2930
    %v2932 = vpop.f32.mrf.mxu0
    %v2933 = vadd.f32 0.0, %v2932
    %2934 = vmatprep.mubr.bf16.mxu0 0
    %2935 = vmatmul.mubr.bf16.gmra.mxu0 %v384
    %v2936 = vpop.f32.mrf.mxu0
    %v2937 = vadd.f32 0.0, %v2936
    %v2938 = vpop.f32.mrf.mxu0
    %v2939 = vadd.f32 0.0, %v2938
    %v2940 = vpop.f32.mrf.mxu0
    %v2941 = vadd.f32 0.0, %v2940
    %v2942 = vpop.f32.mrf.mxu0
    %v2943 = vadd.f32 0.0, %v2942
    %2944 = vmatprep.mubr.bf16.mxu0 0
    %2945 = vmatmul.mubr.bf16.gmra.mxu0 %v387
    %v2946 = vpop.f32.mrf.mxu0
    %v2947 = vadd.f32 0.0, %v2946
    %v2948 = vpop.f32.mrf.mxu0
    %v2949 = vadd.f32 0.0, %v2948
    %v2950 = vpop.f32.mrf.mxu0
    %v2951 = vadd.f32 0.0, %v2950
    %v2952 = vpop.f32.mrf.mxu0
    %v2953 = vadd.f32 0.0, %v2952
    %2954 = vmatprep.mubr.bf16.mxu0 0
    %2955 = vmatmul.mubr.bf16.gmra.mxu0 %v390
    %v2956 = vpop.f32.mrf.mxu0
    %v2957 = vadd.f32 0.0, %v2956
    %v2958 = vpop.f32.mrf.mxu0
    %v2959 = vadd.f32 0.0, %v2958
    %v2960 = vpop.f32.mrf.mxu0
    %v2961 = vadd.f32 0.0, %v2960
    %v2962 = vpop.f32.mrf.mxu0
    %v2963 = vadd.f32 0.0, %v2962
    %2964 = vmatprep.mubr.bf16.mxu0 0
    %2965 = vmatmul.mubr.bf16.gmra.mxu0 %v393
    %v2966 = vpop.f32.mrf.mxu0
    %v2967 = vadd.f32 0.0, %v2966
    %v2968 = vpop.f32.mrf.mxu0
    %v2969 = vadd.f32 0.0, %v2968
    %v2970 = vpop.f32.mrf.mxu0
    %v2971 = vadd.f32 0.0, %v2970
    %v2972 = vpop.f32.mrf.mxu0
    %v2973 = vadd.f32 0.0, %v2972
    %2974 = vmatprep.mubr.bf16.mxu0 0
    %2975 = vmatmul.mubr.bf16.gmra.mxu0 %v396
    %v2976 = vpop.f32.mrf.mxu0
    %v2977 = vadd.f32 0.0, %v2976
    %v2978 = vpop.f32.mrf.mxu0
    %v2979 = vadd.f32 0.0, %v2978
    %v2980 = vpop.f32.mrf.mxu0
    %v2981 = vadd.f32 0.0, %v2980
    %v2982 = vpop.f32.mrf.mxu0
    %v2983 = vadd.f32 0.0, %v2982
    %2984 = vmatprep.mubr.bf16.mxu0 0
    %2985 = vmatmul.mubr.bf16.gmra.mxu0 %v399
    %v2986 = vpop.f32.mrf.mxu0
    %v2987 = vadd.f32 0.0, %v2986
    %v2988 = vpop.f32.mrf.mxu0
    %v2989 = vadd.f32 0.0, %v2988
    %v2990 = vpop.f32.mrf.mxu0
    %v2991 = vadd.f32 0.0, %v2990
    %v2992 = vpop.f32.mrf.mxu0
    %v2993 = vadd.f32 0.0, %v2992
    %2994 = vmatprep.mubr.bf16.mxu0 0
    %2995 = vmatmul.mubr.bf16.gmra.mxu0 %v402
    %v2996 = vpop.f32.mrf.mxu0
    %v2997 = vadd.f32 0.0, %v2996
    %v2998 = vpop.f32.mrf.mxu0
    %v2999 = vadd.f32 0.0, %v2998
    %v3000 = vpop.f32.mrf.mxu0
    %v3001 = vadd.f32 0.0, %v3000
    %v3002 = vpop.f32.mrf.mxu0
    %v3003 = vadd.f32 0.0, %v3002
    %3004 = vmatprep.mubr.bf16.mxu0 0
    %3005 = vmatmul.mubr.bf16.gmra.mxu0 %v405
    %v3006 = vpop.f32.mrf.mxu0
    %v3007 = vadd.f32 0.0, %v3006
    %v3008 = vpop.f32.mrf.mxu0
    %v3009 = vadd.f32 0.0, %v3008
    %v3010 = vpop.f32.mrf.mxu0
    %v3011 = vadd.f32 0.0, %v3010
    %v3012 = vpop.f32.mrf.mxu0
    %v3013 = vadd.f32 0.0, %v3012
    %3014 = vmatprep.mubr.bf16.mxu0 0
    %3015 = vmatmul.mubr.bf16.gmra.mxu0 %v408
    %v3016 = vpop.f32.mrf.mxu0
    %v3017 = vadd.f32 0.0, %v3016
    %v3018 = vpop.f32.mrf.mxu0
    %v3019 = vadd.f32 0.0, %v3018
    %v3020 = vpop.f32.mrf.mxu0
    %v3021 = vadd.f32 0.0, %v3020
    %v3022 = vpop.f32.mrf.mxu0
    %v3023 = vadd.f32 0.0, %v3022
    %3024 = vmatprep.mubr.bf16.mxu0 0
    %3025 = vmatmul.mubr.bf16.gmra.mxu0 %v411
    %v3026 = vpop.f32.mrf.mxu0
    %v3027 = vadd.f32 0.0, %v3026
    %v3028 = vpop.f32.mrf.mxu0
    %v3029 = vadd.f32 0.0, %v3028
    %v3030 = vpop.f32.mrf.mxu0
    %v3031 = vadd.f32 0.0, %v3030
    %v3032 = vpop.f32.mrf.mxu0
    %v3033 = vadd.f32 0.0, %v3032
    %3034 = vmatprep.mubr.bf16.mxu0 0
    %3035 = vmatmul.mubr.bf16.gmra.mxu0 %v414
    %v3036 = vpop.f32.mrf.mxu0
    %v3037 = vadd.f32 0.0, %v3036
    %v3038 = vpop.f32.mrf.mxu0
    %v3039 = vadd.f32 0.0, %v3038
    %v3040 = vpop.f32.mrf.mxu0
    %v3041 = vadd.f32 0.0, %v3040
    %v3042 = vpop.f32.mrf.mxu0
    %v3043 = vadd.f32 0.0, %v3042
    %3044 = vmatprep.mubr.bf16.mxu0 0
    %3045 = vmatmul.mubr.bf16.gmra.mxu0 %v417
    %v3046 = vpop.f32.mrf.mxu0
    %v3047 = vadd.f32 0.0, %v3046
    %v3048 = vpop.f32.mrf.mxu0
    %v3049 = vadd.f32 0.0, %v3048
    %v3050 = vpop.f32.mrf.mxu0
    %v3051 = vadd.f32 0.0, %v3050
    %v3052 = vpop.f32.mrf.mxu0
    %v3053 = vadd.f32 0.0, %v3052
    %3054 = vmatprep.mubr.bf16.mxu0 0
    %3055 = vmatmul.mubr.bf16.gmra.mxu0 %v420
    %v3056 = vpop.f32.mrf.mxu0
    %v3057 = vadd.f32 0.0, %v3056
    %v3058 = vpop.f32.mrf.mxu0
    %v3059 = vadd.f32 0.0, %v3058
    %v3060 = vpop.f32.mrf.mxu0
    %v3061 = vadd.f32 0.0, %v3060
    %v3062 = vpop.f32.mrf.mxu0
    %v3063 = vadd.f32 0.0, %v3062
    %3064 = vmatprep.mubr.bf16.mxu0 0
    %3065 = vmatmul.mubr.bf16.gmra.mxu0 %v423
    %v3066 = vpop.f32.mrf.mxu0
    %v3067 = vadd.f32 0.0, %v3066
    %v3068 = vpop.f32.mrf.mxu0
    %v3069 = vadd.f32 0.0, %v3068
    %v3070 = vpop.f32.mrf.mxu0
    %v3071 = vadd.f32 0.0, %v3070
    %v3072 = vpop.f32.mrf.mxu0
    %v3073 = vadd.f32 0.0, %v3072
    %3074 = vmatprep.mubr.bf16.mxu0 0
    %3075 = vmatmul.mubr.bf16.gmra.mxu0 %v426
    %v3076 = vpop.f32.mrf.mxu0
    %v3077 = vadd.f32 0.0, %v3076
    %v3078 = vpop.f32.mrf.mxu0
    %v3079 = vadd.f32 0.0, %v3078
    %v3080 = vpop.f32.mrf.mxu0
    %v3081 = vadd.f32 0.0, %v3080
    %v3082 = vpop.f32.mrf.mxu0
    %v3083 = vadd.f32 0.0, %v3082
    %3084 = vmatprep.mubr.bf16.mxu0 0
    %3085 = vmatmul.mubr.bf16.gmra.mxu0 %v429
    %v3086 = vpop.f32.mrf.mxu0
    %v3087 = vadd.f32 0.0, %v3086
    %v3088 = vpop.f32.mrf.mxu0
    %v3089 = vadd.f32 0.0, %v3088
    %v3090 = vpop.f32.mrf.mxu0
    %v3091 = vadd.f32 0.0, %v3090
    %v3092 = vpop.f32.mrf.mxu0
    %v3093 = vadd.f32 0.0, %v3092
    %3094 = vmatprep.mubr.bf16.mxu0 0
    %3095 = vmatmul.mubr.bf16.gmra.mxu0 %v432
    %v3096 = vpop.f32.mrf.mxu0
    %v3097 = vadd.f32 0.0, %v3096
    %v3098 = vpop.f32.mrf.mxu0
    %v3099 = vadd.f32 0.0, %v3098
    %v3100 = vpop.f32.mrf.mxu0
    %v3101 = vadd.f32 0.0, %v3100
    %v3102 = vpop.f32.mrf.mxu0
    %v3103 = vadd.f32 0.0, %v3102
    %3104 = vmatprep.mubr.bf16.mxu0 0
    %3105 = vmatmul.mubr.bf16.gmra.mxu0 %v435
    %v3106 = vpop.f32.mrf.mxu0
    %v3107 = vadd.f32 0.0, %v3106
    %v3108 = vpop.f32.mrf.mxu0
    %v3109 = vadd.f32 0.0, %v3108
    %v3110 = vpop.f32.mrf.mxu0
    %v3111 = vadd.f32 0.0, %v3110
    %v3112 = vpop.f32.mrf.mxu0
    %v3113 = vadd.f32 0.0, %v3112
    %3114 = vmatprep.mubr.bf16.mxu0 0
    %3115 = vmatmul.mubr.bf16.gmra.mxu0 %v438
    %v3116 = vpop.f32.mrf.mxu0
    %v3117 = vadd.f32 0.0, %v3116
    %v3118 = vpop.f32.mrf.mxu0
    %v3119 = vadd.f32 0.0, %v3118
    %v3120 = vpop.f32.mrf.mxu0
    %v3121 = vadd.f32 0.0, %v3120
    %v3122 = vpop.f32.mrf.mxu0
    %v3123 = vadd.f32 0.0, %v3122
    %3124 = vmatprep.mubr.bf16.mxu0 0
    %3125 = vmatmul.mubr.bf16.gmra.mxu0 %v441
    %v3126 = vpop.f32.mrf.mxu0
    %v3127 = vadd.f32 0.0, %v3126
    %v3128 = vpop.f32.mrf.mxu0
    %v3129 = vadd.f32 0.0, %v3128
    %v3130 = vpop.f32.mrf.mxu0
    %v3131 = vadd.f32 0.0, %v3130
    %v3132 = vpop.f32.mrf.mxu0
    %v3133 = vadd.f32 0.0, %v3132
    %3134 = vmatprep.mubr.bf16.mxu0 0
    %3135 = vmatmul.mubr.bf16.gmra.mxu0 %v444
    %v3136 = vpop.f32.mrf.mxu0
    %v3137 = vadd.f32 0.0, %v3136
    %v3138 = vpop.f32.mrf.mxu0
    %v3139 = vadd.f32 0.0, %v3138
    %v3140 = vpop.f32.mrf.mxu0
    %v3141 = vadd.f32 0.0, %v3140
    %v3142 = vpop.f32.mrf.mxu0
    %v3143 = vadd.f32 0.0, %v3142
    %3144 = vmatprep.mubr.bf16.mxu0 0
    %3145 = vmatmul.mubr.bf16.gmra.mxu0 %v447
    %v3146 = vpop.f32.mrf.mxu0
    %v3147 = vadd.f32 0.0, %v3146
    %v3148 = vpop.f32.mrf.mxu0
    %v3149 = vadd.f32 0.0, %v3148
    %v3150 = vpop.f32.mrf.mxu0
    %v3151 = vadd.f32 0.0, %v3150
    %v3152 = vpop.f32.mrf.mxu0
    %v3153 = vadd.f32 0.0, %v3152
    %3154 = vmatprep.mubr.bf16.mxu0 0
    %3155 = vmatmul.mubr.bf16.gmra.mxu0 %v450
    %v3156 = vpop.f32.mrf.mxu0
    %v3157 = vadd.f32 0.0, %v3156
    %v3158 = vpop.f32.mrf.mxu0
    %v3159 = vadd.f32 0.0, %v3158
    %v3160 = vpop.f32.mrf.mxu0
    %v3161 = vadd.f32 0.0, %v3160
    %v3162 = vpop.f32.mrf.mxu0
    %v3163 = vadd.f32 0.0, %v3162
    %3164 = vmatprep.mubr.bf16.mxu0 0
    %3165 = vmatmul.mubr.bf16.gmra.mxu0 %v453
    %v3166 = vpop.f32.mrf.mxu0
    %v3167 = vadd.f32 0.0, %v3166
    %v3168 = vpop.f32.mrf.mxu0
    %v3169 = vadd.f32 0.0, %v3168
    %v3170 = vpop.f32.mrf.mxu0
    %v3171 = vadd.f32 0.0, %v3170
    %v3172 = vpop.f32.mrf.mxu0
    %v3173 = vadd.f32 0.0, %v3172
    %3174 = vmatprep.mubr.bf16.mxu0 0
    %3175 = vmatmul.mubr.bf16.gmra.mxu0 %v456
    %v3176 = vpop.f32.mrf.mxu0
    %v3177 = vadd.f32 0.0, %v3176
    %v3178 = vpop.f32.mrf.mxu0
    %v3179 = vadd.f32 0.0, %v3178
    %v3180 = vpop.f32.mrf.mxu0
    %v3181 = vadd.f32 0.0, %v3180
    %v3182 = vpop.f32.mrf.mxu0
    %v3183 = vadd.f32 0.0, %v3182
    %3184 = vdwg.mxu0
    %3185 = vmatprep.subr.bf16.mxu0 0
    %3186 = vmatpush1.bf16.msra.mxu0 0
    %3187 = vmatprep.subr.bf16.mxu0 0
    %3188 = vmatpush1.bf16.msra.mxu0 0
    %3189 = vmatprep.subr.bf16.mxu0 0
    %3190 = vmatpush1.bf16.msra.mxu0 0
    %3191 = vmatprep.subr.bf16.mxu0 0
    %3192 = vmatpush1.bf16.msra.mxu0 0
    %3193 = vmatprep.subr.bf16.mxu0 0
    %3194 = vmatpush1.bf16.msra.mxu0 0
    %3195 = vmatprep.subr.bf16.mxu0 0
    %3196 = vmatpush1.bf16.msra.mxu0 0
    %3197 = vmatprep.subr.bf16.mxu0 %v2870
    %3198 = vmatpush1.bf16.msra.mxu0 %v2867
    %3199 = vmatprep.subr.bf16.mxu0 %v2851
    %3200 = vmatpush1.bf16.msra.mxu0 %v2850
    %3201 = vmatprep.subr.bf16.mxu0 0
    %3202 = vmatpush2.bf16.msra.mxu0 0
    %3203 = vmatprep.subr.bf16.mxu0 0
    %3204 = vmatpush2.bf16.msra.mxu0 0
    %3205 = vmatprep.subr.bf16.mxu0 0
    %3206 = vmatpush2.bf16.msra.mxu0 0
    %3207 = vmatprep.subr.bf16.mxu0 0
    %3208 = vmatpush2.bf16.msra.mxu0 0
    %3209 = vmatprep.subr.bf16.mxu0 0
    %3210 = vmatpush2.bf16.msra.mxu0 0
    %3211 = vmatprep.subr.bf16.mxu0 0
    %3212 = vmatpush2.bf16.msra.mxu0 0
    %3213 = vmatprep.subr.bf16.mxu0 0
    %3214 = vmatpush2.bf16.msra.mxu0 0
    %3215 = vmatprep.subr.bf16.mxu0 0
    %3216 = vmatpush2.bf16.msra.mxu0 0
    %3217 = vmatprep.mubr.bf16.mxu0 0
    %3218 = vmatmul.mubr.bf16.gmra.mxu0 %v375
    %v3219 = vpop.f32.mrf.mxu0
    %v3220 = vadd.f32 0.0, %v3219
    %v3221 = vpop.f32.mrf.mxu0
    %v3222 = vadd.f32 0.0, %v3221
    %v3223 = vpop.f32.mrf.mxu0
    %v3224 = vadd.f32 0.0, %v3223
    %v3225 = vpop.f32.mrf.mxu0
    %v3226 = vadd.f32 0.0, %v3225
    %3227 = vmatprep.mubr.bf16.mxu0 0
    %3228 = vmatmul.mubr.bf16.gmra.mxu0 %v378
    %v3229 = vpop.f32.mrf.mxu0
    %v3230 = vadd.f32 0.0, %v3229
    %v3231 = vpop.f32.mrf.mxu0
    %v3232 = vadd.f32 0.0, %v3231
    %v3233 = vpop.f32.mrf.mxu0
    %v3234 = vadd.f32 0.0, %v3233
    %v3235 = vpop.f32.mrf.mxu0
    %v3236 = vadd.f32 0.0, %v3235
    %3237 = vmatprep.mubr.bf16.mxu0 0
    %3238 = vmatmul.mubr.bf16.gmra.mxu0 %v381
    %v3239 = vpop.f32.mrf.mxu0
    %v3240 = vadd.f32 0.0, %v3239
    %v3241 = vpop.f32.mrf.mxu0
    %v3242 = vadd.f32 0.0, %v3241
    %v3243 = vpop.f32.mrf.mxu0
    %v3244 = vadd.f32 0.0, %v3243
    %v3245 = vpop.f32.mrf.mxu0
    %v3246 = vadd.f32 0.0, %v3245
    %3247 = vmatprep.mubr.bf16.mxu0 0
    %3248 = vmatmul.mubr.bf16.gmra.mxu0 %v384
    %v3249 = vpop.f32.mrf.mxu0
    %v3250 = vadd.f32 0.0, %v3249
    %v3251 = vpop.f32.mrf.mxu0
    %v3252 = vadd.f32 0.0, %v3251
    %v3253 = vpop.f32.mrf.mxu0
    %v3254 = vadd.f32 0.0, %v3253
    %v3255 = vpop.f32.mrf.mxu0
    %v3256 = vadd.f32 0.0, %v3255
    %3257 = vmatprep.mubr.bf16.mxu0 0
    %3258 = vmatmul.mubr.bf16.gmra.mxu0 %v387
    %v3259 = vpop.f32.mrf.mxu0
    %v3260 = vadd.f32 0.0, %v3259
    %v3261 = vpop.f32.mrf.mxu0
    %v3262 = vadd.f32 0.0, %v3261
    %v3263 = vpop.f32.mrf.mxu0
    %v3264 = vadd.f32 0.0, %v3263
    %v3265 = vpop.f32.mrf.mxu0
    %v3266 = vadd.f32 0.0, %v3265
    %3267 = vmatprep.mubr.bf16.mxu0 0
    %3268 = vmatmul.mubr.bf16.gmra.mxu0 %v390
    %v3269 = vpop.f32.mrf.mxu0
    %v3270 = vadd.f32 0.0, %v3269
    %v3271 = vpop.f32.mrf.mxu0
    %v3272 = vadd.f32 0.0, %v3271
    %v3273 = vpop.f32.mrf.mxu0
    %v3274 = vadd.f32 0.0, %v3273
    %v3275 = vpop.f32.mrf.mxu0
    %v3276 = vadd.f32 0.0, %v3275
    %3277 = vmatprep.mubr.bf16.mxu0 0
    %3278 = vmatmul.mubr.bf16.gmra.mxu0 %v393
    %v3279 = vpop.f32.mrf.mxu0
    %v3280 = vadd.f32 0.0, %v3279
    %v3281 = vpop.f32.mrf.mxu0
    %v3282 = vadd.f32 0.0, %v3281
    %v3283 = vpop.f32.mrf.mxu0
    %v3284 = vadd.f32 0.0, %v3283
    %v3285 = vpop.f32.mrf.mxu0
    %v3286 = vadd.f32 0.0, %v3285
    %3287 = vmatprep.mubr.bf16.mxu0 0
    %3288 = vmatmul.mubr.bf16.gmra.mxu0 %v396
    %v3289 = vpop.f32.mrf.mxu0
    %v3290 = vadd.f32 0.0, %v3289
    %v3291 = vpop.f32.mrf.mxu0
    %v3292 = vadd.f32 0.0, %v3291
    %v3293 = vpop.f32.mrf.mxu0
    %v3294 = vadd.f32 0.0, %v3293
    %v3295 = vpop.f32.mrf.mxu0
    %v3296 = vadd.f32 0.0, %v3295
    %3297 = vmatprep.mubr.bf16.mxu0 0
    %3298 = vmatmul.mubr.bf16.gmra.mxu0 %v399
    %v3299 = vpop.f32.mrf.mxu0
    %v3300 = vadd.f32 0.0, %v3299
    %v3301 = vpop.f32.mrf.mxu0
    %v3302 = vadd.f32 0.0, %v3301
    %v3303 = vpop.f32.mrf.mxu0
    %v3304 = vadd.f32 0.0, %v3303
    %v3305 = vpop.f32.mrf.mxu0
    %v3306 = vadd.f32 0.0, %v3305
    %3307 = vmatprep.mubr.bf16.mxu0 0
    %3308 = vmatmul.mubr.bf16.gmra.mxu0 %v402
    %v3309 = vpop.f32.mrf.mxu0
    %v3310 = vadd.f32 0.0, %v3309
    %v3311 = vpop.f32.mrf.mxu0
    %v3312 = vadd.f32 0.0, %v3311
    %v3313 = vpop.f32.mrf.mxu0
    %v3314 = vadd.f32 0.0, %v3313
    %v3315 = vpop.f32.mrf.mxu0
    %v3316 = vadd.f32 0.0, %v3315
    %3317 = vmatprep.mubr.bf16.mxu0 0
    %3318 = vmatmul.mubr.bf16.gmra.mxu0 %v405
    %v3319 = vpop.f32.mrf.mxu0
    %v3320 = vadd.f32 0.0, %v3319
    %v3321 = vpop.f32.mrf.mxu0
    %v3322 = vadd.f32 0.0, %v3321
    %v3323 = vpop.f32.mrf.mxu0
    %v3324 = vadd.f32 0.0, %v3323
    %v3325 = vpop.f32.mrf.mxu0
    %v3326 = vadd.f32 0.0, %v3325
    %3327 = vmatprep.mubr.bf16.mxu0 0
    %3328 = vmatmul.mubr.bf16.gmra.mxu0 %v408
    %v3329 = vpop.f32.mrf.mxu0
    %v3330 = vadd.f32 0.0, %v3329
    %v3331 = vpop.f32.mrf.mxu0
    %v3332 = vadd.f32 0.0, %v3331
    %v3333 = vpop.f32.mrf.mxu0
    %v3334 = vadd.f32 0.0, %v3333
    %v3335 = vpop.f32.mrf.mxu0
    %v3336 = vadd.f32 0.0, %v3335
    %3337 = vmatprep.mubr.bf16.mxu0 0
    %3338 = vmatmul.mubr.bf16.gmra.mxu0 %v411
    %v3339 = vpop.f32.mrf.mxu0
    %v3340 = vadd.f32 0.0, %v3339
    %v3341 = vpop.f32.mrf.mxu0
    %v3342 = vadd.f32 0.0, %v3341
    %v3343 = vpop.f32.mrf.mxu0
    %v3344 = vadd.f32 0.0, %v3343
    %v3345 = vpop.f32.mrf.mxu0
    %v3346 = vadd.f32 0.0, %v3345
    %3347 = vmatprep.mubr.bf16.mxu0 0
    %3348 = vmatmul.mubr.bf16.gmra.mxu0 %v414
    %v3349 = vpop.f32.mrf.mxu0
    %v3350 = vadd.f32 0.0, %v3349
    %v3351 = vpop.f32.mrf.mxu0
    %v3352 = vadd.f32 0.0, %v3351
    %v3353 = vpop.f32.mrf.mxu0
    %v3354 = vadd.f32 0.0, %v3353
    %v3355 = vpop.f32.mrf.mxu0
    %v3356 = vadd.f32 0.0, %v3355
    %3357 = vmatprep.mubr.bf16.mxu0 0
    %3358 = vmatmul.mubr.bf16.gmra.mxu0 %v417
    %v3359 = vpop.f32.mrf.mxu0
    %v3360 = vadd.f32 0.0, %v3359
    %v3361 = vpop.f32.mrf.mxu0
    %v3362 = vadd.f32 0.0, %v3361
    %v3363 = vpop.f32.mrf.mxu0
    %v3364 = vadd.f32 0.0, %v3363
    %v3365 = vpop.f32.mrf.mxu0
    %v3366 = vadd.f32 0.0, %v3365
    %3367 = vmatprep.mubr.bf16.mxu0 0
    %3368 = vmatmul.mubr.bf16.gmra.mxu0 %v420
    %v3369 = vpop.f32.mrf.mxu0
    %v3370 = vadd.f32 0.0, %v3369
    %v3371 = vpop.f32.mrf.mxu0
    %v3372 = vadd.f32 0.0, %v3371
    %v3373 = vpop.f32.mrf.mxu0
    %v3374 = vadd.f32 0.0, %v3373
    %v3375 = vpop.f32.mrf.mxu0
    %v3376 = vadd.f32 0.0, %v3375
    %3377 = vmatprep.mubr.bf16.mxu0 0
    %3378 = vmatmul.mubr.bf16.gmra.mxu0 %v423
    %v3379 = vpop.f32.mrf.mxu0
    %v3380 = vadd.f32 0.0, %v3379
    %v3381 = vpop.f32.mrf.mxu0
    %v3382 = vadd.f32 0.0, %v3381
    %v3383 = vpop.f32.mrf.mxu0
    %v3384 = vadd.f32 0.0, %v3383
    %v3385 = vpop.f32.mrf.mxu0
    %v3386 = vadd.f32 0.0, %v3385
    %3387 = vmatprep.mubr.bf16.mxu0 0
    %3388 = vmatmul.mubr.bf16.gmra.mxu0 %v426
    %v3389 = vpop.f32.mrf.mxu0
    %v3390 = vadd.f32 0.0, %v3389
    %v3391 = vpop.f32.mrf.mxu0
    %v3392 = vadd.f32 0.0, %v3391
    %v3393 = vpop.f32.mrf.mxu0
    %v3394 = vadd.f32 0.0, %v3393
    %v3395 = vpop.f32.mrf.mxu0
    %v3396 = vadd.f32 0.0, %v3395
    %3397 = vmatprep.mubr.bf16.mxu0 0
    %3398 = vmatmul.mubr.bf16.gmra.mxu0 %v429
    %v3399 = vpop.f32.mrf.mxu0
    %v3400 = vadd.f32 0.0, %v3399
    %v3401 = vpop.f32.mrf.mxu0
    %v3402 = vadd.f32 0.0, %v3401
    %v3403 = vpop.f32.mrf.mxu0
    %v3404 = vadd.f32 0.0, %v3403
    %v3405 = vpop.f32.mrf.mxu0
    %v3406 = vadd.f32 0.0, %v3405
    %3407 = vmatprep.mubr.bf16.mxu0 0
    %3408 = vmatmul.mubr.bf16.gmra.mxu0 %v432
    %v3409 = vpop.f32.mrf.mxu0
    %v3410 = vadd.f32 0.0, %v3409
    %v3411 = vpop.f32.mrf.mxu0
    %v3412 = vadd.f32 0.0, %v3411
    %v3413 = vpop.f32.mrf.mxu0
    %v3414 = vadd.f32 0.0, %v3413
    %v3415 = vpop.f32.mrf.mxu0
    %v3416 = vadd.f32 0.0, %v3415
    %3417 = vmatprep.mubr.bf16.mxu0 0
    %3418 = vmatmul.mubr.bf16.gmra.mxu0 %v435
    %v3419 = vpop.f32.mrf.mxu0
    %v3420 = vadd.f32 0.0, %v3419
    %v3421 = vpop.f32.mrf.mxu0
    %v3422 = vadd.f32 0.0, %v3421
    %v3423 = vpop.f32.mrf.mxu0
    %v3424 = vadd.f32 0.0, %v3423
    %v3425 = vpop.f32.mrf.mxu0
    %v3426 = vadd.f32 0.0, %v3425
    %3427 = vmatprep.mubr.bf16.mxu0 0
    %3428 = vmatmul.mubr.bf16.gmra.mxu0 %v438
    %v3429 = vpop.f32.mrf.mxu0
    %v3430 = vadd.f32 0.0, %v3429
    %v3431 = vpop.f32.mrf.mxu0
    %v3432 = vadd.f32 0.0, %v3431
    %v3433 = vpop.f32.mrf.mxu0
    %v3434 = vadd.f32 0.0, %v3433
    %v3435 = vpop.f32.mrf.mxu0
    %v3436 = vadd.f32 0.0, %v3435
    %3437 = vmatprep.mubr.bf16.mxu0 0
    %3438 = vmatmul.mubr.bf16.gmra.mxu0 %v441
    %v3439 = vpop.f32.mrf.mxu0
    %v3440 = vadd.f32 0.0, %v3439
    %v3441 = vpop.f32.mrf.mxu0
    %v3442 = vadd.f32 0.0, %v3441
    %v3443 = vpop.f32.mrf.mxu0
    %v3444 = vadd.f32 0.0, %v3443
    %v3445 = vpop.f32.mrf.mxu0
    %v3446 = vadd.f32 0.0, %v3445
    %3447 = vmatprep.mubr.bf16.mxu0 0
    %3448 = vmatmul.mubr.bf16.gmra.mxu0 %v444
    %v3449 = vpop.f32.mrf.mxu0
    %v3450 = vadd.f32 0.0, %v3449
    %v3451 = vpop.f32.mrf.mxu0
    %v3452 = vadd.f32 0.0, %v3451
    %v3453 = vpop.f32.mrf.mxu0
    %v3454 = vadd.f32 0.0, %v3453
    %v3455 = vpop.f32.mrf.mxu0
    %v3456 = vadd.f32 0.0, %v3455
    %3457 = vmatprep.mubr.bf16.mxu0 0
    %3458 = vmatmul.mubr.bf16.gmra.mxu0 %v447
    %v3459 = vpop.f32.mrf.mxu0
    %v3460 = vadd.f32 0.0, %v3459
    %v3461 = vpop.f32.mrf.mxu0
    %v3462 = vadd.f32 0.0, %v3461
    %v3463 = vpop.f32.mrf.mxu0
    %v3464 = vadd.f32 0.0, %v3463
    %v3465 = vpop.f32.mrf.mxu0
    %v3466 = vadd.f32 0.0, %v3465
    %3467 = vmatprep.mubr.bf16.mxu0 0
    %3468 = vmatmul.mubr.bf16.gmra.mxu0 %v450
    %v3469 = vpop.f32.mrf.mxu0
    %v3470 = vadd.f32 0.0, %v3469
    %v3471 = vpop.f32.mrf.mxu0
    %v3472 = vadd.f32 0.0, %v3471
    %v3473 = vpop.f32.mrf.mxu0
    %v3474 = vadd.f32 0.0, %v3473
    %v3475 = vpop.f32.mrf.mxu0
    %v3476 = vadd.f32 0.0, %v3475
    %3477 = vmatprep.mubr.bf16.mxu0 0
    %3478 = vmatmul.mubr.bf16.gmra.mxu0 %v453
    %v3479 = vpop.f32.mrf.mxu0
    %v3480 = vadd.f32 0.0, %v3479
    %v3481 = vpop.f32.mrf.mxu0
    %v3482 = vadd.f32 0.0, %v3481
    %v3483 = vpop.f32.mrf.mxu0
    %v3484 = vadd.f32 0.0, %v3483
    %v3485 = vpop.f32.mrf.mxu0
    %v3486 = vadd.f32 0.0, %v3485
    %3487 = vmatprep.mubr.bf16.mxu0 0
    %3488 = vmatmul.mubr.bf16.gmra.mxu0 %v456
    %v3489 = vpop.f32.mrf.mxu0
    %v3490 = vadd.f32 0.0, %v3489
    %v3491 = vpop.f32.mrf.mxu0
    %v3492 = vadd.f32 0.0, %v3491
    %v3493 = vpop.f32.mrf.mxu0
    %v3494 = vadd.f32 0.0, %v3493
    %v3495 = vpop.f32.mrf.mxu0
    %v3496 = vadd.f32 0.0, %v3495
    %3497 = vdwg.mxu0
    %v3506 = vunpack.c.l.b16 %v2807
    %v3507 = vunpack.c.h.b16 %v2807
    %v3508 = vunpack.c.l.b16 %v2808
    %v3509 = vunpack.c.h.b16 %v2808
    %v3510 = vunpack.c.l.b16 %v2809
    %v3511 = vunpack.c.h.b16 %v2809
    %v3512 = vunpack.c.l.b16 %v2810
    %v3513 = vunpack.c.h.b16 %v2810
    %v3514 = vunpack.c.l.b16 %v2811
    %v3515 = vunpack.c.h.b16 %v2811
    %v3516 = vunpack.c.l.b16 %v2812
    %v3517 = vunpack.c.h.b16 %v2812
    %v3518 = vunpack.c.l.b16 %v2813
    %v3519 = vunpack.c.h.b16 %v2813
    %v3520 = vunpack.c.l.b16 %v2814
    %v3521 = vunpack.c.h.b16 %v2814
    %v3522 = vpack.c.b16 %v3510, %v3506
    %v3523 = vpack.c.b16 %v3511, %v3507
    %v3524 = vpack.c.b16 %v3512, %v3508
    %v3525 = vpack.c.b16 %v3513, %v3509
    %v3526 = vpack.c.b16 %v3518, %v3514
    %v3527 = vpack.c.b16 %v3519, %v3515
    %v3528 = vpack.c.b16 %v3520, %v3516
    %v3529 = vpack.c.b16 %v3521, %v3517
    %v3535 = vsel %vm458, %v3526, 0
    %v3538 = vsel %vm458, %v3527, 0
    %v3541 = vsel %vm458, %v3528, 0
    %v3544 = vsel %vm458, %v3529, 0
    %3546 = vmatprep.subr.bf16.mxu0 0
    %3547 = vmatpush1.bf16.msra.mxu0 0
    %3548 = vmatprep.subr.bf16.mxu0 0
    %3549 = vmatpush1.bf16.msra.mxu0 0
    %3550 = vmatprep.subr.bf16.mxu0 0
    %3551 = vmatpush1.bf16.msra.mxu0 0
    %3552 = vmatprep.subr.bf16.mxu0 0
    %3553 = vmatpush1.bf16.msra.mxu0 0
    %3554 = vmatprep.subr.bf16.mxu0 0
    %3555 = vmatpush1.bf16.msra.mxu0 0
    %3556 = vmatprep.subr.bf16.mxu0 0
    %3557 = vmatpush1.bf16.msra.mxu0 0
    %3558 = vmatprep.subr.bf16.mxu0 %v3538
    %3559 = vmatpush1.bf16.msra.mxu0 %v3535
    %3560 = vmatprep.subr.bf16.mxu0 %v3523
    %3561 = vmatpush1.bf16.msra.mxu0 %v3522
    %3562 = vmatprep.subr.bf16.mxu0 0
    %3563 = vmatpush2.bf16.msra.mxu0 0
    %3564 = vmatprep.subr.bf16.mxu0 0
    %3565 = vmatpush2.bf16.msra.mxu0 0
    %3566 = vmatprep.subr.bf16.mxu0 0
    %3567 = vmatpush2.bf16.msra.mxu0 0
    %3568 = vmatprep.subr.bf16.mxu0 0
    %3569 = vmatpush2.bf16.msra.mxu0 0
    %3570 = vmatprep.subr.bf16.mxu0 0
    %3571 = vmatpush2.bf16.msra.mxu0 0
    %3572 = vmatprep.subr.bf16.mxu0 0
    %3573 = vmatpush2.bf16.msra.mxu0 0
    %3574 = vmatprep.subr.bf16.mxu0 0
    %3575 = vmatpush2.bf16.msra.mxu0 0
    %3576 = vmatprep.subr.bf16.mxu0 0
    %3577 = vmatpush2.bf16.msra.mxu0 0
    %3578 = vmatprep.mubr.bf16.mxu0 0
    %3579 = vmatmul.mubr.bf16.gmra.mxu0 %v1139
    %v3580 = vpop.f32.mrf.mxu0
    %v3581 = vadd.f32 %v2907, %v3580
    %v3582 = vpop.f32.mrf.mxu0
    %v3583 = vadd.f32 %v2909, %v3582
    %v3584 = vpop.f32.mrf.mxu0
    %v3585 = vadd.f32 %v2911, %v3584
    %v3586 = vpop.f32.mrf.mxu0
    %v3587 = vadd.f32 %v2913, %v3586
    %3588 = vmatprep.mubr.bf16.mxu0 0
    %3589 = vmatmul.mubr.bf16.gmra.mxu0 %v375
    %v3590 = vpop.f32.mrf.mxu0
    %v3591 = vadd.f32 %v2917, %v3590
    %v3592 = vpop.f32.mrf.mxu0
    %v3593 = vadd.f32 %v2919, %v3592
    %v3594 = vpop.f32.mrf.mxu0
    %v3595 = vadd.f32 %v2921, %v3594
    %v3596 = vpop.f32.mrf.mxu0
    %v3597 = vadd.f32 %v2923, %v3596
    %3598 = vmatprep.mubr.bf16.mxu0 0
    %3599 = vmatmul.mubr.bf16.gmra.mxu0 %v378
    %v3600 = vpop.f32.mrf.mxu0
    %v3601 = vadd.f32 %v2927, %v3600
    %v3602 = vpop.f32.mrf.mxu0
    %v3603 = vadd.f32 %v2929, %v3602
    %v3604 = vpop.f32.mrf.mxu0
    %v3605 = vadd.f32 %v2931, %v3604
    %v3606 = vpop.f32.mrf.mxu0
    %v3607 = vadd.f32 %v2933, %v3606
    %3608 = vmatprep.mubr.bf16.mxu0 0
    %3609 = vmatmul.mubr.bf16.gmra.mxu0 %v381
    %v3610 = vpop.f32.mrf.mxu0
    %v3611 = vadd.f32 %v2937, %v3610
    %v3612 = vpop.f32.mrf.mxu0
    %v3613 = vadd.f32 %v2939, %v3612
    %v3614 = vpop.f32.mrf.mxu0
    %v3615 = vadd.f32 %v2941, %v3614
    %v3616 = vpop.f32.mrf.mxu0
    %v3617 = vadd.f32 %v2943, %v3616
    %3618 = vmatprep.mubr.bf16.mxu0 0
    %3619 = vmatmul.mubr.bf16.gmra.mxu0 %v384
    %v3620 = vpop.f32.mrf.mxu0
    %v3621 = vadd.f32 %v2947, %v3620
    %v3622 = vpop.f32.mrf.mxu0
    %v3623 = vadd.f32 %v2949, %v3622
    %v3624 = vpop.f32.mrf.mxu0
    %v3625 = vadd.f32 %v2951, %v3624
    %v3626 = vpop.f32.mrf.mxu0
    %v3627 = vadd.f32 %v2953, %v3626
    %3628 = vmatprep.mubr.bf16.mxu0 0
    %3629 = vmatmul.mubr.bf16.gmra.mxu0 %v387
    %v3630 = vpop.f32.mrf.mxu0
    %v3631 = vadd.f32 %v2957, %v3630
    %v3632 = vpop.f32.mrf.mxu0
    %v3633 = vadd.f32 %v2959, %v3632
    %v3634 = vpop.f32.mrf.mxu0
    %v3635 = vadd.f32 %v2961, %v3634
    %v3636 = vpop.f32.mrf.mxu0
    %v3637 = vadd.f32 %v2963, %v3636
    %3638 = vmatprep.mubr.bf16.mxu0 0
    %3639 = vmatmul.mubr.bf16.gmra.mxu0 %v390
    %v3640 = vpop.f32.mrf.mxu0
    %v3641 = vadd.f32 %v2967, %v3640
    %v3642 = vpop.f32.mrf.mxu0
    %v3643 = vadd.f32 %v2969, %v3642
    %v3644 = vpop.f32.mrf.mxu0
    %v3645 = vadd.f32 %v2971, %v3644
    %v3646 = vpop.f32.mrf.mxu0
    %v3647 = vadd.f32 %v2973, %v3646
    %3648 = vmatprep.mubr.bf16.mxu0 0
    %3649 = vmatmul.mubr.bf16.gmra.mxu0 %v393
    %v3650 = vpop.f32.mrf.mxu0
    %v3651 = vadd.f32 %v2977, %v3650
    %v3652 = vpop.f32.mrf.mxu0
    %v3653 = vadd.f32 %v2979, %v3652
    %v3654 = vpop.f32.mrf.mxu0
    %v3655 = vadd.f32 %v2981, %v3654
    %v3656 = vpop.f32.mrf.mxu0
    %v3657 = vadd.f32 %v2983, %v3656
    %3658 = vmatprep.mubr.bf16.mxu0 0
    %3659 = vmatmul.mubr.bf16.gmra.mxu0 %v396
    %v3660 = vpop.f32.mrf.mxu0
    %v3661 = vadd.f32 %v2987, %v3660
    %v3662 = vpop.f32.mrf.mxu0
    %v3663 = vadd.f32 %v2989, %v3662
    %v3664 = vpop.f32.mrf.mxu0
    %v3665 = vadd.f32 %v2991, %v3664
    %v3666 = vpop.f32.mrf.mxu0
    %v3667 = vadd.f32 %v2993, %v3666
    %3668 = vmatprep.mubr.bf16.mxu0 0
    %3669 = vmatmul.mubr.bf16.gmra.mxu0 %v399
    %v3670 = vpop.f32.mrf.mxu0
    %v3671 = vadd.f32 %v2997, %v3670
    %v3672 = vpop.f32.mrf.mxu0
    %v3673 = vadd.f32 %v2999, %v3672
    %v3674 = vpop.f32.mrf.mxu0
    %v3675 = vadd.f32 %v3001, %v3674
    %v3676 = vpop.f32.mrf.mxu0
    %v3677 = vadd.f32 %v3003, %v3676
    %3678 = vmatprep.mubr.bf16.mxu0 0
    %3679 = vmatmul.mubr.bf16.gmra.mxu0 %v402
    %v3680 = vpop.f32.mrf.mxu0
    %v3681 = vadd.f32 %v3007, %v3680
    %v3682 = vpop.f32.mrf.mxu0
    %v3683 = vadd.f32 %v3009, %v3682
    %v3684 = vpop.f32.mrf.mxu0
    %v3685 = vadd.f32 %v3011, %v3684
    %v3686 = vpop.f32.mrf.mxu0
    %v3687 = vadd.f32 %v3013, %v3686
    %3688 = vmatprep.mubr.bf16.mxu0 0
    %3689 = vmatmul.mubr.bf16.gmra.mxu0 %v405
    %v3690 = vpop.f32.mrf.mxu0
    %v3691 = vadd.f32 %v3017, %v3690
    %v3692 = vpop.f32.mrf.mxu0
    %v3693 = vadd.f32 %v3019, %v3692
    %v3694 = vpop.f32.mrf.mxu0
    %v3695 = vadd.f32 %v3021, %v3694
    %v3696 = vpop.f32.mrf.mxu0
    %v3697 = vadd.f32 %v3023, %v3696
    %3698 = vmatprep.mubr.bf16.mxu0 0
    %3699 = vmatmul.mubr.bf16.gmra.mxu0 %v408
    %v3700 = vpop.f32.mrf.mxu0
    %v3701 = vadd.f32 %v3027, %v3700
    %v3702 = vpop.f32.mrf.mxu0
    %v3703 = vadd.f32 %v3029, %v3702
    %v3704 = vpop.f32.mrf.mxu0
    %v3705 = vadd.f32 %v3031, %v3704
    %v3706 = vpop.f32.mrf.mxu0
    %v3707 = vadd.f32 %v3033, %v3706
    %3708 = vmatprep.mubr.bf16.mxu0 0
    %3709 = vmatmul.mubr.bf16.gmra.mxu0 %v411
    %v3710 = vpop.f32.mrf.mxu0
    %v3711 = vadd.f32 %v3037, %v3710
    %v3712 = vpop.f32.mrf.mxu0
    %v3713 = vadd.f32 %v3039, %v3712
    %v3714 = vpop.f32.mrf.mxu0
    %v3715 = vadd.f32 %v3041, %v3714
    %v3716 = vpop.f32.mrf.mxu0
    %v3717 = vadd.f32 %v3043, %v3716
    %3718 = vmatprep.mubr.bf16.mxu0 0
    %3719 = vmatmul.mubr.bf16.gmra.mxu0 %v414
    %v3720 = vpop.f32.mrf.mxu0
    %v3721 = vadd.f32 %v3047, %v3720
    %v3722 = vpop.f32.mrf.mxu0
    %v3723 = vadd.f32 %v3049, %v3722
    %v3724 = vpop.f32.mrf.mxu0
    %v3725 = vadd.f32 %v3051, %v3724
    %v3726 = vpop.f32.mrf.mxu0
    %v3727 = vadd.f32 %v3053, %v3726
    %3728 = vmatprep.mubr.bf16.mxu0 0
    %3729 = vmatmul.mubr.bf16.gmra.mxu0 %v417
    %v3730 = vpop.f32.mrf.mxu0
    %v3731 = vadd.f32 %v3057, %v3730
    %v3732 = vpop.f32.mrf.mxu0
    %v3733 = vadd.f32 %v3059, %v3732
    %v3734 = vpop.f32.mrf.mxu0
    %v3735 = vadd.f32 %v3061, %v3734
    %v3736 = vpop.f32.mrf.mxu0
    %v3737 = vadd.f32 %v3063, %v3736
    %3738 = vmatprep.mubr.bf16.mxu0 0
    %3739 = vmatmul.mubr.bf16.gmra.mxu0 %v420
    %v3740 = vpop.f32.mrf.mxu0
    %v3741 = vadd.f32 %v3067, %v3740
    %v3742 = vpop.f32.mrf.mxu0
    %v3743 = vadd.f32 %v3069, %v3742
    %v3744 = vpop.f32.mrf.mxu0
    %v3745 = vadd.f32 %v3071, %v3744
    %v3746 = vpop.f32.mrf.mxu0
    %v3747 = vadd.f32 %v3073, %v3746
    %3748 = vmatprep.mubr.bf16.mxu0 0
    %3749 = vmatmul.mubr.bf16.gmra.mxu0 %v423
    %v3750 = vpop.f32.mrf.mxu0
    %v3751 = vadd.f32 %v3077, %v3750
    %v3752 = vpop.f32.mrf.mxu0
    %v3753 = vadd.f32 %v3079, %v3752
    %v3754 = vpop.f32.mrf.mxu0
    %v3755 = vadd.f32 %v3081, %v3754
    %v3756 = vpop.f32.mrf.mxu0
    %v3757 = vadd.f32 %v3083, %v3756
    %3758 = vmatprep.mubr.bf16.mxu0 0
    %3759 = vmatmul.mubr.bf16.gmra.mxu0 %v426
    %v3760 = vpop.f32.mrf.mxu0
    %v3761 = vadd.f32 %v3087, %v3760
    %v3762 = vpop.f32.mrf.mxu0
    %v3763 = vadd.f32 %v3089, %v3762
    %v3764 = vpop.f32.mrf.mxu0
    %v3765 = vadd.f32 %v3091, %v3764
    %v3766 = vpop.f32.mrf.mxu0
    %v3767 = vadd.f32 %v3093, %v3766
    %3768 = vmatprep.mubr.bf16.mxu0 0
    %3769 = vmatmul.mubr.bf16.gmra.mxu0 %v429
    %v3770 = vpop.f32.mrf.mxu0
    %v3771 = vadd.f32 %v3097, %v3770
    %v3772 = vpop.f32.mrf.mxu0
    %v3773 = vadd.f32 %v3099, %v3772
    %v3774 = vpop.f32.mrf.mxu0
    %v3775 = vadd.f32 %v3101, %v3774
    %v3776 = vpop.f32.mrf.mxu0
    %v3777 = vadd.f32 %v3103, %v3776
    %3778 = vmatprep.mubr.bf16.mxu0 0
    %3779 = vmatmul.mubr.bf16.gmra.mxu0 %v432
    %v3780 = vpop.f32.mrf.mxu0
    %v3781 = vadd.f32 %v3107, %v3780
    %v3782 = vpop.f32.mrf.mxu0
    %v3783 = vadd.f32 %v3109, %v3782
    %v3784 = vpop.f32.mrf.mxu0
    %v3785 = vadd.f32 %v3111, %v3784
    %v3786 = vpop.f32.mrf.mxu0
    %v3787 = vadd.f32 %v3113, %v3786
    %3788 = vmatprep.mubr.bf16.mxu0 0
    %3789 = vmatmul.mubr.bf16.gmra.mxu0 %v435
    %v3790 = vpop.f32.mrf.mxu0
    %v3791 = vadd.f32 %v3117, %v3790
    %v3792 = vpop.f32.mrf.mxu0
    %v3793 = vadd.f32 %v3119, %v3792
    %v3794 = vpop.f32.mrf.mxu0
    %v3795 = vadd.f32 %v3121, %v3794
    %v3796 = vpop.f32.mrf.mxu0
    %v3797 = vadd.f32 %v3123, %v3796
    %3798 = vmatprep.mubr.bf16.mxu0 0
    %3799 = vmatmul.mubr.bf16.gmra.mxu0 %v438
    %v3800 = vpop.f32.mrf.mxu0
    %v3801 = vadd.f32 %v3127, %v3800
    %v3802 = vpop.f32.mrf.mxu0
    %v3803 = vadd.f32 %v3129, %v3802
    %v3804 = vpop.f32.mrf.mxu0
    %v3805 = vadd.f32 %v3131, %v3804
    %v3806 = vpop.f32.mrf.mxu0
    %v3807 = vadd.f32 %v3133, %v3806
    %3808 = vmatprep.mubr.bf16.mxu0 0
    %3809 = vmatmul.mubr.bf16.gmra.mxu0 %v441
    %v3810 = vpop.f32.mrf.mxu0
    %v3811 = vadd.f32 %v3137, %v3810
    %v3812 = vpop.f32.mrf.mxu0
    %v3813 = vadd.f32 %v3139, %v3812
    %v3814 = vpop.f32.mrf.mxu0
    %v3815 = vadd.f32 %v3141, %v3814
    %v3816 = vpop.f32.mrf.mxu0
    %v3817 = vadd.f32 %v3143, %v3816
    %3818 = vmatprep.mubr.bf16.mxu0 0
    %3819 = vmatmul.mubr.bf16.gmra.mxu0 %v444
    %v3820 = vpop.f32.mrf.mxu0
    %v3821 = vadd.f32 %v3147, %v3820
    %v3822 = vpop.f32.mrf.mxu0
    %v3823 = vadd.f32 %v3149, %v3822
    %v3824 = vpop.f32.mrf.mxu0
    %v3825 = vadd.f32 %v3151, %v3824
    %v3826 = vpop.f32.mrf.mxu0
    %v3827 = vadd.f32 %v3153, %v3826
    %3828 = vmatprep.mubr.bf16.mxu0 0
    %3829 = vmatmul.mubr.bf16.gmra.mxu0 %v447
    %v3830 = vpop.f32.mrf.mxu0
    %v3831 = vadd.f32 %v3157, %v3830
    %v3832 = vpop.f32.mrf.mxu0
    %v3833 = vadd.f32 %v3159, %v3832
    %v3834 = vpop.f32.mrf.mxu0
    %v3835 = vadd.f32 %v3161, %v3834
    %v3836 = vpop.f32.mrf.mxu0
    %v3837 = vadd.f32 %v3163, %v3836
    %3838 = vmatprep.mubr.bf16.mxu0 0
    %3839 = vmatmul.mubr.bf16.gmra.mxu0 %v450
    %v3840 = vpop.f32.mrf.mxu0
    %v3841 = vadd.f32 %v3167, %v3840
    %v3842 = vpop.f32.mrf.mxu0
    %v3843 = vadd.f32 %v3169, %v3842
    %v3844 = vpop.f32.mrf.mxu0
    %v3845 = vadd.f32 %v3171, %v3844
    %v3846 = vpop.f32.mrf.mxu0
    %v3847 = vadd.f32 %v3173, %v3846
    %3848 = vmatprep.mubr.bf16.mxu0 0
    %3849 = vmatmul.mubr.bf16.gmra.mxu0 %v453
    %v3850 = vpop.f32.mrf.mxu0
    %v3851 = vadd.f32 %v3177, %v3850
    %v3852 = vpop.f32.mrf.mxu0
    %v3853 = vadd.f32 %v3179, %v3852
    %v3854 = vpop.f32.mrf.mxu0
    %v3855 = vadd.f32 %v3181, %v3854
    %v3856 = vpop.f32.mrf.mxu0
    %v3857 = vadd.f32 %v3183, %v3856
    %3858 = vdwg.mxu0
    %3859 = vmatprep.subr.bf16.mxu0 0
    %3860 = vmatpush1.bf16.msra.mxu0 0
    %3861 = vmatprep.subr.bf16.mxu0 0
    %3862 = vmatpush1.bf16.msra.mxu0 0
    %3863 = vmatprep.subr.bf16.mxu0 0
    %3864 = vmatpush1.bf16.msra.mxu0 0
    %3865 = vmatprep.subr.bf16.mxu0 0
    %3866 = vmatpush1.bf16.msra.mxu0 0
    %3867 = vmatprep.subr.bf16.mxu0 0
    %3868 = vmatpush1.bf16.msra.mxu0 0
    %3869 = vmatprep.subr.bf16.mxu0 0
    %3870 = vmatpush1.bf16.msra.mxu0 0
    %3871 = vmatprep.subr.bf16.mxu0 %v3544
    %3872 = vmatpush1.bf16.msra.mxu0 %v3541
    %3873 = vmatprep.subr.bf16.mxu0 %v3525
    %3874 = vmatpush1.bf16.msra.mxu0 %v3524
    %3875 = vmatprep.subr.bf16.mxu0 0
    %3876 = vmatpush2.bf16.msra.mxu0 0
    %3877 = vmatprep.subr.bf16.mxu0 0
    %3878 = vmatpush2.bf16.msra.mxu0 0
    %3879 = vmatprep.subr.bf16.mxu0 0
    %3880 = vmatpush2.bf16.msra.mxu0 0
    %3881 = vmatprep.subr.bf16.mxu0 0
    %3882 = vmatpush2.bf16.msra.mxu0 0
    %3883 = vmatprep.subr.bf16.mxu0 0
    %3884 = vmatpush2.bf16.msra.mxu0 0
    %3885 = vmatprep.subr.bf16.mxu0 0
    %3886 = vmatpush2.bf16.msra.mxu0 0
    %3887 = vmatprep.subr.bf16.mxu0 0
    %3888 = vmatpush2.bf16.msra.mxu0 0
    %3889 = vmatprep.subr.bf16.mxu0 0
    %3890 = vmatpush2.bf16.msra.mxu0 0
    %3891 = vmatprep.mubr.bf16.mxu0 0
    %3892 = vmatmul.mubr.bf16.gmra.mxu0 %v1139
    %v3893 = vpop.f32.mrf.mxu0
    %v3894 = vadd.f32 %v3220, %v3893
    %v3895 = vpop.f32.mrf.mxu0
    %v3896 = vadd.f32 %v3222, %v3895
    %v3897 = vpop.f32.mrf.mxu0
    %v3898 = vadd.f32 %v3224, %v3897
    %v3899 = vpop.f32.mrf.mxu0
    %v3900 = vadd.f32 %v3226, %v3899
    %3901 = vmatprep.mubr.bf16.mxu0 0
    %3902 = vmatmul.mubr.bf16.gmra.mxu0 %v375
    %v3903 = vpop.f32.mrf.mxu0
    %v3904 = vadd.f32 %v3230, %v3903
    %v3905 = vpop.f32.mrf.mxu0
    %v3906 = vadd.f32 %v3232, %v3905
    %v3907 = vpop.f32.mrf.mxu0
    %v3908 = vadd.f32 %v3234, %v3907
    %v3909 = vpop.f32.mrf.mxu0
    %v3910 = vadd.f32 %v3236, %v3909
    %3911 = vmatprep.mubr.bf16.mxu0 0
    %3912 = vmatmul.mubr.bf16.gmra.mxu0 %v378
    %v3913 = vpop.f32.mrf.mxu0
    %v3914 = vadd.f32 %v3240, %v3913
    %v3915 = vpop.f32.mrf.mxu0
    %v3916 = vadd.f32 %v3242, %v3915
    %v3917 = vpop.f32.mrf.mxu0
    %v3918 = vadd.f32 %v3244, %v3917
    %v3919 = vpop.f32.mrf.mxu0
    %v3920 = vadd.f32 %v3246, %v3919
    %3921 = vmatprep.mubr.bf16.mxu0 0
    %3922 = vmatmul.mubr.bf16.gmra.mxu0 %v381
    %v3923 = vpop.f32.mrf.mxu0
    %v3924 = vadd.f32 %v3250, %v3923
    %v3925 = vpop.f32.mrf.mxu0
    %v3926 = vadd.f32 %v3252, %v3925
    %v3927 = vpop.f32.mrf.mxu0
    %v3928 = vadd.f32 %v3254, %v3927
    %v3929 = vpop.f32.mrf.mxu0
    %v3930 = vadd.f32 %v3256, %v3929
    %3931 = vmatprep.mubr.bf16.mxu0 0
    %3932 = vmatmul.mubr.bf16.gmra.mxu0 %v384
    %v3933 = vpop.f32.mrf.mxu0
    %v3934 = vadd.f32 %v3260, %v3933
    %v3935 = vpop.f32.mrf.mxu0
    %v3936 = vadd.f32 %v3262, %v3935
    %v3937 = vpop.f32.mrf.mxu0
    %v3938 = vadd.f32 %v3264, %v3937
    %v3939 = vpop.f32.mrf.mxu0
    %v3940 = vadd.f32 %v3266, %v3939
    %3941 = vmatprep.mubr.bf16.mxu0 0
    %3942 = vmatmul.mubr.bf16.gmra.mxu0 %v387
    %v3943 = vpop.f32.mrf.mxu0
    %v3944 = vadd.f32 %v3270, %v3943
    %v3945 = vpop.f32.mrf.mxu0
    %v3946 = vadd.f32 %v3272, %v3945
    %v3947 = vpop.f32.mrf.mxu0
    %v3948 = vadd.f32 %v3274, %v3947
    %v3949 = vpop.f32.mrf.mxu0
    %v3950 = vadd.f32 %v3276, %v3949
    %3951 = vmatprep.mubr.bf16.mxu0 0
    %3952 = vmatmul.mubr.bf16.gmra.mxu0 %v390
    %v3953 = vpop.f32.mrf.mxu0
    %v3954 = vadd.f32 %v3280, %v3953
    %v3955 = vpop.f32.mrf.mxu0
    %v3956 = vadd.f32 %v3282, %v3955
    %v3957 = vpop.f32.mrf.mxu0
    %v3958 = vadd.f32 %v3284, %v3957
    %v3959 = vpop.f32.mrf.mxu0
    %v3960 = vadd.f32 %v3286, %v3959
    %3961 = vmatprep.mubr.bf16.mxu0 0
    %3962 = vmatmul.mubr.bf16.gmra.mxu0 %v393
    %v3963 = vpop.f32.mrf.mxu0
    %v3964 = vadd.f32 %v3290, %v3963
    %v3965 = vpop.f32.mrf.mxu0
    %v3966 = vadd.f32 %v3292, %v3965
    %v3967 = vpop.f32.mrf.mxu0
    %v3968 = vadd.f32 %v3294, %v3967
    %v3969 = vpop.f32.mrf.mxu0
    %v3970 = vadd.f32 %v3296, %v3969
    %3971 = vmatprep.mubr.bf16.mxu0 0
    %3972 = vmatmul.mubr.bf16.gmra.mxu0 %v396
    %v3973 = vpop.f32.mrf.mxu0
    %v3974 = vadd.f32 %v3300, %v3973
    %v3975 = vpop.f32.mrf.mxu0
    %v3976 = vadd.f32 %v3302, %v3975
    %v3977 = vpop.f32.mrf.mxu0
    %v3978 = vadd.f32 %v3304, %v3977
    %v3979 = vpop.f32.mrf.mxu0
    %v3980 = vadd.f32 %v3306, %v3979
    %3981 = vmatprep.mubr.bf16.mxu0 0
    %3982 = vmatmul.mubr.bf16.gmra.mxu0 %v399
    %v3983 = vpop.f32.mrf.mxu0
    %v3984 = vadd.f32 %v3310, %v3983
    %v3985 = vpop.f32.mrf.mxu0
    %v3986 = vadd.f32 %v3312, %v3985
    %v3987 = vpop.f32.mrf.mxu0
    %v3988 = vadd.f32 %v3314, %v3987
    %v3989 = vpop.f32.mrf.mxu0
    %v3990 = vadd.f32 %v3316, %v3989
    %3991 = vmatprep.mubr.bf16.mxu0 0
    %3992 = vmatmul.mubr.bf16.gmra.mxu0 %v402
    %v3993 = vpop.f32.mrf.mxu0
    %v3994 = vadd.f32 %v3320, %v3993
    %v3995 = vpop.f32.mrf.mxu0
    %v3996 = vadd.f32 %v3322, %v3995
    %v3997 = vpop.f32.mrf.mxu0
    %v3998 = vadd.f32 %v3324, %v3997
    %v3999 = vpop.f32.mrf.mxu0
    %v4000 = vadd.f32 %v3326, %v3999
    %4001 = vmatprep.mubr.bf16.mxu0 0
    %4002 = vmatmul.mubr.bf16.gmra.mxu0 %v405
    %v4003 = vpop.f32.mrf.mxu0
    %v4004 = vadd.f32 %v3330, %v4003
    %v4005 = vpop.f32.mrf.mxu0
    %v4006 = vadd.f32 %v3332, %v4005
    %v4007 = vpop.f32.mrf.mxu0
    %v4008 = vadd.f32 %v3334, %v4007
    %v4009 = vpop.f32.mrf.mxu0
    %v4010 = vadd.f32 %v3336, %v4009
    %4011 = vmatprep.mubr.bf16.mxu0 0
    %4012 = vmatmul.mubr.bf16.gmra.mxu0 %v408
    %v4013 = vpop.f32.mrf.mxu0
    %v4014 = vadd.f32 %v3340, %v4013
    %v4015 = vpop.f32.mrf.mxu0
    %v4016 = vadd.f32 %v3342, %v4015
    %v4017 = vpop.f32.mrf.mxu0
    %v4018 = vadd.f32 %v3344, %v4017
    %v4019 = vpop.f32.mrf.mxu0
    %v4020 = vadd.f32 %v3346, %v4019
    %4021 = vmatprep.mubr.bf16.mxu0 0
    %4022 = vmatmul.mubr.bf16.gmra.mxu0 %v411
    %v4023 = vpop.f32.mrf.mxu0
    %v4024 = vadd.f32 %v3350, %v4023
    %v4025 = vpop.f32.mrf.mxu0
    %v4026 = vadd.f32 %v3352, %v4025
    %v4027 = vpop.f32.mrf.mxu0
    %v4028 = vadd.f32 %v3354, %v4027
    %v4029 = vpop.f32.mrf.mxu0
    %v4030 = vadd.f32 %v3356, %v4029
    %4031 = vmatprep.mubr.bf16.mxu0 0
    %4032 = vmatmul.mubr.bf16.gmra.mxu0 %v414
    %v4033 = vpop.f32.mrf.mxu0
    %v4034 = vadd.f32 %v3360, %v4033
    %v4035 = vpop.f32.mrf.mxu0
    %v4036 = vadd.f32 %v3362, %v4035
    %v4037 = vpop.f32.mrf.mxu0
    %v4038 = vadd.f32 %v3364, %v4037
    %v4039 = vpop.f32.mrf.mxu0
    %v4040 = vadd.f32 %v3366, %v4039
    %4041 = vmatprep.mubr.bf16.mxu0 0
    %4042 = vmatmul.mubr.bf16.gmra.mxu0 %v417
    %v4043 = vpop.f32.mrf.mxu0
    %v4044 = vadd.f32 %v3370, %v4043
    %v4045 = vpop.f32.mrf.mxu0
    %v4046 = vadd.f32 %v3372, %v4045
    %v4047 = vpop.f32.mrf.mxu0
    %v4048 = vadd.f32 %v3374, %v4047
    %v4049 = vpop.f32.mrf.mxu0
    %v4050 = vadd.f32 %v3376, %v4049
    %4051 = vmatprep.mubr.bf16.mxu0 0
    %4052 = vmatmul.mubr.bf16.gmra.mxu0 %v420
    %v4053 = vpop.f32.mrf.mxu0
    %v4054 = vadd.f32 %v3380, %v4053
    %v4055 = vpop.f32.mrf.mxu0
    %v4056 = vadd.f32 %v3382, %v4055
    %v4057 = vpop.f32.mrf.mxu0
    %v4058 = vadd.f32 %v3384, %v4057
    %v4059 = vpop.f32.mrf.mxu0
    %v4060 = vadd.f32 %v3386, %v4059
    %4061 = vmatprep.mubr.bf16.mxu0 0
    %4062 = vmatmul.mubr.bf16.gmra.mxu0 %v423
    %v4063 = vpop.f32.mrf.mxu0
    %v4064 = vadd.f32 %v3390, %v4063
    %v4065 = vpop.f32.mrf.mxu0
    %v4066 = vadd.f32 %v3392, %v4065
    %v4067 = vpop.f32.mrf.mxu0
    %v4068 = vadd.f32 %v3394, %v4067
    %v4069 = vpop.f32.mrf.mxu0
    %v4070 = vadd.f32 %v3396, %v4069
    %4071 = vmatprep.mubr.bf16.mxu0 0
    %4072 = vmatmul.mubr.bf16.gmra.mxu0 %v426
    %v4073 = vpop.f32.mrf.mxu0
    %v4074 = vadd.f32 %v3400, %v4073
    %v4075 = vpop.f32.mrf.mxu0
    %v4076 = vadd.f32 %v3402, %v4075
    %v4077 = vpop.f32.mrf.mxu0
    %v4078 = vadd.f32 %v3404, %v4077
    %v4079 = vpop.f32.mrf.mxu0
    %v4080 = vadd.f32 %v3406, %v4079
    %4081 = vmatprep.mubr.bf16.mxu0 0
    %4082 = vmatmul.mubr.bf16.gmra.mxu0 %v429
    %v4083 = vpop.f32.mrf.mxu0
    %v4084 = vadd.f32 %v3410, %v4083
    %v4085 = vpop.f32.mrf.mxu0
    %v4086 = vadd.f32 %v3412, %v4085
    %v4087 = vpop.f32.mrf.mxu0
    %v4088 = vadd.f32 %v3414, %v4087
    %v4089 = vpop.f32.mrf.mxu0
    %v4090 = vadd.f32 %v3416, %v4089
    %4091 = vmatprep.mubr.bf16.mxu0 0
    %4092 = vmatmul.mubr.bf16.gmra.mxu0 %v432
    %v4093 = vpop.f32.mrf.mxu0
    %v4094 = vadd.f32 %v3420, %v4093
    %v4095 = vpop.f32.mrf.mxu0
    %v4096 = vadd.f32 %v3422, %v4095
    %v4097 = vpop.f32.mrf.mxu0
    %v4098 = vadd.f32 %v3424, %v4097
    %v4099 = vpop.f32.mrf.mxu0
    %v4100 = vadd.f32 %v3426, %v4099
    %4101 = vmatprep.mubr.bf16.mxu0 0
    %4102 = vmatmul.mubr.bf16.gmra.mxu0 %v435
    %v4103 = vpop.f32.mrf.mxu0
    %v4104 = vadd.f32 %v3430, %v4103
    %v4105 = vpop.f32.mrf.mxu0
    %v4106 = vadd.f32 %v3432, %v4105
    %v4107 = vpop.f32.mrf.mxu0
    %v4108 = vadd.f32 %v3434, %v4107
    %v4109 = vpop.f32.mrf.mxu0
    %v4110 = vadd.f32 %v3436, %v4109
    %4111 = vmatprep.mubr.bf16.mxu0 0
    %4112 = vmatmul.mubr.bf16.gmra.mxu0 %v438
    %v4113 = vpop.f32.mrf.mxu0
    %v4114 = vadd.f32 %v3440, %v4113
    %v4115 = vpop.f32.mrf.mxu0
    %v4116 = vadd.f32 %v3442, %v4115
    %v4117 = vpop.f32.mrf.mxu0
    %v4118 = vadd.f32 %v3444, %v4117
    %v4119 = vpop.f32.mrf.mxu0
    %v4120 = vadd.f32 %v3446, %v4119
    %4121 = vmatprep.mubr.bf16.mxu0 0
    %4122 = vmatmul.mubr.bf16.gmra.mxu0 %v441
    %v4123 = vpop.f32.mrf.mxu0
    %v4124 = vadd.f32 %v3450, %v4123
    %v4125 = vpop.f32.mrf.mxu0
    %v4126 = vadd.f32 %v3452, %v4125
    %v4127 = vpop.f32.mrf.mxu0
    %v4128 = vadd.f32 %v3454, %v4127
    %v4129 = vpop.f32.mrf.mxu0
    %v4130 = vadd.f32 %v3456, %v4129
    %4131 = vmatprep.mubr.bf16.mxu0 0
    %4132 = vmatmul.mubr.bf16.gmra.mxu0 %v444
    %v4133 = vpop.f32.mrf.mxu0
    %v4134 = vadd.f32 %v3460, %v4133
    %v4135 = vpop.f32.mrf.mxu0
    %v4136 = vadd.f32 %v3462, %v4135
    %v4137 = vpop.f32.mrf.mxu0
    %v4138 = vadd.f32 %v3464, %v4137
    %v4139 = vpop.f32.mrf.mxu0
    %v4140 = vadd.f32 %v3466, %v4139
    %4141 = vmatprep.mubr.bf16.mxu0 0
    %4142 = vmatmul.mubr.bf16.gmra.mxu0 %v447
    %v4143 = vpop.f32.mrf.mxu0
    %v4144 = vadd.f32 %v3470, %v4143
    %v4145 = vpop.f32.mrf.mxu0
    %v4146 = vadd.f32 %v3472, %v4145
    %v4147 = vpop.f32.mrf.mxu0
    %v4148 = vadd.f32 %v3474, %v4147
    %v4149 = vpop.f32.mrf.mxu0
    %v4150 = vadd.f32 %v3476, %v4149
    %4151 = vmatprep.mubr.bf16.mxu0 0
    %4152 = vmatmul.mubr.bf16.gmra.mxu0 %v450
    %v4153 = vpop.f32.mrf.mxu0
    %v4154 = vadd.f32 %v3480, %v4153
    %v4155 = vpop.f32.mrf.mxu0
    %v4156 = vadd.f32 %v3482, %v4155
    %v4157 = vpop.f32.mrf.mxu0
    %v4158 = vadd.f32 %v3484, %v4157
    %v4159 = vpop.f32.mrf.mxu0
    %v4160 = vadd.f32 %v3486, %v4159
    %4161 = vmatprep.mubr.bf16.mxu0 0
    %4162 = vmatmul.mubr.bf16.gmra.mxu0 %v453
    %v4163 = vpop.f32.mrf.mxu0
    %v4164 = vadd.f32 %v3490, %v4163
    %v4165 = vpop.f32.mrf.mxu0
    %v4166 = vadd.f32 %v3492, %v4165
    %v4167 = vpop.f32.mrf.mxu0
    %v4168 = vadd.f32 %v3494, %v4167
    %v4169 = vpop.f32.mrf.mxu0
    %v4170 = vadd.f32 %v3496, %v4169
    %4171 = vdwg.mxu0
    %s4172 = scalar_lea.vmem [#allocation2], 320
    %v4173 = vld [vmem:[%s4172] sm:$0xff]
    %v4174 = vld [vmem:[%s4172 + $0x8] sm:$0xff]
    %v4175 = vld [vmem:[%s4172 + $0x10] sm:$0xff]
    %v4176 = vld [vmem:[%s4172 + $0x18] sm:$0xff]
    %v4177 = vld [vmem:[%s4172 + $0x20] sm:$0xff]
    %v4178 = vld [vmem:[%s4172 + $0x28] sm:$0xff]
    %v4179 = vld [vmem:[%s4172 + $0x30] sm:$0x77]
    %v4180 = vld [vmem:[%s4172 + $0x38] sm:$0x77]
    %v4189 = vunpack.c.l.b16 %v4173
    %v4190 = vunpack.c.h.b16 %v4173
    %v4191 = vunpack.c.l.b16 %v4174
    %v4192 = vunpack.c.h.b16 %v4174
    %v4193 = vunpack.c.l.b16 %v4175
    %v4194 = vunpack.c.h.b16 %v4175
    %v4195 = vunpack.c.l.b16 %v4176
    %v4196 = vunpack.c.h.b16 %v4176
    %v4197 = vunpack.c.l.b16 %v4177
    %v4198 = vunpack.c.h.b16 %v4177
    %v4199 = vunpack.c.l.b16 %v4178
    %v4200 = vunpack.c.h.b16 %v4178
    %v4201 = vunpack.c.l.b16 %v4179
    %v4202 = vunpack.c.h.b16 %v4179
    %v4203 = vunpack.c.l.b16 %v4180
    %v4204 = vunpack.c.h.b16 %v4180
    %v4205 = vpack.c.b16 %v4193, %v4189
    %v4206 = vpack.c.b16 %v4194, %v4190
    %v4207 = vpack.c.b16 %v4195, %v4191
    %v4208 = vpack.c.b16 %v4196, %v4192
    %v4209 = vpack.c.b16 %v4201, %v4197
    %v4210 = vpack.c.b16 %v4202, %v4198
    %v4211 = vpack.c.b16 %v4203, %v4199
    %v4212 = vpack.c.b16 %v4204, %v4200
    %v4218 = vsel %vm458, %v4209, 0
    %v4221 = vsel %vm458, %v4210, 0
    %v4224 = vsel %vm458, %v4211, 0
    %v4227 = vsel %vm458, %v4212, 0
    %4229 = vmatprep.subr.bf16.mxu0 0
    %4230 = vmatpush1.bf16.msra.mxu0 0
    %4231 = vmatprep.subr.bf16.mxu0 0
    %4232 = vmatpush1.bf16.msra.mxu0 0
    %4233 = vmatprep.subr.bf16.mxu0 0
    %4234 = vmatpush1.bf16.msra.mxu0 0
    %4235 = vmatprep.subr.bf16.mxu0 0
    %4236 = vmatpush1.bf16.msra.mxu0 0
    %4237 = vmatprep.subr.bf16.mxu0 0
    %4238 = vmatpush1.bf16.msra.mxu0 0
    %4239 = vmatprep.subr.bf16.mxu0 0
    %4240 = vmatpush1.bf16.msra.mxu0 0
    %4241 = vmatprep.subr.bf16.mxu0 %v4221
    %4242 = vmatpush1.bf16.msra.mxu0 %v4218
    %4243 = vmatprep.subr.bf16.mxu0 %v4206
    %4244 = vmatpush1.bf16.msra.mxu0 %v4205
    %4245 = vmatprep.subr.bf16.mxu0 0
    %4246 = vmatpush2.bf16.msra.mxu0 0
    %4247 = vmatprep.subr.bf16.mxu0 0
    %4248 = vmatpush2.bf16.msra.mxu0 0
    %4249 = vmatprep.subr.bf16.mxu0 0
    %4250 = vmatpush2.bf16.msra.mxu0 0
    %4251 = vmatprep.subr.bf16.mxu0 0
    %4252 = vmatpush2.bf16.msra.mxu0 0
    %4253 = vmatprep.subr.bf16.mxu0 0
    %4254 = vmatpush2.bf16.msra.mxu0 0
    %4255 = vmatprep.subr.bf16.mxu0 0
    %4256 = vmatpush2.bf16.msra.mxu0 0
    %4257 = vmatprep.subr.bf16.mxu0 0
    %4258 = vmatpush2.bf16.msra.mxu0 0
    %4259 = vmatprep.subr.bf16.mxu0 0
    %4260 = vmatpush2.bf16.msra.mxu0 0
    %4261 = vmatprep.mubr.bf16.mxu0 0
    %4262 = vmatmul.mubr.bf16.gmra.mxu0 %v378
    %v4263 = vpop.f32.mrf.mxu0
    %v4264 = vadd.f32 0.0, %v4263
    %v4265 = vpop.f32.mrf.mxu0
    %v4266 = vadd.f32 0.0, %v4265
    %v4267 = vpop.f32.mrf.mxu0
    %v4268 = vadd.f32 0.0, %v4267
    %v4269 = vpop.f32.mrf.mxu0
    %v4270 = vadd.f32 0.0, %v4269
    %4271 = vmatprep.mubr.bf16.mxu0 0
    %4272 = vmatmul.mubr.bf16.gmra.mxu0 %v381
    %v4273 = vpop.f32.mrf.mxu0
    %v4274 = vadd.f32 0.0, %v4273
    %v4275 = vpop.f32.mrf.mxu0
    %v4276 = vadd.f32 0.0, %v4275
    %v4277 = vpop.f32.mrf.mxu0
    %v4278 = vadd.f32 0.0, %v4277
    %v4279 = vpop.f32.mrf.mxu0
    %v4280 = vadd.f32 0.0, %v4279
    %4281 = vmatprep.mubr.bf16.mxu0 0
    %4282 = vmatmul.mubr.bf16.gmra.mxu0 %v384
    %v4283 = vpop.f32.mrf.mxu0
    %v4284 = vadd.f32 0.0, %v4283
    %v4285 = vpop.f32.mrf.mxu0
    %v4286 = vadd.f32 0.0, %v4285
    %v4287 = vpop.f32.mrf.mxu0
    %v4288 = vadd.f32 0.0, %v4287
    %v4289 = vpop.f32.mrf.mxu0
    %v4290 = vadd.f32 0.0, %v4289
    %4291 = vmatprep.mubr.bf16.mxu0 0
    %4292 = vmatmul.mubr.bf16.gmra.mxu0 %v387
    %v4293 = vpop.f32.mrf.mxu0
    %v4294 = vadd.f32 0.0, %v4293
    %v4295 = vpop.f32.mrf.mxu0
    %v4296 = vadd.f32 0.0, %v4295
    %v4297 = vpop.f32.mrf.mxu0
    %v4298 = vadd.f32 0.0, %v4297
    %v4299 = vpop.f32.mrf.mxu0
    %v4300 = vadd.f32 0.0, %v4299
    %4301 = vmatprep.mubr.bf16.mxu0 0
    %4302 = vmatmul.mubr.bf16.gmra.mxu0 %v390
    %v4303 = vpop.f32.mrf.mxu0
    %v4304 = vadd.f32 0.0, %v4303
    %v4305 = vpop.f32.mrf.mxu0
    %v4306 = vadd.f32 0.0, %v4305
    %v4307 = vpop.f32.mrf.mxu0
    %v4308 = vadd.f32 0.0, %v4307
    %v4309 = vpop.f32.mrf.mxu0
    %v4310 = vadd.f32 0.0, %v4309
    %4311 = vmatprep.mubr.bf16.mxu0 0
    %4312 = vmatmul.mubr.bf16.gmra.mxu0 %v393
    %v4313 = vpop.f32.mrf.mxu0
    %v4314 = vadd.f32 0.0, %v4313
    %v4315 = vpop.f32.mrf.mxu0
    %v4316 = vadd.f32 0.0, %v4315
    %v4317 = vpop.f32.mrf.mxu0
    %v4318 = vadd.f32 0.0, %v4317
    %v4319 = vpop.f32.mrf.mxu0
    %v4320 = vadd.f32 0.0, %v4319
    %4321 = vmatprep.mubr.bf16.mxu0 0
    %4322 = vmatmul.mubr.bf16.gmra.mxu0 %v396
    %v4323 = vpop.f32.mrf.mxu0
    %v4324 = vadd.f32 0.0, %v4323
    %v4325 = vpop.f32.mrf.mxu0
    %v4326 = vadd.f32 0.0, %v4325
    %v4327 = vpop.f32.mrf.mxu0
    %v4328 = vadd.f32 0.0, %v4327
    %v4329 = vpop.f32.mrf.mxu0
    %v4330 = vadd.f32 0.0, %v4329
    %4331 = vmatprep.mubr.bf16.mxu0 0
    %4332 = vmatmul.mubr.bf16.gmra.mxu0 %v399
    %v4333 = vpop.f32.mrf.mxu0
    %v4334 = vadd.f32 0.0, %v4333
    %v4335 = vpop.f32.mrf.mxu0
    %v4336 = vadd.f32 0.0, %v4335
    %v4337 = vpop.f32.mrf.mxu0
    %v4338 = vadd.f32 0.0, %v4337
    %v4339 = vpop.f32.mrf.mxu0
    %v4340 = vadd.f32 0.0, %v4339
    %4341 = vmatprep.mubr.bf16.mxu0 0
    %4342 = vmatmul.mubr.bf16.gmra.mxu0 %v402
    %v4343 = vpop.f32.mrf.mxu0
    %v4344 = vadd.f32 0.0, %v4343
    %v4345 = vpop.f32.mrf.mxu0
    %v4346 = vadd.f32 0.0, %v4345
    %v4347 = vpop.f32.mrf.mxu0
    %v4348 = vadd.f32 0.0, %v4347
    %v4349 = vpop.f32.mrf.mxu0
    %v4350 = vadd.f32 0.0, %v4349
    %4351 = vmatprep.mubr.bf16.mxu0 0
    %4352 = vmatmul.mubr.bf16.gmra.mxu0 %v405
    %v4353 = vpop.f32.mrf.mxu0
    %v4354 = vadd.f32 0.0, %v4353
    %v4355 = vpop.f32.mrf.mxu0
    %v4356 = vadd.f32 0.0, %v4355
    %v4357 = vpop.f32.mrf.mxu0
    %v4358 = vadd.f32 0.0, %v4357
    %v4359 = vpop.f32.mrf.mxu0
    %v4360 = vadd.f32 0.0, %v4359
    %4361 = vmatprep.mubr.bf16.mxu0 0
    %4362 = vmatmul.mubr.bf16.gmra.mxu0 %v408
    %v4363 = vpop.f32.mrf.mxu0
    %v4364 = vadd.f32 0.0, %v4363
    %v4365 = vpop.f32.mrf.mxu0
    %v4366 = vadd.f32 0.0, %v4365
    %v4367 = vpop.f32.mrf.mxu0
    %v4368 = vadd.f32 0.0, %v4367
    %v4369 = vpop.f32.mrf.mxu0
    %v4370 = vadd.f32 0.0, %v4369
    %4371 = vmatprep.mubr.bf16.mxu0 0
    %4372 = vmatmul.mubr.bf16.gmra.mxu0 %v411
    %v4373 = vpop.f32.mrf.mxu0
    %v4374 = vadd.f32 0.0, %v4373
    %v4375 = vpop.f32.mrf.mxu0
    %v4376 = vadd.f32 0.0, %v4375
    %v4377 = vpop.f32.mrf.mxu0
    %v4378 = vadd.f32 0.0, %v4377
    %v4379 = vpop.f32.mrf.mxu0
    %v4380 = vadd.f32 0.0, %v4379
    %4381 = vmatprep.mubr.bf16.mxu0 0
    %4382 = vmatmul.mubr.bf16.gmra.mxu0 %v414
    %v4383 = vpop.f32.mrf.mxu0
    %v4384 = vadd.f32 0.0, %v4383
    %v4385 = vpop.f32.mrf.mxu0
    %v4386 = vadd.f32 0.0, %v4385
    %v4387 = vpop.f32.mrf.mxu0
    %v4388 = vadd.f32 0.0, %v4387
    %v4389 = vpop.f32.mrf.mxu0
    %v4390 = vadd.f32 0.0, %v4389
    %4391 = vmatprep.mubr.bf16.mxu0 0
    %4392 = vmatmul.mubr.bf16.gmra.mxu0 %v417
    %v4393 = vpop.f32.mrf.mxu0
    %v4394 = vadd.f32 0.0, %v4393
    %v4395 = vpop.f32.mrf.mxu0
    %v4396 = vadd.f32 0.0, %v4395
    %v4397 = vpop.f32.mrf.mxu0
    %v4398 = vadd.f32 0.0, %v4397
    %v4399 = vpop.f32.mrf.mxu0
    %v4400 = vadd.f32 0.0, %v4399
    %4401 = vmatprep.mubr.bf16.mxu0 0
    %4402 = vmatmul.mubr.bf16.gmra.mxu0 %v420
    %v4403 = vpop.f32.mrf.mxu0
    %v4404 = vadd.f32 0.0, %v4403
    %v4405 = vpop.f32.mrf.mxu0
    %v4406 = vadd.f32 0.0, %v4405
    %v4407 = vpop.f32.mrf.mxu0
    %v4408 = vadd.f32 0.0, %v4407
    %v4409 = vpop.f32.mrf.mxu0
    %v4410 = vadd.f32 0.0, %v4409
    %4411 = vmatprep.mubr.bf16.mxu0 0
    %4412 = vmatmul.mubr.bf16.gmra.mxu0 %v423
    %v4413 = vpop.f32.mrf.mxu0
    %v4414 = vadd.f32 0.0, %v4413
    %v4415 = vpop.f32.mrf.mxu0
    %v4416 = vadd.f32 0.0, %v4415
    %v4417 = vpop.f32.mrf.mxu0
    %v4418 = vadd.f32 0.0, %v4417
    %v4419 = vpop.f32.mrf.mxu0
    %v4420 = vadd.f32 0.0, %v4419
    %4421 = vmatprep.mubr.bf16.mxu0 0
    %4422 = vmatmul.mubr.bf16.gmra.mxu0 %v426
    %v4423 = vpop.f32.mrf.mxu0
    %v4424 = vadd.f32 0.0, %v4423
    %v4425 = vpop.f32.mrf.mxu0
    %v4426 = vadd.f32 0.0, %v4425
    %v4427 = vpop.f32.mrf.mxu0
    %v4428 = vadd.f32 0.0, %v4427
    %v4429 = vpop.f32.mrf.mxu0
    %v4430 = vadd.f32 0.0, %v4429
    %4431 = vmatprep.mubr.bf16.mxu0 0
    %4432 = vmatmul.mubr.bf16.gmra.mxu0 %v429
    %v4433 = vpop.f32.mrf.mxu0
    %v4434 = vadd.f32 0.0, %v4433
    %v4435 = vpop.f32.mrf.mxu0
    %v4436 = vadd.f32 0.0, %v4435
    %v4437 = vpop.f32.mrf.mxu0
    %v4438 = vadd.f32 0.0, %v4437
    %v4439 = vpop.f32.mrf.mxu0
    %v4440 = vadd.f32 0.0, %v4439
    %4441 = vmatprep.mubr.bf16.mxu0 0
    %4442 = vmatmul.mubr.bf16.gmra.mxu0 %v432
    %v4443 = vpop.f32.mrf.mxu0
    %v4444 = vadd.f32 0.0, %v4443
    %v4445 = vpop.f32.mrf.mxu0
    %v4446 = vadd.f32 0.0, %v4445
    %v4447 = vpop.f32.mrf.mxu0
    %v4448 = vadd.f32 0.0, %v4447
    %v4449 = vpop.f32.mrf.mxu0
    %v4450 = vadd.f32 0.0, %v4449
    %4451 = vmatprep.mubr.bf16.mxu0 0
    %4452 = vmatmul.mubr.bf16.gmra.mxu0 %v435
    %v4453 = vpop.f32.mrf.mxu0
    %v4454 = vadd.f32 0.0, %v4453
    %v4455 = vpop.f32.mrf.mxu0
    %v4456 = vadd.f32 0.0, %v4455
    %v4457 = vpop.f32.mrf.mxu0
    %v4458 = vadd.f32 0.0, %v4457
    %v4459 = vpop.f32.mrf.mxu0
    %v4460 = vadd.f32 0.0, %v4459
    %4461 = vmatprep.mubr.bf16.mxu0 0
    %4462 = vmatmul.mubr.bf16.gmra.mxu0 %v438
    %v4463 = vpop.f32.mrf.mxu0
    %v4464 = vadd.f32 0.0, %v4463
    %v4465 = vpop.f32.mrf.mxu0
    %v4466 = vadd.f32 0.0, %v4465
    %v4467 = vpop.f32.mrf.mxu0
    %v4468 = vadd.f32 0.0, %v4467
    %v4469 = vpop.f32.mrf.mxu0
    %v4470 = vadd.f32 0.0, %v4469
    %4471 = vmatprep.mubr.bf16.mxu0 0
    %4472 = vmatmul.mubr.bf16.gmra.mxu0 %v441
    %v4473 = vpop.f32.mrf.mxu0
    %v4474 = vadd.f32 0.0, %v4473
    %v4475 = vpop.f32.mrf.mxu0
    %v4476 = vadd.f32 0.0, %v4475
    %v4477 = vpop.f32.mrf.mxu0
    %v4478 = vadd.f32 0.0, %v4477
    %v4479 = vpop.f32.mrf.mxu0
    %v4480 = vadd.f32 0.0, %v4479
    %4481 = vmatprep.mubr.bf16.mxu0 0
    %4482 = vmatmul.mubr.bf16.gmra.mxu0 %v444
    %v4483 = vpop.f32.mrf.mxu0
    %v4484 = vadd.f32 0.0, %v4483
    %v4485 = vpop.f32.mrf.mxu0
    %v4486 = vadd.f32 0.0, %v4485
    %v4487 = vpop.f32.mrf.mxu0
    %v4488 = vadd.f32 0.0, %v4487
    %v4489 = vpop.f32.mrf.mxu0
    %v4490 = vadd.f32 0.0, %v4489
    %4491 = vmatprep.mubr.bf16.mxu0 0
    %4492 = vmatmul.mubr.bf16.gmra.mxu0 %v447
    %v4493 = vpop.f32.mrf.mxu0
    %v4494 = vadd.f32 0.0, %v4493
    %v4495 = vpop.f32.mrf.mxu0
    %v4496 = vadd.f32 0.0, %v4495
    %v4497 = vpop.f32.mrf.mxu0
    %v4498 = vadd.f32 0.0, %v4497
    %v4499 = vpop.f32.mrf.mxu0
    %v4500 = vadd.f32 0.0, %v4499
    %4501 = vmatprep.mubr.bf16.mxu0 0
    %4502 = vmatmul.mubr.bf16.gmra.mxu0 %v450
    %v4503 = vpop.f32.mrf.mxu0
    %v4504 = vadd.f32 0.0, %v4503
    %v4505 = vpop.f32.mrf.mxu0
    %v4506 = vadd.f32 0.0, %v4505
    %v4507 = vpop.f32.mrf.mxu0
    %v4508 = vadd.f32 0.0, %v4507
    %v4509 = vpop.f32.mrf.mxu0
    %v4510 = vadd.f32 0.0, %v4509
    %4511 = vmatprep.mubr.bf16.mxu0 0
    %4512 = vmatmul.mubr.bf16.gmra.mxu0 %v453
    %v4513 = vpop.f32.mrf.mxu0
    %v4514 = vadd.f32 0.0, %v4513
    %v4515 = vpop.f32.mrf.mxu0
    %v4516 = vadd.f32 0.0, %v4515
    %v4517 = vpop.f32.mrf.mxu0
    %v4518 = vadd.f32 0.0, %v4517
    %v4519 = vpop.f32.mrf.mxu0
    %v4520 = vadd.f32 0.0, %v4519
    %4521 = vmatprep.mubr.bf16.mxu0 0
    %4522 = vmatmul.mubr.bf16.gmra.mxu0 %v456
    %v4523 = vpop.f32.mrf.mxu0
    %v4524 = vadd.f32 0.0, %v4523
    %v4525 = vpop.f32.mrf.mxu0
    %v4526 = vadd.f32 0.0, %v4525
    %v4527 = vpop.f32.mrf.mxu0
    %v4528 = vadd.f32 0.0, %v4527
    %v4529 = vpop.f32.mrf.mxu0
    %v4530 = vadd.f32 0.0, %v4529
    %4531 = vmatprep.mubr.bf16.mxu0 0
    %4532 = vmatmul.mubr.bf16.gmra.mxu0 %v1830
    %v4533 = vpop.f32.mrf.mxu0
    %v4534 = vadd.f32 0.0, %v4533
    %v4535 = vpop.f32.mrf.mxu0
    %v4536 = vadd.f32 0.0, %v4535
    %v4537 = vpop.f32.mrf.mxu0
    %v4538 = vadd.f32 0.0, %v4537
    %v4539 = vpop.f32.mrf.mxu0
    %v4540 = vadd.f32 0.0, %v4539
    %4541 = vdwg.mxu0
    %4542 = vmatprep.subr.bf16.mxu0 0
    %4543 = vmatpush1.bf16.msra.mxu0 0
    %4544 = vmatprep.subr.bf16.mxu0 0
    %4545 = vmatpush1.bf16.msra.mxu0 0
    %4546 = vmatprep.subr.bf16.mxu0 0
    %4547 = vmatpush1.bf16.msra.mxu0 0
    %4548 = vmatprep.subr.bf16.mxu0 0
    %4549 = vmatpush1.bf16.msra.mxu0 0
    %4550 = vmatprep.subr.bf16.mxu0 0
    %4551 = vmatpush1.bf16.msra.mxu0 0
    %4552 = vmatprep.subr.bf16.mxu0 0
    %4553 = vmatpush1.bf16.msra.mxu0 0
    %4554 = vmatprep.subr.bf16.mxu0 %v4227
    %4555 = vmatpush1.bf16.msra.mxu0 %v4224
    %4556 = vmatprep.subr.bf16.mxu0 %v4208
    %4557 = vmatpush1.bf16.msra.mxu0 %v4207
    %4558 = vmatprep.subr.bf16.mxu0 0
    %4559 = vmatpush2.bf16.msra.mxu0 0
    %4560 = vmatprep.subr.bf16.mxu0 0
    %4561 = vmatpush2.bf16.msra.mxu0 0
    %4562 = vmatprep.subr.bf16.mxu0 0
    %4563 = vmatpush2.bf16.msra.mxu0 0
    %4564 = vmatprep.subr.bf16.mxu0 0
    %4565 = vmatpush2.bf16.msra.mxu0 0
    %4566 = vmatprep.subr.bf16.mxu0 0
    %4567 = vmatpush2.bf16.msra.mxu0 0
    %4568 = vmatprep.subr.bf16.mxu0 0
    %4569 = vmatpush2.bf16.msra.mxu0 0
    %4570 = vmatprep.subr.bf16.mxu0 0
    %4571 = vmatpush2.bf16.msra.mxu0 0
    %4572 = vmatprep.subr.bf16.mxu0 0
    %4573 = vmatpush2.bf16.msra.mxu0 0
    %4574 = vmatprep.mubr.bf16.mxu0 0
    %4575 = vmatmul.mubr.bf16.gmra.mxu0 %v378
    %v4576 = vpop.f32.mrf.mxu0
    %v4577 = vadd.f32 0.0, %v4576
    %v4578 = vpop.f32.mrf.mxu0
    %v4579 = vadd.f32 0.0, %v4578
    %v4580 = vpop.f32.mrf.mxu0
    %v4581 = vadd.f32 0.0, %v4580
    %v4582 = vpop.f32.mrf.mxu0
    %v4583 = vadd.f32 0.0, %v4582
    %4584 = vmatprep.mubr.bf16.mxu0 0
    %4585 = vmatmul.mubr.bf16.gmra.mxu0 %v381
    %v4586 = vpop.f32.mrf.mxu0
    %v4587 = vadd.f32 0.0, %v4586
    %v4588 = vpop.f32.mrf.mxu0
    %v4589 = vadd.f32 0.0, %v4588
    %v4590 = vpop.f32.mrf.mxu0
    %v4591 = vadd.f32 0.0, %v4590
    %v4592 = vpop.f32.mrf.mxu0
    %v4593 = vadd.f32 0.0, %v4592
    %4594 = vmatprep.mubr.bf16.mxu0 0
    %4595 = vmatmul.mubr.bf16.gmra.mxu0 %v384
    %v4596 = vpop.f32.mrf.mxu0
    %v4597 = vadd.f32 0.0, %v4596
    %v4598 = vpop.f32.mrf.mxu0
    %v4599 = vadd.f32 0.0, %v4598
    %v4600 = vpop.f32.mrf.mxu0
    %v4601 = vadd.f32 0.0, %v4600
    %v4602 = vpop.f32.mrf.mxu0
    %v4603 = vadd.f32 0.0, %v4602
    %4604 = vmatprep.mubr.bf16.mxu0 0
    %4605 = vmatmul.mubr.bf16.gmra.mxu0 %v387
    %v4606 = vpop.f32.mrf.mxu0
    %v4607 = vadd.f32 0.0, %v4606
    %v4608 = vpop.f32.mrf.mxu0
    %v4609 = vadd.f32 0.0, %v4608
    %v4610 = vpop.f32.mrf.mxu0
    %v4611 = vadd.f32 0.0, %v4610
    %v4612 = vpop.f32.mrf.mxu0
    %v4613 = vadd.f32 0.0, %v4612
    %4614 = vmatprep.mubr.bf16.mxu0 0
    %4615 = vmatmul.mubr.bf16.gmra.mxu0 %v390
    %v4616 = vpop.f32.mrf.mxu0
    %v4617 = vadd.f32 0.0, %v4616
    %v4618 = vpop.f32.mrf.mxu0
    %v4619 = vadd.f32 0.0, %v4618
    %v4620 = vpop.f32.mrf.mxu0
    %v4621 = vadd.f32 0.0, %v4620
    %v4622 = vpop.f32.mrf.mxu0
    %v4623 = vadd.f32 0.0, %v4622
    %4624 = vmatprep.mubr.bf16.mxu0 0
    %4625 = vmatmul.mubr.bf16.gmra.mxu0 %v393
    %v4626 = vpop.f32.mrf.mxu0
    %v4627 = vadd.f32 0.0, %v4626
    %v4628 = vpop.f32.mrf.mxu0
    %v4629 = vadd.f32 0.0, %v4628
    %v4630 = vpop.f32.mrf.mxu0
    %v4631 = vadd.f32 0.0, %v4630
    %v4632 = vpop.f32.mrf.mxu0
    %v4633 = vadd.f32 0.0, %v4632
    %4634 = vmatprep.mubr.bf16.mxu0 0
    %4635 = vmatmul.mubr.bf16.gmra.mxu0 %v396
    %v4636 = vpop.f32.mrf.mxu0
    %v4637 = vadd.f32 0.0, %v4636
    %v4638 = vpop.f32.mrf.mxu0
    %v4639 = vadd.f32 0.0, %v4638
    %v4640 = vpop.f32.mrf.mxu0
    %v4641 = vadd.f32 0.0, %v4640
    %v4642 = vpop.f32.mrf.mxu0
    %v4643 = vadd.f32 0.0, %v4642
    %4644 = vmatprep.mubr.bf16.mxu0 0
    %4645 = vmatmul.mubr.bf16.gmra.mxu0 %v399
    %v4646 = vpop.f32.mrf.mxu0
    %v4647 = vadd.f32 0.0, %v4646
    %v4648 = vpop.f32.mrf.mxu0
    %v4649 = vadd.f32 0.0, %v4648
    %v4650 = vpop.f32.mrf.mxu0
    %v4651 = vadd.f32 0.0, %v4650
    %v4652 = vpop.f32.mrf.mxu0
    %v4653 = vadd.f32 0.0, %v4652
    %4654 = vmatprep.mubr.bf16.mxu0 0
    %4655 = vmatmul.mubr.bf16.gmra.mxu0 %v402
    %v4656 = vpop.f32.mrf.mxu0
    %v4657 = vadd.f32 0.0, %v4656
    %v4658 = vpop.f32.mrf.mxu0
    %v4659 = vadd.f32 0.0, %v4658
    %v4660 = vpop.f32.mrf.mxu0
    %v4661 = vadd.f32 0.0, %v4660
    %v4662 = vpop.f32.mrf.mxu0
    %v4663 = vadd.f32 0.0, %v4662
    %4664 = vmatprep.mubr.bf16.mxu0 0
    %4665 = vmatmul.mubr.bf16.gmra.mxu0 %v405
    %v4666 = vpop.f32.mrf.mxu0
    %v4667 = vadd.f32 0.0, %v4666
    %v4668 = vpop.f32.mrf.mxu0
    %v4669 = vadd.f32 0.0, %v4668
    %v4670 = vpop.f32.mrf.mxu0
    %v4671 = vadd.f32 0.0, %v4670
    %v4672 = vpop.f32.mrf.mxu0
    %v4673 = vadd.f32 0.0, %v4672
    %4674 = vmatprep.mubr.bf16.mxu0 0
    %4675 = vmatmul.mubr.bf16.gmra.mxu0 %v408
    %v4676 = vpop.f32.mrf.mxu0
    %v4677 = vadd.f32 0.0, %v4676
    %v4678 = vpop.f32.mrf.mxu0
    %v4679 = vadd.f32 0.0, %v4678
    %v4680 = vpop.f32.mrf.mxu0
    %v4681 = vadd.f32 0.0, %v4680
    %v4682 = vpop.f32.mrf.mxu0
    %v4683 = vadd.f32 0.0, %v4682
    %4684 = vmatprep.mubr.bf16.mxu0 0
    %4685 = vmatmul.mubr.bf16.gmra.mxu0 %v411
    %v4686 = vpop.f32.mrf.mxu0
    %v4687 = vadd.f32 0.0, %v4686
    %v4688 = vpop.f32.mrf.mxu0
    %v4689 = vadd.f32 0.0, %v4688
    %v4690 = vpop.f32.mrf.mxu0
    %v4691 = vadd.f32 0.0, %v4690
    %v4692 = vpop.f32.mrf.mxu0
    %v4693 = vadd.f32 0.0, %v4692
    %4694 = vmatprep.mubr.bf16.mxu0 0
    %4695 = vmatmul.mubr.bf16.gmra.mxu0 %v414
    %v4696 = vpop.f32.mrf.mxu0
    %v4697 = vadd.f32 0.0, %v4696
    %v4698 = vpop.f32.mrf.mxu0
    %v4699 = vadd.f32 0.0, %v4698
    %v4700 = vpop.f32.mrf.mxu0
    %v4701 = vadd.f32 0.0, %v4700
    %v4702 = vpop.f32.mrf.mxu0
    %v4703 = vadd.f32 0.0, %v4702
    %4704 = vmatprep.mubr.bf16.mxu0 0
    %4705 = vmatmul.mubr.bf16.gmra.mxu0 %v417
    %v4706 = vpop.f32.mrf.mxu0
    %v4707 = vadd.f32 0.0, %v4706
    %v4708 = vpop.f32.mrf.mxu0
    %v4709 = vadd.f32 0.0, %v4708
    %v4710 = vpop.f32.mrf.mxu0
    %v4711 = vadd.f32 0.0, %v4710
    %v4712 = vpop.f32.mrf.mxu0
    %v4713 = vadd.f32 0.0, %v4712
    %4714 = vmatprep.mubr.bf16.mxu0 0
    %4715 = vmatmul.mubr.bf16.gmra.mxu0 %v420
    %v4716 = vpop.f32.mrf.mxu0
    %v4717 = vadd.f32 0.0, %v4716
    %v4718 = vpop.f32.mrf.mxu0
    %v4719 = vadd.f32 0.0, %v4718
    %v4720 = vpop.f32.mrf.mxu0
    %v4721 = vadd.f32 0.0, %v4720
    %v4722 = vpop.f32.mrf.mxu0
    %v4723 = vadd.f32 0.0, %v4722
    %4724 = vmatprep.mubr.bf16.mxu0 0
    %4725 = vmatmul.mubr.bf16.gmra.mxu0 %v423
    %v4726 = vpop.f32.mrf.mxu0
    %v4727 = vadd.f32 0.0, %v4726
    %v4728 = vpop.f32.mrf.mxu0
    %v4729 = vadd.f32 0.0, %v4728
    %v4730 = vpop.f32.mrf.mxu0
    %v4731 = vadd.f32 0.0, %v4730
    %v4732 = vpop.f32.mrf.mxu0
    %v4733 = vadd.f32 0.0, %v4732
    %4734 = vmatprep.mubr.bf16.mxu0 0
    %4735 = vmatmul.mubr.bf16.gmra.mxu0 %v426
    %v4736 = vpop.f32.mrf.mxu0
    %v4737 = vadd.f32 0.0, %v4736
    %v4738 = vpop.f32.mrf.mxu0
    %v4739 = vadd.f32 0.0, %v4738
    %v4740 = vpop.f32.mrf.mxu0
    %v4741 = vadd.f32 0.0, %v4740
    %v4742 = vpop.f32.mrf.mxu0
    %v4743 = vadd.f32 0.0, %v4742
    %4744 = vmatprep.mubr.bf16.mxu0 0
    %4745 = vmatmul.mubr.bf16.gmra.mxu0 %v429
    %v4746 = vpop.f32.mrf.mxu0
    %v4747 = vadd.f32 0.0, %v4746
    %v4748 = vpop.f32.mrf.mxu0
    %v4749 = vadd.f32 0.0, %v4748
    %v4750 = vpop.f32.mrf.mxu0
    %v4751 = vadd.f32 0.0, %v4750
    %v4752 = vpop.f32.mrf.mxu0
    %v4753 = vadd.f32 0.0, %v4752
    %4754 = vmatprep.mubr.bf16.mxu0 0
    %4755 = vmatmul.mubr.bf16.gmra.mxu0 %v432
    %v4756 = vpop.f32.mrf.mxu0
    %v4757 = vadd.f32 0.0, %v4756
    %v4758 = vpop.f32.mrf.mxu0
    %v4759 = vadd.f32 0.0, %v4758
    %v4760 = vpop.f32.mrf.mxu0
    %v4761 = vadd.f32 0.0, %v4760
    %v4762 = vpop.f32.mrf.mxu0
    %v4763 = vadd.f32 0.0, %v4762
    %4764 = vmatprep.mubr.bf16.mxu0 0
    %4765 = vmatmul.mubr.bf16.gmra.mxu0 %v435
    %v4766 = vpop.f32.mrf.mxu0
    %v4767 = vadd.f32 0.0, %v4766
    %v4768 = vpop.f32.mrf.mxu0
    %v4769 = vadd.f32 0.0, %v4768
    %v4770 = vpop.f32.mrf.mxu0
    %v4771 = vadd.f32 0.0, %v4770
    %v4772 = vpop.f32.mrf.mxu0
    %v4773 = vadd.f32 0.0, %v4772
    %4774 = vmatprep.mubr.bf16.mxu0 0
    %4775 = vmatmul.mubr.bf16.gmra.mxu0 %v438
    %v4776 = vpop.f32.mrf.mxu0
    %v4777 = vadd.f32 0.0, %v4776
    %v4778 = vpop.f32.mrf.mxu0
    %v4779 = vadd.f32 0.0, %v4778
    %v4780 = vpop.f32.mrf.mxu0
    %v4781 = vadd.f32 0.0, %v4780
    %v4782 = vpop.f32.mrf.mxu0
    %v4783 = vadd.f32 0.0, %v4782
    %4784 = vmatprep.mubr.bf16.mxu0 0
    %4785 = vmatmul.mubr.bf16.gmra.mxu0 %v441
    %v4786 = vpop.f32.mrf.mxu0
    %v4787 = vadd.f32 0.0, %v4786
    %v4788 = vpop.f32.mrf.mxu0
    %v4789 = vadd.f32 0.0, %v4788
    %v4790 = vpop.f32.mrf.mxu0
    %v4791 = vadd.f32 0.0, %v4790
    %v4792 = vpop.f32.mrf.mxu0
    %v4793 = vadd.f32 0.0, %v4792
    %4794 = vmatprep.mubr.bf16.mxu0 0
    %4795 = vmatmul.mubr.bf16.gmra.mxu0 %v444
    %v4796 = vpop.f32.mrf.mxu0
    %v4797 = vadd.f32 0.0, %v4796
    %v4798 = vpop.f32.mrf.mxu0
    %v4799 = vadd.f32 0.0, %v4798
    %v4800 = vpop.f32.mrf.mxu0
    %v4801 = vadd.f32 0.0, %v4800
    %v4802 = vpop.f32.mrf.mxu0
    %v4803 = vadd.f32 0.0, %v4802
    %4804 = vmatprep.mubr.bf16.mxu0 0
    %4805 = vmatmul.mubr.bf16.gmra.mxu0 %v447
    %v4806 = vpop.f32.mrf.mxu0
    %v4807 = vadd.f32 0.0, %v4806
    %v4808 = vpop.f32.mrf.mxu0
    %v4809 = vadd.f32 0.0, %v4808
    %v4810 = vpop.f32.mrf.mxu0
    %v4811 = vadd.f32 0.0, %v4810
    %v4812 = vpop.f32.mrf.mxu0
    %v4813 = vadd.f32 0.0, %v4812
    %4814 = vmatprep.mubr.bf16.mxu0 0
    %4815 = vmatmul.mubr.bf16.gmra.mxu0 %v450
    %v4816 = vpop.f32.mrf.mxu0
    %v4817 = vadd.f32 0.0, %v4816
    %v4818 = vpop.f32.mrf.mxu0
    %v4819 = vadd.f32 0.0, %v4818
    %v4820 = vpop.f32.mrf.mxu0
    %v4821 = vadd.f32 0.0, %v4820
    %v4822 = vpop.f32.mrf.mxu0
    %v4823 = vadd.f32 0.0, %v4822
    %4824 = vmatprep.mubr.bf16.mxu0 0
    %4825 = vmatmul.mubr.bf16.gmra.mxu0 %v453
    %v4826 = vpop.f32.mrf.mxu0
    %v4827 = vadd.f32 0.0, %v4826
    %v4828 = vpop.f32.mrf.mxu0
    %v4829 = vadd.f32 0.0, %v4828
    %v4830 = vpop.f32.mrf.mxu0
    %v4831 = vadd.f32 0.0, %v4830
    %v4832 = vpop.f32.mrf.mxu0
    %v4833 = vadd.f32 0.0, %v4832
    %4834 = vmatprep.mubr.bf16.mxu0 0
    %4835 = vmatmul.mubr.bf16.gmra.mxu0 %v456
    %v4836 = vpop.f32.mrf.mxu0
    %v4837 = vadd.f32 0.0, %v4836
    %v4838 = vpop.f32.mrf.mxu0
    %v4839 = vadd.f32 0.0, %v4838
    %v4840 = vpop.f32.mrf.mxu0
    %v4841 = vadd.f32 0.0, %v4840
    %v4842 = vpop.f32.mrf.mxu0
    %v4843 = vadd.f32 0.0, %v4842
    %4844 = vmatprep.mubr.bf16.mxu0 0
    %4845 = vmatmul.mubr.bf16.gmra.mxu0 %v1830
    %v4846 = vpop.f32.mrf.mxu0
    %v4847 = vadd.f32 0.0, %v4846
    %v4848 = vpop.f32.mrf.mxu0
    %v4849 = vadd.f32 0.0, %v4848
    %v4850 = vpop.f32.mrf.mxu0
    %v4851 = vadd.f32 0.0, %v4850
    %v4852 = vpop.f32.mrf.mxu0
    %v4853 = vadd.f32 0.0, %v4852
    %4854 = vdwg.mxu0
    %v4855 = vadd.f32 %v3581, %v4264
    %v4856 = vadd.f32 %v3583, %v4266
    %v4857 = vadd.f32 %v3894, %v4577
    %v4858 = vadd.f32 %v3896, %v4579
    %v4859 = vadd.f32 %v3585, %v4268
    %v4860 = vadd.f32 %v3587, %v4270
    %v4861 = vadd.f32 %v3898, %v4581
    %v4862 = vadd.f32 %v3900, %v4583
    %v4863 = vadd.f32 %v3591, %v4274
    %v4864 = vadd.f32 %v3593, %v4276
    %v4865 = vadd.f32 %v3904, %v4587
    %v4866 = vadd.f32 %v3906, %v4589
    %v4867 = vadd.f32 %v3595, %v4278
    %v4868 = vadd.f32 %v3597, %v4280
    %v4869 = vadd.f32 %v3908, %v4591
    %v4870 = vadd.f32 %v3910, %v4593
    %v4871 = vadd.f32 %v3601, %v4284
    %v4872 = vadd.f32 %v3603, %v4286
    %v4873 = vadd.f32 %v3914, %v4597
    %v4874 = vadd.f32 %v3916, %v4599
    %v4875 = vadd.f32 %v3605, %v4288
    %v4876 = vadd.f32 %v3607, %v4290
    %v4877 = vadd.f32 %v3918, %v4601
    %v4878 = vadd.f32 %v3920, %v4603
    %v4879 = vadd.f32 %v3611, %v4294
    %v4880 = vadd.f32 %v3613, %v4296
    %v4881 = vadd.f32 %v3924, %v4607
    %v4882 = vadd.f32 %v3926, %v4609
    %v4883 = vadd.f32 %v3615, %v4298
    %v4884 = vadd.f32 %v3617, %v4300
    %v4885 = vadd.f32 %v3928, %v4611
    %v4886 = vadd.f32 %v3930, %v4613
    %v4887 = vadd.f32 %v3621, %v4304
    %v4888 = vadd.f32 %v3623, %v4306
    %v4889 = vadd.f32 %v3934, %v4617
    %v4890 = vadd.f32 %v3936, %v4619
    %v4891 = vadd.f32 %v3625, %v4308
    %v4892 = vadd.f32 %v3627, %v4310
    %v4893 = vadd.f32 %v3938, %v4621
    %v4894 = vadd.f32 %v3940, %v4623
    %v4895 = vadd.f32 %v3631, %v4314
    %v4896 = vadd.f32 %v3633, %v4316
    %v4897 = vadd.f32 %v3944, %v4627
    %v4898 = vadd.f32 %v3946, %v4629
    %v4899 = vadd.f32 %v3635, %v4318
    %v4900 = vadd.f32 %v3637, %v4320
    %v4901 = vadd.f32 %v3948, %v4631
    %v4902 = vadd.f32 %v3950, %v4633
    %v4903 = vadd.f32 %v3641, %v4324
    %v4904 = vadd.f32 %v3643, %v4326
    %v4905 = vadd.f32 %v3954, %v4637
    %v4906 = vadd.f32 %v3956, %v4639
    %v4907 = vadd.f32 %v3645, %v4328
    %v4908 = vadd.f32 %v3647, %v4330
    %v4909 = vadd.f32 %v3958, %v4641
    %v4910 = vadd.f32 %v3960, %v4643
    %v4911 = vadd.f32 %v3651, %v4334
    %v4912 = vadd.f32 %v3653, %v4336
    %v4913 = vadd.f32 %v3964, %v4647
    %v4914 = vadd.f32 %v3966, %v4649
    %v4915 = vadd.f32 %v3655, %v4338
    %v4916 = vadd.f32 %v3657, %v4340
    %v4917 = vadd.f32 %v3968, %v4651
    %v4918 = vadd.f32 %v3970, %v4653
    %v4919 = vadd.f32 %v3661, %v4344
    %v4920 = vadd.f32 %v3663, %v4346
    %v4921 = vadd.f32 %v3974, %v4657
    %v4922 = vadd.f32 %v3976, %v4659
    %v4923 = vadd.f32 %v3665, %v4348
    %v4924 = vadd.f32 %v3667, %v4350
    %v4925 = vadd.f32 %v3978, %v4661
    %v4926 = vadd.f32 %v3980, %v4663
    %v4927 = vadd.f32 %v3671, %v4354
    %v4928 = vadd.f32 %v3673, %v4356
    %v4929 = vadd.f32 %v3984, %v4667
    %v4930 = vadd.f32 %v3986, %v4669
    %v4931 = vadd.f32 %v3675, %v4358
    %v4932 = vadd.f32 %v3677, %v4360
    %v4933 = vadd.f32 %v3988, %v4671
    %v4934 = vadd.f32 %v3990, %v4673
    %v4935 = vadd.f32 %v3681, %v4364
    %v4936 = vadd.f32 %v3683, %v4366
    %v4937 = vadd.f32 %v3994, %v4677
    %v4938 = vadd.f32 %v3996, %v4679
    %v4939 = vadd.f32 %v3685, %v4368
    %v4940 = vadd.f32 %v3687, %v4370
    %v4941 = vadd.f32 %v3998, %v4681
    %v4942 = vadd.f32 %v4000, %v4683
    %v4943 = vadd.f32 %v3691, %v4374
    %v4944 = vadd.f32 %v3693, %v4376
    %v4945 = vadd.f32 %v4004, %v4687
    %v4946 = vadd.f32 %v4006, %v4689
    %v4947 = vadd.f32 %v3695, %v4378
    %v4948 = vadd.f32 %v3697, %v4380
    %v4949 = vadd.f32 %v4008, %v4691
    %v4950 = vadd.f32 %v4010, %v4693
    %v4951 = vadd.f32 %v3701, %v4384
    %v4952 = vadd.f32 %v3703, %v4386
    %v4953 = vadd.f32 %v4014, %v4697
    %v4954 = vadd.f32 %v4016, %v4699
    %v4955 = vadd.f32 %v3705, %v4388
    %v4956 = vadd.f32 %v3707, %v4390
    %v4957 = vadd.f32 %v4018, %v4701
    %v4958 = vadd.f32 %v4020, %v4703
    %v4959 = vadd.f32 %v3711, %v4394
    %v4960 = vadd.f32 %v3713, %v4396
    %v4961 = vadd.f32 %v4024, %v4707
    %v4962 = vadd.f32 %v4026, %v4709
    %v4963 = vadd.f32 %v3715, %v4398
    %v4964 = vadd.f32 %v3717, %v4400
    %v4965 = vadd.f32 %v4028, %v4711
    %v4966 = vadd.f32 %v4030, %v4713
    %v4967 = vadd.f32 %v3721, %v4404
    %v4968 = vadd.f32 %v3723, %v4406
    %v4969 = vadd.f32 %v4034, %v4717
    %v4970 = vadd.f32 %v4036, %v4719
    %v4971 = vadd.f32 %v3725, %v4408
    %v4972 = vadd.f32 %v3727, %v4410
    %v4973 = vadd.f32 %v4038, %v4721
    %v4974 = vadd.f32 %v4040, %v4723
    %v4975 = vadd.f32 %v3731, %v4414
    %v4976 = vadd.f32 %v3733, %v4416
    %v4977 = vadd.f32 %v4044, %v4727
    %v4978 = vadd.f32 %v4046, %v4729
    %v4979 = vadd.f32 %v3735, %v4418
    %v4980 = vadd.f32 %v3737, %v4420
    %v4981 = vadd.f32 %v4048, %v4731
    %v4982 = vadd.f32 %v4050, %v4733
    %v4983 = vadd.f32 %v3741, %v4424
    %v4984 = vadd.f32 %v3743, %v4426
    %v4985 = vadd.f32 %v4054, %v4737
    %v4986 = vadd.f32 %v4056, %v4739
    %v4987 = vadd.f32 %v3745, %v4428
    %v4988 = vadd.f32 %v3747, %v4430
    %v4989 = vadd.f32 %v4058, %v4741
    %v4990 = vadd.f32 %v4060, %v4743
    %v4991 = vadd.f32 %v3751, %v4434
    %v4992 = vadd.f32 %v3753, %v4436
    %v4993 = vadd.f32 %v4064, %v4747
    %v4994 = vadd.f32 %v4066, %v4749
    %v4995 = vadd.f32 %v3755, %v4438
    %v4996 = vadd.f32 %v3757, %v4440
    %v4997 = vadd.f32 %v4068, %v4751
    %v4998 = vadd.f32 %v4070, %v4753
    %v4999 = vadd.f32 %v3761, %v4444
    %v5000 = vadd.f32 %v3763, %v4446
    %v5001 = vadd.f32 %v4074, %v4757
    %v5002 = vadd.f32 %v4076, %v4759
    %v5003 = vadd.f32 %v3765, %v4448
    %v5004 = vadd.f32 %v3767, %v4450
    %v5005 = vadd.f32 %v4078, %v4761
    %v5006 = vadd.f32 %v4080, %v4763
    %v5007 = vadd.f32 %v3771, %v4454
    %v5008 = vadd.f32 %v3773, %v4456
    %v5009 = vadd.f32 %v4084, %v4767
    %v5010 = vadd.f32 %v4086, %v4769
    %v5011 = vadd.f32 %v3775, %v4458
    %v5012 = vadd.f32 %v3777, %v4460
    %v5013 = vadd.f32 %v4088, %v4771
    %v5014 = vadd.f32 %v4090, %v4773
    %v5015 = vadd.f32 %v3781, %v4464
    %v5016 = vadd.f32 %v3783, %v4466
    %v5017 = vadd.f32 %v4094, %v4777
    %v5018 = vadd.f32 %v4096, %v4779
    %v5019 = vadd.f32 %v3785, %v4468
    %v5020 = vadd.f32 %v3787, %v4470
    %v5021 = vadd.f32 %v4098, %v4781
    %v5022 = vadd.f32 %v4100, %v4783
    %v5023 = vadd.f32 %v3791, %v4474
    %v5024 = vadd.f32 %v3793, %v4476
    %v5025 = vadd.f32 %v4104, %v4787
    %v5026 = vadd.f32 %v4106, %v4789
    %v5027 = vadd.f32 %v3795, %v4478
    %v5028 = vadd.f32 %v3797, %v4480
    %v5029 = vadd.f32 %v4108, %v4791
    %v5030 = vadd.f32 %v4110, %v4793
    %v5031 = vadd.f32 %v3801, %v4484
    %v5032 = vadd.f32 %v3803, %v4486
    %v5033 = vadd.f32 %v4114, %v4797
    %v5034 = vadd.f32 %v4116, %v4799
    %v5035 = vadd.f32 %v3805, %v4488
    %v5036 = vadd.f32 %v3807, %v4490
    %v5037 = vadd.f32 %v4118, %v4801
    %v5038 = vadd.f32 %v4120, %v4803
    %v5039 = vadd.f32 %v3811, %v4494
    %v5040 = vadd.f32 %v3813, %v4496
    %v5041 = vadd.f32 %v4124, %v4807
    %v5042 = vadd.f32 %v4126, %v4809
    %v5043 = vadd.f32 %v3815, %v4498
    %v5044 = vadd.f32 %v3817, %v4500
    %v5045 = vadd.f32 %v4128, %v4811
    %v5046 = vadd.f32 %v4130, %v4813
    %v5047 = vadd.f32 %v3821, %v4504
    %v5048 = vadd.f32 %v3823, %v4506
    %v5049 = vadd.f32 %v4134, %v4817
    %v5050 = vadd.f32 %v4136, %v4819
    %v5051 = vadd.f32 %v3825, %v4508
    %v5052 = vadd.f32 %v3827, %v4510
    %v5053 = vadd.f32 %v4138, %v4821
    %v5054 = vadd.f32 %v4140, %v4823
    %v5055 = vadd.f32 %v3831, %v4514
    %v5056 = vadd.f32 %v3833, %v4516
    %v5057 = vadd.f32 %v4144, %v4827
    %v5058 = vadd.f32 %v4146, %v4829
    %v5059 = vadd.f32 %v3835, %v4518
    %v5060 = vadd.f32 %v3837, %v4520
    %v5061 = vadd.f32 %v4148, %v4831
    %v5062 = vadd.f32 %v4150, %v4833
    %v5063 = vadd.f32 %v3841, %v4524
    %v5064 = vadd.f32 %v3843, %v4526
    %v5065 = vadd.f32 %v4154, %v4837
    %v5066 = vadd.f32 %v4156, %v4839
    %v5067 = vadd.f32 %v3845, %v4528
    %v5068 = vadd.f32 %v3847, %v4530
    %v5069 = vadd.f32 %v4158, %v4841
    %v5070 = vadd.f32 %v4160, %v4843
    %v5071 = vadd.f32 %v3851, %v4534
    %v5072 = vadd.f32 %v3853, %v4536
    %v5073 = vadd.f32 %v4164, %v4847
    %v5074 = vadd.f32 %v4166, %v4849
    %v5075 = vadd.f32 %v3855, %v4538
    %v5076 = vadd.f32 %v3857, %v4540
    %v5077 = vadd.f32 %v4168, %v4851
    %v5078 = vadd.f32 %v4170, %v4853
    %v5079 = vmax.f32 %v4855, %v4863
    %v5080 = vmax.f32 %v4856, %v4864
    %v5081 = vmax.f32 %v4857, %v4865
    %v5082 = vmax.f32 %v4858, %v4866
    %v5083 = vmax.f32 %v4859, %v4867
    %v5084 = vmax.f32 %v4860, %v4868
    %v5085 = vmax.f32 %v4861, %v4869
    %v5086 = vmax.f32 %v4862, %v4870
    %v5087 = vmax.f32 %v4871, %v4879
    %v5088 = vmax.f32 %v4872, %v4880
    %v5089 = vmax.f32 %v4873, %v4881
    %v5090 = vmax.f32 %v4874, %v4882
    %v5091 = vmax.f32 %v4875, %v4883
    %v5092 = vmax.f32 %v4876, %v4884
    %v5093 = vmax.f32 %v4877, %v4885
    %v5094 = vmax.f32 %v4878, %v4886
    %v5095 = vmax.f32 %v4887, %v4895
    %v5096 = vmax.f32 %v4888, %v4896
    %v5097 = vmax.f32 %v4889, %v4897
    %v5098 = vmax.f32 %v4890, %v4898
    %v5099 = vmax.f32 %v4891, %v4899
    %v5100 = vmax.f32 %v4892, %v4900
    %v5101 = vmax.f32 %v4893, %v4901
    %v5102 = vmax.f32 %v4894, %v4902
    %v5103 = vmax.f32 %v4903, %v4911
    %v5104 = vmax.f32 %v4904, %v4912
    %v5105 = vmax.f32 %v4905, %v4913
    %v5106 = vmax.f32 %v4906, %v4914
    %v5107 = vmax.f32 %v4907, %v4915
    %v5108 = vmax.f32 %v4908, %v4916
    %v5109 = vmax.f32 %v4909, %v4917
    %v5110 = vmax.f32 %v4910, %v4918
    %v5111 = vmax.f32 %v4919, %v4927
    %v5112 = vmax.f32 %v4920, %v4928
    %v5113 = vmax.f32 %v4921, %v4929
    %v5114 = vmax.f32 %v4922, %v4930
    %v5115 = vmax.f32 %v4923, %v4931
    %v5116 = vmax.f32 %v4924, %v4932
    %v5117 = vmax.f32 %v4925, %v4933
    %v5118 = vmax.f32 %v4926, %v4934
    %v5119 = vmax.f32 %v4935, %v4943
    %v5120 = vmax.f32 %v4936, %v4944
    %v5121 = vmax.f32 %v4937, %v4945
    %v5122 = vmax.f32 %v4938, %v4946
    %v5123 = vmax.f32 %v4939, %v4947
    %v5124 = vmax.f32 %v4940, %v4948
    %v5125 = vmax.f32 %v4941, %v4949
    %v5126 = vmax.f32 %v4942, %v4950
    %v5127 = vmax.f32 %v4951, %v4959
    %v5128 = vmax.f32 %v4952, %v4960
    %v5129 = vmax.f32 %v4953, %v4961
    %v5130 = vmax.f32 %v4954, %v4962
    %v5131 = vmax.f32 %v4955, %v4963
    %v5132 = vmax.f32 %v4956, %v4964
    %v5133 = vmax.f32 %v4957, %v4965
    %v5134 = vmax.f32 %v4958, %v4966
    %v5135 = vmax.f32 %v4967, %v4975
    %v5136 = vmax.f32 %v4968, %v4976
    %v5137 = vmax.f32 %v4969, %v4977
    %v5138 = vmax.f32 %v4970, %v4978
    %v5139 = vmax.f32 %v4971, %v4979
    %v5140 = vmax.f32 %v4972, %v4980
    %v5141 = vmax.f32 %v4973, %v4981
    %v5142 = vmax.f32 %v4974, %v4982
    %v5143 = vmax.f32 %v4983, %v4991
    %v5144 = vmax.f32 %v4984, %v4992
    %v5145 = vmax.f32 %v4985, %v4993
    %v5146 = vmax.f32 %v4986, %v4994
    %v5147 = vmax.f32 %v4987, %v4995
    %v5148 = vmax.f32 %v4988, %v4996
    %v5149 = vmax.f32 %v4989, %v4997
    %v5150 = vmax.f32 %v4990, %v4998
    %v5151 = vmax.f32 %v4999, %v5007
    %v5152 = vmax.f32 %v5000, %v5008
    %v5153 = vmax.f32 %v5001, %v5009
    %v5154 = vmax.f32 %v5002, %v5010
    %v5155 = vmax.f32 %v5003, %v5011
    %v5156 = vmax.f32 %v5004, %v5012
    %v5157 = vmax.f32 %v5005, %v5013
    %v5158 = vmax.f32 %v5006, %v5014
    %v5159 = vmax.f32 %v5015, %v5023
    %v5160 = vmax.f32 %v5016, %v5024
    %v5161 = vmax.f32 %v5017, %v5025
    %v5162 = vmax.f32 %v5018, %v5026
    %v5163 = vmax.f32 %v5019, %v5027
    %v5164 = vmax.f32 %v5020, %v5028
    %v5165 = vmax.f32 %v5021, %v5029
    %v5166 = vmax.f32 %v5022, %v5030
    %v5167 = vmax.f32 %v5031, %v5039
    %v5168 = vmax.f32 %v5032, %v5040
    %v5169 = vmax.f32 %v5033, %v5041
    %v5170 = vmax.f32 %v5034, %v5042
    %v5171 = vmax.f32 %v5035, %v5043
    %v5172 = vmax.f32 %v5036, %v5044
    %v5173 = vmax.f32 %v5037, %v5045
    %v5174 = vmax.f32 %v5038, %v5046
    %v5175 = vmax.f32 %v5047, %v5055
    %v5176 = vmax.f32 %v5048, %v5056
    %v5177 = vmax.f32 %v5049, %v5057
    %v5178 = vmax.f32 %v5050, %v5058
    %v5179 = vmax.f32 %v5051, %v5059
    %v5180 = vmax.f32 %v5052, %v5060
    %v5181 = vmax.f32 %v5053, %v5061
    %v5182 = vmax.f32 %v5054, %v5062
    %v5183 = vmax.f32 %v5063, %v5071
    %v5184 = vmax.f32 %v5064, %v5072
    %v5185 = vmax.f32 %v5065, %v5073
    %v5186 = vmax.f32 %v5066, %v5074
    %v5187 = vmax.f32 %v5067, %v5075
    %v5188 = vmax.f32 %v5068, %v5076
    %v5189 = vmax.f32 %v5069, %v5077
    %v5190 = vmax.f32 %v5070, %v5078
    %v5191 = vmax.f32 %v2694, %v5079
    %v5192 = vmax.f32 %v2695, %v5080
    %v5193 = vmax.f32 %v2696, %v5081
    %v5194 = vmax.f32 %v2697, %v5082
    %v5195 = vmax.f32 %v2698, %v5083
    %v5196 = vmax.f32 %v2699, %v5084
    %v5197 = vmax.f32 %v2700, %v5085
    %v5198 = vmax.f32 %v2701, %v5086
    %v5199 = vmax.f32 %v2702, %v5087
    %v5200 = vmax.f32 %v2703, %v5088
    %v5201 = vmax.f32 %v2704, %v5089
    %v5202 = vmax.f32 %v2705, %v5090
    %v5203 = vmax.f32 %v2706, %v5091
    %v5204 = vmax.f32 %v2707, %v5092
    %v5205 = vmax.f32 %v2708, %v5093
    %v5206 = vmax.f32 %v2709, %v5094
    %v5207 = vmax.f32 %v2710, %v5095
    %v5208 = vmax.f32 %v2711, %v5096
    %v5209 = vmax.f32 %v2712, %v5097
    %v5210 = vmax.f32 %v2713, %v5098
    %v5211 = vmax.f32 %v2714, %v5099
    %v5212 = vmax.f32 %v2715, %v5100
    %v5213 = vmax.f32 %v2716, %v5101
    %v5214 = vmax.f32 %v2717, %v5102
    %v5215 = vmax.f32 %v2718, %v5103
    %v5216 = vmax.f32 %v2719, %v5104
    %v5217 = vmax.f32 %v2720, %v5105
    %v5218 = vmax.f32 %v2721, %v5106
    %v5219 = vmax.f32 %v2722, %v5107
    %v5220 = vmax.f32 %v2723, %v5108
    %v5221 = vmax.f32 %v2724, %v5109
    %v5222 = vmax.f32 %v2725, %v5110
    %v5223 = vmax.f32 %v2726, %v5111
    %v5224 = vmax.f32 %v2727, %v5112
    %v5225 = vmax.f32 %v2728, %v5113
    %v5226 = vmax.f32 %v2729, %v5114
    %v5227 = vmax.f32 %v2730, %v5115
    %v5228 = vmax.f32 %v2731, %v5116
    %v5229 = vmax.f32 %v2732, %v5117
    %v5230 = vmax.f32 %v2733, %v5118
    %v5231 = vmax.f32 %v2734, %v5119
    %v5232 = vmax.f32 %v2735, %v5120
    %v5233 = vmax.f32 %v2736, %v5121
    %v5234 = vmax.f32 %v2737, %v5122
    %v5235 = vmax.f32 %v2738, %v5123
    %v5236 = vmax.f32 %v2739, %v5124
    %v5237 = vmax.f32 %v2740, %v5125
    %v5238 = vmax.f32 %v2741, %v5126
    %v5239 = vmax.f32 %v2742, %v5127
    %v5240 = vmax.f32 %v2743, %v5128
    %v5241 = vmax.f32 %v2744, %v5129
    %v5242 = vmax.f32 %v2745, %v5130
    %v5243 = vmax.f32 %v2746, %v5131
    %v5244 = vmax.f32 %v2747, %v5132
    %v5245 = vmax.f32 %v2748, %v5133
    %v5246 = vmax.f32 %v2749, %v5134
    %v5247 = vmax.f32 %v2750, %v5135
    %v5248 = vmax.f32 %v2751, %v5136
    %v5249 = vmax.f32 %v2752, %v5137
    %v5250 = vmax.f32 %v2753, %v5138
    %v5251 = vmax.f32 %v2754, %v5139
    %v5252 = vmax.f32 %v2755, %v5140
    %v5253 = vmax.f32 %v2756, %v5141
    %v5254 = vmax.f32 %v2757, %v5142
    %v5255 = vmax.f32 %v2758, %v5143
    %v5256 = vmax.f32 %v2759, %v5144
    %v5257 = vmax.f32 %v2760, %v5145
    %v5258 = vmax.f32 %v2761, %v5146
    %v5259 = vmax.f32 %v2762, %v5147
    %v5260 = vmax.f32 %v2763, %v5148
    %v5261 = vmax.f32 %v2764, %v5149
    %v5262 = vmax.f32 %v2765, %v5150
    %v5263 = vmax.f32 %v2766, %v5151
    %v5264 = vmax.f32 %v2767, %v5152
    %v5265 = vmax.f32 %v2768, %v5153
    %v5266 = vmax.f32 %v2769, %v5154
    %v5267 = vmax.f32 %v2770, %v5155
    %v5268 = vmax.f32 %v2771, %v5156
    %v5269 = vmax.f32 %v2772, %v5157
    %v5270 = vmax.f32 %v2773, %v5158
    %v5271 = vmax.f32 %v2774, %v5159
    %v5272 = vmax.f32 %v2775, %v5160
    %v5273 = vmax.f32 %v2776, %v5161
    %v5274 = vmax.f32 %v2777, %v5162
    %v5275 = vmax.f32 %v2778, %v5163
    %v5276 = vmax.f32 %v2779, %v5164
    %v5277 = vmax.f32 %v2780, %v5165
    %v5278 = vmax.f32 %v2781, %v5166
    %v5279 = vmax.f32 %v2782, %v5167
    %v5280 = vmax.f32 %v2783, %v5168
    %v5281 = vmax.f32 %v2784, %v5169
    %v5282 = vmax.f32 %v2785, %v5170
    %v5283 = vmax.f32 %v2786, %v5171
    %v5284 = vmax.f32 %v2787, %v5172
    %v5285 = vmax.f32 %v2788, %v5173
    %v5286 = vmax.f32 %v2789, %v5174
    %v5287 = vmax.f32 %v2790, %v5175
    %v5288 = vmax.f32 %v2791, %v5176
    %v5289 = vmax.f32 %v2792, %v5177
    %v5290 = vmax.f32 %v2793, %v5178
    %v5291 = vmax.f32 %v2794, %v5179
    %v5292 = vmax.f32 %v2795, %v5180
    %v5293 = vmax.f32 %v2796, %v5181
    %v5294 = vmax.f32 %v2797, %v5182
    %v5295 = vmax.f32 %v2798, %v5183
    %v5296 = vmax.f32 %v2799, %v5184
    %v5297 = vmax.f32 %v2800, %v5185
    %v5298 = vmax.f32 %v2801, %v5186
    %v5299 = vmax.f32 %v2802, %v5187
    %v5300 = vmax.f32 %v2803, %v5188
    %v5301 = vmax.f32 %v2804, %v5189
    %v5302 = vmax.f32 %v2805, %v5190
    %v5303 = vld [vmem:[#allocation4] sm:$0xf]
    %v5305 = vlaneseq
    %v5306 = vshrl.u32 %v5305, 7
    %v5307 = vsub.s32 0, %v5306
    %v5308 = vrot.slane %v5303, %v5307
    %v5309 = vlaneseq
    %v5310 = vshrl.u32 %v5309, 7
    %v5311 = vsub.s32 1, %v5310
    %v5312 = vrot.slane %v5303, %v5311
    %v5313 = vlaneseq
    %v5314 = vshrl.u32 %v5313, 7
    %v5315 = vsub.s32 2, %v5314
    %v5316 = vrot.slane %v5303, %v5315
    %v5317 = vlaneseq
    %v5318 = vshrl.u32 %v5317, 7
    %v5319 = vsub.s32 3, %v5318
    %v5320 = vrot.slane %v5303, %v5319
    %v5325 = vadd.f32 %v5191, %v5308
    %v5326 = vadd.f32 %v5192, %v5312
    %v5327 = vadd.f32 %v5193, %v5316
    %v5328 = vadd.f32 %v5194, %v5320
    %v5329 = vadd.f32 %v5195, %v5308
    %v5330 = vadd.f32 %v5196, %v5312
    %v5331 = vadd.f32 %v5197, %v5316
    %v5332 = vadd.f32 %v5198, %v5320
    %v5333 = vadd.f32 %v5199, %v5308
    %v5334 = vadd.f32 %v5200, %v5312
    %v5335 = vadd.f32 %v5201, %v5316
    %v5336 = vadd.f32 %v5202, %v5320
    %v5337 = vadd.f32 %v5203, %v5308
    %v5338 = vadd.f32 %v5204, %v5312
    %v5339 = vadd.f32 %v5205, %v5316
    %v5340 = vadd.f32 %v5206, %v5320
    %v5341 = vadd.f32 %v5207, %v5308
    %v5342 = vadd.f32 %v5208, %v5312
    %v5343 = vadd.f32 %v5209, %v5316
    %v5344 = vadd.f32 %v5210, %v5320
    %v5345 = vadd.f32 %v5211, %v5308
    %v5346 = vadd.f32 %v5212, %v5312
    %v5347 = vadd.f32 %v5213, %v5316
    %v5348 = vadd.f32 %v5214, %v5320
    %v5349 = vadd.f32 %v5215, %v5308
    %v5350 = vadd.f32 %v5216, %v5312
    %v5351 = vadd.f32 %v5217, %v5316
    %v5352 = vadd.f32 %v5218, %v5320
    %v5353 = vadd.f32 %v5219, %v5308
    %v5354 = vadd.f32 %v5220, %v5312
    %v5355 = vadd.f32 %v5221, %v5316
    %v5356 = vadd.f32 %v5222, %v5320
    %v5357 = vadd.f32 %v5223, %v5308
    %v5358 = vadd.f32 %v5224, %v5312
    %v5359 = vadd.f32 %v5225, %v5316
    %v5360 = vadd.f32 %v5226, %v5320
    %v5361 = vadd.f32 %v5227, %v5308
    %v5362 = vadd.f32 %v5228, %v5312
    %v5363 = vadd.f32 %v5229, %v5316
    %v5364 = vadd.f32 %v5230, %v5320
    %v5365 = vadd.f32 %v5231, %v5308
    %v5366 = vadd.f32 %v5232, %v5312
    %v5367 = vadd.f32 %v5233, %v5316
    %v5368 = vadd.f32 %v5234, %v5320
    %v5369 = vadd.f32 %v5235, %v5308
    %v5370 = vadd.f32 %v5236, %v5312
    %v5371 = vadd.f32 %v5237, %v5316
    %v5372 = vadd.f32 %v5238, %v5320
    %v5373 = vadd.f32 %v5239, %v5308
    %v5374 = vadd.f32 %v5240, %v5312
    %v5375 = vadd.f32 %v5241, %v5316
    %v5376 = vadd.f32 %v5242, %v5320
    %v5377 = vadd.f32 %v5243, %v5308
    %v5378 = vadd.f32 %v5244, %v5312
    %v5379 = vadd.f32 %v5245, %v5316
    %v5380 = vadd.f32 %v5246, %v5320
    %v5381 = vadd.f32 %v5247, %v5308
    %v5382 = vadd.f32 %v5248, %v5312
    %v5383 = vadd.f32 %v5249, %v5316
    %v5384 = vadd.f32 %v5250, %v5320
    %v5385 = vadd.f32 %v5251, %v5308
    %v5386 = vadd.f32 %v5252, %v5312
    %v5387 = vadd.f32 %v5253, %v5316
    %v5388 = vadd.f32 %v5254, %v5320
    %v5389 = vadd.f32 %v5255, %v5308
    %v5390 = vadd.f32 %v5256, %v5312
    %v5391 = vadd.f32 %v5257, %v5316
    %v5392 = vadd.f32 %v5258, %v5320
    %v5393 = vadd.f32 %v5259, %v5308
    %v5394 = vadd.f32 %v5260, %v5312
    %v5395 = vadd.f32 %v5261, %v5316
    %v5396 = vadd.f32 %v5262, %v5320
    %v5397 = vadd.f32 %v5263, %v5308
    %v5398 = vadd.f32 %v5264, %v5312
    %v5399 = vadd.f32 %v5265, %v5316
    %v5400 = vadd.f32 %v5266, %v5320
    %v5401 = vadd.f32 %v5267, %v5308
    %v5402 = vadd.f32 %v5268, %v5312
    %v5403 = vadd.f32 %v5269, %v5316
    %v5404 = vadd.f32 %v5270, %v5320
    %v5405 = vadd.f32 %v5271, %v5308
    %v5406 = vadd.f32 %v5272, %v5312
    %v5407 = vadd.f32 %v5273, %v5316
    %v5408 = vadd.f32 %v5274, %v5320
    %v5409 = vadd.f32 %v5275, %v5308
    %v5410 = vadd.f32 %v5276, %v5312
    %v5411 = vadd.f32 %v5277, %v5316
    %v5412 = vadd.f32 %v5278, %v5320
    %v5413 = vadd.f32 %v5279, %v5308
    %v5414 = vadd.f32 %v5280, %v5312
    %v5415 = vadd.f32 %v5281, %v5316
    %v5416 = vadd.f32 %v5282, %v5320
    %v5417 = vadd.f32 %v5283, %v5308
    %v5418 = vadd.f32 %v5284, %v5312
    %v5419 = vadd.f32 %v5285, %v5316
    %v5420 = vadd.f32 %v5286, %v5320
    %v5421 = vadd.f32 %v5287, %v5308
    %v5422 = vadd.f32 %v5288, %v5312
    %v5423 = vadd.f32 %v5289, %v5316
    %v5424 = vadd.f32 %v5290, %v5320
    %v5425 = vadd.f32 %v5291, %v5308
    %v5426 = vadd.f32 %v5292, %v5312
    %v5427 = vadd.f32 %v5293, %v5316
    %v5428 = vadd.f32 %v5294, %v5320
    %v5429 = vadd.f32 %v5295, %v5308
    %v5430 = vadd.f32 %v5296, %v5312
    %v5431 = vadd.f32 %v5297, %v5316
    %v5432 = vadd.f32 %v5298, %v5320
    %v5433 = vadd.f32 %v5299, %v5308
    %v5434 = vadd.f32 %v5300, %v5312
    %v5435 = vadd.f32 %v5301, %v5316
    %v5436 = vadd.f32 %v5302, %v5320
    %v5437 = vmax.f32 %v5325, 0.0
    %v5438 = vmax.f32 %v5326, 0.0
    %v5439 = vmax.f32 %v5327, 0.0
    %v5440 = vmax.f32 %v5328, 0.0
    %v5441 = vmax.f32 %v5329, 0.0
    %v5442 = vmax.f32 %v5330, 0.0
    %v5443 = vmax.f32 %v5331, 0.0
    %v5444 = vmax.f32 %v5332, 0.0
    %v5445 = vmax.f32 %v5333, 0.0
    %v5446 = vmax.f32 %v5334, 0.0
    %v5447 = vmax.f32 %v5335, 0.0
    %v5448 = vmax.f32 %v5336, 0.0
    %v5449 = vmax.f32 %v5337, 0.0
    %v5450 = vmax.f32 %v5338, 0.0
    %v5451 = vmax.f32 %v5339, 0.0
    %v5452 = vmax.f32 %v5340, 0.0
    %v5453 = vmax.f32 %v5341, 0.0
    %v5454 = vmax.f32 %v5342, 0.0
    %v5455 = vmax.f32 %v5343, 0.0
    %v5456 = vmax.f32 %v5344, 0.0
    %v5457 = vmax.f32 %v5345, 0.0
    %v5458 = vmax.f32 %v5346, 0.0
    %v5459 = vmax.f32 %v5347, 0.0
    %v5460 = vmax.f32 %v5348, 0.0
    %v5461 = vmax.f32 %v5349, 0.0
    %v5462 = vmax.f32 %v5350, 0.0
    %v5463 = vmax.f32 %v5351, 0.0
    %v5464 = vmax.f32 %v5352, 0.0
    %v5465 = vmax.f32 %v5353, 0.0
    %v5466 = vmax.f32 %v5354, 0.0
    %v5467 = vmax.f32 %v5355, 0.0
    %v5468 = vmax.f32 %v5356, 0.0
    %v5469 = vmax.f32 %v5357, 0.0
    %v5470 = vmax.f32 %v5358, 0.0
    %v5471 = vmax.f32 %v5359, 0.0
    %v5472 = vmax.f32 %v5360, 0.0
    %v5473 = vmax.f32 %v5361, 0.0
    %v5474 = vmax.f32 %v5362, 0.0
    %v5475 = vmax.f32 %v5363, 0.0
    %v5476 = vmax.f32 %v5364, 0.0
    %v5477 = vmax.f32 %v5365, 0.0
    %v5478 = vmax.f32 %v5366, 0.0
    %v5479 = vmax.f32 %v5367, 0.0
    %v5480 = vmax.f32 %v5368, 0.0
    %v5481 = vmax.f32 %v5369, 0.0
    %v5482 = vmax.f32 %v5370, 0.0
    %v5483 = vmax.f32 %v5371, 0.0
    %v5484 = vmax.f32 %v5372, 0.0
    %v5485 = vmax.f32 %v5373, 0.0
    %v5486 = vmax.f32 %v5374, 0.0
    %v5487 = vmax.f32 %v5375, 0.0
    %v5488 = vmax.f32 %v5376, 0.0
    %v5489 = vmax.f32 %v5377, 0.0
    %v5490 = vmax.f32 %v5378, 0.0
    %v5491 = vmax.f32 %v5379, 0.0
    %v5492 = vmax.f32 %v5380, 0.0
    %v5493 = vmax.f32 %v5381, 0.0
    %v5494 = vmax.f32 %v5382, 0.0
    %v5495 = vmax.f32 %v5383, 0.0
    %v5496 = vmax.f32 %v5384, 0.0
    %v5497 = vmax.f32 %v5385, 0.0
    %v5498 = vmax.f32 %v5386, 0.0
    %v5499 = vmax.f32 %v5387, 0.0
    %v5500 = vmax.f32 %v5388, 0.0
    %v5501 = vmax.f32 %v5389, 0.0
    %v5502 = vmax.f32 %v5390, 0.0
    %v5503 = vmax.f32 %v5391, 0.0
    %v5504 = vmax.f32 %v5392, 0.0
    %v5505 = vmax.f32 %v5393, 0.0
    %v5506 = vmax.f32 %v5394, 0.0
    %v5507 = vmax.f32 %v5395, 0.0
    %v5508 = vmax.f32 %v5396, 0.0
    %v5509 = vmax.f32 %v5397, 0.0
    %v5510 = vmax.f32 %v5398, 0.0
    %v5511 = vmax.f32 %v5399, 0.0
    %v5512 = vmax.f32 %v5400, 0.0
    %v5513 = vmax.f32 %v5401, 0.0
    %v5514 = vmax.f32 %v5402, 0.0
    %v5515 = vmax.f32 %v5403, 0.0
    %v5516 = vmax.f32 %v5404, 0.0
    %v5517 = vmax.f32 %v5405, 0.0
    %v5518 = vmax.f32 %v5406, 0.0
    %v5519 = vmax.f32 %v5407, 0.0
    %v5520 = vmax.f32 %v5408, 0.0
    %v5521 = vmax.f32 %v5409, 0.0
    %v5522 = vmax.f32 %v5410, 0.0
    %v5523 = vmax.f32 %v5411, 0.0
    %v5524 = vmax.f32 %v5412, 0.0
    %v5525 = vmax.f32 %v5413, 0.0
    %v5526 = vmax.f32 %v5414, 0.0
    %v5527 = vmax.f32 %v5415, 0.0
    %v5528 = vmax.f32 %v5416, 0.0
    %v5529 = vmax.f32 %v5417, 0.0
    %v5530 = vmax.f32 %v5418, 0.0
    %v5531 = vmax.f32 %v5419, 0.0
    %v5532 = vmax.f32 %v5420, 0.0
    %v5533 = vmax.f32 %v5421, 0.0
    %v5534 = vmax.f32 %v5422, 0.0
    %v5535 = vmax.f32 %v5423, 0.0
    %v5536 = vmax.f32 %v5424, 0.0
    %v5537 = vmax.f32 %v5425, 0.0
    %v5538 = vmax.f32 %v5426, 0.0
    %v5539 = vmax.f32 %v5427, 0.0
    %v5540 = vmax.f32 %v5428, 0.0
    %v5541 = vmax.f32 %v5429, 0.0
    %v5542 = vmax.f32 %v5430, 0.0
    %v5543 = vmax.f32 %v5431, 0.0
    %v5544 = vmax.f32 %v5432, 0.0
    %v5545 = vmax.f32 %v5433, 0.0
    %v5546 = vmax.f32 %v5434, 0.0
    %v5547 = vmax.f32 %v5435, 0.0
    %v5548 = vmax.f32 %v5436, 0.0
    %v5549 = vpack.c.bf16 %v5441, %v5437
    %v5550 = vpack.c.bf16 %v5442, %v5438
    %v5551 = vpack.c.bf16 %v5443, %v5439
    %v5552 = vpack.c.bf16 %v5444, %v5440
    %v5553 = vpack.c.bf16 %v5449, %v5445
    %v5554 = vpack.c.bf16 %v5450, %v5446
    %v5555 = vpack.c.bf16 %v5451, %v5447
    %v5556 = vpack.c.bf16 %v5452, %v5448
    %v5557 = vpack.c.bf16 %v5457, %v5453
    %v5558 = vpack.c.bf16 %v5458, %v5454
    %v5559 = vpack.c.bf16 %v5459, %v5455
    %v5560 = vpack.c.bf16 %v5460, %v5456
    %v5561 = vpack.c.bf16 %v5465, %v5461
    %v5562 = vpack.c.bf16 %v5466, %v5462
    %v5563 = vpack.c.bf16 %v5467, %v5463
    %v5564 = vpack.c.bf16 %v5468, %v5464
    %v5565 = vpack.c.bf16 %v5473, %v5469
    %v5566 = vpack.c.bf16 %v5474, %v5470
    %v5567 = vpack.c.bf16 %v5475, %v5471
    %v5568 = vpack.c.bf16 %v5476, %v5472
    %v5569 = vpack.c.bf16 %v5481, %v5477
    %v5570 = vpack.c.bf16 %v5482, %v5478
    %v5571 = vpack.c.bf16 %v5483, %v5479
    %v5572 = vpack.c.bf16 %v5484, %v5480
    %v5573 = vpack.c.bf16 %v5489, %v5485
    %v5574 = vpack.c.bf16 %v5490, %v5486
    %v5575 = vpack.c.bf16 %v5491, %v5487
    %v5576 = vpack.c.bf16 %v5492, %v5488
    %v5577 = vpack.c.bf16 %v5497, %v5493
    %v5578 = vpack.c.bf16 %v5498, %v5494
    %v5579 = vpack.c.bf16 %v5499, %v5495
    %v5580 = vpack.c.bf16 %v5500, %v5496
    %v5581 = vpack.c.bf16 %v5505, %v5501
    %v5582 = vpack.c.bf16 %v5506, %v5502
    %v5583 = vpack.c.bf16 %v5507, %v5503
    %v5584 = vpack.c.bf16 %v5508, %v5504
    %v5585 = vpack.c.bf16 %v5513, %v5509
    %v5586 = vpack.c.bf16 %v5514, %v5510
    %v5587 = vpack.c.bf16 %v5515, %v5511
    %v5588 = vpack.c.bf16 %v5516, %v5512
    %v5589 = vpack.c.bf16 %v5521, %v5517
    %v5590 = vpack.c.bf16 %v5522, %v5518
    %v5591 = vpack.c.bf16 %v5523, %v5519
    %v5592 = vpack.c.bf16 %v5524, %v5520
    %v5593 = vpack.c.bf16 %v5529, %v5525
    %v5594 = vpack.c.bf16 %v5530, %v5526
    %v5595 = vpack.c.bf16 %v5531, %v5527
    %v5596 = vpack.c.bf16 %v5532, %v5528
    %v5597 = vpack.c.bf16 %v5537, %v5533
    %v5598 = vpack.c.bf16 %v5538, %v5534
    %v5599 = vpack.c.bf16 %v5539, %v5535
    %v5600 = vpack.c.bf16 %v5540, %v5536
    %v5601 = vpack.c.bf16 %v5545, %v5541
    %v5602 = vpack.c.bf16 %v5546, %v5542
    %v5603 = vpack.c.bf16 %v5547, %v5543
    %v5604 = vpack.c.bf16 %v5548, %v5544
    %v5605 = vld [vmem:[#allocation6] sm:$0xff]
    %v5606 = vld [vmem:[#allocation6 + $0x8] sm:$0xff]
    %v5607 = vld [vmem:[#allocation6 + $0x10] sm:$0xff]
    %v5608 = vld [vmem:[#allocation6 + $0x18] sm:$0xff]
    %v5609 = vld [vmem:[#allocation6 + $0x20] sm:$0xff]
    %v5610 = vld [vmem:[#allocation6 + $0x28] sm:$0xff]
    %v5611 = vld [vmem:[#allocation6 + $0x30] sm:$0xff]
    %v5612 = vld [vmem:[#allocation6 + $0x38] sm:$0xff]
    %v5613 = vld [vmem:[#allocation6 + $0x40] sm:$0xff]
    %v5614 = vld [vmem:[#allocation6 + $0x48] sm:$0xff]
    %v5615 = vld [vmem:[#allocation6 + $0x50] sm:$0xff]
    %v5616 = vld [vmem:[#allocation6 + $0x58] sm:$0xff]
    %v5617 = vld [vmem:[#allocation6 + $0x60] sm:$0xff]
    %v5618 = vld [vmem:[#allocation6 + $0x68] sm:$0xff]
    %v5619 = vld [vmem:[#allocation6 + $0x70] sm:$0xff]
    %v5620 = vld [vmem:[#allocation6 + $0x78] sm:$0xff]
    %v5621 = vld [vmem:[#allocation6 + $0x80] sm:$0xff]
    %v5622 = vld [vmem:[#allocation6 + $0x88] sm:$0xff]
    %v5623 = vld [vmem:[#allocation6 + $0x90] sm:$0xff]
    %v5624 = vld [vmem:[#allocation6 + $0x98] sm:$0xff]
    %v5625 = vld [vmem:[#allocation6 + $0xa0] sm:$0xff]
    %v5626 = vld [vmem:[#allocation6 + $0xa8] sm:$0xff]
    %v5627 = vld [vmem:[#allocation6 + $0xb0] sm:$0xff]
    %v5628 = vld [vmem:[#allocation6 + $0xb8] sm:$0xff]
    %v5629 = vld [vmem:[#allocation6 + $0xc0] sm:$0xff]
    %v5630 = vld [vmem:[#allocation6 + $0xc8] sm:$0xff]
    %v5631 = vld [vmem:[#allocation6 + $0xd0] sm:$0xff]
    %v5632 = vld [vmem:[#allocation6 + $0xd8] sm:$0xff]
    %v5633 = vld [vmem:[#allocation6 + $0xe0] sm:$0xff]
    %v5634 = vld [vmem:[#allocation6 + $0xe8] sm:$0xff]
    %v5635 = vld [vmem:[#allocation6 + $0xf0] sm:$0xff]
    %v5636 = vld [vmem:[#allocation6 + $0xf8] sm:$0xff]
    %v5637 = vld [vmem:[#allocation6 + $0x100] sm:$0xff]
    %v5638 = vld [vmem:[#allocation6 + $0x108] sm:$0xff]
    %v5639 = vld [vmem:[#allocation6 + $0x110] sm:$0xff]
    %v5640 = vld [vmem:[#allocation6 + $0x118] sm:$0xff]
    %v5641 = vld [vmem:[#allocation6 + $0x120] sm:$0xff]
    %v5642 = vld [vmem:[#allocation6 + $0x128] sm:$0xff]
    %v5643 = vld [vmem:[#allocation6 + $0x130] sm:$0xff]
    %v5644 = vld [vmem:[#allocation6 + $0x138] sm:$0xff]
    %v5645 = vld [vmem:[#allocation6 + $0x140] sm:$0xff]
    %v5646 = vld [vmem:[#allocation6 + $0x148] sm:$0xff]
    %v5647 = vld [vmem:[#allocation6 + $0x150] sm:$0xff]
    %v5648 = vld [vmem:[#allocation6 + $0x158] sm:$0xff]
    %v5649 = vld [vmem:[#allocation6 + $0x160] sm:$0xff]
    %v5650 = vld [vmem:[#allocation6 + $0x168] sm:$0xff]
    %v5651 = vld [vmem:[#allocation6 + $0x170] sm:$0xff]
    %v5652 = vld [vmem:[#allocation6 + $0x178] sm:$0xff]
    %v5653 = vld [vmem:[#allocation6 + $0x180] sm:$0xff]
    %v5654 = vld [vmem:[#allocation6 + $0x188] sm:$0xff]
    %v5655 = vld [vmem:[#allocation6 + $0x190] sm:$0xff]
    %v5656 = vld [vmem:[#allocation6 + $0x198] sm:$0xff]
    %v5657 = vld [vmem:[#allocation6 + $0x1a0] sm:$0xff]
    %v5658 = vld [vmem:[#allocation6 + $0x1a8] sm:$0xff]
    %v5659 = vld [vmem:[#allocation6 + $0x1b0] sm:$0xff]
    %v5660 = vld [vmem:[#allocation6 + $0x1b8] sm:$0xff]
    %s5661 = scalar_lea.vmem [#allocation6], 896
    %v5662 = vld [vmem:[%s5661] sm:$0xff]
    %v5663 = vld [vmem:[%s5661 + $0x8] sm:$0xff]
    %v5664 = vld [vmem:[%s5661 + $0x10] sm:$0xff]
    %v5665 = vld [vmem:[%s5661 + $0x18] sm:$0xff]
    %v5666 = vld [vmem:[%s5661 + $0x20] sm:$0xff]
    %v5667 = vld [vmem:[%s5661 + $0x28] sm:$0xff]
    %v5668 = vld [vmem:[%s5661 + $0x30] sm:$0xff]
    %v5669 = vld [vmem:[%s5661 + $0x38] sm:$0xff]
    %v5670 = vld [vmem:[%s5661 + $0x40] sm:$0xff]
    %v5671 = vld [vmem:[%s5661 + $0x48] sm:$0xff]
    %v5672 = vld [vmem:[%s5661 + $0x50] sm:$0xff]
    %v5673 = vld [vmem:[%s5661 + $0x58] sm:$0xff]
    %v5674 = vld [vmem:[%s5661 + $0x60] sm:$0xff]
    %v5675 = vld [vmem:[%s5661 + $0x68] sm:$0xff]
    %v5676 = vld [vmem:[%s5661 + $0x70] sm:$0xff]
    %v5677 = vld [vmem:[%s5661 + $0x78] sm:$0xff]
    %v5678 = vld [vmem:[%s5661 + $0x80] sm:$0xff]
    %v5679 = vld [vmem:[%s5661 + $0x88] sm:$0xff]
    %v5680 = vld [vmem:[%s5661 + $0x90] sm:$0xff]
    %v5681 = vld [vmem:[%s5661 + $0x98] sm:$0xff]
    %v5682 = vld [vmem:[%s5661 + $0xa0] sm:$0xff]
    %v5683 = vld [vmem:[%s5661 + $0xa8] sm:$0xff]
    %v5684 = vld [vmem:[%s5661 + $0xb0] sm:$0xff]
    %v5685 = vld [vmem:[%s5661 + $0xb8] sm:$0xff]
    %v5686 = vld [vmem:[%s5661 + $0xc0] sm:$0xff]
    %v5687 = vld [vmem:[%s5661 + $0xc8] sm:$0xff]
    %v5688 = vld [vmem:[%s5661 + $0xd0] sm:$0xff]
    %v5689 = vld [vmem:[%s5661 + $0xd8] sm:$0xff]
    %v5690 = vld [vmem:[%s5661 + $0xe0] sm:$0xff]
    %v5691 = vld [vmem:[%s5661 + $0xe8] sm:$0xff]
    %v5692 = vld [vmem:[%s5661 + $0xf0] sm:$0xff]
    %v5693 = vld [vmem:[%s5661 + $0xf8] sm:$0xff]
    %v5694 = vld [vmem:[%s5661 + $0x100] sm:$0xff]
    %v5695 = vld [vmem:[%s5661 + $0x108] sm:$0xff]
    %v5696 = vld [vmem:[%s5661 + $0x110] sm:$0xff]
    %v5697 = vld [vmem:[%s5661 + $0x118] sm:$0xff]
    %v5698 = vld [vmem:[%s5661 + $0x120] sm:$0xff]
    %v5699 = vld [vmem:[%s5661 + $0x128] sm:$0xff]
    %v5700 = vld [vmem:[%s5661 + $0x130] sm:$0xff]
    %v5701 = vld [vmem:[%s5661 + $0x138] sm:$0xff]
    %v5702 = vld [vmem:[%s5661 + $0x140] sm:$0xff]
    %v5703 = vld [vmem:[%s5661 + $0x148] sm:$0xff]
    %v5704 = vld [vmem:[%s5661 + $0x150] sm:$0xff]
    %v5705 = vld [vmem:[%s5661 + $0x158] sm:$0xff]
    %v5706 = vld [vmem:[%s5661 + $0x160] sm:$0xff]
    %v5707 = vld [vmem:[%s5661 + $0x168] sm:$0xff]
    %v5708 = vld [vmem:[%s5661 + $0x170] sm:$0xff]
    %v5709 = vld [vmem:[%s5661 + $0x178] sm:$0xff]
    %v5710 = vld [vmem:[%s5661 + $0x180] sm:$0xff]
    %v5711 = vld [vmem:[%s5661 + $0x188] sm:$0xff]
    %v5712 = vld [vmem:[%s5661 + $0x190] sm:$0xff]
    %v5713 = vld [vmem:[%s5661 + $0x198] sm:$0xff]
    %v5714 = vld [vmem:[%s5661 + $0x1a0] sm:$0xff]
    %v5715 = vld [vmem:[%s5661 + $0x1a8] sm:$0xff]
    %v5716 = vld [vmem:[%s5661 + $0x1b0] sm:$0xff]
    %v5717 = vld [vmem:[%s5661 + $0x1b8] sm:$0xff]
    %v5774 = vunpack.c.l.b16 %v5662
    %v5775 = vunpack.c.h.b16 %v5662
    %v5776 = vunpack.c.l.b16 %v5663
    %v5777 = vunpack.c.h.b16 %v5663
    %v5778 = vunpack.c.l.b16 %v5664
    %v5779 = vunpack.c.h.b16 %v5664
    %v5780 = vunpack.c.l.b16 %v5665
    %v5781 = vunpack.c.h.b16 %v5665
    %v5782 = vunpack.c.l.b16 %v5666
    %v5783 = vunpack.c.h.b16 %v5666
    %v5784 = vunpack.c.l.b16 %v5667
    %v5785 = vunpack.c.h.b16 %v5667
    %v5786 = vunpack.c.l.b16 %v5668
    %v5787 = vunpack.c.h.b16 %v5668
    %v5788 = vunpack.c.l.b16 %v5669
    %v5789 = vunpack.c.h.b16 %v5669
    %v5790 = vunpack.c.l.b16 %v5670
    %v5791 = vunpack.c.h.b16 %v5670
    %v5792 = vunpack.c.l.b16 %v5671
    %v5793 = vunpack.c.h.b16 %v5671
    %v5794 = vunpack.c.l.b16 %v5672
    %v5795 = vunpack.c.h.b16 %v5672
    %v5796 = vunpack.c.l.b16 %v5673
    %v5797 = vunpack.c.h.b16 %v5673
    %v5798 = vunpack.c.l.b16 %v5674
    %v5799 = vunpack.c.h.b16 %v5674
    %v5800 = vunpack.c.l.b16 %v5675
    %v5801 = vunpack.c.h.b16 %v5675
    %v5802 = vunpack.c.l.b16 %v5676
    %v5803 = vunpack.c.h.b16 %v5676
    %v5804 = vunpack.c.l.b16 %v5677
    %v5805 = vunpack.c.h.b16 %v5677
    %v5806 = vunpack.c.l.b16 %v5678
    %v5807 = vunpack.c.h.b16 %v5678
    %v5808 = vunpack.c.l.b16 %v5679
    %v5809 = vunpack.c.h.b16 %v5679
    %v5810 = vunpack.c.l.b16 %v5680
    %v5811 = vunpack.c.h.b16 %v5680
    %v5812 = vunpack.c.l.b16 %v5681
    %v5813 = vunpack.c.h.b16 %v5681
    %v5814 = vunpack.c.l.b16 %v5682
    %v5815 = vunpack.c.h.b16 %v5682
    %v5816 = vunpack.c.l.b16 %v5683
    %v5817 = vunpack.c.h.b16 %v5683
    %v5818 = vunpack.c.l.b16 %v5684
    %v5819 = vunpack.c.h.b16 %v5684
    %v5820 = vunpack.c.l.b16 %v5685
    %v5821 = vunpack.c.h.b16 %v5685
    %v5822 = vunpack.c.l.b16 %v5686
    %v5823 = vunpack.c.h.b16 %v5686
    %v5824 = vunpack.c.l.b16 %v5687
    %v5825 = vunpack.c.h.b16 %v5687
    %v5826 = vunpack.c.l.b16 %v5688
    %v5827 = vunpack.c.h.b16 %v5688
    %v5828 = vunpack.c.l.b16 %v5689
    %v5829 = vunpack.c.h.b16 %v5689
    %v5830 = vunpack.c.l.b16 %v5690
    %v5831 = vunpack.c.h.b16 %v5690
    %v5832 = vunpack.c.l.b16 %v5691
    %v5833 = vunpack.c.h.b16 %v5691
    %v5834 = vunpack.c.l.b16 %v5692
    %v5835 = vunpack.c.h.b16 %v5692
    %v5836 = vunpack.c.l.b16 %v5693
    %v5837 = vunpack.c.h.b16 %v5693
    %v5838 = vunpack.c.l.b16 %v5694
    %v5839 = vunpack.c.h.b16 %v5694
    %v5840 = vunpack.c.l.b16 %v5695
    %v5841 = vunpack.c.h.b16 %v5695
    %v5842 = vunpack.c.l.b16 %v5696
    %v5843 = vunpack.c.h.b16 %v5696
    %v5844 = vunpack.c.l.b16 %v5697
    %v5845 = vunpack.c.h.b16 %v5697
    %v5846 = vunpack.c.l.b16 %v5698
    %v5847 = vunpack.c.h.b16 %v5698
    %v5848 = vunpack.c.l.b16 %v5699
    %v5849 = vunpack.c.h.b16 %v5699
    %v5850 = vunpack.c.l.b16 %v5700
    %v5851 = vunpack.c.h.b16 %v5700
    %v5852 = vunpack.c.l.b16 %v5701
    %v5853 = vunpack.c.h.b16 %v5701
    %v5854 = vunpack.c.l.b16 %v5702
    %v5855 = vunpack.c.h.b16 %v5702
    %v5856 = vunpack.c.l.b16 %v5703
    %v5857 = vunpack.c.h.b16 %v5703
    %v5858 = vunpack.c.l.b16 %v5704
    %v5859 = vunpack.c.h.b16 %v5704
    %v5860 = vunpack.c.l.b16 %v5705
    %v5861 = vunpack.c.h.b16 %v5705
    %v5862 = vunpack.c.l.b16 %v5706
    %v5863 = vunpack.c.h.b16 %v5706
    %v5864 = vunpack.c.l.b16 %v5707
    %v5865 = vunpack.c.h.b16 %v5707
    %v5866 = vunpack.c.l.b16 %v5708
    %v5867 = vunpack.c.h.b16 %v5708
    %v5868 = vunpack.c.l.b16 %v5709
    %v5869 = vunpack.c.h.b16 %v5709
    %v5870 = vunpack.c.l.b16 %v5710
    %v5871 = vunpack.c.h.b16 %v5710
    %v5872 = vunpack.c.l.b16 %v5711
    %v5873 = vunpack.c.h.b16 %v5711
    %v5874 = vunpack.c.l.b16 %v5712
    %v5875 = vunpack.c.h.b16 %v5712
    %v5876 = vunpack.c.l.b16 %v5713
    %v5877 = vunpack.c.h.b16 %v5713
    %v5878 = vunpack.c.l.b16 %v5714
    %v5879 = vunpack.c.h.b16 %v5714
    %v5880 = vunpack.c.l.b16 %v5715
    %v5881 = vunpack.c.h.b16 %v5715
    %v5882 = vunpack.c.l.b16 %v5716
    %v5883 = vunpack.c.h.b16 %v5716
    %v5884 = vunpack.c.l.b16 %v5717
    %v5885 = vunpack.c.h.b16 %v5717
    %v5886 = vpack.c.b16 %v5776, %v5774
    %v5887 = vpack.c.b16 %v5777, %v5775
    %v5888 = vpack.c.b16 %v5780, %v5778
    %v5889 = vpack.c.b16 %v5781, %v5779
    %v5890 = vpack.c.b16 %v5784, %v5782
    %v5891 = vpack.c.b16 %v5785, %v5783
    %v5892 = vpack.c.b16 %v5788, %v5786
    %v5893 = vpack.c.b16 %v5789, %v5787
    %v5894 = vpack.c.b16 %v5792, %v5790
    %v5895 = vpack.c.b16 %v5793, %v5791
    %v5896 = vpack.c.b16 %v5796, %v5794
    %v5897 = vpack.c.b16 %v5797, %v5795
    %v5898 = vpack.c.b16 %v5800, %v5798
    %v5899 = vpack.c.b16 %v5801, %v5799
    %v5900 = vpack.c.b16 %v5804, %v5802
    %v5901 = vpack.c.b16 %v5805, %v5803
    %v5902 = vpack.c.b16 %v5808, %v5806
    %v5903 = vpack.c.b16 %v5809, %v5807
    %v5904 = vpack.c.b16 %v5812, %v5810
    %v5905 = vpack.c.b16 %v5813, %v5811
    %v5906 = vpack.c.b16 %v5816, %v5814
    %v5907 = vpack.c.b16 %v5817, %v5815
    %v5908 = vpack.c.b16 %v5820, %v5818
    %v5909 = vpack.c.b16 %v5821, %v5819
    %v5910 = vpack.c.b16 %v5824, %v5822
    %v5911 = vpack.c.b16 %v5825, %v5823
    %v5912 = vpack.c.b16 %v5828, %v5826
    %v5913 = vpack.c.b16 %v5829, %v5827
    %v5914 = vpack.c.b16 %v5832, %v5830
    %v5915 = vpack.c.b16 %v5833, %v5831
    %v5916 = vpack.c.b16 %v5836, %v5834
    %v5917 = vpack.c.b16 %v5837, %v5835
    %v5918 = vpack.c.b16 %v5840, %v5838
    %v5919 = vpack.c.b16 %v5841, %v5839
    %v5920 = vpack.c.b16 %v5844, %v5842
    %v5921 = vpack.c.b16 %v5845, %v5843
    %v5922 = vpack.c.b16 %v5848, %v5846
    %v5923 = vpack.c.b16 %v5849, %v5847
    %v5924 = vpack.c.b16 %v5852, %v5850
    %v5925 = vpack.c.b16 %v5853, %v5851
    %v5926 = vpack.c.b16 %v5856, %v5854
    %v5927 = vpack.c.b16 %v5857, %v5855
    %v5928 = vpack.c.b16 %v5860, %v5858
    %v5929 = vpack.c.b16 %v5861, %v5859
    %v5930 = vpack.c.b16 %v5864, %v5862
    %v5931 = vpack.c.b16 %v5865, %v5863
    %v5932 = vpack.c.b16 %v5868, %v5866
    %v5933 = vpack.c.b16 %v5869, %v5867
    %v5934 = vpack.c.b16 %v5872, %v5870
    %v5935 = vpack.c.b16 %v5873, %v5871
    %v5936 = vpack.c.b16 %v5876, %v5874
    %v5937 = vpack.c.b16 %v5877, %v5875
    %v5938 = vpack.c.b16 %v5880, %v5878
    %v5939 = vpack.c.b16 %v5881, %v5879
    %v5940 = vpack.c.b16 %v5884, %v5882
    %v5941 = vpack.c.b16 %v5885, %v5883
    %vm5998 = vcmask 523264
    %v6000 = vsel %vm5998, %v5552, 0
    %v6003 = vsel %vm5998, %v5556, 0
    %v6006 = vsel %vm5998, %v5560, 0
    %v6009 = vsel %vm5998, %v5564, 0
    %v6012 = vsel %vm5998, %v5568, 0
    %v6015 = vsel %vm5998, %v5572, 0
    %v6018 = vsel %vm5998, %v5576, 0
    %v6021 = vsel %vm5998, %v5580, 0
    %v6024 = vsel %vm5998, %v5584, 0
    %v6027 = vsel %vm5998, %v5588, 0
    %v6030 = vsel %vm5998, %v5592, 0
    %v6033 = vsel %vm5998, %v5596, 0
    %v6036 = vsel %vm5998, %v5600, 0
    %v6039 = vsel %vm5998, %v5604, 0
    %6041 = vmatprep.subr.bf16.mxu0 %v5901
    %6042 = vmatpush1.bf16.msra.mxu0 %v5900
    %6043 = vmatprep.subr.bf16.mxu0 %v5899
    %6044 = vmatpush1.bf16.msra.mxu0 %v5898
    %6045 = vmatprep.subr.bf16.mxu0 %v5897
    %6046 = vmatpush1.bf16.msra.mxu0 %v5896
    %6047 = vmatprep.subr.bf16.mxu0 %v5895
    %6048 = vmatpush1.bf16.msra.mxu0 %v5894
    %6049 = vmatprep.subr.bf16.mxu0 %v5893
    %6050 = vmatpush1.bf16.msra.mxu0 %v5892
    %6051 = vmatprep.subr.bf16.mxu0 %v5891
    %6052 = vmatpush1.bf16.msra.mxu0 %v5890
    %6053 = vmatprep.subr.bf16.mxu0 %v5889
    %6054 = vmatpush1.bf16.msra.mxu0 %v5888
    %6055 = vmatprep.subr.bf16.mxu0 %v5887
    %6056 = vmatpush1.bf16.msra.mxu0 %v5886
    %6057 = vmatprep.subr.bf16.mxu0 %v5917
    %6058 = vmatpush2.bf16.msra.mxu0 %v5916
    %6059 = vmatprep.subr.bf16.mxu0 %v5915
    %6060 = vmatpush2.bf16.msra.mxu0 %v5914
    %6061 = vmatprep.subr.bf16.mxu0 %v5913
    %6062 = vmatpush2.bf16.msra.mxu0 %v5912
    %6063 = vmatprep.subr.bf16.mxu0 %v5911
    %6064 = vmatpush2.bf16.msra.mxu0 %v5910
    %6065 = vmatprep.subr.bf16.mxu0 %v5909
    %6066 = vmatpush2.bf16.msra.mxu0 %v5908
    %6067 = vmatprep.subr.bf16.mxu0 %v5907
    %6068 = vmatpush2.bf16.msra.mxu0 %v5906
    %6069 = vmatprep.subr.bf16.mxu0 %v5905
    %6070 = vmatpush2.bf16.msra.mxu0 %v5904
    %6071 = vmatprep.subr.bf16.mxu0 %v5903
    %6072 = vmatpush2.bf16.msra.mxu0 %v5902
    %6073 = vmatprep.mubr.bf16.mxu0 %v5550
    %6074 = vmatmul.mubr.bf16.gmra.mxu0 %v5549
    %v6075 = vpop.f32.mrf.mxu0
    %v6076 = vadd.f32 0.0, %v6075
    %v6077 = vpop.f32.mrf.mxu0
    %v6078 = vadd.f32 0.0, %v6077
    %v6079 = vpop.f32.mrf.mxu0
    %v6080 = vadd.f32 0.0, %v6079
    %v6081 = vpop.f32.mrf.mxu0
    %v6082 = vadd.f32 0.0, %v6081
    %6083 = vmatprep.mubr.bf16.mxu0 %v5554
    %6084 = vmatmul.mubr.bf16.gmra.mxu0 %v5553
    %v6085 = vpop.f32.mrf.mxu0
    %v6086 = vadd.f32 0.0, %v6085
    %v6087 = vpop.f32.mrf.mxu0
    %v6088 = vadd.f32 0.0, %v6087
    %v6089 = vpop.f32.mrf.mxu0
    %v6090 = vadd.f32 0.0, %v6089
    %v6091 = vpop.f32.mrf.mxu0
    %v6092 = vadd.f32 0.0, %v6091
    %6093 = vmatprep.mubr.bf16.mxu0 %v5558
    %6094 = vmatmul.mubr.bf16.gmra.mxu0 %v5557
    %v6095 = vpop.f32.mrf.mxu0
    %v6096 = vadd.f32 0.0, %v6095
    %v6097 = vpop.f32.mrf.mxu0
    %v6098 = vadd.f32 0.0, %v6097
    %v6099 = vpop.f32.mrf.mxu0
    %v6100 = vadd.f32 0.0, %v6099
    %v6101 = vpop.f32.mrf.mxu0
    %v6102 = vadd.f32 0.0, %v6101
    %6103 = vmatprep.mubr.bf16.mxu0 %v5562
    %6104 = vmatmul.mubr.bf16.gmra.mxu0 %v5561
    %v6105 = vpop.f32.mrf.mxu0
    %v6106 = vadd.f32 0.0, %v6105
    %v6107 = vpop.f32.mrf.mxu0
    %v6108 = vadd.f32 0.0, %v6107
    %v6109 = vpop.f32.mrf.mxu0
    %v6110 = vadd.f32 0.0, %v6109
    %v6111 = vpop.f32.mrf.mxu0
    %v6112 = vadd.f32 0.0, %v6111
    %6113 = vmatprep.mubr.bf16.mxu0 %v5566
    %6114 = vmatmul.mubr.bf16.gmra.mxu0 %v5565
    %v6115 = vpop.f32.mrf.mxu0
    %v6116 = vadd.f32 0.0, %v6115
    %v6117 = vpop.f32.mrf.mxu0
    %v6118 = vadd.f32 0.0, %v6117
    %v6119 = vpop.f32.mrf.mxu0
    %v6120 = vadd.f32 0.0, %v6119
    %v6121 = vpop.f32.mrf.mxu0
    %v6122 = vadd.f32 0.0, %v6121
    %6123 = vmatprep.mubr.bf16.mxu0 %v5570
    %6124 = vmatmul.mubr.bf16.gmra.mxu0 %v5569
    %v6125 = vpop.f32.mrf.mxu0
    %v6126 = vadd.f32 0.0, %v6125
    %v6127 = vpop.f32.mrf.mxu0
    %v6128 = vadd.f32 0.0, %v6127
    %v6129 = vpop.f32.mrf.mxu0
    %v6130 = vadd.f32 0.0, %v6129
    %v6131 = vpop.f32.mrf.mxu0
    %v6132 = vadd.f32 0.0, %v6131
    %6133 = vmatprep.mubr.bf16.mxu0 %v5574
    %6134 = vmatmul.mubr.bf16.gmra.mxu0 %v5573
    %v6135 = vpop.f32.mrf.mxu0
    %v6136 = vadd.f32 0.0, %v6135
    %v6137 = vpop.f32.mrf.mxu0
    %v6138 = vadd.f32 0.0, %v6137
    %v6139 = vpop.f32.mrf.mxu0
    %v6140 = vadd.f32 0.0, %v6139
    %v6141 = vpop.f32.mrf.mxu0
    %v6142 = vadd.f32 0.0, %v6141
    %6143 = vmatprep.mubr.bf16.mxu0 %v5578
    %6144 = vmatmul.mubr.bf16.gmra.mxu0 %v5577
    %v6145 = vpop.f32.mrf.mxu0
    %v6146 = vadd.f32 0.0, %v6145
    %v6147 = vpop.f32.mrf.mxu0
    %v6148 = vadd.f32 0.0, %v6147
    %v6149 = vpop.f32.mrf.mxu0
    %v6150 = vadd.f32 0.0, %v6149
    %v6151 = vpop.f32.mrf.mxu0
    %v6152 = vadd.f32 0.0, %v6151
    %6153 = vmatprep.mubr.bf16.mxu0 %v5582
    %6154 = vmatmul.mubr.bf16.gmra.mxu0 %v5581
    %v6155 = vpop.f32.mrf.mxu0
    %v6156 = vadd.f32 0.0, %v6155
    %v6157 = vpop.f32.mrf.mxu0
    %v6158 = vadd.f32 0.0, %v6157
    %v6159 = vpop.f32.mrf.mxu0
    %v6160 = vadd.f32 0.0, %v6159
    %v6161 = vpop.f32.mrf.mxu0
    %v6162 = vadd.f32 0.0, %v6161
    %6163 = vmatprep.mubr.bf16.mxu0 %v5586
    %6164 = vmatmul.mubr.bf16.gmra.mxu0 %v5585
    %v6165 = vpop.f32.mrf.mxu0
    %v6166 = vadd.f32 0.0, %v6165
    %v6167 = vpop.f32.mrf.mxu0
    %v6168 = vadd.f32 0.0, %v6167
    %v6169 = vpop.f32.mrf.mxu0
    %v6170 = vadd.f32 0.0, %v6169
    %v6171 = vpop.f32.mrf.mxu0
    %v6172 = vadd.f32 0.0, %v6171
    %6173 = vmatprep.mubr.bf16.mxu0 %v5590
    %6174 = vmatmul.mubr.bf16.gmra.mxu0 %v5589
    %v6175 = vpop.f32.mrf.mxu0
    %v6176 = vadd.f32 0.0, %v6175
    %v6177 = vpop.f32.mrf.mxu0
    %v6178 = vadd.f32 0.0, %v6177
    %v6179 = vpop.f32.mrf.mxu0
    %v6180 = vadd.f32 0.0, %v6179
    %v6181 = vpop.f32.mrf.mxu0
    %v6182 = vadd.f32 0.0, %v6181
    %6183 = vmatprep.mubr.bf16.mxu0 %v5594
    %6184 = vmatmul.mubr.bf16.gmra.mxu0 %v5593
    %v6185 = vpop.f32.mrf.mxu0
    %v6186 = vadd.f32 0.0, %v6185
    %v6187 = vpop.f32.mrf.mxu0
    %v6188 = vadd.f32 0.0, %v6187
    %v6189 = vpop.f32.mrf.mxu0
    %v6190 = vadd.f32 0.0, %v6189
    %v6191 = vpop.f32.mrf.mxu0
    %v6192 = vadd.f32 0.0, %v6191
    %6193 = vmatprep.mubr.bf16.mxu0 %v5598
    %6194 = vmatmul.mubr.bf16.gmra.mxu0 %v5597
    %v6195 = vpop.f32.mrf.mxu0
    %v6196 = vadd.f32 0.0, %v6195
    %v6197 = vpop.f32.mrf.mxu0
    %v6198 = vadd.f32 0.0, %v6197
    %v6199 = vpop.f32.mrf.mxu0
    %v6200 = vadd.f32 0.0, %v6199
    %v6201 = vpop.f32.mrf.mxu0
    %v6202 = vadd.f32 0.0, %v6201
    %6203 = vmatprep.mubr.bf16.mxu0 %v5602
    %6204 = vmatmul.mubr.bf16.gmra.mxu0 %v5601
    %v6205 = vpop.f32.mrf.mxu0
    %v6206 = vadd.f32 0.0, %v6205
    %v6207 = vpop.f32.mrf.mxu0
    %v6208 = vadd.f32 0.0, %v6207
    %v6209 = vpop.f32.mrf.mxu0
    %v6210 = vadd.f32 0.0, %v6209
    %v6211 = vpop.f32.mrf.mxu0
    %v6212 = vadd.f32 0.0, %v6211
    %6213 = vdwg.mxu0
    %6214 = vmatprep.subr.bf16.mxu0 %v5933
    %6215 = vmatpush1.bf16.msra.mxu0 %v5932
    %6216 = vmatprep.subr.bf16.mxu0 %v5931
    %6217 = vmatpush1.bf16.msra.mxu0 %v5930
    %6218 = vmatprep.subr.bf16.mxu0 %v5929
    %6219 = vmatpush1.bf16.msra.mxu0 %v5928
    %6220 = vmatprep.subr.bf16.mxu0 %v5927
    %6221 = vmatpush1.bf16.msra.mxu0 %v5926
    %6222 = vmatprep.subr.bf16.mxu0 %v5925
    %6223 = vmatpush1.bf16.msra.mxu0 %v5924
    %6224 = vmatprep.subr.bf16.mxu0 %v5923
    %6225 = vmatpush1.bf16.msra.mxu0 %v5922
    %6226 = vmatprep.subr.bf16.mxu0 %v5921
    %6227 = vmatpush1.bf16.msra.mxu0 %v5920
    %6228 = vmatprep.subr.bf16.mxu0 %v5919
    %6229 = vmatpush1.bf16.msra.mxu0 %v5918
    %6230 = vmatprep.subr.bf16.mxu0 0
    %6231 = vmatpush2.bf16.msra.mxu0 0
    %6232 = vmatprep.subr.bf16.mxu0 0
    %6233 = vmatpush2.bf16.msra.mxu0 0
    %6234 = vmatprep.subr.bf16.mxu0 0
    %6235 = vmatpush2.bf16.msra.mxu0 0
    %6236 = vmatprep.subr.bf16.mxu0 0
    %6237 = vmatpush2.bf16.msra.mxu0 0
    %6238 = vmatprep.subr.bf16.mxu0 %v5941
    %6239 = vmatpush2.bf16.msra.mxu0 %v5940
    %6240 = vmatprep.subr.bf16.mxu0 %v5939
    %6241 = vmatpush2.bf16.msra.mxu0 %v5938
    %6242 = vmatprep.subr.bf16.mxu0 %v5937
    %6243 = vmatpush2.bf16.msra.mxu0 %v5936
    %6244 = vmatprep.subr.bf16.mxu0 %v5935
    %6245 = vmatpush2.bf16.msra.mxu0 %v5934
    %6246 = vmatprep.mubr.bf16.mxu0 %v6000
    %6247 = vmatmul.mubr.bf16.gmra.mxu0 %v5551
    %v6248 = vpop.f32.mrf.mxu0
    %v6249 = vadd.f32 %v6076, %v6248
    %v6250 = vpop.f32.mrf.mxu0
    %v6251 = vadd.f32 %v6078, %v6250
    %v6252 = vpop.f32.mrf.mxu0
    %v6253 = vadd.f32 %v6080, %v6252
    %v6254 = vpop.f32.mrf.mxu0
    %v6255 = vadd.f32 %v6082, %v6254
    %6256 = vmatprep.mubr.bf16.mxu0 %v6003
    %6257 = vmatmul.mubr.bf16.gmra.mxu0 %v5555
    %v6258 = vpop.f32.mrf.mxu0
    %v6259 = vadd.f32 %v6086, %v6258
    %v6260 = vpop.f32.mrf.mxu0
    %v6261 = vadd.f32 %v6088, %v6260
    %v6262 = vpop.f32.mrf.mxu0
    %v6263 = vadd.f32 %v6090, %v6262
    %v6264 = vpop.f32.mrf.mxu0
    %v6265 = vadd.f32 %v6092, %v6264
    %6266 = vmatprep.mubr.bf16.mxu0 %v6006
    %6267 = vmatmul.mubr.bf16.gmra.mxu0 %v5559
    %v6268 = vpop.f32.mrf.mxu0
    %v6269 = vadd.f32 %v6096, %v6268
    %v6270 = vpop.f32.mrf.mxu0
    %v6271 = vadd.f32 %v6098, %v6270
    %v6272 = vpop.f32.mrf.mxu0
    %v6273 = vadd.f32 %v6100, %v6272
    %v6274 = vpop.f32.mrf.mxu0
    %v6275 = vadd.f32 %v6102, %v6274
    %6276 = vmatprep.mubr.bf16.mxu0 %v6009
    %6277 = vmatmul.mubr.bf16.gmra.mxu0 %v5563
    %v6278 = vpop.f32.mrf.mxu0
    %v6279 = vadd.f32 %v6106, %v6278
    %v6280 = vpop.f32.mrf.mxu0
    %v6281 = vadd.f32 %v6108, %v6280
    %v6282 = vpop.f32.mrf.mxu0
    %v6283 = vadd.f32 %v6110, %v6282
    %v6284 = vpop.f32.mrf.mxu0
    %v6285 = vadd.f32 %v6112, %v6284
    %6286 = vmatprep.mubr.bf16.mxu0 %v6012
    %6287 = vmatmul.mubr.bf16.gmra.mxu0 %v5567
    %v6288 = vpop.f32.mrf.mxu0
    %v6289 = vadd.f32 %v6116, %v6288
    %v6290 = vpop.f32.mrf.mxu0
    %v6291 = vadd.f32 %v6118, %v6290
    %v6292 = vpop.f32.mrf.mxu0
    %v6293 = vadd.f32 %v6120, %v6292
    %v6294 = vpop.f32.mrf.mxu0
    %v6295 = vadd.f32 %v6122, %v6294
    %6296 = vmatprep.mubr.bf16.mxu0 %v6015
    %6297 = vmatmul.mubr.bf16.gmra.mxu0 %v5571
    %v6298 = vpop.f32.mrf.mxu0
    %v6299 = vadd.f32 %v6126, %v6298
    %v6300 = vpop.f32.mrf.mxu0
    %v6301 = vadd.f32 %v6128, %v6300
    %v6302 = vpop.f32.mrf.mxu0
    %v6303 = vadd.f32 %v6130, %v6302
    %v6304 = vpop.f32.mrf.mxu0
    %v6305 = vadd.f32 %v6132, %v6304
    %6306 = vmatprep.mubr.bf16.mxu0 %v6018
    %6307 = vmatmul.mubr.bf16.gmra.mxu0 %v5575
    %v6308 = vpop.f32.mrf.mxu0
    %v6309 = vadd.f32 %v6136, %v6308
    %v6310 = vpop.f32.mrf.mxu0
    %v6311 = vadd.f32 %v6138, %v6310
    %v6312 = vpop.f32.mrf.mxu0
    %v6313 = vadd.f32 %v6140, %v6312
    %v6314 = vpop.f32.mrf.mxu0
    %v6315 = vadd.f32 %v6142, %v6314
    %6316 = vmatprep.mubr.bf16.mxu0 %v6021
    %6317 = vmatmul.mubr.bf16.gmra.mxu0 %v5579
    %v6318 = vpop.f32.mrf.mxu0
    %v6319 = vadd.f32 %v6146, %v6318
    %v6320 = vpop.f32.mrf.mxu0
    %v6321 = vadd.f32 %v6148, %v6320
    %v6322 = vpop.f32.mrf.mxu0
    %v6323 = vadd.f32 %v6150, %v6322
    %v6324 = vpop.f32.mrf.mxu0
    %v6325 = vadd.f32 %v6152, %v6324
    %6326 = vmatprep.mubr.bf16.mxu0 %v6024
    %6327 = vmatmul.mubr.bf16.gmra.mxu0 %v5583
    %v6328 = vpop.f32.mrf.mxu0
    %v6329 = vadd.f32 %v6156, %v6328
    %v6330 = vpop.f32.mrf.mxu0
    %v6331 = vadd.f32 %v6158, %v6330
    %v6332 = vpop.f32.mrf.mxu0
    %v6333 = vadd.f32 %v6160, %v6332
    %v6334 = vpop.f32.mrf.mxu0
    %v6335 = vadd.f32 %v6162, %v6334
    %6336 = vmatprep.mubr.bf16.mxu0 %v6027
    %6337 = vmatmul.mubr.bf16.gmra.mxu0 %v5587
    %v6338 = vpop.f32.mrf.mxu0
    %v6339 = vadd.f32 %v6166, %v6338
    %v6340 = vpop.f32.mrf.mxu0
    %v6341 = vadd.f32 %v6168, %v6340
    %v6342 = vpop.f32.mrf.mxu0
    %v6343 = vadd.f32 %v6170, %v6342
    %v6344 = vpop.f32.mrf.mxu0
    %v6345 = vadd.f32 %v6172, %v6344
    %6346 = vmatprep.mubr.bf16.mxu0 %v6030
    %6347 = vmatmul.mubr.bf16.gmra.mxu0 %v5591
    %v6348 = vpop.f32.mrf.mxu0
    %v6349 = vadd.f32 %v6176, %v6348
    %v6350 = vpop.f32.mrf.mxu0
    %v6351 = vadd.f32 %v6178, %v6350
    %v6352 = vpop.f32.mrf.mxu0
    %v6353 = vadd.f32 %v6180, %v6352
    %v6354 = vpop.f32.mrf.mxu0
    %v6355 = vadd.f32 %v6182, %v6354
    %6356 = vmatprep.mubr.bf16.mxu0 %v6033
    %6357 = vmatmul.mubr.bf16.gmra.mxu0 %v5595
    %v6358 = vpop.f32.mrf.mxu0
    %v6359 = vadd.f32 %v6186, %v6358
    %v6360 = vpop.f32.mrf.mxu0
    %v6361 = vadd.f32 %v6188, %v6360
    %v6362 = vpop.f32.mrf.mxu0
    %v6363 = vadd.f32 %v6190, %v6362
    %v6364 = vpop.f32.mrf.mxu0
    %v6365 = vadd.f32 %v6192, %v6364
    %6366 = vmatprep.mubr.bf16.mxu0 %v6036
    %6367 = vmatmul.mubr.bf16.gmra.mxu0 %v5599
    %v6368 = vpop.f32.mrf.mxu0
    %v6369 = vadd.f32 %v6196, %v6368
    %v6370 = vpop.f32.mrf.mxu0
    %v6371 = vadd.f32 %v6198, %v6370
    %v6372 = vpop.f32.mrf.mxu0
    %v6373 = vadd.f32 %v6200, %v6372
    %v6374 = vpop.f32.mrf.mxu0
    %v6375 = vadd.f32 %v6202, %v6374
    %6376 = vmatprep.mubr.bf16.mxu0 %v6039
    %6377 = vmatmul.mubr.bf16.gmra.mxu0 %v5603
    %v6378 = vpop.f32.mrf.mxu0
    %v6379 = vadd.f32 %v6206, %v6378
    %v6380 = vpop.f32.mrf.mxu0
    %v6381 = vadd.f32 %v6208, %v6380
    %v6382 = vpop.f32.mrf.mxu0
    %v6383 = vadd.f32 %v6210, %v6382
    %v6384 = vpop.f32.mrf.mxu0
    %v6385 = vadd.f32 %v6212, %v6384
    %6386 = vdwg.mxu0
    %v6443 = vunpack.c.l.b16 %v5605
    %v6444 = vunpack.c.h.b16 %v5605
    %v6445 = vunpack.c.l.b16 %v5606
    %v6446 = vunpack.c.h.b16 %v5606
    %v6447 = vunpack.c.l.b16 %v5607
    %v6448 = vunpack.c.h.b16 %v5607
    %v6449 = vunpack.c.l.b16 %v5608
    %v6450 = vunpack.c.h.b16 %v5608
    %v6451 = vunpack.c.l.b16 %v5609
    %v6452 = vunpack.c.h.b16 %v5609
    %v6453 = vunpack.c.l.b16 %v5610
    %v6454 = vunpack.c.h.b16 %v5610
    %v6455 = vunpack.c.l.b16 %v5611
    %v6456 = vunpack.c.h.b16 %v5611
    %v6457 = vunpack.c.l.b16 %v5612
    %v6458 = vunpack.c.h.b16 %v5612
    %v6459 = vunpack.c.l.b16 %v5613
    %v6460 = vunpack.c.h.b16 %v5613
    %v6461 = vunpack.c.l.b16 %v5614
    %v6462 = vunpack.c.h.b16 %v5614
    %v6463 = vunpack.c.l.b16 %v5615
    %v6464 = vunpack.c.h.b16 %v5615
    %v6465 = vunpack.c.l.b16 %v5616
    %v6466 = vunpack.c.h.b16 %v5616
    %v6467 = vunpack.c.l.b16 %v5617
    %v6468 = vunpack.c.h.b16 %v5617
    %v6469 = vunpack.c.l.b16 %v5618
    %v6470 = vunpack.c.h.b16 %v5618
    %v6471 = vunpack.c.l.b16 %v5619
    %v6472 = vunpack.c.h.b16 %v5619
    %v6473 = vunpack.c.l.b16 %v5620
    %v6474 = vunpack.c.h.b16 %v5620
    %v6475 = vunpack.c.l.b16 %v5621
    %v6476 = vunpack.c.h.b16 %v5621
    %v6477 = vunpack.c.l.b16 %v5622
    %v6478 = vunpack.c.h.b16 %v5622
    %v6479 = vunpack.c.l.b16 %v5623
    %v6480 = vunpack.c.h.b16 %v5623
    %v6481 = vunpack.c.l.b16 %v5624
    %v6482 = vunpack.c.h.b16 %v5624
    %v6483 = vunpack.c.l.b16 %v5625
    %v6484 = vunpack.c.h.b16 %v5625
    %v6485 = vunpack.c.l.b16 %v5626
    %v6486 = vunpack.c.h.b16 %v5626
    %v6487 = vunpack.c.l.b16 %v5627
    %v6488 = vunpack.c.h.b16 %v5627
    %v6489 = vunpack.c.l.b16 %v5628
    %v6490 = vunpack.c.h.b16 %v5628
    %v6491 = vunpack.c.l.b16 %v5629
    %v6492 = vunpack.c.h.b16 %v5629
    %v6493 = vunpack.c.l.b16 %v5630
    %v6494 = vunpack.c.h.b16 %v5630
    %v6495 = vunpack.c.l.b16 %v5631
    %v6496 = vunpack.c.h.b16 %v5631
    %v6497 = vunpack.c.l.b16 %v5632
    %v6498 = vunpack.c.h.b16 %v5632
    %v6499 = vunpack.c.l.b16 %v5633
    %v6500 = vunpack.c.h.b16 %v5633
    %v6501 = vunpack.c.l.b16 %v5634
    %v6502 = vunpack.c.h.b16 %v5634
    %v6503 = vunpack.c.l.b16 %v5635
    %v6504 = vunpack.c.h.b16 %v5635
    %v6505 = vunpack.c.l.b16 %v5636
    %v6506 = vunpack.c.h.b16 %v5636
    %v6507 = vunpack.c.l.b16 %v5637
    %v6508 = vunpack.c.h.b16 %v5637
    %v6509 = vunpack.c.l.b16 %v5638
    %v6510 = vunpack.c.h.b16 %v5638
    %v6511 = vunpack.c.l.b16 %v5639
    %v6512 = vunpack.c.h.b16 %v5639
    %v6513 = vunpack.c.l.b16 %v5640
    %v6514 = vunpack.c.h.b16 %v5640
    %v6515 = vunpack.c.l.b16 %v5641
    %v6516 = vunpack.c.h.b16 %v5641
    %v6517 = vunpack.c.l.b16 %v5642
    %v6518 = vunpack.c.h.b16 %v5642
    %v6519 = vunpack.c.l.b16 %v5643
    %v6520 = vunpack.c.h.b16 %v5643
    %v6521 = vunpack.c.l.b16 %v5644
    %v6522 = vunpack.c.h.b16 %v5644
    %v6523 = vunpack.c.l.b16 %v5645
    %v6524 = vunpack.c.h.b16 %v5645
    %v6525 = vunpack.c.l.b16 %v5646
    %v6526 = vunpack.c.h.b16 %v5646
    %v6527 = vunpack.c.l.b16 %v5647
    %v6528 = vunpack.c.h.b16 %v5647
    %v6529 = vunpack.c.l.b16 %v5648
    %v6530 = vunpack.c.h.b16 %v5648
    %v6531 = vunpack.c.l.b16 %v5649
    %v6532 = vunpack.c.h.b16 %v5649
    %v6533 = vunpack.c.l.b16 %v5650
    %v6534 = vunpack.c.h.b16 %v5650
    %v6535 = vunpack.c.l.b16 %v5651
    %v6536 = vunpack.c.h.b16 %v5651
    %v6537 = vunpack.c.l.b16 %v5652
    %v6538 = vunpack.c.h.b16 %v5652
    %v6539 = vunpack.c.l.b16 %v5653
    %v6540 = vunpack.c.h.b16 %v5653
    %v6541 = vunpack.c.l.b16 %v5654
    %v6542 = vunpack.c.h.b16 %v5654
    %v6543 = vunpack.c.l.b16 %v5655
    %v6544 = vunpack.c.h.b16 %v5655
    %v6545 = vunpack.c.l.b16 %v5656
    %v6546 = vunpack.c.h.b16 %v5656
    %v6547 = vunpack.c.l.b16 %v5657
    %v6548 = vunpack.c.h.b16 %v5657
    %v6549 = vunpack.c.l.b16 %v5658
    %v6550 = vunpack.c.h.b16 %v5658
    %v6551 = vunpack.c.l.b16 %v5659
    %v6552 = vunpack.c.h.b16 %v5659
    %v6553 = vunpack.c.l.b16 %v5660
    %v6554 = vunpack.c.h.b16 %v5660
    %v6555 = vpack.c.b16 %v6445, %v6443
    %v6556 = vpack.c.b16 %v6446, %v6444
    %v6557 = vpack.c.b16 %v6449, %v6447
    %v6558 = vpack.c.b16 %v6450, %v6448
    %v6559 = vpack.c.b16 %v6453, %v6451
    %v6560 = vpack.c.b16 %v6454, %v6452
    %v6561 = vpack.c.b16 %v6457, %v6455
    %v6562 = vpack.c.b16 %v6458, %v6456
    %v6563 = vpack.c.b16 %v6461, %v6459
    %v6564 = vpack.c.b16 %v6462, %v6460
    %v6565 = vpack.c.b16 %v6465, %v6463
    %v6566 = vpack.c.b16 %v6466, %v6464
    %v6567 = vpack.c.b16 %v6469, %v6467
    %v6568 = vpack.c.b16 %v6470, %v6468
    %v6569 = vpack.c.b16 %v6473, %v6471
    %v6570 = vpack.c.b16 %v6474, %v6472
    %v6571 = vpack.c.b16 %v6477, %v6475
    %v6572 = vpack.c.b16 %v6478, %v6476
    %v6573 = vpack.c.b16 %v6481, %v6479
    %v6574 = vpack.c.b16 %v6482, %v6480
    %v6575 = vpack.c.b16 %v6485, %v6483
    %v6576 = vpack.c.b16 %v6486, %v6484
    %v6577 = vpack.c.b16 %v6489, %v6487
    %v6578 = vpack.c.b16 %v6490, %v6488
    %v6579 = vpack.c.b16 %v6493, %v6491
    %v6580 = vpack.c.b16 %v6494, %v6492
    %v6581 = vpack.c.b16 %v6497, %v6495
    %v6582 = vpack.c.b16 %v6498, %v6496
    %v6583 = vpack.c.b16 %v6501, %v6499
    %v6584 = vpack.c.b16 %v6502, %v6500
    %v6585 = vpack.c.b16 %v6505, %v6503
    %v6586 = vpack.c.b16 %v6506, %v6504
    %v6587 = vpack.c.b16 %v6509, %v6507
    %v6588 = vpack.c.b16 %v6510, %v6508
    %v6589 = vpack.c.b16 %v6513, %v6511
    %v6590 = vpack.c.b16 %v6514, %v6512
    %v6591 = vpack.c.b16 %v6517, %v6515
    %v6592 = vpack.c.b16 %v6518, %v6516
    %v6593 = vpack.c.b16 %v6521, %v6519
    %v6594 = vpack.c.b16 %v6522, %v6520
    %v6595 = vpack.c.b16 %v6525, %v6523
    %v6596 = vpack.c.b16 %v6526, %v6524
    %v6597 = vpack.c.b16 %v6529, %v6527
    %v6598 = vpack.c.b16 %v6530, %v6528
    %v6599 = vpack.c.b16 %v6533, %v6531
    %v6600 = vpack.c.b16 %v6534, %v6532
    %v6601 = vpack.c.b16 %v6537, %v6535
    %v6602 = vpack.c.b16 %v6538, %v6536
    %v6603 = vpack.c.b16 %v6541, %v6539
    %v6604 = vpack.c.b16 %v6542, %v6540
    %v6605 = vpack.c.b16 %v6545, %v6543
    %v6606 = vpack.c.b16 %v6546, %v6544
    %v6607 = vpack.c.b16 %v6549, %v6547
    %v6608 = vpack.c.b16 %v6550, %v6548
    %v6609 = vpack.c.b16 %v6553, %v6551
    %v6610 = vpack.c.b16 %v6554, %v6552
    %v6668 = vsel %vm5998, 0, 0
    %6670 = vmatprep.subr.bf16.mxu0 %v6570
    %6671 = vmatpush1.bf16.msra.mxu0 %v6569
    %6672 = vmatprep.subr.bf16.mxu0 %v6568
    %6673 = vmatpush1.bf16.msra.mxu0 %v6567
    %6674 = vmatprep.subr.bf16.mxu0 %v6566
    %6675 = vmatpush1.bf16.msra.mxu0 %v6565
    %6676 = vmatprep.subr.bf16.mxu0 %v6564
    %6677 = vmatpush1.bf16.msra.mxu0 %v6563
    %6678 = vmatprep.subr.bf16.mxu0 %v6562
    %6679 = vmatpush1.bf16.msra.mxu0 %v6561
    %6680 = vmatprep.subr.bf16.mxu0 %v6560
    %6681 = vmatpush1.bf16.msra.mxu0 %v6559
    %6682 = vmatprep.subr.bf16.mxu0 %v6558
    %6683 = vmatpush1.bf16.msra.mxu0 %v6557
    %6684 = vmatprep.subr.bf16.mxu0 %v6556
    %6685 = vmatpush1.bf16.msra.mxu0 %v6555
    %6686 = vmatprep.subr.bf16.mxu0 %v6586
    %6687 = vmatpush2.bf16.msra.mxu0 %v6585
    %6688 = vmatprep.subr.bf16.mxu0 %v6584
    %6689 = vmatpush2.bf16.msra.mxu0 %v6583
    %6690 = vmatprep.subr.bf16.mxu0 %v6582
    %6691 = vmatpush2.bf16.msra.mxu0 %v6581
    %6692 = vmatprep.subr.bf16.mxu0 %v6580
    %6693 = vmatpush2.bf16.msra.mxu0 %v6579
    %6694 = vmatprep.subr.bf16.mxu0 %v6578
    %6695 = vmatpush2.bf16.msra.mxu0 %v6577
    %6696 = vmatprep.subr.bf16.mxu0 %v6576
    %6697 = vmatpush2.bf16.msra.mxu0 %v6575
    %6698 = vmatprep.subr.bf16.mxu0 %v6574
    %6699 = vmatpush2.bf16.msra.mxu0 %v6573
    %6700 = vmatprep.subr.bf16.mxu0 %v6572
    %6701 = vmatpush2.bf16.msra.mxu0 %v6571
    %6702 = vmatprep.mubr.bf16.mxu0 0
    %6703 = vmatmul.mubr.bf16.gmra.mxu0 0
    %v6704 = vpop.f32.mrf.mxu0
    %v6705 = vadd.f32 %v6249, %v6704
    %v6706 = vpop.f32.mrf.mxu0
    %v6707 = vadd.f32 %v6251, %v6706
    %v6708 = vpop.f32.mrf.mxu0
    %v6709 = vadd.f32 %v6253, %v6708
    %v6710 = vpop.f32.mrf.mxu0
    %v6711 = vadd.f32 %v6255, %v6710
    %6712 = vmatprep.mubr.bf16.mxu0 %v5550
    %6713 = vmatmul.mubr.bf16.gmra.mxu0 %v5549
    %v6714 = vpop.f32.mrf.mxu0
    %v6715 = vadd.f32 %v6259, %v6714
    %v6716 = vpop.f32.mrf.mxu0
    %v6717 = vadd.f32 %v6261, %v6716
    %v6718 = vpop.f32.mrf.mxu0
    %v6719 = vadd.f32 %v6263, %v6718
    %v6720 = vpop.f32.mrf.mxu0
    %v6721 = vadd.f32 %v6265, %v6720
    %6722 = vmatprep.mubr.bf16.mxu0 %v5554
    %6723 = vmatmul.mubr.bf16.gmra.mxu0 %v5553
    %v6724 = vpop.f32.mrf.mxu0
    %v6725 = vadd.f32 %v6269, %v6724
    %v6726 = vpop.f32.mrf.mxu0
    %v6727 = vadd.f32 %v6271, %v6726
    %v6728 = vpop.f32.mrf.mxu0
    %v6729 = vadd.f32 %v6273, %v6728
    %v6730 = vpop.f32.mrf.mxu0
    %v6731 = vadd.f32 %v6275, %v6730
    %6732 = vmatprep.mubr.bf16.mxu0 %v5558
    %6733 = vmatmul.mubr.bf16.gmra.mxu0 %v5557
    %v6734 = vpop.f32.mrf.mxu0
    %v6735 = vadd.f32 %v6279, %v6734
    %v6736 = vpop.f32.mrf.mxu0
    %v6737 = vadd.f32 %v6281, %v6736
    %v6738 = vpop.f32.mrf.mxu0
    %v6739 = vadd.f32 %v6283, %v6738
    %v6740 = vpop.f32.mrf.mxu0
    %v6741 = vadd.f32 %v6285, %v6740
    %6742 = vmatprep.mubr.bf16.mxu0 %v5562
    %6743 = vmatmul.mubr.bf16.gmra.mxu0 %v5561
    %v6744 = vpop.f32.mrf.mxu0
    %v6745 = vadd.f32 %v6289, %v6744
    %v6746 = vpop.f32.mrf.mxu0
    %v6747 = vadd.f32 %v6291, %v6746
    %v6748 = vpop.f32.mrf.mxu0
    %v6749 = vadd.f32 %v6293, %v6748
    %v6750 = vpop.f32.mrf.mxu0
    %v6751 = vadd.f32 %v6295, %v6750
    %6752 = vmatprep.mubr.bf16.mxu0 %v5566
    %6753 = vmatmul.mubr.bf16.gmra.mxu0 %v5565
    %v6754 = vpop.f32.mrf.mxu0
    %v6755 = vadd.f32 %v6299, %v6754
    %v6756 = vpop.f32.mrf.mxu0
    %v6757 = vadd.f32 %v6301, %v6756
    %v6758 = vpop.f32.mrf.mxu0
    %v6759 = vadd.f32 %v6303, %v6758
    %v6760 = vpop.f32.mrf.mxu0
    %v6761 = vadd.f32 %v6305, %v6760
    %6762 = vmatprep.mubr.bf16.mxu0 %v5570
    %6763 = vmatmul.mubr.bf16.gmra.mxu0 %v5569
    %v6764 = vpop.f32.mrf.mxu0
    %v6765 = vadd.f32 %v6309, %v6764
    %v6766 = vpop.f32.mrf.mxu0
    %v6767 = vadd.f32 %v6311, %v6766
    %v6768 = vpop.f32.mrf.mxu0
    %v6769 = vadd.f32 %v6313, %v6768
    %v6770 = vpop.f32.mrf.mxu0
    %v6771 = vadd.f32 %v6315, %v6770
    %6772 = vmatprep.mubr.bf16.mxu0 %v5574
    %6773 = vmatmul.mubr.bf16.gmra.mxu0 %v5573
    %v6774 = vpop.f32.mrf.mxu0
    %v6775 = vadd.f32 %v6319, %v6774
    %v6776 = vpop.f32.mrf.mxu0
    %v6777 = vadd.f32 %v6321, %v6776
    %v6778 = vpop.f32.mrf.mxu0
    %v6779 = vadd.f32 %v6323, %v6778
    %v6780 = vpop.f32.mrf.mxu0
    %v6781 = vadd.f32 %v6325, %v6780
    %6782 = vmatprep.mubr.bf16.mxu0 %v5578
    %6783 = vmatmul.mubr.bf16.gmra.mxu0 %v5577
    %v6784 = vpop.f32.mrf.mxu0
    %v6785 = vadd.f32 %v6329, %v6784
    %v6786 = vpop.f32.mrf.mxu0
    %v6787 = vadd.f32 %v6331, %v6786
    %v6788 = vpop.f32.mrf.mxu0
    %v6789 = vadd.f32 %v6333, %v6788
    %v6790 = vpop.f32.mrf.mxu0
    %v6791 = vadd.f32 %v6335, %v6790
    %6792 = vmatprep.mubr.bf16.mxu0 %v5582
    %6793 = vmatmul.mubr.bf16.gmra.mxu0 %v5581
    %v6794 = vpop.f32.mrf.mxu0
    %v6795 = vadd.f32 %v6339, %v6794
    %v6796 = vpop.f32.mrf.mxu0
    %v6797 = vadd.f32 %v6341, %v6796
    %v6798 = vpop.f32.mrf.mxu0
    %v6799 = vadd.f32 %v6343, %v6798
    %v6800 = vpop.f32.mrf.mxu0
    %v6801 = vadd.f32 %v6345, %v6800
    %6802 = vmatprep.mubr.bf16.mxu0 %v5586
    %6803 = vmatmul.mubr.bf16.gmra.mxu0 %v5585
    %v6804 = vpop.f32.mrf.mxu0
    %v6805 = vadd.f32 %v6349, %v6804
    %v6806 = vpop.f32.mrf.mxu0
    %v6807 = vadd.f32 %v6351, %v6806
    %v6808 = vpop.f32.mrf.mxu0
    %v6809 = vadd.f32 %v6353, %v6808
    %v6810 = vpop.f32.mrf.mxu0
    %v6811 = vadd.f32 %v6355, %v6810
    %6812 = vmatprep.mubr.bf16.mxu0 %v5590
    %6813 = vmatmul.mubr.bf16.gmra.mxu0 %v5589
    %v6814 = vpop.f32.mrf.mxu0
    %v6815 = vadd.f32 %v6359, %v6814
    %v6816 = vpop.f32.mrf.mxu0
    %v6817 = vadd.f32 %v6361, %v6816
    %v6818 = vpop.f32.mrf.mxu0
    %v6819 = vadd.f32 %v6363, %v6818
    %v6820 = vpop.f32.mrf.mxu0
    %v6821 = vadd.f32 %v6365, %v6820
    %6822 = vmatprep.mubr.bf16.mxu0 %v5594
    %6823 = vmatmul.mubr.bf16.gmra.mxu0 %v5593
    %v6824 = vpop.f32.mrf.mxu0
    %v6825 = vadd.f32 %v6369, %v6824
    %v6826 = vpop.f32.mrf.mxu0
    %v6827 = vadd.f32 %v6371, %v6826
    %v6828 = vpop.f32.mrf.mxu0
    %v6829 = vadd.f32 %v6373, %v6828
    %v6830 = vpop.f32.mrf.mxu0
    %v6831 = vadd.f32 %v6375, %v6830
    %6832 = vmatprep.mubr.bf16.mxu0 %v5598
    %6833 = vmatmul.mubr.bf16.gmra.mxu0 %v5597
    %v6834 = vpop.f32.mrf.mxu0
    %v6835 = vadd.f32 %v6379, %v6834
    %v6836 = vpop.f32.mrf.mxu0
    %v6837 = vadd.f32 %v6381, %v6836
    %v6838 = vpop.f32.mrf.mxu0
    %v6839 = vadd.f32 %v6383, %v6838
    %v6840 = vpop.f32.mrf.mxu0
    %v6841 = vadd.f32 %v6385, %v6840
    %6842 = vdwg.mxu0
    %6843 = vmatprep.subr.bf16.mxu0 %v6602
    %6844 = vmatpush1.bf16.msra.mxu0 %v6601
    %6845 = vmatprep.subr.bf16.mxu0 %v6600
    %6846 = vmatpush1.bf16.msra.mxu0 %v6599
    %6847 = vmatprep.subr.bf16.mxu0 %v6598
    %6848 = vmatpush1.bf16.msra.mxu0 %v6597
    %6849 = vmatprep.subr.bf16.mxu0 %v6596
    %6850 = vmatpush1.bf16.msra.mxu0 %v6595
    %6851 = vmatprep.subr.bf16.mxu0 %v6594
    %6852 = vmatpush1.bf16.msra.mxu0 %v6593
    %6853 = vmatprep.subr.bf16.mxu0 %v6592
    %6854 = vmatpush1.bf16.msra.mxu0 %v6591
    %6855 = vmatprep.subr.bf16.mxu0 %v6590
    %6856 = vmatpush1.bf16.msra.mxu0 %v6589
    %6857 = vmatprep.subr.bf16.mxu0 %v6588
    %6858 = vmatpush1.bf16.msra.mxu0 %v6587
    %6859 = vmatprep.subr.bf16.mxu0 0
    %6860 = vmatpush2.bf16.msra.mxu0 0
    %6861 = vmatprep.subr.bf16.mxu0 0
    %6862 = vmatpush2.bf16.msra.mxu0 0
    %6863 = vmatprep.subr.bf16.mxu0 0
    %6864 = vmatpush2.bf16.msra.mxu0 0
    %6865 = vmatprep.subr.bf16.mxu0 0
    %6866 = vmatpush2.bf16.msra.mxu0 0
    %6867 = vmatprep.subr.bf16.mxu0 %v6610
    %6868 = vmatpush2.bf16.msra.mxu0 %v6609
    %6869 = vmatprep.subr.bf16.mxu0 %v6608
    %6870 = vmatpush2.bf16.msra.mxu0 %v6607
    %6871 = vmatprep.subr.bf16.mxu0 %v6606
    %6872 = vmatpush2.bf16.msra.mxu0 %v6605
    %6873 = vmatprep.subr.bf16.mxu0 %v6604
    %6874 = vmatpush2.bf16.msra.mxu0 %v6603
    %6875 = vmatprep.mubr.bf16.mxu0 %v6668
    %6876 = vmatmul.mubr.bf16.gmra.mxu0 0
    %v6877 = vpop.f32.mrf.mxu0
    %v6878 = vadd.f32 %v6705, %v6877
    %v6879 = vpop.f32.mrf.mxu0
    %v6880 = vadd.f32 %v6707, %v6879
    %v6881 = vpop.f32.mrf.mxu0
    %v6882 = vadd.f32 %v6709, %v6881
    %v6883 = vpop.f32.mrf.mxu0
    %v6884 = vadd.f32 %v6711, %v6883
    %6885 = vmatprep.mubr.bf16.mxu0 %v6000
    %6886 = vmatmul.mubr.bf16.gmra.mxu0 %v5551
    %v6887 = vpop.f32.mrf.mxu0
    %v6888 = vadd.f32 %v6715, %v6887
    %v6889 = vpop.f32.mrf.mxu0
    %v6890 = vadd.f32 %v6717, %v6889
    %v6891 = vpop.f32.mrf.mxu0
    %v6892 = vadd.f32 %v6719, %v6891
    %v6893 = vpop.f32.mrf.mxu0
    %v6894 = vadd.f32 %v6721, %v6893
    %6895 = vmatprep.mubr.bf16.mxu0 %v6003
    %6896 = vmatmul.mubr.bf16.gmra.mxu0 %v5555
    %v6897 = vpop.f32.mrf.mxu0
    %v6898 = vadd.f32 %v6725, %v6897
    %v6899 = vpop.f32.mrf.mxu0
    %v6900 = vadd.f32 %v6727, %v6899
    %v6901 = vpop.f32.mrf.mxu0
    %v6902 = vadd.f32 %v6729, %v6901
    %v6903 = vpop.f32.mrf.mxu0
    %v6904 = vadd.f32 %v6731, %v6903
    %6905 = vmatprep.mubr.bf16.mxu0 %v6006
    %6906 = vmatmul.mubr.bf16.gmra.mxu0 %v5559
    %v6907 = vpop.f32.mrf.mxu0
    %v6908 = vadd.f32 %v6735, %v6907
    %v6909 = vpop.f32.mrf.mxu0
    %v6910 = vadd.f32 %v6737, %v6909
    %v6911 = vpop.f32.mrf.mxu0
    %v6912 = vadd.f32 %v6739, %v6911
    %v6913 = vpop.f32.mrf.mxu0
    %v6914 = vadd.f32 %v6741, %v6913
    %6915 = vmatprep.mubr.bf16.mxu0 %v6009
    %6916 = vmatmul.mubr.bf16.gmra.mxu0 %v5563
    %v6917 = vpop.f32.mrf.mxu0
    %v6918 = vadd.f32 %v6745, %v6917
    %v6919 = vpop.f32.mrf.mxu0
    %v6920 = vadd.f32 %v6747, %v6919
    %v6921 = vpop.f32.mrf.mxu0
    %v6922 = vadd.f32 %v6749, %v6921
    %v6923 = vpop.f32.mrf.mxu0
    %v6924 = vadd.f32 %v6751, %v6923
    %6925 = vmatprep.mubr.bf16.mxu0 %v6012
    %6926 = vmatmul.mubr.bf16.gmra.mxu0 %v5567
    %v6927 = vpop.f32.mrf.mxu0
    %v6928 = vadd.f32 %v6755, %v6927
    %v6929 = vpop.f32.mrf.mxu0
    %v6930 = vadd.f32 %v6757, %v6929
    %v6931 = vpop.f32.mrf.mxu0
    %v6932 = vadd.f32 %v6759, %v6931
    %v6933 = vpop.f32.mrf.mxu0
    %v6934 = vadd.f32 %v6761, %v6933
    %6935 = vmatprep.mubr.bf16.mxu0 %v6015
    %6936 = vmatmul.mubr.bf16.gmra.mxu0 %v5571
    %v6937 = vpop.f32.mrf.mxu0
    %v6938 = vadd.f32 %v6765, %v6937
    %v6939 = vpop.f32.mrf.mxu0
    %v6940 = vadd.f32 %v6767, %v6939
    %v6941 = vpop.f32.mrf.mxu0
    %v6942 = vadd.f32 %v6769, %v6941
    %v6943 = vpop.f32.mrf.mxu0
    %v6944 = vadd.f32 %v6771, %v6943
    %6945 = vmatprep.mubr.bf16.mxu0 %v6018
    %6946 = vmatmul.mubr.bf16.gmra.mxu0 %v5575
    %v6947 = vpop.f32.mrf.mxu0
    %v6948 = vadd.f32 %v6775, %v6947
    %v6949 = vpop.f32.mrf.mxu0
    %v6950 = vadd.f32 %v6777, %v6949
    %v6951 = vpop.f32.mrf.mxu0
    %v6952 = vadd.f32 %v6779, %v6951
    %v6953 = vpop.f32.mrf.mxu0
    %v6954 = vadd.f32 %v6781, %v6953
    %6955 = vmatprep.mubr.bf16.mxu0 %v6021
    %6956 = vmatmul.mubr.bf16.gmra.mxu0 %v5579
    %v6957 = vpop.f32.mrf.mxu0
    %v6958 = vadd.f32 %v6785, %v6957
    %v6959 = vpop.f32.mrf.mxu0
    %v6960 = vadd.f32 %v6787, %v6959
    %v6961 = vpop.f32.mrf.mxu0
    %v6962 = vadd.f32 %v6789, %v6961
    %v6963 = vpop.f32.mrf.mxu0
    %v6964 = vadd.f32 %v6791, %v6963
    %6965 = vmatprep.mubr.bf16.mxu0 %v6024
    %6966 = vmatmul.mubr.bf16.gmra.mxu0 %v5583
    %v6967 = vpop.f32.mrf.mxu0
    %v6968 = vadd.f32 %v6795, %v6967
    %v6969 = vpop.f32.mrf.mxu0
    %v6970 = vadd.f32 %v6797, %v6969
    %v6971 = vpop.f32.mrf.mxu0
    %v6972 = vadd.f32 %v6799, %v6971
    %v6973 = vpop.f32.mrf.mxu0
    %v6974 = vadd.f32 %v6801, %v6973
    %6975 = vmatprep.mubr.bf16.mxu0 %v6027
    %6976 = vmatmul.mubr.bf16.gmra.mxu0 %v5587
    %v6977 = vpop.f32.mrf.mxu0
    %v6978 = vadd.f32 %v6805, %v6977
    %v6979 = vpop.f32.mrf.mxu0
    %v6980 = vadd.f32 %v6807, %v6979
    %v6981 = vpop.f32.mrf.mxu0
    %v6982 = vadd.f32 %v6809, %v6981
    %v6983 = vpop.f32.mrf.mxu0
    %v6984 = vadd.f32 %v6811, %v6983
    %6985 = vmatprep.mubr.bf16.mxu0 %v6030
    %6986 = vmatmul.mubr.bf16.gmra.mxu0 %v5591
    %v6987 = vpop.f32.mrf.mxu0
    %v6988 = vadd.f32 %v6815, %v6987
    %v6989 = vpop.f32.mrf.mxu0
    %v6990 = vadd.f32 %v6817, %v6989
    %v6991 = vpop.f32.mrf.mxu0
    %v6992 = vadd.f32 %v6819, %v6991
    %v6993 = vpop.f32.mrf.mxu0
    %v6994 = vadd.f32 %v6821, %v6993
    %6995 = vmatprep.mubr.bf16.mxu0 %v6033
    %6996 = vmatmul.mubr.bf16.gmra.mxu0 %v5595
    %v6997 = vpop.f32.mrf.mxu0
    %v6998 = vadd.f32 %v6825, %v6997
    %v6999 = vpop.f32.mrf.mxu0
    %v7000 = vadd.f32 %v6827, %v6999
    %v7001 = vpop.f32.mrf.mxu0
    %v7002 = vadd.f32 %v6829, %v7001
    %v7003 = vpop.f32.mrf.mxu0
    %v7004 = vadd.f32 %v6831, %v7003
    %7005 = vmatprep.mubr.bf16.mxu0 %v6036
    %7006 = vmatmul.mubr.bf16.gmra.mxu0 %v5599
    %v7007 = vpop.f32.mrf.mxu0
    %v7008 = vadd.f32 %v6835, %v7007
    %v7009 = vpop.f32.mrf.mxu0
    %v7010 = vadd.f32 %v6837, %v7009
    %v7011 = vpop.f32.mrf.mxu0
    %v7012 = vadd.f32 %v6839, %v7011
    %v7013 = vpop.f32.mrf.mxu0
    %v7014 = vadd.f32 %v6841, %v7013
    %7015 = vdwg.mxu0
    %s7016 = scalar_lea.vmem [#allocation6], 1792
    %v7017 = vld [vmem:[%s7016] sm:$0xff]
    %v7018 = vld [vmem:[%s7016 + $0x8] sm:$0xff]
    %v7019 = vld [vmem:[%s7016 + $0x10] sm:$0xff]
    %v7020 = vld [vmem:[%s7016 + $0x18] sm:$0xff]
    %v7021 = vld [vmem:[%s7016 + $0x20] sm:$0xff]
    %v7022 = vld [vmem:[%s7016 + $0x28] sm:$0xff]
    %v7023 = vld [vmem:[%s7016 + $0x30] sm:$0xff]
    %v7024 = vld [vmem:[%s7016 + $0x38] sm:$0xff]
    %v7025 = vld [vmem:[%s7016 + $0x40] sm:$0xff]
    %v7026 = vld [vmem:[%s7016 + $0x48] sm:$0xff]
    %v7027 = vld [vmem:[%s7016 + $0x50] sm:$0xff]
    %v7028 = vld [vmem:[%s7016 + $0x58] sm:$0xff]
    %v7029 = vld [vmem:[%s7016 + $0x60] sm:$0xff]
    %v7030 = vld [vmem:[%s7016 + $0x68] sm:$0xff]
    %v7031 = vld [vmem:[%s7016 + $0x70] sm:$0xff]
    %v7032 = vld [vmem:[%s7016 + $0x78] sm:$0xff]
    %v7033 = vld [vmem:[%s7016 + $0x80] sm:$0xff]
    %v7034 = vld [vmem:[%s7016 + $0x88] sm:$0xff]
    %v7035 = vld [vmem:[%s7016 + $0x90] sm:$0xff]
    %v7036 = vld [vmem:[%s7016 + $0x98] sm:$0xff]
    %v7037 = vld [vmem:[%s7016 + $0xa0] sm:$0xff]
    %v7038 = vld [vmem:[%s7016 + $0xa8] sm:$0xff]
    %v7039 = vld [vmem:[%s7016 + $0xb0] sm:$0xff]
    %v7040 = vld [vmem:[%s7016 + $0xb8] sm:$0xff]
    %v7041 = vld [vmem:[%s7016 + $0xc0] sm:$0xff]
    %v7042 = vld [vmem:[%s7016 + $0xc8] sm:$0xff]
    %v7043 = vld [vmem:[%s7016 + $0xd0] sm:$0xff]
    %v7044 = vld [vmem:[%s7016 + $0xd8] sm:$0xff]
    %v7045 = vld [vmem:[%s7016 + $0xe0] sm:$0xff]
    %v7046 = vld [vmem:[%s7016 + $0xe8] sm:$0xff]
    %v7047 = vld [vmem:[%s7016 + $0xf0] sm:$0xff]
    %v7048 = vld [vmem:[%s7016 + $0xf8] sm:$0xff]
    %v7049 = vld [vmem:[%s7016 + $0x100] sm:$0xff]
    %v7050 = vld [vmem:[%s7016 + $0x108] sm:$0xff]
    %v7051 = vld [vmem:[%s7016 + $0x110] sm:$0xff]
    %v7052 = vld [vmem:[%s7016 + $0x118] sm:$0xff]
    %v7053 = vld [vmem:[%s7016 + $0x120] sm:$0xff]
    %v7054 = vld [vmem:[%s7016 + $0x128] sm:$0xff]
    %v7055 = vld [vmem:[%s7016 + $0x130] sm:$0xff]
    %v7056 = vld [vmem:[%s7016 + $0x138] sm:$0xff]
    %v7057 = vld [vmem:[%s7016 + $0x140] sm:$0xff]
    %v7058 = vld [vmem:[%s7016 + $0x148] sm:$0xff]
    %v7059 = vld [vmem:[%s7016 + $0x150] sm:$0xff]
    %v7060 = vld [vmem:[%s7016 + $0x158] sm:$0xff]
    %v7061 = vld [vmem:[%s7016 + $0x160] sm:$0xff]
    %v7062 = vld [vmem:[%s7016 + $0x168] sm:$0xff]
    %v7063 = vld [vmem:[%s7016 + $0x170] sm:$0xff]
    %v7064 = vld [vmem:[%s7016 + $0x178] sm:$0xff]
    %v7065 = vld [vmem:[%s7016 + $0x180] sm:$0xff]
    %v7066 = vld [vmem:[%s7016 + $0x188] sm:$0xff]
    %v7067 = vld [vmem:[%s7016 + $0x190] sm:$0xff]
    %v7068 = vld [vmem:[%s7016 + $0x198] sm:$0xff]
    %v7069 = vld [vmem:[%s7016 + $0x1a0] sm:$0xff]
    %v7070 = vld [vmem:[%s7016 + $0x1a8] sm:$0xff]
    %v7071 = vld [vmem:[%s7016 + $0x1b0] sm:$0xff]
    %v7072 = vld [vmem:[%s7016 + $0x1b8] sm:$0xff]
    %v7129 = vunpack.c.l.b16 %v7017
    %v7130 = vunpack.c.h.b16 %v7017
    %v7131 = vunpack.c.l.b16 %v7018
    %v7132 = vunpack.c.h.b16 %v7018
    %v7133 = vunpack.c.l.b16 %v7019
    %v7134 = vunpack.c.h.b16 %v7019
    %v7135 = vunpack.c.l.b16 %v7020
    %v7136 = vunpack.c.h.b16 %v7020
    %v7137 = vunpack.c.l.b16 %v7021
    %v7138 = vunpack.c.h.b16 %v7021
    %v7139 = vunpack.c.l.b16 %v7022
    %v7140 = vunpack.c.h.b16 %v7022
    %v7141 = vunpack.c.l.b16 %v7023
    %v7142 = vunpack.c.h.b16 %v7023
    %v7143 = vunpack.c.l.b16 %v7024
    %v7144 = vunpack.c.h.b16 %v7024
    %v7145 = vunpack.c.l.b16 %v7025
    %v7146 = vunpack.c.h.b16 %v7025
    %v7147 = vunpack.c.l.b16 %v7026
    %v7148 = vunpack.c.h.b16 %v7026
    %v7149 = vunpack.c.l.b16 %v7027
    %v7150 = vunpack.c.h.b16 %v7027
    %v7151 = vunpack.c.l.b16 %v7028
    %v7152 = vunpack.c.h.b16 %v7028
    %v7153 = vunpack.c.l.b16 %v7029
    %v7154 = vunpack.c.h.b16 %v7029
    %v7155 = vunpack.c.l.b16 %v7030
    %v7156 = vunpack.c.h.b16 %v7030
    %v7157 = vunpack.c.l.b16 %v7031
    %v7158 = vunpack.c.h.b16 %v7031
    %v7159 = vunpack.c.l.b16 %v7032
    %v7160 = vunpack.c.h.b16 %v7032
    %v7161 = vunpack.c.l.b16 %v7033
    %v7162 = vunpack.c.h.b16 %v7033
    %v7163 = vunpack.c.l.b16 %v7034
    %v7164 = vunpack.c.h.b16 %v7034
    %v7165 = vunpack.c.l.b16 %v7035
    %v7166 = vunpack.c.h.b16 %v7035
    %v7167 = vunpack.c.l.b16 %v7036
    %v7168 = vunpack.c.h.b16 %v7036
    %v7169 = vunpack.c.l.b16 %v7037
    %v7170 = vunpack.c.h.b16 %v7037
    %v7171 = vunpack.c.l.b16 %v7038
    %v7172 = vunpack.c.h.b16 %v7038
    %v7173 = vunpack.c.l.b16 %v7039
    %v7174 = vunpack.c.h.b16 %v7039
    %v7175 = vunpack.c.l.b16 %v7040
    %v7176 = vunpack.c.h.b16 %v7040
    %v7177 = vunpack.c.l.b16 %v7041
    %v7178 = vunpack.c.h.b16 %v7041
    %v7179 = vunpack.c.l.b16 %v7042
    %v7180 = vunpack.c.h.b16 %v7042
    %v7181 = vunpack.c.l.b16 %v7043
    %v7182 = vunpack.c.h.b16 %v7043
    %v7183 = vunpack.c.l.b16 %v7044
    %v7184 = vunpack.c.h.b16 %v7044
    %v7185 = vunpack.c.l.b16 %v7045
    %v7186 = vunpack.c.h.b16 %v7045
    %v7187 = vunpack.c.l.b16 %v7046
    %v7188 = vunpack.c.h.b16 %v7046
    %v7189 = vunpack.c.l.b16 %v7047
    %v7190 = vunpack.c.h.b16 %v7047
    %v7191 = vunpack.c.l.b16 %v7048
    %v7192 = vunpack.c.h.b16 %v7048
    %v7193 = vunpack.c.l.b16 %v7049
    %v7194 = vunpack.c.h.b16 %v7049
    %v7195 = vunpack.c.l.b16 %v7050
    %v7196 = vunpack.c.h.b16 %v7050
    %v7197 = vunpack.c.l.b16 %v7051
    %v7198 = vunpack.c.h.b16 %v7051
    %v7199 = vunpack.c.l.b16 %v7052
    %v7200 = vunpack.c.h.b16 %v7052
    %v7201 = vunpack.c.l.b16 %v7053
    %v7202 = vunpack.c.h.b16 %v7053
    %v7203 = vunpack.c.l.b16 %v7054
    %v7204 = vunpack.c.h.b16 %v7054
    %v7205 = vunpack.c.l.b16 %v7055
    %v7206 = vunpack.c.h.b16 %v7055
    %v7207 = vunpack.c.l.b16 %v7056
    %v7208 = vunpack.c.h.b16 %v7056
    %v7209 = vunpack.c.l.b16 %v7057
    %v7210 = vunpack.c.h.b16 %v7057
    %v7211 = vunpack.c.l.b16 %v7058
    %v7212 = vunpack.c.h.b16 %v7058
    %v7213 = vunpack.c.l.b16 %v7059
    %v7214 = vunpack.c.h.b16 %v7059
    %v7215 = vunpack.c.l.b16 %v7060
    %v7216 = vunpack.c.h.b16 %v7060
    %v7217 = vunpack.c.l.b16 %v7061
    %v7218 = vunpack.c.h.b16 %v7061
    %v7219 = vunpack.c.l.b16 %v7062
    %v7220 = vunpack.c.h.b16 %v7062
    %v7221 = vunpack.c.l.b16 %v7063
    %v7222 = vunpack.c.h.b16 %v7063
    %v7223 = vunpack.c.l.b16 %v7064
    %v7224 = vunpack.c.h.b16 %v7064
    %v7225 = vunpack.c.l.b16 %v7065
    %v7226 = vunpack.c.h.b16 %v7065
    %v7227 = vunpack.c.l.b16 %v7066
    %v7228 = vunpack.c.h.b16 %v7066
    %v7229 = vunpack.c.l.b16 %v7067
    %v7230 = vunpack.c.h.b16 %v7067
    %v7231 = vunpack.c.l.b16 %v7068
    %v7232 = vunpack.c.h.b16 %v7068
    %v7233 = vunpack.c.l.b16 %v7069
    %v7234 = vunpack.c.h.b16 %v7069
    %v7235 = vunpack.c.l.b16 %v7070
    %v7236 = vunpack.c.h.b16 %v7070
    %v7237 = vunpack.c.l.b16 %v7071
    %v7238 = vunpack.c.h.b16 %v7071
    %v7239 = vunpack.c.l.b16 %v7072
    %v7240 = vunpack.c.h.b16 %v7072
    %v7241 = vpack.c.b16 %v7131, %v7129
    %v7242 = vpack.c.b16 %v7132, %v7130
    %v7243 = vpack.c.b16 %v7135, %v7133
    %v7244 = vpack.c.b16 %v7136, %v7134
    %v7245 = vpack.c.b16 %v7139, %v7137
    %v7246 = vpack.c.b16 %v7140, %v7138
    %v7247 = vpack.c.b16 %v7143, %v7141
    %v7248 = vpack.c.b16 %v7144, %v7142
    %v7249 = vpack.c.b16 %v7147, %v7145
    %v7250 = vpack.c.b16 %v7148, %v7146
    %v7251 = vpack.c.b16 %v7151, %v7149
    %v7252 = vpack.c.b16 %v7152, %v7150
    %v7253 = vpack.c.b16 %v7155, %v7153
    %v7254 = vpack.c.b16 %v7156, %v7154
    %v7255 = vpack.c.b16 %v7159, %v7157
    %v7256 = vpack.c.b16 %v7160, %v7158
    %v7257 = vpack.c.b16 %v7163, %v7161
    %v7258 = vpack.c.b16 %v7164, %v7162
    %v7259 = vpack.c.b16 %v7167, %v7165
    %v7260 = vpack.c.b16 %v7168, %v7166
    %v7261 = vpack.c.b16 %v7171, %v7169
    %v7262 = vpack.c.b16 %v7172, %v7170
    %v7263 = vpack.c.b16 %v7175, %v7173
    %v7264 = vpack.c.b16 %v7176, %v7174
    %v7265 = vpack.c.b16 %v7179, %v7177
    %v7266 = vpack.c.b16 %v7180, %v7178
    %v7267 = vpack.c.b16 %v7183, %v7181
    %v7268 = vpack.c.b16 %v7184, %v7182
    %v7269 = vpack.c.b16 %v7187, %v7185
    %v7270 = vpack.c.b16 %v7188, %v7186
    %v7271 = vpack.c.b16 %v7191, %v7189
    %v7272 = vpack.c.b16 %v7192, %v7190
    %v7273 = vpack.c.b16 %v7195, %v7193
    %v7274 = vpack.c.b16 %v7196, %v7194
    %v7275 = vpack.c.b16 %v7199, %v7197
    %v7276 = vpack.c.b16 %v7200, %v7198
    %v7277 = vpack.c.b16 %v7203, %v7201
    %v7278 = vpack.c.b16 %v7204, %v7202
    %v7279 = vpack.c.b16 %v7207, %v7205
    %v7280 = vpack.c.b16 %v7208, %v7206
    %v7281 = vpack.c.b16 %v7211, %v7209
    %v7282 = vpack.c.b16 %v7212, %v7210
    %v7283 = vpack.c.b16 %v7215, %v7213
    %v7284 = vpack.c.b16 %v7216, %v7214
    %v7285 = vpack.c.b16 %v7219, %v7217
    %v7286 = vpack.c.b16 %v7220, %v7218
    %v7287 = vpack.c.b16 %v7223, %v7221
    %v7288 = vpack.c.b16 %v7224, %v7222
    %v7289 = vpack.c.b16 %v7227, %v7225
    %v7290 = vpack.c.b16 %v7228, %v7226
    %v7291 = vpack.c.b16 %v7231, %v7229
    %v7292 = vpack.c.b16 %v7232, %v7230
    %v7293 = vpack.c.b16 %v7235, %v7233
    %v7294 = vpack.c.b16 %v7236, %v7234
    %v7295 = vpack.c.b16 %v7239, %v7237
    %v7296 = vpack.c.b16 %v7240, %v7238
    %7353 = vmatprep.subr.bf16.mxu0 %v7256
    %7354 = vmatpush1.bf16.msra.mxu0 %v7255
    %7355 = vmatprep.subr.bf16.mxu0 %v7254
    %7356 = vmatpush1.bf16.msra.mxu0 %v7253
    %7357 = vmatprep.subr.bf16.mxu0 %v7252
    %7358 = vmatpush1.bf16.msra.mxu0 %v7251
    %7359 = vmatprep.subr.bf16.mxu0 %v7250
    %7360 = vmatpush1.bf16.msra.mxu0 %v7249
    %7361 = vmatprep.subr.bf16.mxu0 %v7248
    %7362 = vmatpush1.bf16.msra.mxu0 %v7247
    %7363 = vmatprep.subr.bf16.mxu0 %v7246
    %7364 = vmatpush1.bf16.msra.mxu0 %v7245
    %7365 = vmatprep.subr.bf16.mxu0 %v7244
    %7366 = vmatpush1.bf16.msra.mxu0 %v7243
    %7367 = vmatprep.subr.bf16.mxu0 %v7242
    %7368 = vmatpush1.bf16.msra.mxu0 %v7241
    %7369 = vmatprep.subr.bf16.mxu0 %v7272
    %7370 = vmatpush2.bf16.msra.mxu0 %v7271
    %7371 = vmatprep.subr.bf16.mxu0 %v7270
    %7372 = vmatpush2.bf16.msra.mxu0 %v7269
    %7373 = vmatprep.subr.bf16.mxu0 %v7268
    %7374 = vmatpush2.bf16.msra.mxu0 %v7267
    %7375 = vmatprep.subr.bf16.mxu0 %v7266
    %7376 = vmatpush2.bf16.msra.mxu0 %v7265
    %7377 = vmatprep.subr.bf16.mxu0 %v7264
    %7378 = vmatpush2.bf16.msra.mxu0 %v7263
    %7379 = vmatprep.subr.bf16.mxu0 %v7262
    %7380 = vmatpush2.bf16.msra.mxu0 %v7261
    %7381 = vmatprep.subr.bf16.mxu0 %v7260
    %7382 = vmatpush2.bf16.msra.mxu0 %v7259
    %7383 = vmatprep.subr.bf16.mxu0 %v7258
    %7384 = vmatpush2.bf16.msra.mxu0 %v7257
    %7385 = vmatprep.mubr.bf16.mxu0 %v5554
    %7386 = vmatmul.mubr.bf16.gmra.mxu0 %v5553
    %v7387 = vpop.f32.mrf.mxu0
    %v7388 = vadd.f32 0.0, %v7387
    %v7389 = vpop.f32.mrf.mxu0
    %v7390 = vadd.f32 0.0, %v7389
    %v7391 = vpop.f32.mrf.mxu0
    %v7392 = vadd.f32 0.0, %v7391
    %v7393 = vpop.f32.mrf.mxu0
    %v7394 = vadd.f32 0.0, %v7393
    %7395 = vmatprep.mubr.bf16.mxu0 %v5558
    %7396 = vmatmul.mubr.bf16.gmra.mxu0 %v5557
    %v7397 = vpop.f32.mrf.mxu0
    %v7398 = vadd.f32 0.0, %v7397
    %v7399 = vpop.f32.mrf.mxu0
    %v7400 = vadd.f32 0.0, %v7399
    %v7401 = vpop.f32.mrf.mxu0
    %v7402 = vadd.f32 0.0, %v7401
    %v7403 = vpop.f32.mrf.mxu0
    %v7404 = vadd.f32 0.0, %v7403
    %7405 = vmatprep.mubr.bf16.mxu0 %v5562
    %7406 = vmatmul.mubr.bf16.gmra.mxu0 %v5561
    %v7407 = vpop.f32.mrf.mxu0
    %v7408 = vadd.f32 0.0, %v7407
    %v7409 = vpop.f32.mrf.mxu0
    %v7410 = vadd.f32 0.0, %v7409
    %v7411 = vpop.f32.mrf.mxu0
    %v7412 = vadd.f32 0.0, %v7411
    %v7413 = vpop.f32.mrf.mxu0
    %v7414 = vadd.f32 0.0, %v7413
    %7415 = vmatprep.mubr.bf16.mxu0 %v5566
    %7416 = vmatmul.mubr.bf16.gmra.mxu0 %v5565
    %v7417 = vpop.f32.mrf.mxu0
    %v7418 = vadd.f32 0.0, %v7417
    %v7419 = vpop.f32.mrf.mxu0
    %v7420 = vadd.f32 0.0, %v7419
    %v7421 = vpop.f32.mrf.mxu0
    %v7422 = vadd.f32 0.0, %v7421
    %v7423 = vpop.f32.mrf.mxu0
    %v7424 = vadd.f32 0.0, %v7423
    %7425 = vmatprep.mubr.bf16.mxu0 %v5570
    %7426 = vmatmul.mubr.bf16.gmra.mxu0 %v5569
    %v7427 = vpop.f32.mrf.mxu0
    %v7428 = vadd.f32 0.0, %v7427
    %v7429 = vpop.f32.mrf.mxu0
    %v7430 = vadd.f32 0.0, %v7429
    %v7431 = vpop.f32.mrf.mxu0
    %v7432 = vadd.f32 0.0, %v7431
    %v7433 = vpop.f32.mrf.mxu0
    %v7434 = vadd.f32 0.0, %v7433
    %7435 = vmatprep.mubr.bf16.mxu0 %v5574
    %7436 = vmatmul.mubr.bf16.gmra.mxu0 %v5573
    %v7437 = vpop.f32.mrf.mxu0
    %v7438 = vadd.f32 0.0, %v7437
    %v7439 = vpop.f32.mrf.mxu0
    %v7440 = vadd.f32 0.0, %v7439
    %v7441 = vpop.f32.mrf.mxu0
    %v7442 = vadd.f32 0.0, %v7441
    %v7443 = vpop.f32.mrf.mxu0
    %v7444 = vadd.f32 0.0, %v7443
    %7445 = vmatprep.mubr.bf16.mxu0 %v5578
    %7446 = vmatmul.mubr.bf16.gmra.mxu0 %v5577
    %v7447 = vpop.f32.mrf.mxu0
    %v7448 = vadd.f32 0.0, %v7447
    %v7449 = vpop.f32.mrf.mxu0
    %v7450 = vadd.f32 0.0, %v7449
    %v7451 = vpop.f32.mrf.mxu0
    %v7452 = vadd.f32 0.0, %v7451
    %v7453 = vpop.f32.mrf.mxu0
    %v7454 = vadd.f32 0.0, %v7453
    %7455 = vmatprep.mubr.bf16.mxu0 %v5582
    %7456 = vmatmul.mubr.bf16.gmra.mxu0 %v5581
    %v7457 = vpop.f32.mrf.mxu0
    %v7458 = vadd.f32 0.0, %v7457
    %v7459 = vpop.f32.mrf.mxu0
    %v7460 = vadd.f32 0.0, %v7459
    %v7461 = vpop.f32.mrf.mxu0
    %v7462 = vadd.f32 0.0, %v7461
    %v7463 = vpop.f32.mrf.mxu0
    %v7464 = vadd.f32 0.0, %v7463
    %7465 = vmatprep.mubr.bf16.mxu0 %v5586
    %7466 = vmatmul.mubr.bf16.gmra.mxu0 %v5585
    %v7467 = vpop.f32.mrf.mxu0
    %v7468 = vadd.f32 0.0, %v7467
    %v7469 = vpop.f32.mrf.mxu0
    %v7470 = vadd.f32 0.0, %v7469
    %v7471 = vpop.f32.mrf.mxu0
    %v7472 = vadd.f32 0.0, %v7471
    %v7473 = vpop.f32.mrf.mxu0
    %v7474 = vadd.f32 0.0, %v7473
    %7475 = vmatprep.mubr.bf16.mxu0 %v5590
    %7476 = vmatmul.mubr.bf16.gmra.mxu0 %v5589
    %v7477 = vpop.f32.mrf.mxu0
    %v7478 = vadd.f32 0.0, %v7477
    %v7479 = vpop.f32.mrf.mxu0
    %v7480 = vadd.f32 0.0, %v7479
    %v7481 = vpop.f32.mrf.mxu0
    %v7482 = vadd.f32 0.0, %v7481
    %v7483 = vpop.f32.mrf.mxu0
    %v7484 = vadd.f32 0.0, %v7483
    %7485 = vmatprep.mubr.bf16.mxu0 %v5594
    %7486 = vmatmul.mubr.bf16.gmra.mxu0 %v5593
    %v7487 = vpop.f32.mrf.mxu0
    %v7488 = vadd.f32 0.0, %v7487
    %v7489 = vpop.f32.mrf.mxu0
    %v7490 = vadd.f32 0.0, %v7489
    %v7491 = vpop.f32.mrf.mxu0
    %v7492 = vadd.f32 0.0, %v7491
    %v7493 = vpop.f32.mrf.mxu0
    %v7494 = vadd.f32 0.0, %v7493
    %7495 = vmatprep.mubr.bf16.mxu0 %v5598
    %7496 = vmatmul.mubr.bf16.gmra.mxu0 %v5597
    %v7497 = vpop.f32.mrf.mxu0
    %v7498 = vadd.f32 0.0, %v7497
    %v7499 = vpop.f32.mrf.mxu0
    %v7500 = vadd.f32 0.0, %v7499
    %v7501 = vpop.f32.mrf.mxu0
    %v7502 = vadd.f32 0.0, %v7501
    %v7503 = vpop.f32.mrf.mxu0
    %v7504 = vadd.f32 0.0, %v7503
    %7505 = vmatprep.mubr.bf16.mxu0 %v5602
    %7506 = vmatmul.mubr.bf16.gmra.mxu0 %v5601
    %v7507 = vpop.f32.mrf.mxu0
    %v7508 = vadd.f32 0.0, %v7507
    %v7509 = vpop.f32.mrf.mxu0
    %v7510 = vadd.f32 0.0, %v7509
    %v7511 = vpop.f32.mrf.mxu0
    %v7512 = vadd.f32 0.0, %v7511
    %v7513 = vpop.f32.mrf.mxu0
    %v7514 = vadd.f32 0.0, %v7513
    %7515 = vmatprep.mubr.bf16.mxu0 0
    %7516 = vmatmul.mubr.bf16.gmra.mxu0 0
    %v7517 = vpop.f32.mrf.mxu0
    %v7518 = vadd.f32 0.0, %v7517
    %v7519 = vpop.f32.mrf.mxu0
    %v7520 = vadd.f32 0.0, %v7519
    %v7521 = vpop.f32.mrf.mxu0
    %v7522 = vadd.f32 0.0, %v7521
    %v7523 = vpop.f32.mrf.mxu0
    %v7524 = vadd.f32 0.0, %v7523
    %7525 = vdwg.mxu0
    %7526 = vmatprep.subr.bf16.mxu0 %v7288
    %7527 = vmatpush1.bf16.msra.mxu0 %v7287
    %7528 = vmatprep.subr.bf16.mxu0 %v7286
    %7529 = vmatpush1.bf16.msra.mxu0 %v7285
    %7530 = vmatprep.subr.bf16.mxu0 %v7284
    %7531 = vmatpush1.bf16.msra.mxu0 %v7283
    %7532 = vmatprep.subr.bf16.mxu0 %v7282
    %7533 = vmatpush1.bf16.msra.mxu0 %v7281
    %7534 = vmatprep.subr.bf16.mxu0 %v7280
    %7535 = vmatpush1.bf16.msra.mxu0 %v7279
    %7536 = vmatprep.subr.bf16.mxu0 %v7278
    %7537 = vmatpush1.bf16.msra.mxu0 %v7277
    %7538 = vmatprep.subr.bf16.mxu0 %v7276
    %7539 = vmatpush1.bf16.msra.mxu0 %v7275
    %7540 = vmatprep.subr.bf16.mxu0 %v7274
    %7541 = vmatpush1.bf16.msra.mxu0 %v7273
    %7542 = vmatprep.subr.bf16.mxu0 0
    %7543 = vmatpush2.bf16.msra.mxu0 0
    %7544 = vmatprep.subr.bf16.mxu0 0
    %7545 = vmatpush2.bf16.msra.mxu0 0
    %7546 = vmatprep.subr.bf16.mxu0 0
    %7547 = vmatpush2.bf16.msra.mxu0 0
    %7548 = vmatprep.subr.bf16.mxu0 0
    %7549 = vmatpush2.bf16.msra.mxu0 0
    %7550 = vmatprep.subr.bf16.mxu0 %v7296
    %7551 = vmatpush2.bf16.msra.mxu0 %v7295
    %7552 = vmatprep.subr.bf16.mxu0 %v7294
    %7553 = vmatpush2.bf16.msra.mxu0 %v7293
    %7554 = vmatprep.subr.bf16.mxu0 %v7292
    %7555 = vmatpush2.bf16.msra.mxu0 %v7291
    %7556 = vmatprep.subr.bf16.mxu0 %v7290
    %7557 = vmatpush2.bf16.msra.mxu0 %v7289
    %7558 = vmatprep.mubr.bf16.mxu0 %v6003
    %7559 = vmatmul.mubr.bf16.gmra.mxu0 %v5555
    %v7560 = vpop.f32.mrf.mxu0
    %v7561 = vadd.f32 %v7388, %v7560
    %v7562 = vpop.f32.mrf.mxu0
    %v7563 = vadd.f32 %v7390, %v7562
    %v7564 = vpop.f32.mrf.mxu0
    %v7565 = vadd.f32 %v7392, %v7564
    %v7566 = vpop.f32.mrf.mxu0
    %v7567 = vadd.f32 %v7394, %v7566
    %7568 = vmatprep.mubr.bf16.mxu0 %v6006
    %7569 = vmatmul.mubr.bf16.gmra.mxu0 %v5559
    %v7570 = vpop.f32.mrf.mxu0
    %v7571 = vadd.f32 %v7398, %v7570
    %v7572 = vpop.f32.mrf.mxu0
    %v7573 = vadd.f32 %v7400, %v7572
    %v7574 = vpop.f32.mrf.mxu0
    %v7575 = vadd.f32 %v7402, %v7574
    %v7576 = vpop.f32.mrf.mxu0
    %v7577 = vadd.f32 %v7404, %v7576
    %7578 = vmatprep.mubr.bf16.mxu0 %v6009
    %7579 = vmatmul.mubr.bf16.gmra.mxu0 %v5563
    %v7580 = vpop.f32.mrf.mxu0
    %v7581 = vadd.f32 %v7408, %v7580
    %v7582 = vpop.f32.mrf.mxu0
    %v7583 = vadd.f32 %v7410, %v7582
    %v7584 = vpop.f32.mrf.mxu0
    %v7585 = vadd.f32 %v7412, %v7584
    %v7586 = vpop.f32.mrf.mxu0
    %v7587 = vadd.f32 %v7414, %v7586
    %7588 = vmatprep.mubr.bf16.mxu0 %v6012
    %7589 = vmatmul.mubr.bf16.gmra.mxu0 %v5567
    %v7590 = vpop.f32.mrf.mxu0
    %v7591 = vadd.f32 %v7418, %v7590
    %v7592 = vpop.f32.mrf.mxu0
    %v7593 = vadd.f32 %v7420, %v7592
    %v7594 = vpop.f32.mrf.mxu0
    %v7595 = vadd.f32 %v7422, %v7594
    %v7596 = vpop.f32.mrf.mxu0
    %v7597 = vadd.f32 %v7424, %v7596
    %7598 = vmatprep.mubr.bf16.mxu0 %v6015
    %7599 = vmatmul.mubr.bf16.gmra.mxu0 %v5571
    %v7600 = vpop.f32.mrf.mxu0
    %v7601 = vadd.f32 %v7428, %v7600
    %v7602 = vpop.f32.mrf.mxu0
    %v7603 = vadd.f32 %v7430, %v7602
    %v7604 = vpop.f32.mrf.mxu0
    %v7605 = vadd.f32 %v7432, %v7604
    %v7606 = vpop.f32.mrf.mxu0
    %v7607 = vadd.f32 %v7434, %v7606
    %7608 = vmatprep.mubr.bf16.mxu0 %v6018
    %7609 = vmatmul.mubr.bf16.gmra.mxu0 %v5575
    %v7610 = vpop.f32.mrf.mxu0
    %v7611 = vadd.f32 %v7438, %v7610
    %v7612 = vpop.f32.mrf.mxu0
    %v7613 = vadd.f32 %v7440, %v7612
    %v7614 = vpop.f32.mrf.mxu0
    %v7615 = vadd.f32 %v7442, %v7614
    %v7616 = vpop.f32.mrf.mxu0
    %v7617 = vadd.f32 %v7444, %v7616
    %7618 = vmatprep.mubr.bf16.mxu0 %v6021
    %7619 = vmatmul.mubr.bf16.gmra.mxu0 %v5579
    %v7620 = vpop.f32.mrf.mxu0
    %v7621 = vadd.f32 %v7448, %v7620
    %v7622 = vpop.f32.mrf.mxu0
    %v7623 = vadd.f32 %v7450, %v7622
    %v7624 = vpop.f32.mrf.mxu0
    %v7625 = vadd.f32 %v7452, %v7624
    %v7626 = vpop.f32.mrf.mxu0
    %v7627 = vadd.f32 %v7454, %v7626
    %7628 = vmatprep.mubr.bf16.mxu0 %v6024
    %7629 = vmatmul.mubr.bf16.gmra.mxu0 %v5583
    %v7630 = vpop.f32.mrf.mxu0
    %v7631 = vadd.f32 %v7458, %v7630
    %v7632 = vpop.f32.mrf.mxu0
    %v7633 = vadd.f32 %v7460, %v7632
    %v7634 = vpop.f32.mrf.mxu0
    %v7635 = vadd.f32 %v7462, %v7634
    %v7636 = vpop.f32.mrf.mxu0
    %v7637 = vadd.f32 %v7464, %v7636
    %7638 = vmatprep.mubr.bf16.mxu0 %v6027
    %7639 = vmatmul.mubr.bf16.gmra.mxu0 %v5587
    %v7640 = vpop.f32.mrf.mxu0
    %v7641 = vadd.f32 %v7468, %v7640
    %v7642 = vpop.f32.mrf.mxu0
    %v7643 = vadd.f32 %v7470, %v7642
    %v7644 = vpop.f32.mrf.mxu0
    %v7645 = vadd.f32 %v7472, %v7644
    %v7646 = vpop.f32.mrf.mxu0
    %v7647 = vadd.f32 %v7474, %v7646
    %7648 = vmatprep.mubr.bf16.mxu0 %v6030
    %7649 = vmatmul.mubr.bf16.gmra.mxu0 %v5591
    %v7650 = vpop.f32.mrf.mxu0
    %v7651 = vadd.f32 %v7478, %v7650
    %v7652 = vpop.f32.mrf.mxu0
    %v7653 = vadd.f32 %v7480, %v7652
    %v7654 = vpop.f32.mrf.mxu0
    %v7655 = vadd.f32 %v7482, %v7654
    %v7656 = vpop.f32.mrf.mxu0
    %v7657 = vadd.f32 %v7484, %v7656
    %7658 = vmatprep.mubr.bf16.mxu0 %v6033
    %7659 = vmatmul.mubr.bf16.gmra.mxu0 %v5595
    %v7660 = vpop.f32.mrf.mxu0
    %v7661 = vadd.f32 %v7488, %v7660
    %v7662 = vpop.f32.mrf.mxu0
    %v7663 = vadd.f32 %v7490, %v7662
    %v7664 = vpop.f32.mrf.mxu0
    %v7665 = vadd.f32 %v7492, %v7664
    %v7666 = vpop.f32.mrf.mxu0
    %v7667 = vadd.f32 %v7494, %v7666
    %7668 = vmatprep.mubr.bf16.mxu0 %v6036
    %7669 = vmatmul.mubr.bf16.gmra.mxu0 %v5599
    %v7670 = vpop.f32.mrf.mxu0
    %v7671 = vadd.f32 %v7498, %v7670
    %v7672 = vpop.f32.mrf.mxu0
    %v7673 = vadd.f32 %v7500, %v7672
    %v7674 = vpop.f32.mrf.mxu0
    %v7675 = vadd.f32 %v7502, %v7674
    %v7676 = vpop.f32.mrf.mxu0
    %v7677 = vadd.f32 %v7504, %v7676
    %7678 = vmatprep.mubr.bf16.mxu0 %v6039
    %7679 = vmatmul.mubr.bf16.gmra.mxu0 %v5603
    %v7680 = vpop.f32.mrf.mxu0
    %v7681 = vadd.f32 %v7508, %v7680
    %v7682 = vpop.f32.mrf.mxu0
    %v7683 = vadd.f32 %v7510, %v7682
    %v7684 = vpop.f32.mrf.mxu0
    %v7685 = vadd.f32 %v7512, %v7684
    %v7686 = vpop.f32.mrf.mxu0
    %v7687 = vadd.f32 %v7514, %v7686
    %7688 = vmatprep.mubr.bf16.mxu0 %v6668
    %7689 = vmatmul.mubr.bf16.gmra.mxu0 0
    %v7690 = vpop.f32.mrf.mxu0
    %v7691 = vadd.f32 %v7518, %v7690
    %v7692 = vpop.f32.mrf.mxu0
    %v7693 = vadd.f32 %v7520, %v7692
    %v7694 = vpop.f32.mrf.mxu0
    %v7695 = vadd.f32 %v7522, %v7694
    %v7696 = vpop.f32.mrf.mxu0
    %v7697 = vadd.f32 %v7524, %v7696
    %7698 = vdwg.mxu0
    %v7699 = vadd.f32 %v6878, %v7561
    %v7700 = vadd.f32 %v6880, %v7563
    %v7701 = vadd.f32 %v6882, %v7565
    %v7702 = vadd.f32 %v6884, %v7567
    %v7703 = vadd.f32 %v6888, %v7571
    %v7704 = vadd.f32 %v6890, %v7573
    %v7705 = vadd.f32 %v6892, %v7575
    %v7706 = vadd.f32 %v6894, %v7577
    %v7707 = vadd.f32 %v6898, %v7581
    %v7708 = vadd.f32 %v6900, %v7583
    %v7709 = vadd.f32 %v6902, %v7585
    %v7710 = vadd.f32 %v6904, %v7587
    %v7711 = vadd.f32 %v6908, %v7591
    %v7712 = vadd.f32 %v6910, %v7593
    %v7713 = vadd.f32 %v6912, %v7595
    %v7714 = vadd.f32 %v6914, %v7597
    %v7715 = vadd.f32 %v6918, %v7601
    %v7716 = vadd.f32 %v6920, %v7603
    %v7717 = vadd.f32 %v6922, %v7605
    %v7718 = vadd.f32 %v6924, %v7607
    %v7719 = vadd.f32 %v6928, %v7611
    %v7720 = vadd.f32 %v6930, %v7613
    %v7721 = vadd.f32 %v6932, %v7615
    %v7722 = vadd.f32 %v6934, %v7617
    %v7723 = vadd.f32 %v6938, %v7621
    %v7724 = vadd.f32 %v6940, %v7623
    %v7725 = vadd.f32 %v6942, %v7625
    %v7726 = vadd.f32 %v6944, %v7627
    %v7727 = vadd.f32 %v6948, %v7631
    %v7728 = vadd.f32 %v6950, %v7633
    %v7729 = vadd.f32 %v6952, %v7635
    %v7730 = vadd.f32 %v6954, %v7637
    %v7731 = vadd.f32 %v6958, %v7641
    %v7732 = vadd.f32 %v6960, %v7643
    %v7733 = vadd.f32 %v6962, %v7645
    %v7734 = vadd.f32 %v6964, %v7647
    %v7735 = vadd.f32 %v6968, %v7651
    %v7736 = vadd.f32 %v6970, %v7653
    %v7737 = vadd.f32 %v6972, %v7655
    %v7738 = vadd.f32 %v6974, %v7657
    %v7739 = vadd.f32 %v6978, %v7661
    %v7740 = vadd.f32 %v6980, %v7663
    %v7741 = vadd.f32 %v6982, %v7665
    %v7742 = vadd.f32 %v6984, %v7667
    %v7743 = vadd.f32 %v6988, %v7671
    %v7744 = vadd.f32 %v6990, %v7673
    %v7745 = vadd.f32 %v6992, %v7675
    %v7746 = vadd.f32 %v6994, %v7677
    %v7747 = vadd.f32 %v6998, %v7681
    %v7748 = vadd.f32 %v7000, %v7683
    %v7749 = vadd.f32 %v7002, %v7685
    %v7750 = vadd.f32 %v7004, %v7687
    %v7751 = vadd.f32 %v7008, %v7691
    %v7752 = vadd.f32 %v7010, %v7693
    %v7753 = vadd.f32 %v7012, %v7695
    %v7754 = vadd.f32 %v7014, %v7697
    %v7755 = vmax.f32 %v7699, %v7703
    %v7756 = vmax.f32 %v7700, %v7704
    %v7757 = vmax.f32 %v7701, %v7705
    %v7758 = vmax.f32 %v7702, %v7706
    %v7759 = vmax.f32 %v7707, %v7711
    %v7760 = vmax.f32 %v7708, %v7712
    %v7761 = vmax.f32 %v7709, %v7713
    %v7762 = vmax.f32 %v7710, %v7714
    %v7763 = vmax.f32 %v7715, %v7719
    %v7764 = vmax.f32 %v7716, %v7720
    %v7765 = vmax.f32 %v7717, %v7721
    %v7766 = vmax.f32 %v7718, %v7722
    %v7767 = vmax.f32 %v7723, %v7727
    %v7768 = vmax.f32 %v7724, %v7728
    %v7769 = vmax.f32 %v7725, %v7729
    %v7770 = vmax.f32 %v7726, %v7730
    %v7771 = vmax.f32 %v7731, %v7735
    %v7772 = vmax.f32 %v7732, %v7736
    %v7773 = vmax.f32 %v7733, %v7737
    %v7774 = vmax.f32 %v7734, %v7738
    %v7775 = vmax.f32 %v7739, %v7743
    %v7776 = vmax.f32 %v7740, %v7744
    %v7777 = vmax.f32 %v7741, %v7745
    %v7778 = vmax.f32 %v7742, %v7746
    %v7779 = vmax.f32 %v7747, %v7751
    %v7780 = vmax.f32 %v7748, %v7752
    %v7781 = vmax.f32 %v7749, %v7753
    %v7782 = vmax.f32 %v7750, %v7754
    %s7783 = scalar_lea.vmem [#allocation6], 448
    %v7784 = vld [vmem:[%s7783] sm:$0xff]
    %v7785 = vld [vmem:[%s7783 + $0x8] sm:$0xff]
    %v7786 = vld [vmem:[%s7783 + $0x10] sm:$0xff]
    %v7787 = vld [vmem:[%s7783 + $0x18] sm:$0xff]
    %v7788 = vld [vmem:[%s7783 + $0x20] sm:$0xff]
    %v7789 = vld [vmem:[%s7783 + $0x28] sm:$0xff]
    %v7790 = vld [vmem:[%s7783 + $0x30] sm:$0xff]
    %v7791 = vld [vmem:[%s7783 + $0x38] sm:$0xff]
    %v7792 = vld [vmem:[%s7783 + $0x40] sm:$0xff]
    %v7793 = vld [vmem:[%s7783 + $0x48] sm:$0xff]
    %v7794 = vld [vmem:[%s7783 + $0x50] sm:$0xff]
    %v7795 = vld [vmem:[%s7783 + $0x58] sm:$0xff]
    %v7796 = vld [vmem:[%s7783 + $0x60] sm:$0xff]
    %v7797 = vld [vmem:[%s7783 + $0x68] sm:$0xff]
    %v7798 = vld [vmem:[%s7783 + $0x70] sm:$0xff]
    %v7799 = vld [vmem:[%s7783 + $0x78] sm:$0xff]
    %v7800 = vld [vmem:[%s7783 + $0x80] sm:$0xff]
    %v7801 = vld [vmem:[%s7783 + $0x88] sm:$0xff]
    %v7802 = vld [vmem:[%s7783 + $0x90] sm:$0xff]
    %v7803 = vld [vmem:[%s7783 + $0x98] sm:$0xff]
    %v7804 = vld [vmem:[%s7783 + $0xa0] sm:$0xff]
    %v7805 = vld [vmem:[%s7783 + $0xa8] sm:$0xff]
    %v7806 = vld [vmem:[%s7783 + $0xb0] sm:$0xff]
    %v7807 = vld [vmem:[%s7783 + $0xb8] sm:$0xff]
    %v7808 = vld [vmem:[%s7783 + $0xc0] sm:$0xff]
    %v7809 = vld [vmem:[%s7783 + $0xc8] sm:$0xff]
    %v7810 = vld [vmem:[%s7783 + $0xd0] sm:$0xff]
    %v7811 = vld [vmem:[%s7783 + $0xd8] sm:$0xff]
    %v7812 = vld [vmem:[%s7783 + $0xe0] sm:$0xff]
    %v7813 = vld [vmem:[%s7783 + $0xe8] sm:$0xff]
    %v7814 = vld [vmem:[%s7783 + $0xf0] sm:$0xff]
    %v7815 = vld [vmem:[%s7783 + $0xf8] sm:$0xff]
    %v7816 = vld [vmem:[%s7783 + $0x100] sm:$0xff]
    %v7817 = vld [vmem:[%s7783 + $0x108] sm:$0xff]
    %v7818 = vld [vmem:[%s7783 + $0x110] sm:$0xff]
    %v7819 = vld [vmem:[%s7783 + $0x118] sm:$0xff]
    %v7820 = vld [vmem:[%s7783 + $0x120] sm:$0xff]
    %v7821 = vld [vmem:[%s7783 + $0x128] sm:$0xff]
    %v7822 = vld [vmem:[%s7783 + $0x130] sm:$0xff]
    %v7823 = vld [vmem:[%s7783 + $0x138] sm:$0xff]
    %v7824 = vld [vmem:[%s7783 + $0x140] sm:$0xff]
    %v7825 = vld [vmem:[%s7783 + $0x148] sm:$0xff]
    %v7826 = vld [vmem:[%s7783 + $0x150] sm:$0xff]
    %v7827 = vld [vmem:[%s7783 + $0x158] sm:$0xff]
    %v7828 = vld [vmem:[%s7783 + $0x160] sm:$0xff]
    %v7829 = vld [vmem:[%s7783 + $0x168] sm:$0xff]
    %v7830 = vld [vmem:[%s7783 + $0x170] sm:$0xff]
    %v7831 = vld [vmem:[%s7783 + $0x178] sm:$0xff]
    %v7832 = vld [vmem:[%s7783 + $0x180] sm:$0xff]
    %v7833 = vld [vmem:[%s7783 + $0x188] sm:$0xff]
    %v7834 = vld [vmem:[%s7783 + $0x190] sm:$0xff]
    %v7835 = vld [vmem:[%s7783 + $0x198] sm:$0xff]
    %v7836 = vld [vmem:[%s7783 + $0x1a0] sm:$0xff]
    %v7837 = vld [vmem:[%s7783 + $0x1a8] sm:$0xff]
    %v7838 = vld [vmem:[%s7783 + $0x1b0] sm:$0xff]
    %v7839 = vld [vmem:[%s7783 + $0x1b8] sm:$0xff]
    %s7840 = scalar_lea.vmem [#allocation6], 1344
    %v7841 = vld [vmem:[%s7840] sm:$0xff]
    %v7842 = vld [vmem:[%s7840 + $0x8] sm:$0xff]
    %v7843 = vld [vmem:[%s7840 + $0x10] sm:$0xff]
    %v7844 = vld [vmem:[%s7840 + $0x18] sm:$0xff]
    %v7845 = vld [vmem:[%s7840 + $0x20] sm:$0xff]
    %v7846 = vld [vmem:[%s7840 + $0x28] sm:$0xff]
    %v7847 = vld [vmem:[%s7840 + $0x30] sm:$0xff]
    %v7848 = vld [vmem:[%s7840 + $0x38] sm:$0xff]
    %v7849 = vld [vmem:[%s7840 + $0x40] sm:$0xff]
    %v7850 = vld [vmem:[%s7840 + $0x48] sm:$0xff]
    %v7851 = vld [vmem:[%s7840 + $0x50] sm:$0xff]
    %v7852 = vld [vmem:[%s7840 + $0x58] sm:$0xff]
    %v7853 = vld [vmem:[%s7840 + $0x60] sm:$0xff]
    %v7854 = vld [vmem:[%s7840 + $0x68] sm:$0xff]
    %v7855 = vld [vmem:[%s7840 + $0x70] sm:$0xff]
    %v7856 = vld [vmem:[%s7840 + $0x78] sm:$0xff]
    %v7857 = vld [vmem:[%s7840 + $0x80] sm:$0xff]
    %v7858 = vld [vmem:[%s7840 + $0x88] sm:$0xff]
    %v7859 = vld [vmem:[%s7840 + $0x90] sm:$0xff]
    %v7860 = vld [vmem:[%s7840 + $0x98] sm:$0xff]
    %v7861 = vld [vmem:[%s7840 + $0xa0] sm:$0xff]
    %v7862 = vld [vmem:[%s7840 + $0xa8] sm:$0xff]
    %v7863 = vld [vmem:[%s7840 + $0xb0] sm:$0xff]
    %v7864 = vld [vmem:[%s7840 + $0xb8] sm:$0xff]
    %v7865 = vld [vmem:[%s7840 + $0xc0] sm:$0xff]
    %v7866 = vld [vmem:[%s7840 + $0xc8] sm:$0xff]
    %v7867 = vld [vmem:[%s7840 + $0xd0] sm:$0xff]
    %v7868 = vld [vmem:[%s7840 + $0xd8] sm:$0xff]
    %v7869 = vld [vmem:[%s7840 + $0xe0] sm:$0xff]
    %v7870 = vld [vmem:[%s7840 + $0xe8] sm:$0xff]
    %v7871 = vld [vmem:[%s7840 + $0xf0] sm:$0xff]
    %v7872 = vld [vmem:[%s7840 + $0xf8] sm:$0xff]
    %v7873 = vld [vmem:[%s7840 + $0x100] sm:$0xff]
    %v7874 = vld [vmem:[%s7840 + $0x108] sm:$0xff]
    %v7875 = vld [vmem:[%s7840 + $0x110] sm:$0xff]
    %v7876 = vld [vmem:[%s7840 + $0x118] sm:$0xff]
    %v7877 = vld [vmem:[%s7840 + $0x120] sm:$0xff]
    %v7878 = vld [vmem:[%s7840 + $0x128] sm:$0xff]
    %v7879 = vld [vmem:[%s7840 + $0x130] sm:$0xff]
    %v7880 = vld [vmem:[%s7840 + $0x138] sm:$0xff]
    %v7881 = vld [vmem:[%s7840 + $0x140] sm:$0xff]
    %v7882 = vld [vmem:[%s7840 + $0x148] sm:$0xff]
    %v7883 = vld [vmem:[%s7840 + $0x150] sm:$0xff]
    %v7884 = vld [vmem:[%s7840 + $0x158] sm:$0xff]
    %v7885 = vld [vmem:[%s7840 + $0x160] sm:$0xff]
    %v7886 = vld [vmem:[%s7840 + $0x168] sm:$0xff]
    %v7887 = vld [vmem:[%s7840 + $0x170] sm:$0xff]
    %v7888 = vld [vmem:[%s7840 + $0x178] sm:$0xff]
    %v7889 = vld [vmem:[%s7840 + $0x180] sm:$0xff]
    %v7890 = vld [vmem:[%s7840 + $0x188] sm:$0xff]
    %v7891 = vld [vmem:[%s7840 + $0x190] sm:$0xff]
    %v7892 = vld [vmem:[%s7840 + $0x198] sm:$0xff]
    %v7893 = vld [vmem:[%s7840 + $0x1a0] sm:$0xff]
    %v7894 = vld [vmem:[%s7840 + $0x1a8] sm:$0xff]
    %v7895 = vld [vmem:[%s7840 + $0x1b0] sm:$0xff]
    %v7896 = vld [vmem:[%s7840 + $0x1b8] sm:$0xff]
    %v7953 = vunpack.c.l.b16 %v7841
    %v7954 = vunpack.c.h.b16 %v7841
    %v7955 = vunpack.c.l.b16 %v7842
    %v7956 = vunpack.c.h.b16 %v7842
    %v7957 = vunpack.c.l.b16 %v7843
    %v7958 = vunpack.c.h.b16 %v7843
    %v7959 = vunpack.c.l.b16 %v7844
    %v7960 = vunpack.c.h.b16 %v7844
    %v7961 = vunpack.c.l.b16 %v7845
    %v7962 = vunpack.c.h.b16 %v7845
    %v7963 = vunpack.c.l.b16 %v7846
    %v7964 = vunpack.c.h.b16 %v7846
    %v7965 = vunpack.c.l.b16 %v7847
    %v7966 = vunpack.c.h.b16 %v7847
    %v7967 = vunpack.c.l.b16 %v7848
    %v7968 = vunpack.c.h.b16 %v7848
    %v7969 = vunpack.c.l.b16 %v7849
    %v7970 = vunpack.c.h.b16 %v7849
    %v7971 = vunpack.c.l.b16 %v7850
    %v7972 = vunpack.c.h.b16 %v7850
    %v7973 = vunpack.c.l.b16 %v7851
    %v7974 = vunpack.c.h.b16 %v7851
    %v7975 = vunpack.c.l.b16 %v7852
    %v7976 = vunpack.c.h.b16 %v7852
    %v7977 = vunpack.c.l.b16 %v7853
    %v7978 = vunpack.c.h.b16 %v7853
    %v7979 = vunpack.c.l.b16 %v7854
    %v7980 = vunpack.c.h.b16 %v7854
    %v7981 = vunpack.c.l.b16 %v7855
    %v7982 = vunpack.c.h.b16 %v7855
    %v7983 = vunpack.c.l.b16 %v7856
    %v7984 = vunpack.c.h.b16 %v7856
    %v7985 = vunpack.c.l.b16 %v7857
    %v7986 = vunpack.c.h.b16 %v7857
    %v7987 = vunpack.c.l.b16 %v7858
    %v7988 = vunpack.c.h.b16 %v7858
    %v7989 = vunpack.c.l.b16 %v7859
    %v7990 = vunpack.c.h.b16 %v7859
    %v7991 = vunpack.c.l.b16 %v7860
    %v7992 = vunpack.c.h.b16 %v7860
    %v7993 = vunpack.c.l.b16 %v7861
    %v7994 = vunpack.c.h.b16 %v7861
    %v7995 = vunpack.c.l.b16 %v7862
    %v7996 = vunpack.c.h.b16 %v7862
    %v7997 = vunpack.c.l.b16 %v7863
    %v7998 = vunpack.c.h.b16 %v7863
    %v7999 = vunpack.c.l.b16 %v7864
    %v8000 = vunpack.c.h.b16 %v7864
    %v8001 = vunpack.c.l.b16 %v7865
    %v8002 = vunpack.c.h.b16 %v7865
    %v8003 = vunpack.c.l.b16 %v7866
    %v8004 = vunpack.c.h.b16 %v7866
    %v8005 = vunpack.c.l.b16 %v7867
    %v8006 = vunpack.c.h.b16 %v7867
    %v8007 = vunpack.c.l.b16 %v7868
    %v8008 = vunpack.c.h.b16 %v7868
    %v8009 = vunpack.c.l.b16 %v7869
    %v8010 = vunpack.c.h.b16 %v7869
    %v8011 = vunpack.c.l.b16 %v7870
    %v8012 = vunpack.c.h.b16 %v7870
    %v8013 = vunpack.c.l.b16 %v7871
    %v8014 = vunpack.c.h.b16 %v7871
    %v8015 = vunpack.c.l.b16 %v7872
    %v8016 = vunpack.c.h.b16 %v7872
    %v8017 = vunpack.c.l.b16 %v7873
    %v8018 = vunpack.c.h.b16 %v7873
    %v8019 = vunpack.c.l.b16 %v7874
    %v8020 = vunpack.c.h.b16 %v7874
    %v8021 = vunpack.c.l.b16 %v7875
    %v8022 = vunpack.c.h.b16 %v7875
    %v8023 = vunpack.c.l.b16 %v7876
    %v8024 = vunpack.c.h.b16 %v7876
    %v8025 = vunpack.c.l.b16 %v7877
    %v8026 = vunpack.c.h.b16 %v7877
    %v8027 = vunpack.c.l.b16 %v7878
    %v8028 = vunpack.c.h.b16 %v7878
    %v8029 = vunpack.c.l.b16 %v7879
    %v8030 = vunpack.c.h.b16 %v7879
    %v8031 = vunpack.c.l.b16 %v7880
    %v8032 = vunpack.c.h.b16 %v7880
    %v8033 = vunpack.c.l.b16 %v7881
    %v8034 = vunpack.c.h.b16 %v7881
    %v8035 = vunpack.c.l.b16 %v7882
    %v8036 = vunpack.c.h.b16 %v7882
    %v8037 = vunpack.c.l.b16 %v7883
    %v8038 = vunpack.c.h.b16 %v7883
    %v8039 = vunpack.c.l.b16 %v7884
    %v8040 = vunpack.c.h.b16 %v7884
    %v8041 = vunpack.c.l.b16 %v7885
    %v8042 = vunpack.c.h.b16 %v7885
    %v8043 = vunpack.c.l.b16 %v7886
    %v8044 = vunpack.c.h.b16 %v7886
    %v8045 = vunpack.c.l.b16 %v7887
    %v8046 = vunpack.c.h.b16 %v7887
    %v8047 = vunpack.c.l.b16 %v7888
    %v8048 = vunpack.c.h.b16 %v7888
    %v8049 = vunpack.c.l.b16 %v7889
    %v8050 = vunpack.c.h.b16 %v7889
    %v8051 = vunpack.c.l.b16 %v7890
    %v8052 = vunpack.c.h.b16 %v7890
    %v8053 = vunpack.c.l.b16 %v7891
    %v8054 = vunpack.c.h.b16 %v7891
    %v8055 = vunpack.c.l.b16 %v7892
    %v8056 = vunpack.c.h.b16 %v7892
    %v8057 = vunpack.c.l.b16 %v7893
    %v8058 = vunpack.c.h.b16 %v7893
    %v8059 = vunpack.c.l.b16 %v7894
    %v8060 = vunpack.c.h.b16 %v7894
    %v8061 = vunpack.c.l.b16 %v7895
    %v8062 = vunpack.c.h.b16 %v7895
    %v8063 = vunpack.c.l.b16 %v7896
    %v8064 = vunpack.c.h.b16 %v7896
    %v8065 = vpack.c.b16 %v7955, %v7953
    %v8066 = vpack.c.b16 %v7956, %v7954
    %v8067 = vpack.c.b16 %v7959, %v7957
    %v8068 = vpack.c.b16 %v7960, %v7958
    %v8069 = vpack.c.b16 %v7963, %v7961
    %v8070 = vpack.c.b16 %v7964, %v7962
    %v8071 = vpack.c.b16 %v7967, %v7965
    %v8072 = vpack.c.b16 %v7968, %v7966
    %v8073 = vpack.c.b16 %v7971, %v7969
    %v8074 = vpack.c.b16 %v7972, %v7970
    %v8075 = vpack.c.b16 %v7975, %v7973
    %v8076 = vpack.c.b16 %v7976, %v7974
    %v8077 = vpack.c.b16 %v7979, %v7977
    %v8078 = vpack.c.b16 %v7980, %v7978
    %v8079 = vpack.c.b16 %v7983, %v7981
    %v8080 = vpack.c.b16 %v7984, %v7982
    %v8081 = vpack.c.b16 %v7987, %v7985
    %v8082 = vpack.c.b16 %v7988, %v7986
    %v8083 = vpack.c.b16 %v7991, %v7989
    %v8084 = vpack.c.b16 %v7992, %v7990
    %v8085 = vpack.c.b16 %v7995, %v7993
    %v8086 = vpack.c.b16 %v7996, %v7994
    %v8087 = vpack.c.b16 %v7999, %v7997
    %v8088 = vpack.c.b16 %v8000, %v7998
    %v8089 = vpack.c.b16 %v8003, %v8001
    %v8090 = vpack.c.b16 %v8004, %v8002
    %v8091 = vpack.c.b16 %v8007, %v8005
    %v8092 = vpack.c.b16 %v8008, %v8006
    %v8093 = vpack.c.b16 %v8011, %v8009
    %v8094 = vpack.c.b16 %v8012, %v8010
    %v8095 = vpack.c.b16 %v8015, %v8013
    %v8096 = vpack.c.b16 %v8016, %v8014
    %v8097 = vpack.c.b16 %v8019, %v8017
    %v8098 = vpack.c.b16 %v8020, %v8018
    %v8099 = vpack.c.b16 %v8023, %v8021
    %v8100 = vpack.c.b16 %v8024, %v8022
    %v8101 = vpack.c.b16 %v8027, %v8025
    %v8102 = vpack.c.b16 %v8028, %v8026
    %v8103 = vpack.c.b16 %v8031, %v8029
    %v8104 = vpack.c.b16 %v8032, %v8030
    %v8105 = vpack.c.b16 %v8035, %v8033
    %v8106 = vpack.c.b16 %v8036, %v8034
    %v8107 = vpack.c.b16 %v8039, %v8037
    %v8108 = vpack.c.b16 %v8040, %v8038
    %v8109 = vpack.c.b16 %v8043, %v8041
    %v8110 = vpack.c.b16 %v8044, %v8042
    %v8111 = vpack.c.b16 %v8047, %v8045
    %v8112 = vpack.c.b16 %v8048, %v8046
    %v8113 = vpack.c.b16 %v8051, %v8049
    %v8114 = vpack.c.b16 %v8052, %v8050
    %v8115 = vpack.c.b16 %v8055, %v8053
    %v8116 = vpack.c.b16 %v8056, %v8054
    %v8117 = vpack.c.b16 %v8059, %v8057
    %v8118 = vpack.c.b16 %v8060, %v8058
    %v8119 = vpack.c.b16 %v8063, %v8061
    %v8120 = vpack.c.b16 %v8064, %v8062
    %8177 = vmatprep.subr.bf16.mxu0 %v8080
    %8178 = vmatpush1.bf16.msra.mxu0 %v8079
    %8179 = vmatprep.subr.bf16.mxu0 %v8078
    %8180 = vmatpush1.bf16.msra.mxu0 %v8077
    %8181 = vmatprep.subr.bf16.mxu0 %v8076
    %8182 = vmatpush1.bf16.msra.mxu0 %v8075
    %8183 = vmatprep.subr.bf16.mxu0 %v8074
    %8184 = vmatpush1.bf16.msra.mxu0 %v8073
    %8185 = vmatprep.subr.bf16.mxu0 %v8072
    %8186 = vmatpush1.bf16.msra.mxu0 %v8071
    %8187 = vmatprep.subr.bf16.mxu0 %v8070
    %8188 = vmatpush1.bf16.msra.mxu0 %v8069
    %8189 = vmatprep.subr.bf16.mxu0 %v8068
    %8190 = vmatpush1.bf16.msra.mxu0 %v8067
    %8191 = vmatprep.subr.bf16.mxu0 %v8066
    %8192 = vmatpush1.bf16.msra.mxu0 %v8065
    %8193 = vmatprep.subr.bf16.mxu0 %v8096
    %8194 = vmatpush2.bf16.msra.mxu0 %v8095
    %8195 = vmatprep.subr.bf16.mxu0 %v8094
    %8196 = vmatpush2.bf16.msra.mxu0 %v8093
    %8197 = vmatprep.subr.bf16.mxu0 %v8092
    %8198 = vmatpush2.bf16.msra.mxu0 %v8091
    %8199 = vmatprep.subr.bf16.mxu0 %v8090
    %8200 = vmatpush2.bf16.msra.mxu0 %v8089
    %8201 = vmatprep.subr.bf16.mxu0 %v8088
    %8202 = vmatpush2.bf16.msra.mxu0 %v8087
    %8203 = vmatprep.subr.bf16.mxu0 %v8086
    %8204 = vmatpush2.bf16.msra.mxu0 %v8085
    %8205 = vmatprep.subr.bf16.mxu0 %v8084
    %8206 = vmatpush2.bf16.msra.mxu0 %v8083
    %8207 = vmatprep.subr.bf16.mxu0 %v8082
    %8208 = vmatpush2.bf16.msra.mxu0 %v8081
    %8209 = vmatprep.mubr.bf16.mxu0 %v5550
    %8210 = vmatmul.mubr.bf16.gmra.mxu0 %v5549
    %v8211 = vpop.f32.mrf.mxu0
    %v8212 = vadd.f32 0.0, %v8211
    %v8213 = vpop.f32.mrf.mxu0
    %v8214 = vadd.f32 0.0, %v8213
    %v8215 = vpop.f32.mrf.mxu0
    %v8216 = vadd.f32 0.0, %v8215
    %v8217 = vpop.f32.mrf.mxu0
    %v8218 = vadd.f32 0.0, %v8217
    %8219 = vmatprep.mubr.bf16.mxu0 %v5554
    %8220 = vmatmul.mubr.bf16.gmra.mxu0 %v5553
    %v8221 = vpop.f32.mrf.mxu0
    %v8222 = vadd.f32 0.0, %v8221
    %v8223 = vpop.f32.mrf.mxu0
    %v8224 = vadd.f32 0.0, %v8223
    %v8225 = vpop.f32.mrf.mxu0
    %v8226 = vadd.f32 0.0, %v8225
    %v8227 = vpop.f32.mrf.mxu0
    %v8228 = vadd.f32 0.0, %v8227
    %8229 = vmatprep.mubr.bf16.mxu0 %v5558
    %8230 = vmatmul.mubr.bf16.gmra.mxu0 %v5557
    %v8231 = vpop.f32.mrf.mxu0
    %v8232 = vadd.f32 0.0, %v8231
    %v8233 = vpop.f32.mrf.mxu0
    %v8234 = vadd.f32 0.0, %v8233
    %v8235 = vpop.f32.mrf.mxu0
    %v8236 = vadd.f32 0.0, %v8235
    %v8237 = vpop.f32.mrf.mxu0
    %v8238 = vadd.f32 0.0, %v8237
    %8239 = vmatprep.mubr.bf16.mxu0 %v5562
    %8240 = vmatmul.mubr.bf16.gmra.mxu0 %v5561
    %v8241 = vpop.f32.mrf.mxu0
    %v8242 = vadd.f32 0.0, %v8241
    %v8243 = vpop.f32.mrf.mxu0
    %v8244 = vadd.f32 0.0, %v8243
    %v8245 = vpop.f32.mrf.mxu0
    %v8246 = vadd.f32 0.0, %v8245
    %v8247 = vpop.f32.mrf.mxu0
    %v8248 = vadd.f32 0.0, %v8247
    %8249 = vmatprep.mubr.bf16.mxu0 %v5566
    %8250 = vmatmul.mubr.bf16.gmra.mxu0 %v5565
    %v8251 = vpop.f32.mrf.mxu0
    %v8252 = vadd.f32 0.0, %v8251
    %v8253 = vpop.f32.mrf.mxu0
    %v8254 = vadd.f32 0.0, %v8253
    %v8255 = vpop.f32.mrf.mxu0
    %v8256 = vadd.f32 0.0, %v8255
    %v8257 = vpop.f32.mrf.mxu0
    %v8258 = vadd.f32 0.0, %v8257
    %8259 = vmatprep.mubr.bf16.mxu0 %v5570
    %8260 = vmatmul.mubr.bf16.gmra.mxu0 %v5569
    %v8261 = vpop.f32.mrf.mxu0
    %v8262 = vadd.f32 0.0, %v8261
    %v8263 = vpop.f32.mrf.mxu0
    %v8264 = vadd.f32 0.0, %v8263
    %v8265 = vpop.f32.mrf.mxu0
    %v8266 = vadd.f32 0.0, %v8265
    %v8267 = vpop.f32.mrf.mxu0
    %v8268 = vadd.f32 0.0, %v8267
    %8269 = vmatprep.mubr.bf16.mxu0 %v5574
    %8270 = vmatmul.mubr.bf16.gmra.mxu0 %v5573
    %v8271 = vpop.f32.mrf.mxu0
    %v8272 = vadd.f32 0.0, %v8271
    %v8273 = vpop.f32.mrf.mxu0
    %v8274 = vadd.f32 0.0, %v8273
    %v8275 = vpop.f32.mrf.mxu0
    %v8276 = vadd.f32 0.0, %v8275
    %v8277 = vpop.f32.mrf.mxu0
    %v8278 = vadd.f32 0.0, %v8277
    %8279 = vmatprep.mubr.bf16.mxu0 %v5578
    %8280 = vmatmul.mubr.bf16.gmra.mxu0 %v5577
    %v8281 = vpop.f32.mrf.mxu0
    %v8282 = vadd.f32 0.0, %v8281
    %v8283 = vpop.f32.mrf.mxu0
    %v8284 = vadd.f32 0.0, %v8283
    %v8285 = vpop.f32.mrf.mxu0
    %v8286 = vadd.f32 0.0, %v8285
    %v8287 = vpop.f32.mrf.mxu0
    %v8288 = vadd.f32 0.0, %v8287
    %8289 = vmatprep.mubr.bf16.mxu0 %v5582
    %8290 = vmatmul.mubr.bf16.gmra.mxu0 %v5581
    %v8291 = vpop.f32.mrf.mxu0
    %v8292 = vadd.f32 0.0, %v8291
    %v8293 = vpop.f32.mrf.mxu0
    %v8294 = vadd.f32 0.0, %v8293
    %v8295 = vpop.f32.mrf.mxu0
    %v8296 = vadd.f32 0.0, %v8295
    %v8297 = vpop.f32.mrf.mxu0
    %v8298 = vadd.f32 0.0, %v8297
    %8299 = vmatprep.mubr.bf16.mxu0 %v5586
    %8300 = vmatmul.mubr.bf16.gmra.mxu0 %v5585
    %v8301 = vpop.f32.mrf.mxu0
    %v8302 = vadd.f32 0.0, %v8301
    %v8303 = vpop.f32.mrf.mxu0
    %v8304 = vadd.f32 0.0, %v8303
    %v8305 = vpop.f32.mrf.mxu0
    %v8306 = vadd.f32 0.0, %v8305
    %v8307 = vpop.f32.mrf.mxu0
    %v8308 = vadd.f32 0.0, %v8307
    %8309 = vmatprep.mubr.bf16.mxu0 %v5590
    %8310 = vmatmul.mubr.bf16.gmra.mxu0 %v5589
    %v8311 = vpop.f32.mrf.mxu0
    %v8312 = vadd.f32 0.0, %v8311
    %v8313 = vpop.f32.mrf.mxu0
    %v8314 = vadd.f32 0.0, %v8313
    %v8315 = vpop.f32.mrf.mxu0
    %v8316 = vadd.f32 0.0, %v8315
    %v8317 = vpop.f32.mrf.mxu0
    %v8318 = vadd.f32 0.0, %v8317
    %8319 = vmatprep.mubr.bf16.mxu0 %v5594
    %8320 = vmatmul.mubr.bf16.gmra.mxu0 %v5593
    %v8321 = vpop.f32.mrf.mxu0
    %v8322 = vadd.f32 0.0, %v8321
    %v8323 = vpop.f32.mrf.mxu0
    %v8324 = vadd.f32 0.0, %v8323
    %v8325 = vpop.f32.mrf.mxu0
    %v8326 = vadd.f32 0.0, %v8325
    %v8327 = vpop.f32.mrf.mxu0
    %v8328 = vadd.f32 0.0, %v8327
    %8329 = vmatprep.mubr.bf16.mxu0 %v5598
    %8330 = vmatmul.mubr.bf16.gmra.mxu0 %v5597
    %v8331 = vpop.f32.mrf.mxu0
    %v8332 = vadd.f32 0.0, %v8331
    %v8333 = vpop.f32.mrf.mxu0
    %v8334 = vadd.f32 0.0, %v8333
    %v8335 = vpop.f32.mrf.mxu0
    %v8336 = vadd.f32 0.0, %v8335
    %v8337 = vpop.f32.mrf.mxu0
    %v8338 = vadd.f32 0.0, %v8337
    %8339 = vmatprep.mubr.bf16.mxu0 %v5602
    %8340 = vmatmul.mubr.bf16.gmra.mxu0 %v5601
    %v8341 = vpop.f32.mrf.mxu0
    %v8342 = vadd.f32 0.0, %v8341
    %v8343 = vpop.f32.mrf.mxu0
    %v8344 = vadd.f32 0.0, %v8343
    %v8345 = vpop.f32.mrf.mxu0
    %v8346 = vadd.f32 0.0, %v8345
    %v8347 = vpop.f32.mrf.mxu0
    %v8348 = vadd.f32 0.0, %v8347
    %8349 = vdwg.mxu0
    %8350 = vmatprep.subr.bf16.mxu0 %v8112
    %8351 = vmatpush1.bf16.msra.mxu0 %v8111
    %8352 = vmatprep.subr.bf16.mxu0 %v8110
    %8353 = vmatpush1.bf16.msra.mxu0 %v8109
    %8354 = vmatprep.subr.bf16.mxu0 %v8108
    %8355 = vmatpush1.bf16.msra.mxu0 %v8107
    %8356 = vmatprep.subr.bf16.mxu0 %v8106
    %8357 = vmatpush1.bf16.msra.mxu0 %v8105
    %8358 = vmatprep.subr.bf16.mxu0 %v8104
    %8359 = vmatpush1.bf16.msra.mxu0 %v8103
    %8360 = vmatprep.subr.bf16.mxu0 %v8102
    %8361 = vmatpush1.bf16.msra.mxu0 %v8101
    %8362 = vmatprep.subr.bf16.mxu0 %v8100
    %8363 = vmatpush1.bf16.msra.mxu0 %v8099
    %8364 = vmatprep.subr.bf16.mxu0 %v8098
    %8365 = vmatpush1.bf16.msra.mxu0 %v8097
    %8366 = vmatprep.subr.bf16.mxu0 0
    %8367 = vmatpush2.bf16.msra.mxu0 0
    %8368 = vmatprep.subr.bf16.mxu0 0
    %8369 = vmatpush2.bf16.msra.mxu0 0
    %8370 = vmatprep.subr.bf16.mxu0 0
    %8371 = vmatpush2.bf16.msra.mxu0 0
    %8372 = vmatprep.subr.bf16.mxu0 0
    %8373 = vmatpush2.bf16.msra.mxu0 0
    %8374 = vmatprep.subr.bf16.mxu0 %v8120
    %8375 = vmatpush2.bf16.msra.mxu0 %v8119
    %8376 = vmatprep.subr.bf16.mxu0 %v8118
    %8377 = vmatpush2.bf16.msra.mxu0 %v8117
    %8378 = vmatprep.subr.bf16.mxu0 %v8116
    %8379 = vmatpush2.bf16.msra.mxu0 %v8115
    %8380 = vmatprep.subr.bf16.mxu0 %v8114
    %8381 = vmatpush2.bf16.msra.mxu0 %v8113
    %8382 = vmatprep.mubr.bf16.mxu0 %v6000
    %8383 = vmatmul.mubr.bf16.gmra.mxu0 %v5551
    %v8384 = vpop.f32.mrf.mxu0
    %v8385 = vadd.f32 %v8212, %v8384
    %v8386 = vpop.f32.mrf.mxu0
    %v8387 = vadd.f32 %v8214, %v8386
    %v8388 = vpop.f32.mrf.mxu0
    %v8389 = vadd.f32 %v8216, %v8388
    %v8390 = vpop.f32.mrf.mxu0
    %v8391 = vadd.f32 %v8218, %v8390
    %8392 = vmatprep.mubr.bf16.mxu0 %v6003
    %8393 = vmatmul.mubr.bf16.gmra.mxu0 %v5555
    %v8394 = vpop.f32.mrf.mxu0
    %v8395 = vadd.f32 %v8222, %v8394
    %v8396 = vpop.f32.mrf.mxu0
    %v8397 = vadd.f32 %v8224, %v8396
    %v8398 = vpop.f32.mrf.mxu0
    %v8399 = vadd.f32 %v8226, %v8398
    %v8400 = vpop.f32.mrf.mxu0
    %v8401 = vadd.f32 %v8228, %v8400
    %8402 = vmatprep.mubr.bf16.mxu0 %v6006
    %8403 = vmatmul.mubr.bf16.gmra.mxu0 %v5559
    %v8404 = vpop.f32.mrf.mxu0
    %v8405 = vadd.f32 %v8232, %v8404
    %v8406 = vpop.f32.mrf.mxu0
    %v8407 = vadd.f32 %v8234, %v8406
    %v8408 = vpop.f32.mrf.mxu0
    %v8409 = vadd.f32 %v8236, %v8408
    %v8410 = vpop.f32.mrf.mxu0
    %v8411 = vadd.f32 %v8238, %v8410
    %8412 = vmatprep.mubr.bf16.mxu0 %v6009
    %8413 = vmatmul.mubr.bf16.gmra.mxu0 %v5563
    %v8414 = vpop.f32.mrf.mxu0
    %v8415 = vadd.f32 %v8242, %v8414
    %v8416 = vpop.f32.mrf.mxu0
    %v8417 = vadd.f32 %v8244, %v8416
    %v8418 = vpop.f32.mrf.mxu0
    %v8419 = vadd.f32 %v8246, %v8418
    %v8420 = vpop.f32.mrf.mxu0
    %v8421 = vadd.f32 %v8248, %v8420
    %8422 = vmatprep.mubr.bf16.mxu0 %v6012
    %8423 = vmatmul.mubr.bf16.gmra.mxu0 %v5567
    %v8424 = vpop.f32.mrf.mxu0
    %v8425 = vadd.f32 %v8252, %v8424
    %v8426 = vpop.f32.mrf.mxu0
    %v8427 = vadd.f32 %v8254, %v8426
    %v8428 = vpop.f32.mrf.mxu0
    %v8429 = vadd.f32 %v8256, %v8428
    %v8430 = vpop.f32.mrf.mxu0
    %v8431 = vadd.f32 %v8258, %v8430
    %8432 = vmatprep.mubr.bf16.mxu0 %v6015
    %8433 = vmatmul.mubr.bf16.gmra.mxu0 %v5571
    %v8434 = vpop.f32.mrf.mxu0
    %v8435 = vadd.f32 %v8262, %v8434
    %v8436 = vpop.f32.mrf.mxu0
    %v8437 = vadd.f32 %v8264, %v8436
    %v8438 = vpop.f32.mrf.mxu0
    %v8439 = vadd.f32 %v8266, %v8438
    %v8440 = vpop.f32.mrf.mxu0
    %v8441 = vadd.f32 %v8268, %v8440
    %8442 = vmatprep.mubr.bf16.mxu0 %v6018
    %8443 = vmatmul.mubr.bf16.gmra.mxu0 %v5575
    %v8444 = vpop.f32.mrf.mxu0
    %v8445 = vadd.f32 %v8272, %v8444
    %v8446 = vpop.f32.mrf.mxu0
    %v8447 = vadd.f32 %v8274, %v8446
    %v8448 = vpop.f32.mrf.mxu0
    %v8449 = vadd.f32 %v8276, %v8448
    %v8450 = vpop.f32.mrf.mxu0
    %v8451 = vadd.f32 %v8278, %v8450
    %8452 = vmatprep.mubr.bf16.mxu0 %v6021
    %8453 = vmatmul.mubr.bf16.gmra.mxu0 %v5579
    %v8454 = vpop.f32.mrf.mxu0
    %v8455 = vadd.f32 %v8282, %v8454
    %v8456 = vpop.f32.mrf.mxu0
    %v8457 = vadd.f32 %v8284, %v8456
    %v8458 = vpop.f32.mrf.mxu0
    %v8459 = vadd.f32 %v8286, %v8458
    %v8460 = vpop.f32.mrf.mxu0
    %v8461 = vadd.f32 %v8288, %v8460
    %8462 = vmatprep.mubr.bf16.mxu0 %v6024
    %8463 = vmatmul.mubr.bf16.gmra.mxu0 %v5583
    %v8464 = vpop.f32.mrf.mxu0
    %v8465 = vadd.f32 %v8292, %v8464
    %v8466 = vpop.f32.mrf.mxu0
    %v8467 = vadd.f32 %v8294, %v8466
    %v8468 = vpop.f32.mrf.mxu0
    %v8469 = vadd.f32 %v8296, %v8468
    %v8470 = vpop.f32.mrf.mxu0
    %v8471 = vadd.f32 %v8298, %v8470
    %8472 = vmatprep.mubr.bf16.mxu0 %v6027
    %8473 = vmatmul.mubr.bf16.gmra.mxu0 %v5587
    %v8474 = vpop.f32.mrf.mxu0
    %v8475 = vadd.f32 %v8302, %v8474
    %v8476 = vpop.f32.mrf.mxu0
    %v8477 = vadd.f32 %v8304, %v8476
    %v8478 = vpop.f32.mrf.mxu0
    %v8479 = vadd.f32 %v8306, %v8478
    %v8480 = vpop.f32.mrf.mxu0
    %v8481 = vadd.f32 %v8308, %v8480
    %8482 = vmatprep.mubr.bf16.mxu0 %v6030
    %8483 = vmatmul.mubr.bf16.gmra.mxu0 %v5591
    %v8484 = vpop.f32.mrf.mxu0
    %v8485 = vadd.f32 %v8312, %v8484
    %v8486 = vpop.f32.mrf.mxu0
    %v8487 = vadd.f32 %v8314, %v8486
    %v8488 = vpop.f32.mrf.mxu0
    %v8489 = vadd.f32 %v8316, %v8488
    %v8490 = vpop.f32.mrf.mxu0
    %v8491 = vadd.f32 %v8318, %v8490
    %8492 = vmatprep.mubr.bf16.mxu0 %v6033
    %8493 = vmatmul.mubr.bf16.gmra.mxu0 %v5595
    %v8494 = vpop.f32.mrf.mxu0
    %v8495 = vadd.f32 %v8322, %v8494
    %v8496 = vpop.f32.mrf.mxu0
    %v8497 = vadd.f32 %v8324, %v8496
    %v8498 = vpop.f32.mrf.mxu0
    %v8499 = vadd.f32 %v8326, %v8498
    %v8500 = vpop.f32.mrf.mxu0
    %v8501 = vadd.f32 %v8328, %v8500
    %8502 = vmatprep.mubr.bf16.mxu0 %v6036
    %8503 = vmatmul.mubr.bf16.gmra.mxu0 %v5599
    %v8504 = vpop.f32.mrf.mxu0
    %v8505 = vadd.f32 %v8332, %v8504
    %v8506 = vpop.f32.mrf.mxu0
    %v8507 = vadd.f32 %v8334, %v8506
    %v8508 = vpop.f32.mrf.mxu0
    %v8509 = vadd.f32 %v8336, %v8508
    %v8510 = vpop.f32.mrf.mxu0
    %v8511 = vadd.f32 %v8338, %v8510
    %8512 = vmatprep.mubr.bf16.mxu0 %v6039
    %8513 = vmatmul.mubr.bf16.gmra.mxu0 %v5603
    %v8514 = vpop.f32.mrf.mxu0
    %v8515 = vadd.f32 %v8342, %v8514
    %v8516 = vpop.f32.mrf.mxu0
    %v8517 = vadd.f32 %v8344, %v8516
    %v8518 = vpop.f32.mrf.mxu0
    %v8519 = vadd.f32 %v8346, %v8518
    %v8520 = vpop.f32.mrf.mxu0
    %v8521 = vadd.f32 %v8348, %v8520
    %8522 = vdwg.mxu0
    %v8579 = vunpack.c.l.b16 %v7784
    %v8580 = vunpack.c.h.b16 %v7784
    %v8581 = vunpack.c.l.b16 %v7785
    %v8582 = vunpack.c.h.b16 %v7785
    %v8583 = vunpack.c.l.b16 %v7786
    %v8584 = vunpack.c.h.b16 %v7786
    %v8585 = vunpack.c.l.b16 %v7787
    %v8586 = vunpack.c.h.b16 %v7787
    %v8587 = vunpack.c.l.b16 %v7788
    %v8588 = vunpack.c.h.b16 %v7788
    %v8589 = vunpack.c.l.b16 %v7789
    %v8590 = vunpack.c.h.b16 %v7789
    %v8591 = vunpack.c.l.b16 %v7790
    %v8592 = vunpack.c.h.b16 %v7790
    %v8593 = vunpack.c.l.b16 %v7791
    %v8594 = vunpack.c.h.b16 %v7791
    %v8595 = vunpack.c.l.b16 %v7792
    %v8596 = vunpack.c.h.b16 %v7792
    %v8597 = vunpack.c.l.b16 %v7793
    %v8598 = vunpack.c.h.b16 %v7793
    %v8599 = vunpack.c.l.b16 %v7794
    %v8600 = vunpack.c.h.b16 %v7794
    %v8601 = vunpack.c.l.b16 %v7795
    %v8602 = vunpack.c.h.b16 %v7795
    %v8603 = vunpack.c.l.b16 %v7796
    %v8604 = vunpack.c.h.b16 %v7796
    %v8605 = vunpack.c.l.b16 %v7797
    %v8606 = vunpack.c.h.b16 %v7797
    %v8607 = vunpack.c.l.b16 %v7798
    %v8608 = vunpack.c.h.b16 %v7798
    %v8609 = vunpack.c.l.b16 %v7799
    %v8610 = vunpack.c.h.b16 %v7799
    %v8611 = vunpack.c.l.b16 %v7800
    %v8612 = vunpack.c.h.b16 %v7800
    %v8613 = vunpack.c.l.b16 %v7801
    %v8614 = vunpack.c.h.b16 %v7801
    %v8615 = vunpack.c.l.b16 %v7802
    %v8616 = vunpack.c.h.b16 %v7802
    %v8617 = vunpack.c.l.b16 %v7803
    %v8618 = vunpack.c.h.b16 %v7803
    %v8619 = vunpack.c.l.b16 %v7804
    %v8620 = vunpack.c.h.b16 %v7804
    %v8621 = vunpack.c.l.b16 %v7805
    %v8622 = vunpack.c.h.b16 %v7805
    %v8623 = vunpack.c.l.b16 %v7806
    %v8624 = vunpack.c.h.b16 %v7806
    %v8625 = vunpack.c.l.b16 %v7807
    %v8626 = vunpack.c.h.b16 %v7807
    %v8627 = vunpack.c.l.b16 %v7808
    %v8628 = vunpack.c.h.b16 %v7808
    %v8629 = vunpack.c.l.b16 %v7809
    %v8630 = vunpack.c.h.b16 %v7809
    %v8631 = vunpack.c.l.b16 %v7810
    %v8632 = vunpack.c.h.b16 %v7810
    %v8633 = vunpack.c.l.b16 %v7811
    %v8634 = vunpack.c.h.b16 %v7811
    %v8635 = vunpack.c.l.b16 %v7812
    %v8636 = vunpack.c.h.b16 %v7812
    %v8637 = vunpack.c.l.b16 %v7813
    %v8638 = vunpack.c.h.b16 %v7813
    %v8639 = vunpack.c.l.b16 %v7814
    %v8640 = vunpack.c.h.b16 %v7814
    %v8641 = vunpack.c.l.b16 %v7815
    %v8642 = vunpack.c.h.b16 %v7815
    %v8643 = vunpack.c.l.b16 %v7816
    %v8644 = vunpack.c.h.b16 %v7816
    %v8645 = vunpack.c.l.b16 %v7817
    %v8646 = vunpack.c.h.b16 %v7817
    %v8647 = vunpack.c.l.b16 %v7818
    %v8648 = vunpack.c.h.b16 %v7818
    %v8649 = vunpack.c.l.b16 %v7819
    %v8650 = vunpack.c.h.b16 %v7819
    %v8651 = vunpack.c.l.b16 %v7820
    %v8652 = vunpack.c.h.b16 %v7820
    %v8653 = vunpack.c.l.b16 %v7821
    %v8654 = vunpack.c.h.b16 %v7821
    %v8655 = vunpack.c.l.b16 %v7822
    %v8656 = vunpack.c.h.b16 %v7822
    %v8657 = vunpack.c.l.b16 %v7823
    %v8658 = vunpack.c.h.b16 %v7823
    %v8659 = vunpack.c.l.b16 %v7824
    %v8660 = vunpack.c.h.b16 %v7824
    %v8661 = vunpack.c.l.b16 %v7825
    %v8662 = vunpack.c.h.b16 %v7825
    %v8663 = vunpack.c.l.b16 %v7826
    %v8664 = vunpack.c.h.b16 %v7826
    %v8665 = vunpack.c.l.b16 %v7827
    %v8666 = vunpack.c.h.b16 %v7827
    %v8667 = vunpack.c.l.b16 %v7828
    %v8668 = vunpack.c.h.b16 %v7828
    %v8669 = vunpack.c.l.b16 %v7829
    %v8670 = vunpack.c.h.b16 %v7829
    %v8671 = vunpack.c.l.b16 %v7830
    %v8672 = vunpack.c.h.b16 %v7830
    %v8673 = vunpack.c.l.b16 %v7831
    %v8674 = vunpack.c.h.b16 %v7831
    %v8675 = vunpack.c.l.b16 %v7832
    %v8676 = vunpack.c.h.b16 %v7832
    %v8677 = vunpack.c.l.b16 %v7833
    %v8678 = vunpack.c.h.b16 %v7833
    %v8679 = vunpack.c.l.b16 %v7834
    %v8680 = vunpack.c.h.b16 %v7834
    %v8681 = vunpack.c.l.b16 %v7835
    %v8682 = vunpack.c.h.b16 %v7835
    %v8683 = vunpack.c.l.b16 %v7836
    %v8684 = vunpack.c.h.b16 %v7836
    %v8685 = vunpack.c.l.b16 %v7837
    %v8686 = vunpack.c.h.b16 %v7837
    %v8687 = vunpack.c.l.b16 %v7838
    %v8688 = vunpack.c.h.b16 %v7838
    %v8689 = vunpack.c.l.b16 %v7839
    %v8690 = vunpack.c.h.b16 %v7839
    %v8691 = vpack.c.b16 %v8581, %v8579
    %v8692 = vpack.c.b16 %v8582, %v8580
    %v8693 = vpack.c.b16 %v8585, %v8583
    %v8694 = vpack.c.b16 %v8586, %v8584
    %v8695 = vpack.c.b16 %v8589, %v8587
    %v8696 = vpack.c.b16 %v8590, %v8588
    %v8697 = vpack.c.b16 %v8593, %v8591
    %v8698 = vpack.c.b16 %v8594, %v8592
    %v8699 = vpack.c.b16 %v8597, %v8595
    %v8700 = vpack.c.b16 %v8598, %v8596
    %v8701 = vpack.c.b16 %v8601, %v8599
    %v8702 = vpack.c.b16 %v8602, %v8600
    %v8703 = vpack.c.b16 %v8605, %v8603
    %v8704 = vpack.c.b16 %v8606, %v8604
    %v8705 = vpack.c.b16 %v8609, %v8607
    %v8706 = vpack.c.b16 %v8610, %v8608
    %v8707 = vpack.c.b16 %v8613, %v8611
    %v8708 = vpack.c.b16 %v8614, %v8612
    %v8709 = vpack.c.b16 %v8617, %v8615
    %v8710 = vpack.c.b16 %v8618, %v8616
    %v8711 = vpack.c.b16 %v8621, %v8619
    %v8712 = vpack.c.b16 %v8622, %v8620
    %v8713 = vpack.c.b16 %v8625, %v8623
    %v8714 = vpack.c.b16 %v8626, %v8624
    %v8715 = vpack.c.b16 %v8629, %v8627
    %v8716 = vpack.c.b16 %v8630, %v8628
    %v8717 = vpack.c.b16 %v8633, %v8631
    %v8718 = vpack.c.b16 %v8634, %v8632
    %v8719 = vpack.c.b16 %v8637, %v8635
    %v8720 = vpack.c.b16 %v8638, %v8636
    %v8721 = vpack.c.b16 %v8641, %v8639
    %v8722 = vpack.c.b16 %v8642, %v8640
    %v8723 = vpack.c.b16 %v8645, %v8643
    %v8724 = vpack.c.b16 %v8646, %v8644
    %v8725 = vpack.c.b16 %v8649, %v8647
    %v8726 = vpack.c.b16 %v8650, %v8648
    %v8727 = vpack.c.b16 %v8653, %v8651
    %v8728 = vpack.c.b16 %v8654, %v8652
    %v8729 = vpack.c.b16 %v8657, %v8655
    %v8730 = vpack.c.b16 %v8658, %v8656
    %v8731 = vpack.c.b16 %v8661, %v8659
    %v8732 = vpack.c.b16 %v8662, %v8660
    %v8733 = vpack.c.b16 %v8665, %v8663
    %v8734 = vpack.c.b16 %v8666, %v8664
    %v8735 = vpack.c.b16 %v8669, %v8667
    %v8736 = vpack.c.b16 %v8670, %v8668
    %v8737 = vpack.c.b16 %v8673, %v8671
    %v8738 = vpack.c.b16 %v8674, %v8672
    %v8739 = vpack.c.b16 %v8677, %v8675
    %v8740 = vpack.c.b16 %v8678, %v8676
    %v8741 = vpack.c.b16 %v8681, %v8679
    %v8742 = vpack.c.b16 %v8682, %v8680
    %v8743 = vpack.c.b16 %v8685, %v8683
    %v8744 = vpack.c.b16 %v8686, %v8684
    %v8745 = vpack.c.b16 %v8689, %v8687
    %v8746 = vpack.c.b16 %v8690, %v8688
    %8803 = vmatprep.subr.bf16.mxu0 %v8706
    %8804 = vmatpush1.bf16.msra.mxu0 %v8705
    %8805 = vmatprep.subr.bf16.mxu0 %v8704
    %8806 = vmatpush1.bf16.msra.mxu0 %v8703
    %8807 = vmatprep.subr.bf16.mxu0 %v8702
    %8808 = vmatpush1.bf16.msra.mxu0 %v8701
    %8809 = vmatprep.subr.bf16.mxu0 %v8700
    %8810 = vmatpush1.bf16.msra.mxu0 %v8699
    %8811 = vmatprep.subr.bf16.mxu0 %v8698
    %8812 = vmatpush1.bf16.msra.mxu0 %v8697
    %8813 = vmatprep.subr.bf16.mxu0 %v8696
    %8814 = vmatpush1.bf16.msra.mxu0 %v8695
    %8815 = vmatprep.subr.bf16.mxu0 %v8694
    %8816 = vmatpush1.bf16.msra.mxu0 %v8693
    %8817 = vmatprep.subr.bf16.mxu0 %v8692
    %8818 = vmatpush1.bf16.msra.mxu0 %v8691
    %8819 = vmatprep.subr.bf16.mxu0 %v8722
    %8820 = vmatpush2.bf16.msra.mxu0 %v8721
    %8821 = vmatprep.subr.bf16.mxu0 %v8720
    %8822 = vmatpush2.bf16.msra.mxu0 %v8719
    %8823 = vmatprep.subr.bf16.mxu0 %v8718
    %8824 = vmatpush2.bf16.msra.mxu0 %v8717
    %8825 = vmatprep.subr.bf16.mxu0 %v8716
    %8826 = vmatpush2.bf16.msra.mxu0 %v8715
    %8827 = vmatprep.subr.bf16.mxu0 %v8714
    %8828 = vmatpush2.bf16.msra.mxu0 %v8713
    %8829 = vmatprep.subr.bf16.mxu0 %v8712
    %8830 = vmatpush2.bf16.msra.mxu0 %v8711
    %8831 = vmatprep.subr.bf16.mxu0 %v8710
    %8832 = vmatpush2.bf16.msra.mxu0 %v8709
    %8833 = vmatprep.subr.bf16.mxu0 %v8708
    %8834 = vmatpush2.bf16.msra.mxu0 %v8707
    %8835 = vmatprep.mubr.bf16.mxu0 0
    %8836 = vmatmul.mubr.bf16.gmra.mxu0 0
    %v8837 = vpop.f32.mrf.mxu0
    %v8838 = vadd.f32 %v8385, %v8837
    %v8839 = vpop.f32.mrf.mxu0
    %v8840 = vadd.f32 %v8387, %v8839
    %v8841 = vpop.f32.mrf.mxu0
    %v8842 = vadd.f32 %v8389, %v8841
    %v8843 = vpop.f32.mrf.mxu0
    %v8844 = vadd.f32 %v8391, %v8843
    %8845 = vmatprep.mubr.bf16.mxu0 %v5550
    %8846 = vmatmul.mubr.bf16.gmra.mxu0 %v5549
    %v8847 = vpop.f32.mrf.mxu0
    %v8848 = vadd.f32 %v8395, %v8847
    %v8849 = vpop.f32.mrf.mxu0
    %v8850 = vadd.f32 %v8397, %v8849
    %v8851 = vpop.f32.mrf.mxu0
    %v8852 = vadd.f32 %v8399, %v8851
    %v8853 = vpop.f32.mrf.mxu0
    %v8854 = vadd.f32 %v8401, %v8853
    %8855 = vmatprep.mubr.bf16.mxu0 %v5554
    %8856 = vmatmul.mubr.bf16.gmra.mxu0 %v5553
    %v8857 = vpop.f32.mrf.mxu0
    %v8858 = vadd.f32 %v8405, %v8857
    %v8859 = vpop.f32.mrf.mxu0
    %v8860 = vadd.f32 %v8407, %v8859
    %v8861 = vpop.f32.mrf.mxu0
    %v8862 = vadd.f32 %v8409, %v8861
    %v8863 = vpop.f32.mrf.mxu0
    %v8864 = vadd.f32 %v8411, %v8863
    %8865 = vmatprep.mubr.bf16.mxu0 %v5558
    %8866 = vmatmul.mubr.bf16.gmra.mxu0 %v5557
    %v8867 = vpop.f32.mrf.mxu0
    %v8868 = vadd.f32 %v8415, %v8867
    %v8869 = vpop.f32.mrf.mxu0
    %v8870 = vadd.f32 %v8417, %v8869
    %v8871 = vpop.f32.mrf.mxu0
    %v8872 = vadd.f32 %v8419, %v8871
    %v8873 = vpop.f32.mrf.mxu0
    %v8874 = vadd.f32 %v8421, %v8873
    %8875 = vmatprep.mubr.bf16.mxu0 %v5562
    %8876 = vmatmul.mubr.bf16.gmra.mxu0 %v5561
    %v8877 = vpop.f32.mrf.mxu0
    %v8878 = vadd.f32 %v8425, %v8877
    %v8879 = vpop.f32.mrf.mxu0
    %v8880 = vadd.f32 %v8427, %v8879
    %v8881 = vpop.f32.mrf.mxu0
    %v8882 = vadd.f32 %v8429, %v8881
    %v8883 = vpop.f32.mrf.mxu0
    %v8884 = vadd.f32 %v8431, %v8883
    %8885 = vmatprep.mubr.bf16.mxu0 %v5566
    %8886 = vmatmul.mubr.bf16.gmra.mxu0 %v5565
    %v8887 = vpop.f32.mrf.mxu0
    %v8888 = vadd.f32 %v8435, %v8887
    %v8889 = vpop.f32.mrf.mxu0
    %v8890 = vadd.f32 %v8437, %v8889
    %v8891 = vpop.f32.mrf.mxu0
    %v8892 = vadd.f32 %v8439, %v8891
    %v8893 = vpop.f32.mrf.mxu0
    %v8894 = vadd.f32 %v8441, %v8893
    %8895 = vmatprep.mubr.bf16.mxu0 %v5570
    %8896 = vmatmul.mubr.bf16.gmra.mxu0 %v5569
    %v8897 = vpop.f32.mrf.mxu0
    %v8898 = vadd.f32 %v8445, %v8897
    %v8899 = vpop.f32.mrf.mxu0
    %v8900 = vadd.f32 %v8447, %v8899
    %v8901 = vpop.f32.mrf.mxu0
    %v8902 = vadd.f32 %v8449, %v8901
    %v8903 = vpop.f32.mrf.mxu0
    %v8904 = vadd.f32 %v8451, %v8903
    %8905 = vmatprep.mubr.bf16.mxu0 %v5574
    %8906 = vmatmul.mubr.bf16.gmra.mxu0 %v5573
    %v8907 = vpop.f32.mrf.mxu0
    %v8908 = vadd.f32 %v8455, %v8907
    %v8909 = vpop.f32.mrf.mxu0
    %v8910 = vadd.f32 %v8457, %v8909
    %v8911 = vpop.f32.mrf.mxu0
    %v8912 = vadd.f32 %v8459, %v8911
    %v8913 = vpop.f32.mrf.mxu0
    %v8914 = vadd.f32 %v8461, %v8913
    %8915 = vmatprep.mubr.bf16.mxu0 %v5578
    %8916 = vmatmul.mubr.bf16.gmra.mxu0 %v5577
    %v8917 = vpop.f32.mrf.mxu0
    %v8918 = vadd.f32 %v8465, %v8917
    %v8919 = vpop.f32.mrf.mxu0
    %v8920 = vadd.f32 %v8467, %v8919
    %v8921 = vpop.f32.mrf.mxu0
    %v8922 = vadd.f32 %v8469, %v8921
    %v8923 = vpop.f32.mrf.mxu0
    %v8924 = vadd.f32 %v8471, %v8923
    %8925 = vmatprep.mubr.bf16.mxu0 %v5582
    %8926 = vmatmul.mubr.bf16.gmra.mxu0 %v5581
    %v8927 = vpop.f32.mrf.mxu0
    %v8928 = vadd.f32 %v8475, %v8927
    %v8929 = vpop.f32.mrf.mxu0
    %v8930 = vadd.f32 %v8477, %v8929
    %v8931 = vpop.f32.mrf.mxu0
    %v8932 = vadd.f32 %v8479, %v8931
    %v8933 = vpop.f32.mrf.mxu0
    %v8934 = vadd.f32 %v8481, %v8933
    %8935 = vmatprep.mubr.bf16.mxu0 %v5586
    %8936 = vmatmul.mubr.bf16.gmra.mxu0 %v5585
    %v8937 = vpop.f32.mrf.mxu0
    %v8938 = vadd.f32 %v8485, %v8937
    %v8939 = vpop.f32.mrf.mxu0
    %v8940 = vadd.f32 %v8487, %v8939
    %v8941 = vpop.f32.mrf.mxu0
    %v8942 = vadd.f32 %v8489, %v8941
    %v8943 = vpop.f32.mrf.mxu0
    %v8944 = vadd.f32 %v8491, %v8943
    %8945 = vmatprep.mubr.bf16.mxu0 %v5590
    %8946 = vmatmul.mubr.bf16.gmra.mxu0 %v5589
    %v8947 = vpop.f32.mrf.mxu0
    %v8948 = vadd.f32 %v8495, %v8947
    %v8949 = vpop.f32.mrf.mxu0
    %v8950 = vadd.f32 %v8497, %v8949
    %v8951 = vpop.f32.mrf.mxu0
    %v8952 = vadd.f32 %v8499, %v8951
    %v8953 = vpop.f32.mrf.mxu0
    %v8954 = vadd.f32 %v8501, %v8953
    %8955 = vmatprep.mubr.bf16.mxu0 %v5594
    %8956 = vmatmul.mubr.bf16.gmra.mxu0 %v5593
    %v8957 = vpop.f32.mrf.mxu0
    %v8958 = vadd.f32 %v8505, %v8957
    %v8959 = vpop.f32.mrf.mxu0
    %v8960 = vadd.f32 %v8507, %v8959
    %v8961 = vpop.f32.mrf.mxu0
    %v8962 = vadd.f32 %v8509, %v8961
    %v8963 = vpop.f32.mrf.mxu0
    %v8964 = vadd.f32 %v8511, %v8963
    %8965 = vmatprep.mubr.bf16.mxu0 %v5598
    %8966 = vmatmul.mubr.bf16.gmra.mxu0 %v5597
    %v8967 = vpop.f32.mrf.mxu0
    %v8968 = vadd.f32 %v8515, %v8967
    %v8969 = vpop.f32.mrf.mxu0
    %v8970 = vadd.f32 %v8517, %v8969
    %v8971 = vpop.f32.mrf.mxu0
    %v8972 = vadd.f32 %v8519, %v8971
    %v8973 = vpop.f32.mrf.mxu0
    %v8974 = vadd.f32 %v8521, %v8973
    %8975 = vdwg.mxu0
    %8976 = vmatprep.subr.bf16.mxu0 %v8738
    %8977 = vmatpush1.bf16.msra.mxu0 %v8737
    %8978 = vmatprep.subr.bf16.mxu0 %v8736
    %8979 = vmatpush1.bf16.msra.mxu0 %v8735
    %8980 = vmatprep.subr.bf16.mxu0 %v8734
    %8981 = vmatpush1.bf16.msra.mxu0 %v8733
    %8982 = vmatprep.subr.bf16.mxu0 %v8732
    %8983 = vmatpush1.bf16.msra.mxu0 %v8731
    %8984 = vmatprep.subr.bf16.mxu0 %v8730
    %8985 = vmatpush1.bf16.msra.mxu0 %v8729
    %8986 = vmatprep.subr.bf16.mxu0 %v8728
    %8987 = vmatpush1.bf16.msra.mxu0 %v8727
    %8988 = vmatprep.subr.bf16.mxu0 %v8726
    %8989 = vmatpush1.bf16.msra.mxu0 %v8725
    %8990 = vmatprep.subr.bf16.mxu0 %v8724
    %8991 = vmatpush1.bf16.msra.mxu0 %v8723
    %8992 = vmatprep.subr.bf16.mxu0 0
    %8993 = vmatpush2.bf16.msra.mxu0 0
    %8994 = vmatprep.subr.bf16.mxu0 0
    %8995 = vmatpush2.bf16.msra.mxu0 0
    %8996 = vmatprep.subr.bf16.mxu0 0
    %8997 = vmatpush2.bf16.msra.mxu0 0
    %8998 = vmatprep.subr.bf16.mxu0 0
    %8999 = vmatpush2.bf16.msra.mxu0 0
    %9000 = vmatprep.subr.bf16.mxu0 %v8746
    %9001 = vmatpush2.bf16.msra.mxu0 %v8745
    %9002 = vmatprep.subr.bf16.mxu0 %v8744
    %9003 = vmatpush2.bf16.msra.mxu0 %v8743
    %9004 = vmatprep.subr.bf16.mxu0 %v8742
    %9005 = vmatpush2.bf16.msra.mxu0 %v8741
    %9006 = vmatprep.subr.bf16.mxu0 %v8740
    %9007 = vmatpush2.bf16.msra.mxu0 %v8739
    %9008 = vmatprep.mubr.bf16.mxu0 %v6668
    %9009 = vmatmul.mubr.bf16.gmra.mxu0 0
    %v9010 = vpop.f32.mrf.mxu0
    %v9011 = vadd.f32 %v8838, %v9010
    %v9012 = vpop.f32.mrf.mxu0
    %v9013 = vadd.f32 %v8840, %v9012
    %v9014 = vpop.f32.mrf.mxu0
    %v9015 = vadd.f32 %v8842, %v9014
    %v9016 = vpop.f32.mrf.mxu0
    %v9017 = vadd.f32 %v8844, %v9016
    %9018 = vmatprep.mubr.bf16.mxu0 %v6000
    %9019 = vmatmul.mubr.bf16.gmra.mxu0 %v5551
    %v9020 = vpop.f32.mrf.mxu0
    %v9021 = vadd.f32 %v8848, %v9020
    %v9022 = vpop.f32.mrf.mxu0
    %v9023 = vadd.f32 %v8850, %v9022
    %v9024 = vpop.f32.mrf.mxu0
    %v9025 = vadd.f32 %v8852, %v9024
    %v9026 = vpop.f32.mrf.mxu0
    %v9027 = vadd.f32 %v8854, %v9026
    %9028 = vmatprep.mubr.bf16.mxu0 %v6003
    %9029 = vmatmul.mubr.bf16.gmra.mxu0 %v5555
    %v9030 = vpop.f32.mrf.mxu0
    %v9031 = vadd.f32 %v8858, %v9030
    %v9032 = vpop.f32.mrf.mxu0
    %v9033 = vadd.f32 %v8860, %v9032
    %v9034 = vpop.f32.mrf.mxu0
    %v9035 = vadd.f32 %v8862, %v9034
    %v9036 = vpop.f32.mrf.mxu0
    %v9037 = vadd.f32 %v8864, %v9036
    %9038 = vmatprep.mubr.bf16.mxu0 %v6006
    %9039 = vmatmul.mubr.bf16.gmra.mxu0 %v5559
    %v9040 = vpop.f32.mrf.mxu0
    %v9041 = vadd.f32 %v8868, %v9040
    %v9042 = vpop.f32.mrf.mxu0
    %v9043 = vadd.f32 %v8870, %v9042
    %v9044 = vpop.f32.mrf.mxu0
    %v9045 = vadd.f32 %v8872, %v9044
    %v9046 = vpop.f32.mrf.mxu0
    %v9047 = vadd.f32 %v8874, %v9046
    %9048 = vmatprep.mubr.bf16.mxu0 %v6009
    %9049 = vmatmul.mubr.bf16.gmra.mxu0 %v5563
    %v9050 = vpop.f32.mrf.mxu0
    %v9051 = vadd.f32 %v8878, %v9050
    %v9052 = vpop.f32.mrf.mxu0
    %v9053 = vadd.f32 %v8880, %v9052
    %v9054 = vpop.f32.mrf.mxu0
    %v9055 = vadd.f32 %v8882, %v9054
    %v9056 = vpop.f32.mrf.mxu0
    %v9057 = vadd.f32 %v8884, %v9056
    %9058 = vmatprep.mubr.bf16.mxu0 %v6012
    %9059 = vmatmul.mubr.bf16.gmra.mxu0 %v5567
    %v9060 = vpop.f32.mrf.mxu0
    %v9061 = vadd.f32 %v8888, %v9060
    %v9062 = vpop.f32.mrf.mxu0
    %v9063 = vadd.f32 %v8890, %v9062
    %v9064 = vpop.f32.mrf.mxu0
    %v9065 = vadd.f32 %v8892, %v9064
    %v9066 = vpop.f32.mrf.mxu0
    %v9067 = vadd.f32 %v8894, %v9066
    %9068 = vmatprep.mubr.bf16.mxu0 %v6015
    %9069 = vmatmul.mubr.bf16.gmra.mxu0 %v5571
    %v9070 = vpop.f32.mrf.mxu0
    %v9071 = vadd.f32 %v8898, %v9070
    %v9072 = vpop.f32.mrf.mxu0
    %v9073 = vadd.f32 %v8900, %v9072
    %v9074 = vpop.f32.mrf.mxu0
    %v9075 = vadd.f32 %v8902, %v9074
    %v9076 = vpop.f32.mrf.mxu0
    %v9077 = vadd.f32 %v8904, %v9076
    %9078 = vmatprep.mubr.bf16.mxu0 %v6018
    %9079 = vmatmul.mubr.bf16.gmra.mxu0 %v5575
    %v9080 = vpop.f32.mrf.mxu0
    %v9081 = vadd.f32 %v8908, %v9080
    %v9082 = vpop.f32.mrf.mxu0
    %v9083 = vadd.f32 %v8910, %v9082
    %v9084 = vpop.f32.mrf.mxu0
    %v9085 = vadd.f32 %v8912, %v9084
    %v9086 = vpop.f32.mrf.mxu0
    %v9087 = vadd.f32 %v8914, %v9086
    %9088 = vmatprep.mubr.bf16.mxu0 %v6021
    %9089 = vmatmul.mubr.bf16.gmra.mxu0 %v5579
    %v9090 = vpop.f32.mrf.mxu0
    %v9091 = vadd.f32 %v8918, %v9090
    %v9092 = vpop.f32.mrf.mxu0
    %v9093 = vadd.f32 %v8920, %v9092
    %v9094 = vpop.f32.mrf.mxu0
    %v9095 = vadd.f32 %v8922, %v9094
    %v9096 = vpop.f32.mrf.mxu0
    %v9097 = vadd.f32 %v8924, %v9096
    %9098 = vmatprep.mubr.bf16.mxu0 %v6024
    %9099 = vmatmul.mubr.bf16.gmra.mxu0 %v5583
    %v9100 = vpop.f32.mrf.mxu0
    %v9101 = vadd.f32 %v8928, %v9100
    %v9102 = vpop.f32.mrf.mxu0
    %v9103 = vadd.f32 %v8930, %v9102
    %v9104 = vpop.f32.mrf.mxu0
    %v9105 = vadd.f32 %v8932, %v9104
    %v9106 = vpop.f32.mrf.mxu0
    %v9107 = vadd.f32 %v8934, %v9106
    %9108 = vmatprep.mubr.bf16.mxu0 %v6027
    %9109 = vmatmul.mubr.bf16.gmra.mxu0 %v5587
    %v9110 = vpop.f32.mrf.mxu0
    %v9111 = vadd.f32 %v8938, %v9110
    %v9112 = vpop.f32.mrf.mxu0
    %v9113 = vadd.f32 %v8940, %v9112
    %v9114 = vpop.f32.mrf.mxu0
    %v9115 = vadd.f32 %v8942, %v9114
    %v9116 = vpop.f32.mrf.mxu0
    %v9117 = vadd.f32 %v8944, %v9116
    %9118 = vmatprep.mubr.bf16.mxu0 %v6030
    %9119 = vmatmul.mubr.bf16.gmra.mxu0 %v5591
    %v9120 = vpop.f32.mrf.mxu0
    %v9121 = vadd.f32 %v8948, %v9120
    %v9122 = vpop.f32.mrf.mxu0
    %v9123 = vadd.f32 %v8950, %v9122
    %v9124 = vpop.f32.mrf.mxu0
    %v9125 = vadd.f32 %v8952, %v9124
    %v9126 = vpop.f32.mrf.mxu0
    %v9127 = vadd.f32 %v8954, %v9126
    %9128 = vmatprep.mubr.bf16.mxu0 %v6033
    %9129 = vmatmul.mubr.bf16.gmra.mxu0 %v5595
    %v9130 = vpop.f32.mrf.mxu0
    %v9131 = vadd.f32 %v8958, %v9130
    %v9132 = vpop.f32.mrf.mxu0
    %v9133 = vadd.f32 %v8960, %v9132
    %v9134 = vpop.f32.mrf.mxu0
    %v9135 = vadd.f32 %v8962, %v9134
    %v9136 = vpop.f32.mrf.mxu0
    %v9137 = vadd.f32 %v8964, %v9136
    %9138 = vmatprep.mubr.bf16.mxu0 %v6036
    %9139 = vmatmul.mubr.bf16.gmra.mxu0 %v5599
    %v9140 = vpop.f32.mrf.mxu0
    %v9141 = vadd.f32 %v8968, %v9140
    %v9142 = vpop.f32.mrf.mxu0
    %v9143 = vadd.f32 %v8970, %v9142
    %v9144 = vpop.f32.mrf.mxu0
    %v9145 = vadd.f32 %v8972, %v9144
    %v9146 = vpop.f32.mrf.mxu0
    %v9147 = vadd.f32 %v8974, %v9146
    %9148 = vdwg.mxu0
    %s9149 = scalar_lea.vmem [#allocation6], 2240
    %v9150 = vld [vmem:[%s9149] sm:$0xff]
    %v9151 = vld [vmem:[%s9149 + $0x8] sm:$0xff]
    %v9152 = vld [vmem:[%s9149 + $0x10] sm:$0xff]
    %v9153 = vld [vmem:[%s9149 + $0x18] sm:$0xff]
    %v9154 = vld [vmem:[%s9149 + $0x20] sm:$0xff]
    %v9155 = vld [vmem:[%s9149 + $0x28] sm:$0xff]
    %v9156 = vld [vmem:[%s9149 + $0x30] sm:$0xff]
    %v9157 = vld [vmem:[%s9149 + $0x38] sm:$0xff]
    %v9158 = vld [vmem:[%s9149 + $0x40] sm:$0xff]
    %v9159 = vld [vmem:[%s9149 + $0x48] sm:$0xff]
    %v9160 = vld [vmem:[%s9149 + $0x50] sm:$0xff]
    %v9161 = vld [vmem:[%s9149 + $0x58] sm:$0xff]
    %v9162 = vld [vmem:[%s9149 + $0x60] sm:$0xff]
    %v9163 = vld [vmem:[%s9149 + $0x68] sm:$0xff]
    %v9164 = vld [vmem:[%s9149 + $0x70] sm:$0xff]
    %v9165 = vld [vmem:[%s9149 + $0x78] sm:$0xff]
    %v9166 = vld [vmem:[%s9149 + $0x80] sm:$0xff]
    %v9167 = vld [vmem:[%s9149 + $0x88] sm:$0xff]
    %v9168 = vld [vmem:[%s9149 + $0x90] sm:$0xff]
    %v9169 = vld [vmem:[%s9149 + $0x98] sm:$0xff]
    %v9170 = vld [vmem:[%s9149 + $0xa0] sm:$0xff]
    %v9171 = vld [vmem:[%s9149 + $0xa8] sm:$0xff]
    %v9172 = vld [vmem:[%s9149 + $0xb0] sm:$0xff]
    %v9173 = vld [vmem:[%s9149 + $0xb8] sm:$0xff]
    %v9174 = vld [vmem:[%s9149 + $0xc0] sm:$0xff]
    %v9175 = vld [vmem:[%s9149 + $0xc8] sm:$0xff]
    %v9176 = vld [vmem:[%s9149 + $0xd0] sm:$0xff]
    %v9177 = vld [vmem:[%s9149 + $0xd8] sm:$0xff]
    %v9178 = vld [vmem:[%s9149 + $0xe0] sm:$0xff]
    %v9179 = vld [vmem:[%s9149 + $0xe8] sm:$0xff]
    %v9180 = vld [vmem:[%s9149 + $0xf0] sm:$0xff]
    %v9181 = vld [vmem:[%s9149 + $0xf8] sm:$0xff]
    %v9182 = vld [vmem:[%s9149 + $0x100] sm:$0xff]
    %v9183 = vld [vmem:[%s9149 + $0x108] sm:$0xff]
    %v9184 = vld [vmem:[%s9149 + $0x110] sm:$0xff]
    %v9185 = vld [vmem:[%s9149 + $0x118] sm:$0xff]
    %v9186 = vld [vmem:[%s9149 + $0x120] sm:$0xff]
    %v9187 = vld [vmem:[%s9149 + $0x128] sm:$0xff]
    %v9188 = vld [vmem:[%s9149 + $0x130] sm:$0xff]
    %v9189 = vld [vmem:[%s9149 + $0x138] sm:$0xff]
    %v9190 = vld [vmem:[%s9149 + $0x140] sm:$0xff]
    %v9191 = vld [vmem:[%s9149 + $0x148] sm:$0xff]
    %v9192 = vld [vmem:[%s9149 + $0x150] sm:$0xff]
    %v9193 = vld [vmem:[%s9149 + $0x158] sm:$0xff]
    %v9194 = vld [vmem:[%s9149 + $0x160] sm:$0xff]
    %v9195 = vld [vmem:[%s9149 + $0x168] sm:$0xff]
    %v9196 = vld [vmem:[%s9149 + $0x170] sm:$0xff]
    %v9197 = vld [vmem:[%s9149 + $0x178] sm:$0xff]
    %v9198 = vld [vmem:[%s9149 + $0x180] sm:$0xff]
    %v9199 = vld [vmem:[%s9149 + $0x188] sm:$0xff]
    %v9200 = vld [vmem:[%s9149 + $0x190] sm:$0xff]
    %v9201 = vld [vmem:[%s9149 + $0x198] sm:$0xff]
    %v9202 = vld [vmem:[%s9149 + $0x1a0] sm:$0xff]
    %v9203 = vld [vmem:[%s9149 + $0x1a8] sm:$0xff]
    %v9204 = vld [vmem:[%s9149 + $0x1b0] sm:$0xff]
    %v9205 = vld [vmem:[%s9149 + $0x1b8] sm:$0xff]
    %v9262 = vunpack.c.l.b16 %v9150
    %v9263 = vunpack.c.h.b16 %v9150
    %v9264 = vunpack.c.l.b16 %v9151
    %v9265 = vunpack.c.h.b16 %v9151
    %v9266 = vunpack.c.l.b16 %v9152
    %v9267 = vunpack.c.h.b16 %v9152
    %v9268 = vunpack.c.l.b16 %v9153
    %v9269 = vunpack.c.h.b16 %v9153
    %v9270 = vunpack.c.l.b16 %v9154
    %v9271 = vunpack.c.h.b16 %v9154
    %v9272 = vunpack.c.l.b16 %v9155
    %v9273 = vunpack.c.h.b16 %v9155
    %v9274 = vunpack.c.l.b16 %v9156
    %v9275 = vunpack.c.h.b16 %v9156
    %v9276 = vunpack.c.l.b16 %v9157
    %v9277 = vunpack.c.h.b16 %v9157
    %v9278 = vunpack.c.l.b16 %v9158
    %v9279 = vunpack.c.h.b16 %v9158
    %v9280 = vunpack.c.l.b16 %v9159
    %v9281 = vunpack.c.h.b16 %v9159
    %v9282 = vunpack.c.l.b16 %v9160
    %v9283 = vunpack.c.h.b16 %v9160
    %v9284 = vunpack.c.l.b16 %v9161
    %v9285 = vunpack.c.h.b16 %v9161
    %v9286 = vunpack.c.l.b16 %v9162
    %v9287 = vunpack.c.h.b16 %v9162
    %v9288 = vunpack.c.l.b16 %v9163
    %v9289 = vunpack.c.h.b16 %v9163
    %v9290 = vunpack.c.l.b16 %v9164
    %v9291 = vunpack.c.h.b16 %v9164
    %v9292 = vunpack.c.l.b16 %v9165
    %v9293 = vunpack.c.h.b16 %v9165
    %v9294 = vunpack.c.l.b16 %v9166
    %v9295 = vunpack.c.h.b16 %v9166
    %v9296 = vunpack.c.l.b16 %v9167
    %v9297 = vunpack.c.h.b16 %v9167
    %v9298 = vunpack.c.l.b16 %v9168
    %v9299 = vunpack.c.h.b16 %v9168
    %v9300 = vunpack.c.l.b16 %v9169
    %v9301 = vunpack.c.h.b16 %v9169
    %v9302 = vunpack.c.l.b16 %v9170
    %v9303 = vunpack.c.h.b16 %v9170
    %v9304 = vunpack.c.l.b16 %v9171
    %v9305 = vunpack.c.h.b16 %v9171
    %v9306 = vunpack.c.l.b16 %v9172
    %v9307 = vunpack.c.h.b16 %v9172
    %v9308 = vunpack.c.l.b16 %v9173
    %v9309 = vunpack.c.h.b16 %v9173
    %v9310 = vunpack.c.l.b16 %v9174
    %v9311 = vunpack.c.h.b16 %v9174
    %v9312 = vunpack.c.l.b16 %v9175
    %v9313 = vunpack.c.h.b16 %v9175
    %v9314 = vunpack.c.l.b16 %v9176
    %v9315 = vunpack.c.h.b16 %v9176
    %v9316 = vunpack.c.l.b16 %v9177
    %v9317 = vunpack.c.h.b16 %v9177
    %v9318 = vunpack.c.l.b16 %v9178
    %v9319 = vunpack.c.h.b16 %v9178
    %v9320 = vunpack.c.l.b16 %v9179
    %v9321 = vunpack.c.h.b16 %v9179
    %v9322 = vunpack.c.l.b16 %v9180
    %v9323 = vunpack.c.h.b16 %v9180
    %v9324 = vunpack.c.l.b16 %v9181
    %v9325 = vunpack.c.h.b16 %v9181
    %v9326 = vunpack.c.l.b16 %v9182
    %v9327 = vunpack.c.h.b16 %v9182
    %v9328 = vunpack.c.l.b16 %v9183
    %v9329 = vunpack.c.h.b16 %v9183
    %v9330 = vunpack.c.l.b16 %v9184
    %v9331 = vunpack.c.h.b16 %v9184
    %v9332 = vunpack.c.l.b16 %v9185
    %v9333 = vunpack.c.h.b16 %v9185
    %v9334 = vunpack.c.l.b16 %v9186
    %v9335 = vunpack.c.h.b16 %v9186
    %v9336 = vunpack.c.l.b16 %v9187
    %v9337 = vunpack.c.h.b16 %v9187
    %v9338 = vunpack.c.l.b16 %v9188
    %v9339 = vunpack.c.h.b16 %v9188
    %v9340 = vunpack.c.l.b16 %v9189
    %v9341 = vunpack.c.h.b16 %v9189
    %v9342 = vunpack.c.l.b16 %v9190
    %v9343 = vunpack.c.h.b16 %v9190
    %v9344 = vunpack.c.l.b16 %v9191
    %v9345 = vunpack.c.h.b16 %v9191
    %v9346 = vunpack.c.l.b16 %v9192
    %v9347 = vunpack.c.h.b16 %v9192
    %v9348 = vunpack.c.l.b16 %v9193
    %v9349 = vunpack.c.h.b16 %v9193
    %v9350 = vunpack.c.l.b16 %v9194
    %v9351 = vunpack.c.h.b16 %v9194
    %v9352 = vunpack.c.l.b16 %v9195
    %v9353 = vunpack.c.h.b16 %v9195
    %v9354 = vunpack.c.l.b16 %v9196
    %v9355 = vunpack.c.h.b16 %v9196
    %v9356 = vunpack.c.l.b16 %v9197
    %v9357 = vunpack.c.h.b16 %v9197
    %v9358 = vunpack.c.l.b16 %v9198
    %v9359 = vunpack.c.h.b16 %v9198
    %v9360 = vunpack.c.l.b16 %v9199
    %v9361 = vunpack.c.h.b16 %v9199
    %v9362 = vunpack.c.l.b16 %v9200
    %v9363 = vunpack.c.h.b16 %v9200
    %v9364 = vunpack.c.l.b16 %v9201
    %v9365 = vunpack.c.h.b16 %v9201
    %v9366 = vunpack.c.l.b16 %v9202
    %v9367 = vunpack.c.h.b16 %v9202
    %v9368 = vunpack.c.l.b16 %v9203
    %v9369 = vunpack.c.h.b16 %v9203
    %v9370 = vunpack.c.l.b16 %v9204
    %v9371 = vunpack.c.h.b16 %v9204
    %v9372 = vunpack.c.l.b16 %v9205
    %v9373 = vunpack.c.h.b16 %v9205
    %v9374 = vpack.c.b16 %v9264, %v9262
    %v9375 = vpack.c.b16 %v9265, %v9263
    %v9376 = vpack.c.b16 %v9268, %v9266
    %v9377 = vpack.c.b16 %v9269, %v9267
    %v9378 = vpack.c.b16 %v9272, %v9270
    %v9379 = vpack.c.b16 %v9273, %v9271
    %v9380 = vpack.c.b16 %v9276, %v9274
    %v9381 = vpack.c.b16 %v9277, %v9275
    %v9382 = vpack.c.b16 %v9280, %v9278
    %v9383 = vpack.c.b16 %v9281, %v9279
    %v9384 = vpack.c.b16 %v9284, %v9282
    %v9385 = vpack.c.b16 %v9285, %v9283
    %v9386 = vpack.c.b16 %v9288, %v9286
    %v9387 = vpack.c.b16 %v9289, %v9287
    %v9388 = vpack.c.b16 %v9292, %v9290
    %v9389 = vpack.c.b16 %v9293, %v9291
    %v9390 = vpack.c.b16 %v9296, %v9294
    %v9391 = vpack.c.b16 %v9297, %v9295
    %v9392 = vpack.c.b16 %v9300, %v9298
    %v9393 = vpack.c.b16 %v9301, %v9299
    %v9394 = vpack.c.b16 %v9304, %v9302
    %v9395 = vpack.c.b16 %v9305, %v9303
    %v9396 = vpack.c.b16 %v9308, %v9306
    %v9397 = vpack.c.b16 %v9309, %v9307
    %v9398 = vpack.c.b16 %v9312, %v9310
    %v9399 = vpack.c.b16 %v9313, %v9311
    %v9400 = vpack.c.b16 %v9316, %v9314
    %v9401 = vpack.c.b16 %v9317, %v9315
    %v9402 = vpack.c.b16 %v9320, %v9318
    %v9403 = vpack.c.b16 %v9321, %v9319
    %v9404 = vpack.c.b16 %v9324, %v9322
    %v9405 = vpack.c.b16 %v9325, %v9323
    %v9406 = vpack.c.b16 %v9328, %v9326
    %v9407 = vpack.c.b16 %v9329, %v9327
    %v9408 = vpack.c.b16 %v9332, %v9330
    %v9409 = vpack.c.b16 %v9333, %v9331
    %v9410 = vpack.c.b16 %v9336, %v9334
    %v9411 = vpack.c.b16 %v9337, %v9335
    %v9412 = vpack.c.b16 %v9340, %v9338
    %v9413 = vpack.c.b16 %v9341, %v9339
    %v9414 = vpack.c.b16 %v9344, %v9342
    %v9415 = vpack.c.b16 %v9345, %v9343
    %v9416 = vpack.c.b16 %v9348, %v9346
    %v9417 = vpack.c.b16 %v9349, %v9347
    %v9418 = vpack.c.b16 %v9352, %v9350
    %v9419 = vpack.c.b16 %v9353, %v9351
    %v9420 = vpack.c.b16 %v9356, %v9354
    %v9421 = vpack.c.b16 %v9357, %v9355
    %v9422 = vpack.c.b16 %v9360, %v9358
    %v9423 = vpack.c.b16 %v9361, %v9359
    %v9424 = vpack.c.b16 %v9364, %v9362
    %v9425 = vpack.c.b16 %v9365, %v9363
    %v9426 = vpack.c.b16 %v9368, %v9366
    %v9427 = vpack.c.b16 %v9369, %v9367
    %v9428 = vpack.c.b16 %v9372, %v9370
    %v9429 = vpack.c.b16 %v9373, %v9371
    %9486 = vmatprep.subr.bf16.mxu0 %v9389
    %9487 = vmatpush1.bf16.msra.mxu0 %v9388
    %9488 = vmatprep.subr.bf16.mxu0 %v9387
    %9489 = vmatpush1.bf16.msra.mxu0 %v9386
    %9490 = vmatprep.subr.bf16.mxu0 %v9385
    %9491 = vmatpush1.bf16.msra.mxu0 %v9384
    %9492 = vmatprep.subr.bf16.mxu0 %v9383
    %9493 = vmatpush1.bf16.msra.mxu0 %v9382
    %9494 = vmatprep.subr.bf16.mxu0 %v9381
    %9495 = vmatpush1.bf16.msra.mxu0 %v9380
    %9496 = vmatprep.subr.bf16.mxu0 %v9379
    %9497 = vmatpush1.bf16.msra.mxu0 %v9378
    %9498 = vmatprep.subr.bf16.mxu0 %v9377
    %9499 = vmatpush1.bf16.msra.mxu0 %v9376
    %9500 = vmatprep.subr.bf16.mxu0 %v9375
    %9501 = vmatpush1.bf16.msra.mxu0 %v9374
    %9502 = vmatprep.subr.bf16.mxu0 %v9405
    %9503 = vmatpush2.bf16.msra.mxu0 %v9404
    %9504 = vmatprep.subr.bf16.mxu0 %v9403
    %9505 = vmatpush2.bf16.msra.mxu0 %v9402
    %9506 = vmatprep.subr.bf16.mxu0 %v9401
    %9507 = vmatpush2.bf16.msra.mxu0 %v9400
    %9508 = vmatprep.subr.bf16.mxu0 %v9399
    %9509 = vmatpush2.bf16.msra.mxu0 %v9398
    %9510 = vmatprep.subr.bf16.mxu0 %v9397
    %9511 = vmatpush2.bf16.msra.mxu0 %v9396
    %9512 = vmatprep.subr.bf16.mxu0 %v9395
    %9513 = vmatpush2.bf16.msra.mxu0 %v9394
    %9514 = vmatprep.subr.bf16.mxu0 %v9393
    %9515 = vmatpush2.bf16.msra.mxu0 %v9392
    %9516 = vmatprep.subr.bf16.mxu0 %v9391
    %9517 = vmatpush2.bf16.msra.mxu0 %v9390
    %9518 = vmatprep.mubr.bf16.mxu0 %v5554
    %9519 = vmatmul.mubr.bf16.gmra.mxu0 %v5553
    %v9520 = vpop.f32.mrf.mxu0
    %v9521 = vadd.f32 0.0, %v9520
    %v9522 = vpop.f32.mrf.mxu0
    %v9523 = vadd.f32 0.0, %v9522
    %v9524 = vpop.f32.mrf.mxu0
    %v9525 = vadd.f32 0.0, %v9524
    %v9526 = vpop.f32.mrf.mxu0
    %v9527 = vadd.f32 0.0, %v9526
    %9528 = vmatprep.mubr.bf16.mxu0 %v5558
    %9529 = vmatmul.mubr.bf16.gmra.mxu0 %v5557
    %v9530 = vpop.f32.mrf.mxu0
    %v9531 = vadd.f32 0.0, %v9530
    %v9532 = vpop.f32.mrf.mxu0
    %v9533 = vadd.f32 0.0, %v9532
    %v9534 = vpop.f32.mrf.mxu0
    %v9535 = vadd.f32 0.0, %v9534
    %v9536 = vpop.f32.mrf.mxu0
    %v9537 = vadd.f32 0.0, %v9536
    %9538 = vmatprep.mubr.bf16.mxu0 %v5562
    %9539 = vmatmul.mubr.bf16.gmra.mxu0 %v5561
    %v9540 = vpop.f32.mrf.mxu0
    %v9541 = vadd.f32 0.0, %v9540
    %v9542 = vpop.f32.mrf.mxu0
    %v9543 = vadd.f32 0.0, %v9542
    %v9544 = vpop.f32.mrf.mxu0
    %v9545 = vadd.f32 0.0, %v9544
    %v9546 = vpop.f32.mrf.mxu0
    %v9547 = vadd.f32 0.0, %v9546
    %9548 = vmatprep.mubr.bf16.mxu0 %v5566
    %9549 = vmatmul.mubr.bf16.gmra.mxu0 %v5565
    %v9550 = vpop.f32.mrf.mxu0
    %v9551 = vadd.f32 0.0, %v9550
    %v9552 = vpop.f32.mrf.mxu0
    %v9553 = vadd.f32 0.0, %v9552
    %v9554 = vpop.f32.mrf.mxu0
    %v9555 = vadd.f32 0.0, %v9554
    %v9556 = vpop.f32.mrf.mxu0
    %v9557 = vadd.f32 0.0, %v9556
    %9558 = vmatprep.mubr.bf16.mxu0 %v5570
    %9559 = vmatmul.mubr.bf16.gmra.mxu0 %v5569
    %v9560 = vpop.f32.mrf.mxu0
    %v9561 = vadd.f32 0.0, %v9560
    %v9562 = vpop.f32.mrf.mxu0
    %v9563 = vadd.f32 0.0, %v9562
    %v9564 = vpop.f32.mrf.mxu0
    %v9565 = vadd.f32 0.0, %v9564
    %v9566 = vpop.f32.mrf.mxu0
    %v9567 = vadd.f32 0.0, %v9566
    %9568 = vmatprep.mubr.bf16.mxu0 %v5574
    %9569 = vmatmul.mubr.bf16.gmra.mxu0 %v5573
    %v9570 = vpop.f32.mrf.mxu0
    %v9571 = vadd.f32 0.0, %v9570
    %v9572 = vpop.f32.mrf.mxu0
    %v9573 = vadd.f32 0.0, %v9572
    %v9574 = vpop.f32.mrf.mxu0
    %v9575 = vadd.f32 0.0, %v9574
    %v9576 = vpop.f32.mrf.mxu0
    %v9577 = vadd.f32 0.0, %v9576
    %9578 = vmatprep.mubr.bf16.mxu0 %v5578
    %9579 = vmatmul.mubr.bf16.gmra.mxu0 %v5577
    %v9580 = vpop.f32.mrf.mxu0
    %v9581 = vadd.f32 0.0, %v9580
    %v9582 = vpop.f32.mrf.mxu0
    %v9583 = vadd.f32 0.0, %v9582
    %v9584 = vpop.f32.mrf.mxu0
    %v9585 = vadd.f32 0.0, %v9584
    %v9586 = vpop.f32.mrf.mxu0
    %v9587 = vadd.f32 0.0, %v9586
    %9588 = vmatprep.mubr.bf16.mxu0 %v5582
    %9589 = vmatmul.mubr.bf16.gmra.mxu0 %v5581
    %v9590 = vpop.f32.mrf.mxu0
    %v9591 = vadd.f32 0.0, %v9590
    %v9592 = vpop.f32.mrf.mxu0
    %v9593 = vadd.f32 0.0, %v9592
    %v9594 = vpop.f32.mrf.mxu0
    %v9595 = vadd.f32 0.0, %v9594
    %v9596 = vpop.f32.mrf.mxu0
    %v9597 = vadd.f32 0.0, %v9596
    %9598 = vmatprep.mubr.bf16.mxu0 %v5586
    %9599 = vmatmul.mubr.bf16.gmra.mxu0 %v5585
    %v9600 = vpop.f32.mrf.mxu0
    %v9601 = vadd.f32 0.0, %v9600
    %v9602 = vpop.f32.mrf.mxu0
    %v9603 = vadd.f32 0.0, %v9602
    %v9604 = vpop.f32.mrf.mxu0
    %v9605 = vadd.f32 0.0, %v9604
    %v9606 = vpop.f32.mrf.mxu0
    %v9607 = vadd.f32 0.0, %v9606
    %9608 = vmatprep.mubr.bf16.mxu0 %v5590
    %9609 = vmatmul.mubr.bf16.gmra.mxu0 %v5589
    %v9610 = vpop.f32.mrf.mxu0
    %v9611 = vadd.f32 0.0, %v9610
    %v9612 = vpop.f32.mrf.mxu0
    %v9613 = vadd.f32 0.0, %v9612
    %v9614 = vpop.f32.mrf.mxu0
    %v9615 = vadd.f32 0.0, %v9614
    %v9616 = vpop.f32.mrf.mxu0
    %v9617 = vadd.f32 0.0, %v9616
    %9618 = vmatprep.mubr.bf16.mxu0 %v5594
    %9619 = vmatmul.mubr.bf16.gmra.mxu0 %v5593
    %v9620 = vpop.f32.mrf.mxu0
    %v9621 = vadd.f32 0.0, %v9620
    %v9622 = vpop.f32.mrf.mxu0
    %v9623 = vadd.f32 0.0, %v9622
    %v9624 = vpop.f32.mrf.mxu0
    %v9625 = vadd.f32 0.0, %v9624
    %v9626 = vpop.f32.mrf.mxu0
    %v9627 = vadd.f32 0.0, %v9626
    %9628 = vmatprep.mubr.bf16.mxu0 %v5598
    %9629 = vmatmul.mubr.bf16.gmra.mxu0 %v5597
    %v9630 = vpop.f32.mrf.mxu0
    %v9631 = vadd.f32 0.0, %v9630
    %v9632 = vpop.f32.mrf.mxu0
    %v9633 = vadd.f32 0.0, %v9632
    %v9634 = vpop.f32.mrf.mxu0
    %v9635 = vadd.f32 0.0, %v9634
    %v9636 = vpop.f32.mrf.mxu0
    %v9637 = vadd.f32 0.0, %v9636
    %9638 = vmatprep.mubr.bf16.mxu0 %v5602
    %9639 = vmatmul.mubr.bf16.gmra.mxu0 %v5601
    %v9640 = vpop.f32.mrf.mxu0
    %v9641 = vadd.f32 0.0, %v9640
    %v9642 = vpop.f32.mrf.mxu0
    %v9643 = vadd.f32 0.0, %v9642
    %v9644 = vpop.f32.mrf.mxu0
    %v9645 = vadd.f32 0.0, %v9644
    %v9646 = vpop.f32.mrf.mxu0
    %v9647 = vadd.f32 0.0, %v9646
    %9648 = vmatprep.mubr.bf16.mxu0 0
    %9649 = vmatmul.mubr.bf16.gmra.mxu0 0
    %v9650 = vpop.f32.mrf.mxu0
    %v9651 = vadd.f32 0.0, %v9650
    %v9652 = vpop.f32.mrf.mxu0
    %v9653 = vadd.f32 0.0, %v9652
    %v9654 = vpop.f32.mrf.mxu0
    %v9655 = vadd.f32 0.0, %v9654
    %v9656 = vpop.f32.mrf.mxu0
    %v9657 = vadd.f32 0.0, %v9656
    %9658 = vdwg.mxu0
    %9659 = vmatprep.subr.bf16.mxu0 %v9421
    %9660 = vmatpush1.bf16.msra.mxu0 %v9420
    %9661 = vmatprep.subr.bf16.mxu0 %v9419
    %9662 = vmatpush1.bf16.msra.mxu0 %v9418
    %9663 = vmatprep.subr.bf16.mxu0 %v9417
    %9664 = vmatpush1.bf16.msra.mxu0 %v9416
    %9665 = vmatprep.subr.bf16.mxu0 %v9415
    %9666 = vmatpush1.bf16.msra.mxu0 %v9414
    %9667 = vmatprep.subr.bf16.mxu0 %v9413
    %9668 = vmatpush1.bf16.msra.mxu0 %v9412
    %9669 = vmatprep.subr.bf16.mxu0 %v9411
    %9670 = vmatpush1.bf16.msra.mxu0 %v9410
    %9671 = vmatprep.subr.bf16.mxu0 %v9409
    %9672 = vmatpush1.bf16.msra.mxu0 %v9408
    %9673 = vmatprep.subr.bf16.mxu0 %v9407
    %9674 = vmatpush1.bf16.msra.mxu0 %v9406
    %9675 = vmatprep.subr.bf16.mxu0 0
    %9676 = vmatpush2.bf16.msra.mxu0 0
    %9677 = vmatprep.subr.bf16.mxu0 0
    %9678 = vmatpush2.bf16.msra.mxu0 0
    %9679 = vmatprep.subr.bf16.mxu0 0
    %9680 = vmatpush2.bf16.msra.mxu0 0
    %9681 = vmatprep.subr.bf16.mxu0 0
    %9682 = vmatpush2.bf16.msra.mxu0 0
    %9683 = vmatprep.subr.bf16.mxu0 %v9429
    %9684 = vmatpush2.bf16.msra.mxu0 %v9428
    %9685 = vmatprep.subr.bf16.mxu0 %v9427
    %9686 = vmatpush2.bf16.msra.mxu0 %v9426
    %9687 = vmatprep.subr.bf16.mxu0 %v9425
    %9688 = vmatpush2.bf16.msra.mxu0 %v9424
    %9689 = vmatprep.subr.bf16.mxu0 %v9423
    %9690 = vmatpush2.bf16.msra.mxu0 %v9422
    %9691 = vmatprep.mubr.bf16.mxu0 %v6003
    %9692 = vmatmul.mubr.bf16.gmra.mxu0 %v5555
    %v9693 = vpop.f32.mrf.mxu0
    %v9694 = vadd.f32 %v9521, %v9693
    %v9695 = vpop.f32.mrf.mxu0
    %v9696 = vadd.f32 %v9523, %v9695
    %v9697 = vpop.f32.mrf.mxu0
    %v9698 = vadd.f32 %v9525, %v9697
    %v9699 = vpop.f32.mrf.mxu0
    %v9700 = vadd.f32 %v9527, %v9699
    %9701 = vmatprep.mubr.bf16.mxu0 %v6006
    %9702 = vmatmul.mubr.bf16.gmra.mxu0 %v5559
    %v9703 = vpop.f32.mrf.mxu0
    %v9704 = vadd.f32 %v9531, %v9703
    %v9705 = vpop.f32.mrf.mxu0
    %v9706 = vadd.f32 %v9533, %v9705
    %v9707 = vpop.f32.mrf.mxu0
    %v9708 = vadd.f32 %v9535, %v9707
    %v9709 = vpop.f32.mrf.mxu0
    %v9710 = vadd.f32 %v9537, %v9709
    %9711 = vmatprep.mubr.bf16.mxu0 %v6009
    %9712 = vmatmul.mubr.bf16.gmra.mxu0 %v5563
    %v9713 = vpop.f32.mrf.mxu0
    %v9714 = vadd.f32 %v9541, %v9713
    %v9715 = vpop.f32.mrf.mxu0
    %v9716 = vadd.f32 %v9543, %v9715
    %v9717 = vpop.f32.mrf.mxu0
    %v9718 = vadd.f32 %v9545, %v9717
    %v9719 = vpop.f32.mrf.mxu0
    %v9720 = vadd.f32 %v9547, %v9719
    %9721 = vmatprep.mubr.bf16.mxu0 %v6012
    %9722 = vmatmul.mubr.bf16.gmra.mxu0 %v5567
    %v9723 = vpop.f32.mrf.mxu0
    %v9724 = vadd.f32 %v9551, %v9723
    %v9725 = vpop.f32.mrf.mxu0
    %v9726 = vadd.f32 %v9553, %v9725
    %v9727 = vpop.f32.mrf.mxu0
    %v9728 = vadd.f32 %v9555, %v9727
    %v9729 = vpop.f32.mrf.mxu0
    %v9730 = vadd.f32 %v9557, %v9729
    %9731 = vmatprep.mubr.bf16.mxu0 %v6015
    %9732 = vmatmul.mubr.bf16.gmra.mxu0 %v5571
    %v9733 = vpop.f32.mrf.mxu0
    %v9734 = vadd.f32 %v9561, %v9733
    %v9735 = vpop.f32.mrf.mxu0
    %v9736 = vadd.f32 %v9563, %v9735
    %v9737 = vpop.f32.mrf.mxu0
    %v9738 = vadd.f32 %v9565, %v9737
    %v9739 = vpop.f32.mrf.mxu0
    %v9740 = vadd.f32 %v9567, %v9739
    %9741 = vmatprep.mubr.bf16.mxu0 %v6018
    %9742 = vmatmul.mubr.bf16.gmra.mxu0 %v5575
    %v9743 = vpop.f32.mrf.mxu0
    %v9744 = vadd.f32 %v9571, %v9743
    %v9745 = vpop.f32.mrf.mxu0
    %v9746 = vadd.f32 %v9573, %v9745
    %v9747 = vpop.f32.mrf.mxu0
    %v9748 = vadd.f32 %v9575, %v9747
    %v9749 = vpop.f32.mrf.mxu0
    %v9750 = vadd.f32 %v9577, %v9749
    %9751 = vmatprep.mubr.bf16.mxu0 %v6021
    %9752 = vmatmul.mubr.bf16.gmra.mxu0 %v5579
    %v9753 = vpop.f32.mrf.mxu0
    %v9754 = vadd.f32 %v9581, %v9753
    %v9755 = vpop.f32.mrf.mxu0
    %v9756 = vadd.f32 %v9583, %v9755
    %v9757 = vpop.f32.mrf.mxu0
    %v9758 = vadd.f32 %v9585, %v9757
    %v9759 = vpop.f32.mrf.mxu0
    %v9760 = vadd.f32 %v9587, %v9759
    %9761 = vmatprep.mubr.bf16.mxu0 %v6024
    %9762 = vmatmul.mubr.bf16.gmra.mxu0 %v5583
    %v9763 = vpop.f32.mrf.mxu0
    %v9764 = vadd.f32 %v9591, %v9763
    %v9765 = vpop.f32.mrf.mxu0
    %v9766 = vadd.f32 %v9593, %v9765
    %v9767 = vpop.f32.mrf.mxu0
    %v9768 = vadd.f32 %v9595, %v9767
    %v9769 = vpop.f32.mrf.mxu0
    %v9770 = vadd.f32 %v9597, %v9769
    %9771 = vmatprep.mubr.bf16.mxu0 %v6027
    %9772 = vmatmul.mubr.bf16.gmra.mxu0 %v5587
    %v9773 = vpop.f32.mrf.mxu0
    %v9774 = vadd.f32 %v9601, %v9773
    %v9775 = vpop.f32.mrf.mxu0
    %v9776 = vadd.f32 %v9603, %v9775
    %v9777 = vpop.f32.mrf.mxu0
    %v9778 = vadd.f32 %v9605, %v9777
    %v9779 = vpop.f32.mrf.mxu0
    %v9780 = vadd.f32 %v9607, %v9779
    %9781 = vmatprep.mubr.bf16.mxu0 %v6030
    %9782 = vmatmul.mubr.bf16.gmra.mxu0 %v5591
    %v9783 = vpop.f32.mrf.mxu0
    %v9784 = vadd.f32 %v9611, %v9783
    %v9785 = vpop.f32.mrf.mxu0
    %v9786 = vadd.f32 %v9613, %v9785
    %v9787 = vpop.f32.mrf.mxu0
    %v9788 = vadd.f32 %v9615, %v9787
    %v9789 = vpop.f32.mrf.mxu0
    %v9790 = vadd.f32 %v9617, %v9789
    %9791 = vmatprep.mubr.bf16.mxu0 %v6033
    %9792 = vmatmul.mubr.bf16.gmra.mxu0 %v5595
    %v9793 = vpop.f32.mrf.mxu0
    %v9794 = vadd.f32 %v9621, %v9793
    %v9795 = vpop.f32.mrf.mxu0
    %v9796 = vadd.f32 %v9623, %v9795
    %v9797 = vpop.f32.mrf.mxu0
    %v9798 = vadd.f32 %v9625, %v9797
    %v9799 = vpop.f32.mrf.mxu0
    %v9800 = vadd.f32 %v9627, %v9799
    %9801 = vmatprep.mubr.bf16.mxu0 %v6036
    %9802 = vmatmul.mubr.bf16.gmra.mxu0 %v5599
    %v9803 = vpop.f32.mrf.mxu0
    %v9804 = vadd.f32 %v9631, %v9803
    %v9805 = vpop.f32.mrf.mxu0
    %v9806 = vadd.f32 %v9633, %v9805
    %v9807 = vpop.f32.mrf.mxu0
    %v9808 = vadd.f32 %v9635, %v9807
    %v9809 = vpop.f32.mrf.mxu0
    %v9810 = vadd.f32 %v9637, %v9809
    %9811 = vmatprep.mubr.bf16.mxu0 %v6039
    %9812 = vmatmul.mubr.bf16.gmra.mxu0 %v5603
    %v9813 = vpop.f32.mrf.mxu0
    %v9814 = vadd.f32 %v9641, %v9813
    %v9815 = vpop.f32.mrf.mxu0
    %v9816 = vadd.f32 %v9643, %v9815
    %v9817 = vpop.f32.mrf.mxu0
    %v9818 = vadd.f32 %v9645, %v9817
    %v9819 = vpop.f32.mrf.mxu0
    %v9820 = vadd.f32 %v9647, %v9819
    %9821 = vmatprep.mubr.bf16.mxu0 %v6668
    %9822 = vmatmul.mubr.bf16.gmra.mxu0 0
    %v9823 = vpop.f32.mrf.mxu0
    %v9824 = vadd.f32 %v9651, %v9823
    %v9825 = vpop.f32.mrf.mxu0
    %v9826 = vadd.f32 %v9653, %v9825
    %v9827 = vpop.f32.mrf.mxu0
    %v9828 = vadd.f32 %v9655, %v9827
    %v9829 = vpop.f32.mrf.mxu0
    %v9830 = vadd.f32 %v9657, %v9829
    %9831 = vdwg.mxu0
    %v9832 = vadd.f32 %v9011, %v9694
    %v9833 = vadd.f32 %v9013, %v9696
    %v9834 = vadd.f32 %v9015, %v9698
    %v9835 = vadd.f32 %v9017, %v9700
    %v9836 = vadd.f32 %v9021, %v9704
    %v9837 = vadd.f32 %v9023, %v9706
    %v9838 = vadd.f32 %v9025, %v9708
    %v9839 = vadd.f32 %v9027, %v9710
    %v9840 = vadd.f32 %v9031, %v9714
    %v9841 = vadd.f32 %v9033, %v9716
    %v9842 = vadd.f32 %v9035, %v9718
    %v9843 = vadd.f32 %v9037, %v9720
    %v9844 = vadd.f32 %v9041, %v9724
    %v9845 = vadd.f32 %v9043, %v9726
    %v9846 = vadd.f32 %v9045, %v9728
    %v9847 = vadd.f32 %v9047, %v9730
    %v9848 = vadd.f32 %v9051, %v9734
    %v9849 = vadd.f32 %v9053, %v9736
    %v9850 = vadd.f32 %v9055, %v9738
    %v9851 = vadd.f32 %v9057, %v9740
    %v9852 = vadd.f32 %v9061, %v9744
    %v9853 = vadd.f32 %v9063, %v9746
    %v9854 = vadd.f32 %v9065, %v9748
    %v9855 = vadd.f32 %v9067, %v9750
    %v9856 = vadd.f32 %v9071, %v9754
    %v9857 = vadd.f32 %v9073, %v9756
    %v9858 = vadd.f32 %v9075, %v9758
    %v9859 = vadd.f32 %v9077, %v9760
    %v9860 = vadd.f32 %v9081, %v9764
    %v9861 = vadd.f32 %v9083, %v9766
    %v9862 = vadd.f32 %v9085, %v9768
    %v9863 = vadd.f32 %v9087, %v9770
    %v9864 = vadd.f32 %v9091, %v9774
    %v9865 = vadd.f32 %v9093, %v9776
    %v9866 = vadd.f32 %v9095, %v9778
    %v9867 = vadd.f32 %v9097, %v9780
    %v9868 = vadd.f32 %v9101, %v9784
    %v9869 = vadd.f32 %v9103, %v9786
    %v9870 = vadd.f32 %v9105, %v9788
    %v9871 = vadd.f32 %v9107, %v9790
    %v9872 = vadd.f32 %v9111, %v9794
    %v9873 = vadd.f32 %v9113, %v9796
    %v9874 = vadd.f32 %v9115, %v9798
    %v9875 = vadd.f32 %v9117, %v9800
    %v9876 = vadd.f32 %v9121, %v9804
    %v9877 = vadd.f32 %v9123, %v9806
    %v9878 = vadd.f32 %v9125, %v9808
    %v9879 = vadd.f32 %v9127, %v9810
    %v9880 = vadd.f32 %v9131, %v9814
    %v9881 = vadd.f32 %v9133, %v9816
    %v9882 = vadd.f32 %v9135, %v9818
    %v9883 = vadd.f32 %v9137, %v9820
    %v9884 = vadd.f32 %v9141, %v9824
    %v9885 = vadd.f32 %v9143, %v9826
    %v9886 = vadd.f32 %v9145, %v9828
    %v9887 = vadd.f32 %v9147, %v9830
    %v9888 = vmax.f32 %v9832, %v9836
    %v9889 = vmax.f32 %v9833, %v9837
    %v9890 = vmax.f32 %v9834, %v9838
    %v9891 = vmax.f32 %v9835, %v9839
    %v9892 = vmax.f32 %v9840, %v9844
    %v9893 = vmax.f32 %v9841, %v9845
    %v9894 = vmax.f32 %v9842, %v9846
    %v9895 = vmax.f32 %v9843, %v9847
    %v9896 = vmax.f32 %v9848, %v9852
    %v9897 = vmax.f32 %v9849, %v9853
    %v9898 = vmax.f32 %v9850, %v9854
    %v9899 = vmax.f32 %v9851, %v9855
    %v9900 = vmax.f32 %v9856, %v9860
    %v9901 = vmax.f32 %v9857, %v9861
    %v9902 = vmax.f32 %v9858, %v9862
    %v9903 = vmax.f32 %v9859, %v9863
    %v9904 = vmax.f32 %v9864, %v9868
    %v9905 = vmax.f32 %v9865, %v9869
    %v9906 = vmax.f32 %v9866, %v9870
    %v9907 = vmax.f32 %v9867, %v9871
    %v9908 = vmax.f32 %v9872, %v9876
    %v9909 = vmax.f32 %v9873, %v9877
    %v9910 = vmax.f32 %v9874, %v9878
    %v9911 = vmax.f32 %v9875, %v9879
    %v9912 = vmax.f32 %v9880, %v9884
    %v9913 = vmax.f32 %v9881, %v9885
    %v9914 = vmax.f32 %v9882, %v9886
    %v9915 = vmax.f32 %v9883, %v9887
    %v9916 = vmax.f32 %v7755, %v9888
    %v9917 = vmax.f32 %v7756, %v9889
    %v9918 = vmax.f32 %v7757, %v9890
    %v9919 = vmax.f32 %v7758, %v9891
    %v9920 = vmax.f32 %v7759, %v9892
    %v9921 = vmax.f32 %v7760, %v9893
    %v9922 = vmax.f32 %v7761, %v9894
    %v9923 = vmax.f32 %v7762, %v9895
    %v9924 = vmax.f32 %v7763, %v9896
    %v9925 = vmax.f32 %v7764, %v9897
    %v9926 = vmax.f32 %v7765, %v9898
    %v9927 = vmax.f32 %v7766, %v9899
    %v9928 = vmax.f32 %v7767, %v9900
    %v9929 = vmax.f32 %v7768, %v9901
    %v9930 = vmax.f32 %v7769, %v9902
    %v9931 = vmax.f32 %v7770, %v9903
    %v9932 = vmax.f32 %v7771, %v9904
    %v9933 = vmax.f32 %v7772, %v9905
    %v9934 = vmax.f32 %v7773, %v9906
    %v9935 = vmax.f32 %v7774, %v9907
    %v9936 = vmax.f32 %v7775, %v9908
    %v9937 = vmax.f32 %v7776, %v9909
    %v9938 = vmax.f32 %v7777, %v9910
    %v9939 = vmax.f32 %v7778, %v9911
    %v9940 = vmax.f32 %v7779, %v9912
    %v9941 = vmax.f32 %v7780, %v9913
    %v9942 = vmax.f32 %v7781, %v9914
    %v9943 = vmax.f32 %v7782, %v9915
    %v9944 = vld [vmem:[#allocation7] sm:$0x3]
    %v9946 = vlaneseq
    %v9947 = vshrl.u32 %v9946, 7
    %v9948 = vsub.s32 0, %v9947
    %v9949 = vrot.slane %v9944, %v9948
    %v9950 = vlaneseq
    %v9951 = vshrl.u32 %v9950, 7
    %v9952 = vsub.s32 1, %v9951
    %v9953 = vrot.slane %v9944, %v9952
    %v9956 = vadd.f32 %v9916, %v9949
    %v9957 = vadd.f32 %v9917, %v9953
    %v9958 = vadd.f32 %v9918, %v9949
    %v9959 = vadd.f32 %v9919, %v9953
    %v9960 = vadd.f32 %v9920, %v9949
    %v9961 = vadd.f32 %v9921, %v9953
    %v9962 = vadd.f32 %v9922, %v9949
    %v9963 = vadd.f32 %v9923, %v9953
    %v9964 = vadd.f32 %v9924, %v9949
    %v9965 = vadd.f32 %v9925, %v9953
    %v9966 = vadd.f32 %v9926, %v9949
    %v9967 = vadd.f32 %v9927, %v9953
    %v9968 = vadd.f32 %v9928, %v9949
    %v9969 = vadd.f32 %v9929, %v9953
    %v9970 = vadd.f32 %v9930, %v9949
    %v9971 = vadd.f32 %v9931, %v9953
    %v9972 = vadd.f32 %v9932, %v9949
    %v9973 = vadd.f32 %v9933, %v9953
    %v9974 = vadd.f32 %v9934, %v9949
    %v9975 = vadd.f32 %v9935, %v9953
    %v9976 = vadd.f32 %v9936, %v9949
    %v9977 = vadd.f32 %v9937, %v9953
    %v9978 = vadd.f32 %v9938, %v9949
    %v9979 = vadd.f32 %v9939, %v9953
    %v9980 = vadd.f32 %v9940, %v9949
    %v9981 = vadd.f32 %v9941, %v9953
    %v9982 = vadd.f32 %v9942, %v9949
    %v9983 = vadd.f32 %v9943, %v9953
    %v9984 = vmax.f32 %v9956, 0.0
    %v9985 = vmax.f32 %v9957, 0.0
    %v9986 = vmax.f32 %v9958, 0.0
    %v9987 = vmax.f32 %v9959, 0.0
    %v9988 = vmax.f32 %v9960, 0.0
    %v9989 = vmax.f32 %v9961, 0.0
    %v9990 = vmax.f32 %v9962, 0.0
    %v9991 = vmax.f32 %v9963, 0.0
    %v9992 = vmax.f32 %v9964, 0.0
    %v9993 = vmax.f32 %v9965, 0.0
    %v9994 = vmax.f32 %v9966, 0.0
    %v9995 = vmax.f32 %v9967, 0.0
    %v9996 = vmax.f32 %v9968, 0.0
    %v9997 = vmax.f32 %v9969, 0.0
    %v9998 = vmax.f32 %v9970, 0.0
    %v9999 = vmax.f32 %v9971, 0.0
    %v10000 = vmax.f32 %v9972, 0.0
    %v10001 = vmax.f32 %v9973, 0.0
    %v10002 = vmax.f32 %v9974, 0.0
    %v10003 = vmax.f32 %v9975, 0.0
    %v10004 = vmax.f32 %v9976, 0.0
    %v10005 = vmax.f32 %v9977, 0.0
    %v10006 = vmax.f32 %v9978, 0.0
    %v10007 = vmax.f32 %v9979, 0.0
    %v10008 = vmax.f32 %v9980, 0.0
    %v10009 = vmax.f32 %v9981, 0.0
    %v10010 = vmax.f32 %v9982, 0.0
    %v10011 = vmax.f32 %v9983, 0.0
    %v10012 = vpack.c.bf16 %v9986, %v9984
    %v10013 = vpack.c.bf16 %v9987, %v9985
    %v10014 = vpack.c.bf16 %v9990, %v9988
    %v10015 = vpack.c.bf16 %v9991, %v9989
    %v10016 = vpack.c.bf16 %v9994, %v9992
    %v10017 = vpack.c.bf16 %v9995, %v9993
    %v10018 = vpack.c.bf16 %v9998, %v9996
    %v10019 = vpack.c.bf16 %v9999, %v9997
    %v10020 = vpack.c.bf16 %v10002, %v10000
    %v10021 = vpack.c.bf16 %v10003, %v10001
    %v10022 = vpack.c.bf16 %v10006, %v10004
    %v10023 = vpack.c.bf16 %v10007, %v10005
    %v10024 = vpack.c.bf16 %v10010, %v10008
    %v10025 = vpack.c.bf16 %v10011, %v10009
    %v10026 = vld [vmem:[#allocation9] sm:$0xff]
    %v10027 = vld [vmem:[#allocation9 + $0x8] sm:$0xff]
    %v10028 = vld [vmem:[#allocation9 + $0x10] sm:$0xff]
    %v10029 = vld [vmem:[#allocation9 + $0x18] sm:$0xff]
    %v10030 = vld [vmem:[#allocation9 + $0x20] sm:$0xff]
    %v10031 = vld [vmem:[#allocation9 + $0x28] sm:$0xff]
    %v10032 = vld [vmem:[#allocation9 + $0x30] sm:$0xff]
    %v10033 = vld [vmem:[#allocation9 + $0x38] sm:$0xff]
    %v10034 = vld [vmem:[#allocation9 + $0x40] sm:$0xff]
    %v10035 = vld [vmem:[#allocation9 + $0x48] sm:$0xff]
    %v10036 = vld [vmem:[#allocation9 + $0x50] sm:$0xff]
    %v10037 = vld [vmem:[#allocation9 + $0x58] sm:$0xff]
    %v10038 = vld [vmem:[#allocation9 + $0x60] sm:$0xff]
    %v10039 = vld [vmem:[#allocation9 + $0x68] sm:$0xff]
    %v10040 = vld [vmem:[#allocation9 + $0x70] sm:$0xff]
    %v10041 = vld [vmem:[#allocation9 + $0x78] sm:$0xff]
    %v10042 = vld [vmem:[#allocation9 + $0x80] sm:$0xff]
    %v10043 = vld [vmem:[#allocation9 + $0x88] sm:$0xff]
    %v10044 = vld [vmem:[#allocation9 + $0x90] sm:$0xff]
    %v10045 = vld [vmem:[#allocation9 + $0x98] sm:$0xff]
    %v10046 = vld [vmem:[#allocation9 + $0xa0] sm:$0xff]
    %v10047 = vld [vmem:[#allocation9 + $0xa8] sm:$0xff]
    %v10048 = vld [vmem:[#allocation9 + $0xb0] sm:$0xff]
    %v10049 = vld [vmem:[#allocation9 + $0xb8] sm:$0xff]
    %v10050 = vld [vmem:[#allocation9 + $0xc0] sm:$0xff]
    %v10051 = vld [vmem:[#allocation9 + $0xc8] sm:$0xff]
    %v10052 = vld [vmem:[#allocation9 + $0xd0] sm:$0xff]
    %v10053 = vld [vmem:[#allocation9 + $0xd8] sm:$0xff]
    %v10054 = vld [vmem:[#allocation9 + $0xe0] sm:$0xff]
    %v10055 = vld [vmem:[#allocation9 + $0xe8] sm:$0xff]
    %v10056 = vld [vmem:[#allocation9 + $0xf0] sm:$0xff]
    %v10057 = vld [vmem:[#allocation9 + $0xf8] sm:$0xff]
    %v10058 = vld [vmem:[#allocation9 + $0x100] sm:$0xff]
    %v10059 = vld [vmem:[#allocation9 + $0x108] sm:$0xff]
    %v10060 = vld [vmem:[#allocation9 + $0x110] sm:$0xff]
    %v10061 = vld [vmem:[#allocation9 + $0x118] sm:$0xff]
    %v10062 = vld [vmem:[#allocation9 + $0x120] sm:$0xff]
    %v10063 = vld [vmem:[#allocation9 + $0x128] sm:$0xff]
    %v10064 = vld [vmem:[#allocation9 + $0x130] sm:$0xff]
    %v10065 = vld [vmem:[#allocation9 + $0x138] sm:$0xff]
    %v10066 = vld [vmem:[#allocation9 + $0x140] sm:$0xff]
    %v10067 = vld [vmem:[#allocation9 + $0x148] sm:$0xff]
    %v10068 = vld [vmem:[#allocation9 + $0x150] sm:$0xff]
    %v10069 = vld [vmem:[#allocation9 + $0x158] sm:$0xff]
    %v10070 = vld [vmem:[#allocation9 + $0x160] sm:$0xff]
    %v10071 = vld [vmem:[#allocation9 + $0x168] sm:$0xff]
    %v10072 = vld [vmem:[#allocation9 + $0x170] sm:$0xff]
    %v10073 = vld [vmem:[#allocation9 + $0x178] sm:$0xff]
    %v10074 = vld [vmem:[#allocation9 + $0x180] sm:$0xff]
    %v10075 = vld [vmem:[#allocation9 + $0x188] sm:$0xff]
    %v10076 = vld [vmem:[#allocation9 + $0x190] sm:$0xff]
    %v10077 = vld [vmem:[#allocation9 + $0x198] sm:$0xff]
    %v10078 = vld [vmem:[#allocation9 + $0x1a0] sm:$0xff]
    %v10079 = vld [vmem:[#allocation9 + $0x1a8] sm:$0xff]
    %v10080 = vld [vmem:[#allocation9 + $0x1b0] sm:$0xff]
    %v10081 = vld [vmem:[#allocation9 + $0x1b8] sm:$0xff]
    %s10082 = scalar_lea.vmem [#allocation9], 448
    %v10083 = vld [vmem:[%s10082] sm:$0xff]
    %v10084 = vld [vmem:[%s10082 + $0x8] sm:$0xff]
    %v10085 = vld [vmem:[%s10082 + $0x10] sm:$0xff]
    %v10086 = vld [vmem:[%s10082 + $0x18] sm:$0xff]
    %v10087 = vld [vmem:[%s10082 + $0x20] sm:$0xff]
    %v10088 = vld [vmem:[%s10082 + $0x28] sm:$0xff]
    %v10089 = vld [vmem:[%s10082 + $0x30] sm:$0xff]
    %v10090 = vld [vmem:[%s10082 + $0x38] sm:$0xff]
    %v10091 = vld [vmem:[%s10082 + $0x40] sm:$0xff]
    %v10092 = vld [vmem:[%s10082 + $0x48] sm:$0xff]
    %v10093 = vld [vmem:[%s10082 + $0x50] sm:$0xff]
    %v10094 = vld [vmem:[%s10082 + $0x58] sm:$0xff]
    %v10095 = vld [vmem:[%s10082 + $0x60] sm:$0xff]
    %v10096 = vld [vmem:[%s10082 + $0x68] sm:$0xff]
    %v10097 = vld [vmem:[%s10082 + $0x70] sm:$0xff]
    %v10098 = vld [vmem:[%s10082 + $0x78] sm:$0xff]
    %v10099 = vld [vmem:[%s10082 + $0x80] sm:$0xff]
    %v10100 = vld [vmem:[%s10082 + $0x88] sm:$0xff]
    %v10101 = vld [vmem:[%s10082 + $0x90] sm:$0xff]
    %v10102 = vld [vmem:[%s10082 + $0x98] sm:$0xff]
    %v10103 = vld [vmem:[%s10082 + $0xa0] sm:$0xff]
    %v10104 = vld [vmem:[%s10082 + $0xa8] sm:$0xff]
    %v10105 = vld [vmem:[%s10082 + $0xb0] sm:$0xff]
    %v10106 = vld [vmem:[%s10082 + $0xb8] sm:$0xff]
    %v10107 = vld [vmem:[%s10082 + $0xc0] sm:$0xff]
    %v10108 = vld [vmem:[%s10082 + $0xc8] sm:$0xff]
    %v10109 = vld [vmem:[%s10082 + $0xd0] sm:$0xff]
    %v10110 = vld [vmem:[%s10082 + $0xd8] sm:$0xff]
    %v10111 = vld [vmem:[%s10082 + $0xe0] sm:$0xff]
    %v10112 = vld [vmem:[%s10082 + $0xe8] sm:$0xff]
    %v10113 = vld [vmem:[%s10082 + $0xf0] sm:$0xff]
    %v10114 = vld [vmem:[%s10082 + $0xf8] sm:$0xff]
    %v10115 = vld [vmem:[%s10082 + $0x100] sm:$0xff]
    %v10116 = vld [vmem:[%s10082 + $0x108] sm:$0xff]
    %v10117 = vld [vmem:[%s10082 + $0x110] sm:$0xff]
    %v10118 = vld [vmem:[%s10082 + $0x118] sm:$0xff]
    %v10119 = vld [vmem:[%s10082 + $0x120] sm:$0xff]
    %v10120 = vld [vmem:[%s10082 + $0x128] sm:$0xff]
    %v10121 = vld [vmem:[%s10082 + $0x130] sm:$0xff]
    %v10122 = vld [vmem:[%s10082 + $0x138] sm:$0xff]
    %v10123 = vld [vmem:[%s10082 + $0x140] sm:$0xff]
    %v10124 = vld [vmem:[%s10082 + $0x148] sm:$0xff]
    %v10125 = vld [vmem:[%s10082 + $0x150] sm:$0xff]
    %v10126 = vld [vmem:[%s10082 + $0x158] sm:$0xff]
    %v10127 = vld [vmem:[%s10082 + $0x160] sm:$0xff]
    %v10128 = vld [vmem:[%s10082 + $0x168] sm:$0xff]
    %v10129 = vld [vmem:[%s10082 + $0x170] sm:$0xff]
    %v10130 = vld [vmem:[%s10082 + $0x178] sm:$0xff]
    %v10131 = vld [vmem:[%s10082 + $0x180] sm:$0xff]
    %v10132 = vld [vmem:[%s10082 + $0x188] sm:$0xff]
    %v10133 = vld [vmem:[%s10082 + $0x190] sm:$0xff]
    %v10134 = vld [vmem:[%s10082 + $0x198] sm:$0xff]
    %v10135 = vld [vmem:[%s10082 + $0x1a0] sm:$0xff]
    %v10136 = vld [vmem:[%s10082 + $0x1a8] sm:$0xff]
    %v10137 = vld [vmem:[%s10082 + $0x1b0] sm:$0xff]
    %v10138 = vld [vmem:[%s10082 + $0x1b8] sm:$0xff]
    %v10195 = vunpack.c.l.b16 %v10083
    %v10196 = vunpack.c.h.b16 %v10083
    %v10197 = vunpack.c.l.b16 %v10084
    %v10198 = vunpack.c.h.b16 %v10084
    %v10199 = vunpack.c.l.b16 %v10085
    %v10200 = vunpack.c.h.b16 %v10085
    %v10201 = vunpack.c.l.b16 %v10086
    %v10202 = vunpack.c.h.b16 %v10086
    %v10203 = vunpack.c.l.b16 %v10087
    %v10204 = vunpack.c.h.b16 %v10087
    %v10205 = vunpack.c.l.b16 %v10088
    %v10206 = vunpack.c.h.b16 %v10088
    %v10207 = vunpack.c.l.b16 %v10089
    %v10208 = vunpack.c.h.b16 %v10089
    %v10209 = vunpack.c.l.b16 %v10090
    %v10210 = vunpack.c.h.b16 %v10090
    %v10211 = vunpack.c.l.b16 %v10091
    %v10212 = vunpack.c.h.b16 %v10091
    %v10213 = vunpack.c.l.b16 %v10092
    %v10214 = vunpack.c.h.b16 %v10092
    %v10215 = vunpack.c.l.b16 %v10093
    %v10216 = vunpack.c.h.b16 %v10093
    %v10217 = vunpack.c.l.b16 %v10094
    %v10218 = vunpack.c.h.b16 %v10094
    %v10219 = vunpack.c.l.b16 %v10095
    %v10220 = vunpack.c.h.b16 %v10095
    %v10221 = vunpack.c.l.b16 %v10096
    %v10222 = vunpack.c.h.b16 %v10096
    %v10223 = vunpack.c.l.b16 %v10097
    %v10224 = vunpack.c.h.b16 %v10097
    %v10225 = vunpack.c.l.b16 %v10098
    %v10226 = vunpack.c.h.b16 %v10098
    %v10227 = vunpack.c.l.b16 %v10099
    %v10228 = vunpack.c.h.b16 %v10099
    %v10229 = vunpack.c.l.b16 %v10100
    %v10230 = vunpack.c.h.b16 %v10100
    %v10231 = vunpack.c.l.b16 %v10101
    %v10232 = vunpack.c.h.b16 %v10101
    %v10233 = vunpack.c.l.b16 %v10102
    %v10234 = vunpack.c.h.b16 %v10102
    %v10235 = vunpack.c.l.b16 %v10103
    %v10236 = vunpack.c.h.b16 %v10103
    %v10237 = vunpack.c.l.b16 %v10104
    %v10238 = vunpack.c.h.b16 %v10104
    %v10239 = vunpack.c.l.b16 %v10105
    %v10240 = vunpack.c.h.b16 %v10105
    %v10241 = vunpack.c.l.b16 %v10106
    %v10242 = vunpack.c.h.b16 %v10106
    %v10243 = vunpack.c.l.b16 %v10107
    %v10244 = vunpack.c.h.b16 %v10107
    %v10245 = vunpack.c.l.b16 %v10108
    %v10246 = vunpack.c.h.b16 %v10108
    %v10247 = vunpack.c.l.b16 %v10109
    %v10248 = vunpack.c.h.b16 %v10109
    %v10249 = vunpack.c.l.b16 %v10110
    %v10250 = vunpack.c.h.b16 %v10110
    %v10251 = vunpack.c.l.b16 %v10111
    %v10252 = vunpack.c.h.b16 %v10111
    %v10253 = vunpack.c.l.b16 %v10112
    %v10254 = vunpack.c.h.b16 %v10112
    %v10255 = vunpack.c.l.b16 %v10113
    %v10256 = vunpack.c.h.b16 %v10113
    %v10257 = vunpack.c.l.b16 %v10114
    %v10258 = vunpack.c.h.b16 %v10114
    %v10259 = vunpack.c.l.b16 %v10115
    %v10260 = vunpack.c.h.b16 %v10115
    %v10261 = vunpack.c.l.b16 %v10116
    %v10262 = vunpack.c.h.b16 %v10116
    %v10263 = vunpack.c.l.b16 %v10117
    %v10264 = vunpack.c.h.b16 %v10117
    %v10265 = vunpack.c.l.b16 %v10118
    %v10266 = vunpack.c.h.b16 %v10118
    %v10267 = vunpack.c.l.b16 %v10119
    %v10268 = vunpack.c.h.b16 %v10119
    %v10269 = vunpack.c.l.b16 %v10120
    %v10270 = vunpack.c.h.b16 %v10120
    %v10271 = vunpack.c.l.b16 %v10121
    %v10272 = vunpack.c.h.b16 %v10121
    %v10273 = vunpack.c.l.b16 %v10122
    %v10274 = vunpack.c.h.b16 %v10122
    %v10275 = vunpack.c.l.b16 %v10123
    %v10276 = vunpack.c.h.b16 %v10123
    %v10277 = vunpack.c.l.b16 %v10124
    %v10278 = vunpack.c.h.b16 %v10124
    %v10279 = vunpack.c.l.b16 %v10125
    %v10280 = vunpack.c.h.b16 %v10125
    %v10281 = vunpack.c.l.b16 %v10126
    %v10282 = vunpack.c.h.b16 %v10126
    %v10283 = vunpack.c.l.b16 %v10127
    %v10284 = vunpack.c.h.b16 %v10127
    %v10285 = vunpack.c.l.b16 %v10128
    %v10286 = vunpack.c.h.b16 %v10128
    %v10287 = vunpack.c.l.b16 %v10129
    %v10288 = vunpack.c.h.b16 %v10129
    %v10289 = vunpack.c.l.b16 %v10130
    %v10290 = vunpack.c.h.b16 %v10130
    %v10291 = vunpack.c.l.b16 %v10131
    %v10292 = vunpack.c.h.b16 %v10131
    %v10293 = vunpack.c.l.b16 %v10132
    %v10294 = vunpack.c.h.b16 %v10132
    %v10295 = vunpack.c.l.b16 %v10133
    %v10296 = vunpack.c.h.b16 %v10133
    %v10297 = vunpack.c.l.b16 %v10134
    %v10298 = vunpack.c.h.b16 %v10134
    %v10299 = vunpack.c.l.b16 %v10135
    %v10300 = vunpack.c.h.b16 %v10135
    %v10301 = vunpack.c.l.b16 %v10136
    %v10302 = vunpack.c.h.b16 %v10136
    %v10303 = vunpack.c.l.b16 %v10137
    %v10304 = vunpack.c.h.b16 %v10137
    %v10305 = vunpack.c.l.b16 %v10138
    %v10306 = vunpack.c.h.b16 %v10138
    %v10307 = vpack.c.b16 %v10199, %v10195
    %v10308 = vpack.c.b16 %v10200, %v10196
    %v10309 = vpack.c.b16 %v10201, %v10197
    %v10310 = vpack.c.b16 %v10202, %v10198
    %v10311 = vpack.c.b16 %v10207, %v10203
    %v10312 = vpack.c.b16 %v10208, %v10204
    %v10313 = vpack.c.b16 %v10209, %v10205
    %v10314 = vpack.c.b16 %v10210, %v10206
    %v10315 = vpack.c.b16 %v10215, %v10211
    %v10316 = vpack.c.b16 %v10216, %v10212
    %v10317 = vpack.c.b16 %v10217, %v10213
    %v10318 = vpack.c.b16 %v10218, %v10214
    %v10319 = vpack.c.b16 %v10223, %v10219
    %v10320 = vpack.c.b16 %v10224, %v10220
    %v10321 = vpack.c.b16 %v10225, %v10221
    %v10322 = vpack.c.b16 %v10226, %v10222
    %v10323 = vpack.c.b16 %v10231, %v10227
    %v10324 = vpack.c.b16 %v10232, %v10228
    %v10325 = vpack.c.b16 %v10233, %v10229
    %v10326 = vpack.c.b16 %v10234, %v10230
    %v10327 = vpack.c.b16 %v10239, %v10235
    %v10328 = vpack.c.b16 %v10240, %v10236
    %v10329 = vpack.c.b16 %v10241, %v10237
    %v10330 = vpack.c.b16 %v10242, %v10238
    %v10331 = vpack.c.b16 %v10247, %v10243
    %v10332 = vpack.c.b16 %v10248, %v10244
    %v10333 = vpack.c.b16 %v10249, %v10245
    %v10334 = vpack.c.b16 %v10250, %v10246
    %v10335 = vpack.c.b16 %v10255, %v10251
    %v10336 = vpack.c.b16 %v10256, %v10252
    %v10337 = vpack.c.b16 %v10257, %v10253
    %v10338 = vpack.c.b16 %v10258, %v10254
    %v10339 = vpack.c.b16 %v10263, %v10259
    %v10340 = vpack.c.b16 %v10264, %v10260
    %v10341 = vpack.c.b16 %v10265, %v10261
    %v10342 = vpack.c.b16 %v10266, %v10262
    %v10343 = vpack.c.b16 %v10271, %v10267
    %v10344 = vpack.c.b16 %v10272, %v10268
    %v10345 = vpack.c.b16 %v10273, %v10269
    %v10346 = vpack.c.b16 %v10274, %v10270
    %v10347 = vpack.c.b16 %v10279, %v10275
    %v10348 = vpack.c.b16 %v10280, %v10276
    %v10349 = vpack.c.b16 %v10281, %v10277
    %v10350 = vpack.c.b16 %v10282, %v10278
    %v10351 = vpack.c.b16 %v10287, %v10283
    %v10352 = vpack.c.b16 %v10288, %v10284
    %v10353 = vpack.c.b16 %v10289, %v10285
    %v10354 = vpack.c.b16 %v10290, %v10286
    %v10355 = vpack.c.b16 %v10295, %v10291
    %v10356 = vpack.c.b16 %v10296, %v10292
    %v10357 = vpack.c.b16 %v10297, %v10293
    %v10358 = vpack.c.b16 %v10298, %v10294
    %v10359 = vpack.c.b16 %v10303, %v10299
    %v10360 = vpack.c.b16 %v10304, %v10300
    %v10361 = vpack.c.b16 %v10305, %v10301
    %v10362 = vpack.c.b16 %v10306, %v10302
    %vm10419 = vcmask 785408
    %v10421 = vsel %vm10419, %v10015, 0
    %10423 = vmatprep.subr.bf16.mxu0 %v10336
    %10424 = vmatpush1.bf16.msra.mxu0 %v10335
    %10425 = vmatprep.subr.bf16.mxu0 %v10332
    %10426 = vmatpush1.bf16.msra.mxu0 %v10331
    %10427 = vmatprep.subr.bf16.mxu0 %v10328
    %10428 = vmatpush1.bf16.msra.mxu0 %v10327
    %10429 = vmatprep.subr.bf16.mxu0 %v10324
    %10430 = vmatpush1.bf16.msra.mxu0 %v10323
    %10431 = vmatprep.subr.bf16.mxu0 %v10320
    %10432 = vmatpush1.bf16.msra.mxu0 %v10319
    %10433 = vmatprep.subr.bf16.mxu0 %v10316
    %10434 = vmatpush1.bf16.msra.mxu0 %v10315
    %10435 = vmatprep.subr.bf16.mxu0 %v10312
    %10436 = vmatpush1.bf16.msra.mxu0 %v10311
    %10437 = vmatprep.subr.bf16.mxu0 %v10308
    %10438 = vmatpush1.bf16.msra.mxu0 %v10307
    %10439 = vmatprep.subr.bf16.mxu0 0
    %10440 = vmatpush2.bf16.msra.mxu0 0
    %10441 = vmatprep.subr.bf16.mxu0 0
    %10442 = vmatpush2.bf16.msra.mxu0 0
    %10443 = vmatprep.subr.bf16.mxu0 %v10360
    %10444 = vmatpush2.bf16.msra.mxu0 %v10359
    %10445 = vmatprep.subr.bf16.mxu0 %v10356
    %10446 = vmatpush2.bf16.msra.mxu0 %v10355
    %10447 = vmatprep.subr.bf16.mxu0 %v10352
    %10448 = vmatpush2.bf16.msra.mxu0 %v10351
    %10449 = vmatprep.subr.bf16.mxu0 %v10348
    %10450 = vmatpush2.bf16.msra.mxu0 %v10347
    %10451 = vmatprep.subr.bf16.mxu0 %v10344
    %10452 = vmatpush2.bf16.msra.mxu0 %v10343
    %10453 = vmatprep.subr.bf16.mxu0 %v10340
    %10454 = vmatpush2.bf16.msra.mxu0 %v10339
    %10455 = vmatprep.mubr.bf16.mxu0 %v10421
    %10456 = vmatmul.mubr.bf16.gmra.mxu0 %v10014
    %v10457 = vpop.f32.mrf.mxu0
    %v10458 = vadd.f32 0.0, %v10457
    %v10459 = vpop.f32.mrf.mxu0
    %v10460 = vadd.f32 0.0, %v10459
    %v10461 = vpop.f32.mrf.mxu0
    %v10462 = vadd.f32 0.0, %v10461
    %v10463 = vpop.f32.mrf.mxu0
    %v10464 = vadd.f32 0.0, %v10463
    %10465 = vdwg.mxu0
    %10466 = vmatprep.subr.bf16.mxu0 %v10338
    %10467 = vmatpush1.bf16.msra.mxu0 %v10337
    %10468 = vmatprep.subr.bf16.mxu0 %v10334
    %10469 = vmatpush1.bf16.msra.mxu0 %v10333
    %10470 = vmatprep.subr.bf16.mxu0 %v10330
    %10471 = vmatpush1.bf16.msra.mxu0 %v10329
    %10472 = vmatprep.subr.bf16.mxu0 %v10326
    %10473 = vmatpush1.bf16.msra.mxu0 %v10325
    %10474 = vmatprep.subr.bf16.mxu0 %v10322
    %10475 = vmatpush1.bf16.msra.mxu0 %v10321
    %10476 = vmatprep.subr.bf16.mxu0 %v10318
    %10477 = vmatpush1.bf16.msra.mxu0 %v10317
    %10478 = vmatprep.subr.bf16.mxu0 %v10314
    %10479 = vmatpush1.bf16.msra.mxu0 %v10313
    %10480 = vmatprep.subr.bf16.mxu0 %v10310
    %10481 = vmatpush1.bf16.msra.mxu0 %v10309
    %10482 = vmatprep.subr.bf16.mxu0 0
    %10483 = vmatpush2.bf16.msra.mxu0 0
    %10484 = vmatprep.subr.bf16.mxu0 0
    %10485 = vmatpush2.bf16.msra.mxu0 0
    %10486 = vmatprep.subr.bf16.mxu0 %v10362
    %10487 = vmatpush2.bf16.msra.mxu0 %v10361
    %10488 = vmatprep.subr.bf16.mxu0 %v10358
    %10489 = vmatpush2.bf16.msra.mxu0 %v10357
    %10490 = vmatprep.subr.bf16.mxu0 %v10354
    %10491 = vmatpush2.bf16.msra.mxu0 %v10353
    %10492 = vmatprep.subr.bf16.mxu0 %v10350
    %10493 = vmatpush2.bf16.msra.mxu0 %v10349
    %10494 = vmatprep.subr.bf16.mxu0 %v10346
    %10495 = vmatpush2.bf16.msra.mxu0 %v10345
    %10496 = vmatprep.subr.bf16.mxu0 %v10342
    %10497 = vmatpush2.bf16.msra.mxu0 %v10341
    %10498 = vmatprep.mubr.bf16.mxu0 %v10421
    %10499 = vmatmul.mubr.bf16.gmra.mxu0 %v10014
    %v10500 = vpop.f32.mrf.mxu0
    %v10501 = vadd.f32 0.0, %v10500
    %v10502 = vpop.f32.mrf.mxu0
    %v10503 = vadd.f32 0.0, %v10502
    %v10504 = vpop.f32.mrf.mxu0
    %v10505 = vadd.f32 0.0, %v10504
    %v10506 = vpop.f32.mrf.mxu0
    %v10507 = vadd.f32 0.0, %v10506
    %10508 = vdwg.mxu0
    %v10565 = vunpack.c.l.b16 %v10026
    %v10566 = vunpack.c.h.b16 %v10026
    %v10567 = vunpack.c.l.b16 %v10027
    %v10568 = vunpack.c.h.b16 %v10027
    %v10569 = vunpack.c.l.b16 %v10028
    %v10570 = vunpack.c.h.b16 %v10028
    %v10571 = vunpack.c.l.b16 %v10029
    %v10572 = vunpack.c.h.b16 %v10029
    %v10573 = vunpack.c.l.b16 %v10030
    %v10574 = vunpack.c.h.b16 %v10030
    %v10575 = vunpack.c.l.b16 %v10031
    %v10576 = vunpack.c.h.b16 %v10031
    %v10577 = vunpack.c.l.b16 %v10032
    %v10578 = vunpack.c.h.b16 %v10032
    %v10579 = vunpack.c.l.b16 %v10033
    %v10580 = vunpack.c.h.b16 %v10033
    %v10581 = vunpack.c.l.b16 %v10034
    %v10582 = vunpack.c.h.b16 %v10034
    %v10583 = vunpack.c.l.b16 %v10035
    %v10584 = vunpack.c.h.b16 %v10035
    %v10585 = vunpack.c.l.b16 %v10036
    %v10586 = vunpack.c.h.b16 %v10036
    %v10587 = vunpack.c.l.b16 %v10037
    %v10588 = vunpack.c.h.b16 %v10037
    %v10589 = vunpack.c.l.b16 %v10038
    %v10590 = vunpack.c.h.b16 %v10038
    %v10591 = vunpack.c.l.b16 %v10039
    %v10592 = vunpack.c.h.b16 %v10039
    %v10593 = vunpack.c.l.b16 %v10040
    %v10594 = vunpack.c.h.b16 %v10040
    %v10595 = vunpack.c.l.b16 %v10041
    %v10596 = vunpack.c.h.b16 %v10041
    %v10597 = vunpack.c.l.b16 %v10042
    %v10598 = vunpack.c.h.b16 %v10042
    %v10599 = vunpack.c.l.b16 %v10043
    %v10600 = vunpack.c.h.b16 %v10043
    %v10601 = vunpack.c.l.b16 %v10044
    %v10602 = vunpack.c.h.b16 %v10044
    %v10603 = vunpack.c.l.b16 %v10045
    %v10604 = vunpack.c.h.b16 %v10045
    %v10605 = vunpack.c.l.b16 %v10046
    %v10606 = vunpack.c.h.b16 %v10046
    %v10607 = vunpack.c.l.b16 %v10047
    %v10608 = vunpack.c.h.b16 %v10047
    %v10609 = vunpack.c.l.b16 %v10048
    %v10610 = vunpack.c.h.b16 %v10048
    %v10611 = vunpack.c.l.b16 %v10049
    %v10612 = vunpack.c.h.b16 %v10049
    %v10613 = vunpack.c.l.b16 %v10050
    %v10614 = vunpack.c.h.b16 %v10050
    %v10615 = vunpack.c.l.b16 %v10051
    %v10616 = vunpack.c.h.b16 %v10051
    %v10617 = vunpack.c.l.b16 %v10052
    %v10618 = vunpack.c.h.b16 %v10052
    %v10619 = vunpack.c.l.b16 %v10053
    %v10620 = vunpack.c.h.b16 %v10053
    %v10621 = vunpack.c.l.b16 %v10054
    %v10622 = vunpack.c.h.b16 %v10054
    %v10623 = vunpack.c.l.b16 %v10055
    %v10624 = vunpack.c.h.b16 %v10055
    %v10625 = vunpack.c.l.b16 %v10056
    %v10626 = vunpack.c.h.b16 %v10056
    %v10627 = vunpack.c.l.b16 %v10057
    %v10628 = vunpack.c.h.b16 %v10057
    %v10629 = vunpack.c.l.b16 %v10058
    %v10630 = vunpack.c.h.b16 %v10058
    %v10631 = vunpack.c.l.b16 %v10059
    %v10632 = vunpack.c.h.b16 %v10059
    %v10633 = vunpack.c.l.b16 %v10060
    %v10634 = vunpack.c.h.b16 %v10060
    %v10635 = vunpack.c.l.b16 %v10061
    %v10636 = vunpack.c.h.b16 %v10061
    %v10637 = vunpack.c.l.b16 %v10062
    %v10638 = vunpack.c.h.b16 %v10062
    %v10639 = vunpack.c.l.b16 %v10063
    %v10640 = vunpack.c.h.b16 %v10063
    %v10641 = vunpack.c.l.b16 %v10064
    %v10642 = vunpack.c.h.b16 %v10064
    %v10643 = vunpack.c.l.b16 %v10065
    %v10644 = vunpack.c.h.b16 %v10065
    %v10645 = vunpack.c.l.b16 %v10066
    %v10646 = vunpack.c.h.b16 %v10066
    %v10647 = vunpack.c.l.b16 %v10067
    %v10648 = vunpack.c.h.b16 %v10067
    %v10649 = vunpack.c.l.b16 %v10068
    %v10650 = vunpack.c.h.b16 %v10068
    %v10651 = vunpack.c.l.b16 %v10069
    %v10652 = vunpack.c.h.b16 %v10069
    %v10653 = vunpack.c.l.b16 %v10070
    %v10654 = vunpack.c.h.b16 %v10070
    %v10655 = vunpack.c.l.b16 %v10071
    %v10656 = vunpack.c.h.b16 %v10071
    %v10657 = vunpack.c.l.b16 %v10072
    %v10658 = vunpack.c.h.b16 %v10072
    %v10659 = vunpack.c.l.b16 %v10073
    %v10660 = vunpack.c.h.b16 %v10073
    %v10661 = vunpack.c.l.b16 %v10074
    %v10662 = vunpack.c.h.b16 %v10074
    %v10663 = vunpack.c.l.b16 %v10075
    %v10664 = vunpack.c.h.b16 %v10075
    %v10665 = vunpack.c.l.b16 %v10076
    %v10666 = vunpack.c.h.b16 %v10076
    %v10667 = vunpack.c.l.b16 %v10077
    %v10668 = vunpack.c.h.b16 %v10077
    %v10669 = vunpack.c.l.b16 %v10078
    %v10670 = vunpack.c.h.b16 %v10078
    %v10671 = vunpack.c.l.b16 %v10079
    %v10672 = vunpack.c.h.b16 %v10079
    %v10673 = vunpack.c.l.b16 %v10080
    %v10674 = vunpack.c.h.b16 %v10080
    %v10675 = vunpack.c.l.b16 %v10081
    %v10676 = vunpack.c.h.b16 %v10081
    %v10677 = vpack.c.b16 %v10569, %v10565
    %v10678 = vpack.c.b16 %v10570, %v10566
    %v10679 = vpack.c.b16 %v10571, %v10567
    %v10680 = vpack.c.b16 %v10572, %v10568
    %v10681 = vpack.c.b16 %v10577, %v10573
    %v10682 = vpack.c.b16 %v10578, %v10574
    %v10683 = vpack.c.b16 %v10579, %v10575
    %v10684 = vpack.c.b16 %v10580, %v10576
    %v10685 = vpack.c.b16 %v10585, %v10581
    %v10686 = vpack.c.b16 %v10586, %v10582
    %v10687 = vpack.c.b16 %v10587, %v10583
    %v10688 = vpack.c.b16 %v10588, %v10584
    %v10689 = vpack.c.b16 %v10593, %v10589
    %v10690 = vpack.c.b16 %v10594, %v10590
    %v10691 = vpack.c.b16 %v10595, %v10591
    %v10692 = vpack.c.b16 %v10596, %v10592
    %v10693 = vpack.c.b16 %v10601, %v10597
    %v10694 = vpack.c.b16 %v10602, %v10598
    %v10695 = vpack.c.b16 %v10603, %v10599
    %v10696 = vpack.c.b16 %v10604, %v10600
    %v10697 = vpack.c.b16 %v10609, %v10605
    %v10698 = vpack.c.b16 %v10610, %v10606
    %v10699 = vpack.c.b16 %v10611, %v10607
    %v10700 = vpack.c.b16 %v10612, %v10608
    %v10701 = vpack.c.b16 %v10617, %v10613
    %v10702 = vpack.c.b16 %v10618, %v10614
    %v10703 = vpack.c.b16 %v10619, %v10615
    %v10704 = vpack.c.b16 %v10620, %v10616
    %v10705 = vpack.c.b16 %v10625, %v10621
    %v10706 = vpack.c.b16 %v10626, %v10622
    %v10707 = vpack.c.b16 %v10627, %v10623
    %v10708 = vpack.c.b16 %v10628, %v10624
    %v10709 = vpack.c.b16 %v10633, %v10629
    %v10710 = vpack.c.b16 %v10634, %v10630
    %v10711 = vpack.c.b16 %v10635, %v10631
    %v10712 = vpack.c.b16 %v10636, %v10632
    %v10713 = vpack.c.b16 %v10641, %v10637
    %v10714 = vpack.c.b16 %v10642, %v10638
    %v10715 = vpack.c.b16 %v10643, %v10639
    %v10716 = vpack.c.b16 %v10644, %v10640
    %v10717 = vpack.c.b16 %v10649, %v10645
    %v10718 = vpack.c.b16 %v10650, %v10646
    %v10719 = vpack.c.b16 %v10651, %v10647
    %v10720 = vpack.c.b16 %v10652, %v10648
    %v10721 = vpack.c.b16 %v10657, %v10653
    %v10722 = vpack.c.b16 %v10658, %v10654
    %v10723 = vpack.c.b16 %v10659, %v10655
    %v10724 = vpack.c.b16 %v10660, %v10656
    %v10725 = vpack.c.b16 %v10665, %v10661
    %v10726 = vpack.c.b16 %v10666, %v10662
    %v10727 = vpack.c.b16 %v10667, %v10663
    %v10728 = vpack.c.b16 %v10668, %v10664
    %v10729 = vpack.c.b16 %v10673, %v10669
    %v10730 = vpack.c.b16 %v10674, %v10670
    %v10731 = vpack.c.b16 %v10675, %v10671
    %v10732 = vpack.c.b16 %v10676, %v10672
    %v10790 = vsel %vm10419, %v10013, 0
    %10792 = vmatprep.subr.bf16.mxu0 %v10706
    %10793 = vmatpush1.bf16.msra.mxu0 %v10705
    %10794 = vmatprep.subr.bf16.mxu0 %v10702
    %10795 = vmatpush1.bf16.msra.mxu0 %v10701
    %10796 = vmatprep.subr.bf16.mxu0 %v10698
    %10797 = vmatpush1.bf16.msra.mxu0 %v10697
    %10798 = vmatprep.subr.bf16.mxu0 %v10694
    %10799 = vmatpush1.bf16.msra.mxu0 %v10693
    %10800 = vmatprep.subr.bf16.mxu0 %v10690
    %10801 = vmatpush1.bf16.msra.mxu0 %v10689
    %10802 = vmatprep.subr.bf16.mxu0 %v10686
    %10803 = vmatpush1.bf16.msra.mxu0 %v10685
    %10804 = vmatprep.subr.bf16.mxu0 %v10682
    %10805 = vmatpush1.bf16.msra.mxu0 %v10681
    %10806 = vmatprep.subr.bf16.mxu0 %v10678
    %10807 = vmatpush1.bf16.msra.mxu0 %v10677
    %10808 = vmatprep.subr.bf16.mxu0 0
    %10809 = vmatpush2.bf16.msra.mxu0 0
    %10810 = vmatprep.subr.bf16.mxu0 0
    %10811 = vmatpush2.bf16.msra.mxu0 0
    %10812 = vmatprep.subr.bf16.mxu0 %v10730
    %10813 = vmatpush2.bf16.msra.mxu0 %v10729
    %10814 = vmatprep.subr.bf16.mxu0 %v10726
    %10815 = vmatpush2.bf16.msra.mxu0 %v10725
    %10816 = vmatprep.subr.bf16.mxu0 %v10722
    %10817 = vmatpush2.bf16.msra.mxu0 %v10721
    %10818 = vmatprep.subr.bf16.mxu0 %v10718
    %10819 = vmatpush2.bf16.msra.mxu0 %v10717
    %10820 = vmatprep.subr.bf16.mxu0 %v10714
    %10821 = vmatpush2.bf16.msra.mxu0 %v10713
    %10822 = vmatprep.subr.bf16.mxu0 %v10710
    %10823 = vmatpush2.bf16.msra.mxu0 %v10709
    %10824 = vmatprep.mubr.bf16.mxu0 %v10790
    %10825 = vmatmul.mubr.bf16.gmra.mxu0 %v10012
    %v10826 = vpop.f32.mrf.mxu0
    %v10827 = vadd.f32 %v10458, %v10826
    %v10828 = vpop.f32.mrf.mxu0
    %v10829 = vadd.f32 %v10460, %v10828
    %v10830 = vpop.f32.mrf.mxu0
    %v10831 = vadd.f32 %v10462, %v10830
    %v10832 = vpop.f32.mrf.mxu0
    %v10833 = vadd.f32 %v10464, %v10832
    %10834 = vdwg.mxu0
    %10835 = vmatprep.subr.bf16.mxu0 %v10708
    %10836 = vmatpush1.bf16.msra.mxu0 %v10707
    %10837 = vmatprep.subr.bf16.mxu0 %v10704
    %10838 = vmatpush1.bf16.msra.mxu0 %v10703
    %10839 = vmatprep.subr.bf16.mxu0 %v10700
    %10840 = vmatpush1.bf16.msra.mxu0 %v10699
    %10841 = vmatprep.subr.bf16.mxu0 %v10696
    %10842 = vmatpush1.bf16.msra.mxu0 %v10695
    %10843 = vmatprep.subr.bf16.mxu0 %v10692
    %10844 = vmatpush1.bf16.msra.mxu0 %v10691
    %10845 = vmatprep.subr.bf16.mxu0 %v10688
    %10846 = vmatpush1.bf16.msra.mxu0 %v10687
    %10847 = vmatprep.subr.bf16.mxu0 %v10684
    %10848 = vmatpush1.bf16.msra.mxu0 %v10683
    %10849 = vmatprep.subr.bf16.mxu0 %v10680
    %10850 = vmatpush1.bf16.msra.mxu0 %v10679
    %10851 = vmatprep.subr.bf16.mxu0 0
    %10852 = vmatpush2.bf16.msra.mxu0 0
    %10853 = vmatprep.subr.bf16.mxu0 0
    %10854 = vmatpush2.bf16.msra.mxu0 0
    %10855 = vmatprep.subr.bf16.mxu0 %v10732
    %10856 = vmatpush2.bf16.msra.mxu0 %v10731
    %10857 = vmatprep.subr.bf16.mxu0 %v10728
    %10858 = vmatpush2.bf16.msra.mxu0 %v10727
    %10859 = vmatprep.subr.bf16.mxu0 %v10724
    %10860 = vmatpush2.bf16.msra.mxu0 %v10723
    %10861 = vmatprep.subr.bf16.mxu0 %v10720
    %10862 = vmatpush2.bf16.msra.mxu0 %v10719
    %10863 = vmatprep.subr.bf16.mxu0 %v10716
    %10864 = vmatpush2.bf16.msra.mxu0 %v10715
    %10865 = vmatprep.subr.bf16.mxu0 %v10712
    %10866 = vmatpush2.bf16.msra.mxu0 %v10711
    %10867 = vmatprep.mubr.bf16.mxu0 %v10790
    %10868 = vmatmul.mubr.bf16.gmra.mxu0 %v10012
    %v10869 = vpop.f32.mrf.mxu0
    %v10870 = vadd.f32 %v10501, %v10869
    %v10871 = vpop.f32.mrf.mxu0
    %v10872 = vadd.f32 %v10503, %v10871
    %v10873 = vpop.f32.mrf.mxu0
    %v10874 = vadd.f32 %v10505, %v10873
    %v10875 = vpop.f32.mrf.mxu0
    %v10876 = vadd.f32 %v10507, %v10875
    %10877 = vdwg.mxu0
    %s10878 = scalar_lea.vmem [#allocation9], 896
    %v10879 = vld [vmem:[%s10878] sm:$0xff]
    %v10880 = vld [vmem:[%s10878 + $0x8] sm:$0xff]
    %v10881 = vld [vmem:[%s10878 + $0x10] sm:$0xff]
    %v10882 = vld [vmem:[%s10878 + $0x18] sm:$0xff]
    %v10883 = vld [vmem:[%s10878 + $0x20] sm:$0xff]
    %v10884 = vld [vmem:[%s10878 + $0x28] sm:$0xff]
    %v10885 = vld [vmem:[%s10878 + $0x30] sm:$0xff]
    %v10886 = vld [vmem:[%s10878 + $0x38] sm:$0xff]
    %v10887 = vld [vmem:[%s10878 + $0x40] sm:$0xff]
    %v10888 = vld [vmem:[%s10878 + $0x48] sm:$0xff]
    %v10889 = vld [vmem:[%s10878 + $0x50] sm:$0xff]
    %v10890 = vld [vmem:[%s10878 + $0x58] sm:$0xff]
    %v10891 = vld [vmem:[%s10878 + $0x60] sm:$0xff]
    %v10892 = vld [vmem:[%s10878 + $0x68] sm:$0xff]
    %v10893 = vld [vmem:[%s10878 + $0x70] sm:$0xff]
    %v10894 = vld [vmem:[%s10878 + $0x78] sm:$0xff]
    %v10895 = vld [vmem:[%s10878 + $0x80] sm:$0xff]
    %v10896 = vld [vmem:[%s10878 + $0x88] sm:$0xff]
    %v10897 = vld [vmem:[%s10878 + $0x90] sm:$0xff]
    %v10898 = vld [vmem:[%s10878 + $0x98] sm:$0xff]
    %v10899 = vld [vmem:[%s10878 + $0xa0] sm:$0xff]
    %v10900 = vld [vmem:[%s10878 + $0xa8] sm:$0xff]
    %v10901 = vld [vmem:[%s10878 + $0xb0] sm:$0xff]
    %v10902 = vld [vmem:[%s10878 + $0xb8] sm:$0xff]
    %v10903 = vld [vmem:[%s10878 + $0xc0] sm:$0xff]
    %v10904 = vld [vmem:[%s10878 + $0xc8] sm:$0xff]
    %v10905 = vld [vmem:[%s10878 + $0xd0] sm:$0xff]
    %v10906 = vld [vmem:[%s10878 + $0xd8] sm:$0xff]
    %v10907 = vld [vmem:[%s10878 + $0xe0] sm:$0xff]
    %v10908 = vld [vmem:[%s10878 + $0xe8] sm:$0xff]
    %v10909 = vld [vmem:[%s10878 + $0xf0] sm:$0xff]
    %v10910 = vld [vmem:[%s10878 + $0xf8] sm:$0xff]
    %v10911 = vld [vmem:[%s10878 + $0x100] sm:$0xff]
    %v10912 = vld [vmem:[%s10878 + $0x108] sm:$0xff]
    %v10913 = vld [vmem:[%s10878 + $0x110] sm:$0xff]
    %v10914 = vld [vmem:[%s10878 + $0x118] sm:$0xff]
    %v10915 = vld [vmem:[%s10878 + $0x120] sm:$0xff]
    %v10916 = vld [vmem:[%s10878 + $0x128] sm:$0xff]
    %v10917 = vld [vmem:[%s10878 + $0x130] sm:$0xff]
    %v10918 = vld [vmem:[%s10878 + $0x138] sm:$0xff]
    %v10919 = vld [vmem:[%s10878 + $0x140] sm:$0xff]
    %v10920 = vld [vmem:[%s10878 + $0x148] sm:$0xff]
    %v10921 = vld [vmem:[%s10878 + $0x150] sm:$0xff]
    %v10922 = vld [vmem:[%s10878 + $0x158] sm:$0xff]
    %v10923 = vld [vmem:[%s10878 + $0x160] sm:$0xff]
    %v10924 = vld [vmem:[%s10878 + $0x168] sm:$0xff]
    %v10925 = vld [vmem:[%s10878 + $0x170] sm:$0xff]
    %v10926 = vld [vmem:[%s10878 + $0x178] sm:$0xff]
    %v10927 = vld [vmem:[%s10878 + $0x180] sm:$0xff]
    %v10928 = vld [vmem:[%s10878 + $0x188] sm:$0xff]
    %v10929 = vld [vmem:[%s10878 + $0x190] sm:$0xff]
    %v10930 = vld [vmem:[%s10878 + $0x198] sm:$0xff]
    %v10931 = vld [vmem:[%s10878 + $0x1a0] sm:$0xff]
    %v10932 = vld [vmem:[%s10878 + $0x1a8] sm:$0xff]
    %v10933 = vld [vmem:[%s10878 + $0x1b0] sm:$0xff]
    %v10934 = vld [vmem:[%s10878 + $0x1b8] sm:$0xff]
    %v10991 = vunpack.c.l.b16 %v10879
    %v10992 = vunpack.c.h.b16 %v10879
    %v10993 = vunpack.c.l.b16 %v10880
    %v10994 = vunpack.c.h.b16 %v10880
    %v10995 = vunpack.c.l.b16 %v10881
    %v10996 = vunpack.c.h.b16 %v10881
    %v10997 = vunpack.c.l.b16 %v10882
    %v10998 = vunpack.c.h.b16 %v10882
    %v10999 = vunpack.c.l.b16 %v10883
    %v11000 = vunpack.c.h.b16 %v10883
    %v11001 = vunpack.c.l.b16 %v10884
    %v11002 = vunpack.c.h.b16 %v10884
    %v11003 = vunpack.c.l.b16 %v10885
    %v11004 = vunpack.c.h.b16 %v10885
    %v11005 = vunpack.c.l.b16 %v10886
    %v11006 = vunpack.c.h.b16 %v10886
    %v11007 = vunpack.c.l.b16 %v10887
    %v11008 = vunpack.c.h.b16 %v10887
    %v11009 = vunpack.c.l.b16 %v10888
    %v11010 = vunpack.c.h.b16 %v10888
    %v11011 = vunpack.c.l.b16 %v10889
    %v11012 = vunpack.c.h.b16 %v10889
    %v11013 = vunpack.c.l.b16 %v10890
    %v11014 = vunpack.c.h.b16 %v10890
    %v11015 = vunpack.c.l.b16 %v10891
    %v11016 = vunpack.c.h.b16 %v10891
    %v11017 = vunpack.c.l.b16 %v10892
    %v11018 = vunpack.c.h.b16 %v10892
    %v11019 = vunpack.c.l.b16 %v10893
    %v11020 = vunpack.c.h.b16 %v10893
    %v11021 = vunpack.c.l.b16 %v10894
    %v11022 = vunpack.c.h.b16 %v10894
    %v11023 = vunpack.c.l.b16 %v10895
    %v11024 = vunpack.c.h.b16 %v10895
    %v11025 = vunpack.c.l.b16 %v10896
    %v11026 = vunpack.c.h.b16 %v10896
    %v11027 = vunpack.c.l.b16 %v10897
    %v11028 = vunpack.c.h.b16 %v10897
    %v11029 = vunpack.c.l.b16 %v10898
    %v11030 = vunpack.c.h.b16 %v10898
    %v11031 = vunpack.c.l.b16 %v10899
    %v11032 = vunpack.c.h.b16 %v10899
    %v11033 = vunpack.c.l.b16 %v10900
    %v11034 = vunpack.c.h.b16 %v10900
    %v11035 = vunpack.c.l.b16 %v10901
    %v11036 = vunpack.c.h.b16 %v10901
    %v11037 = vunpack.c.l.b16 %v10902
    %v11038 = vunpack.c.h.b16 %v10902
    %v11039 = vunpack.c.l.b16 %v10903
    %v11040 = vunpack.c.h.b16 %v10903
    %v11041 = vunpack.c.l.b16 %v10904
    %v11042 = vunpack.c.h.b16 %v10904
    %v11043 = vunpack.c.l.b16 %v10905
    %v11044 = vunpack.c.h.b16 %v10905
    %v11045 = vunpack.c.l.b16 %v10906
    %v11046 = vunpack.c.h.b16 %v10906
    %v11047 = vunpack.c.l.b16 %v10907
    %v11048 = vunpack.c.h.b16 %v10907
    %v11049 = vunpack.c.l.b16 %v10908
    %v11050 = vunpack.c.h.b16 %v10908
    %v11051 = vunpack.c.l.b16 %v10909
    %v11052 = vunpack.c.h.b16 %v10909
    %v11053 = vunpack.c.l.b16 %v10910
    %v11054 = vunpack.c.h.b16 %v10910
    %v11055 = vunpack.c.l.b16 %v10911
    %v11056 = vunpack.c.h.b16 %v10911
    %v11057 = vunpack.c.l.b16 %v10912
    %v11058 = vunpack.c.h.b16 %v10912
    %v11059 = vunpack.c.l.b16 %v10913
    %v11060 = vunpack.c.h.b16 %v10913
    %v11061 = vunpack.c.l.b16 %v10914
    %v11062 = vunpack.c.h.b16 %v10914
    %v11063 = vunpack.c.l.b16 %v10915
    %v11064 = vunpack.c.h.b16 %v10915
    %v11065 = vunpack.c.l.b16 %v10916
    %v11066 = vunpack.c.h.b16 %v10916
    %v11067 = vunpack.c.l.b16 %v10917
    %v11068 = vunpack.c.h.b16 %v10917
    %v11069 = vunpack.c.l.b16 %v10918
    %v11070 = vunpack.c.h.b16 %v10918
    %v11071 = vunpack.c.l.b16 %v10919
    %v11072 = vunpack.c.h.b16 %v10919
    %v11073 = vunpack.c.l.b16 %v10920
    %v11074 = vunpack.c.h.b16 %v10920
    %v11075 = vunpack.c.l.b16 %v10921
    %v11076 = vunpack.c.h.b16 %v10921
    %v11077 = vunpack.c.l.b16 %v10922
    %v11078 = vunpack.c.h.b16 %v10922
    %v11079 = vunpack.c.l.b16 %v10923
    %v11080 = vunpack.c.h.b16 %v10923
    %v11081 = vunpack.c.l.b16 %v10924
    %v11082 = vunpack.c.h.b16 %v10924
    %v11083 = vunpack.c.l.b16 %v10925
    %v11084 = vunpack.c.h.b16 %v10925
    %v11085 = vunpack.c.l.b16 %v10926
    %v11086 = vunpack.c.h.b16 %v10926
    %v11087 = vunpack.c.l.b16 %v10927
    %v11088 = vunpack.c.h.b16 %v10927
    %v11089 = vunpack.c.l.b16 %v10928
    %v11090 = vunpack.c.h.b16 %v10928
    %v11091 = vunpack.c.l.b16 %v10929
    %v11092 = vunpack.c.h.b16 %v10929
    %v11093 = vunpack.c.l.b16 %v10930
    %v11094 = vunpack.c.h.b16 %v10930
    %v11095 = vunpack.c.l.b16 %v10931
    %v11096 = vunpack.c.h.b16 %v10931
    %v11097 = vunpack.c.l.b16 %v10932
    %v11098 = vunpack.c.h.b16 %v10932
    %v11099 = vunpack.c.l.b16 %v10933
    %v11100 = vunpack.c.h.b16 %v10933
    %v11101 = vunpack.c.l.b16 %v10934
    %v11102 = vunpack.c.h.b16 %v10934
    %v11103 = vpack.c.b16 %v10995, %v10991
    %v11104 = vpack.c.b16 %v10996, %v10992
    %v11105 = vpack.c.b16 %v10997, %v10993
    %v11106 = vpack.c.b16 %v10998, %v10994
    %v11107 = vpack.c.b16 %v11003, %v10999
    %v11108 = vpack.c.b16 %v11004, %v11000
    %v11109 = vpack.c.b16 %v11005, %v11001
    %v11110 = vpack.c.b16 %v11006, %v11002
    %v11111 = vpack.c.b16 %v11011, %v11007
    %v11112 = vpack.c.b16 %v11012, %v11008
    %v11113 = vpack.c.b16 %v11013, %v11009
    %v11114 = vpack.c.b16 %v11014, %v11010
    %v11115 = vpack.c.b16 %v11019, %v11015
    %v11116 = vpack.c.b16 %v11020, %v11016
    %v11117 = vpack.c.b16 %v11021, %v11017
    %v11118 = vpack.c.b16 %v11022, %v11018
    %v11119 = vpack.c.b16 %v11027, %v11023
    %v11120 = vpack.c.b16 %v11028, %v11024
    %v11121 = vpack.c.b16 %v11029, %v11025
    %v11122 = vpack.c.b16 %v11030, %v11026
    %v11123 = vpack.c.b16 %v11035, %v11031
    %v11124 = vpack.c.b16 %v11036, %v11032
    %v11125 = vpack.c.b16 %v11037, %v11033
    %v11126 = vpack.c.b16 %v11038, %v11034
    %v11127 = vpack.c.b16 %v11043, %v11039
    %v11128 = vpack.c.b16 %v11044, %v11040
    %v11129 = vpack.c.b16 %v11045, %v11041
    %v11130 = vpack.c.b16 %v11046, %v11042
    %v11131 = vpack.c.b16 %v11051, %v11047
    %v11132 = vpack.c.b16 %v11052, %v11048
    %v11133 = vpack.c.b16 %v11053, %v11049
    %v11134 = vpack.c.b16 %v11054, %v11050
    %v11135 = vpack.c.b16 %v11059, %v11055
    %v11136 = vpack.c.b16 %v11060, %v11056
    %v11137 = vpack.c.b16 %v11061, %v11057
    %v11138 = vpack.c.b16 %v11062, %v11058
    %v11139 = vpack.c.b16 %v11067, %v11063
    %v11140 = vpack.c.b16 %v11068, %v11064
    %v11141 = vpack.c.b16 %v11069, %v11065
    %v11142 = vpack.c.b16 %v11070, %v11066
    %v11143 = vpack.c.b16 %v11075, %v11071
    %v11144 = vpack.c.b16 %v11076, %v11072
    %v11145 = vpack.c.b16 %v11077, %v11073
    %v11146 = vpack.c.b16 %v11078, %v11074
    %v11147 = vpack.c.b16 %v11083, %v11079
    %v11148 = vpack.c.b16 %v11084, %v11080
    %v11149 = vpack.c.b16 %v11085, %v11081
    %v11150 = vpack.c.b16 %v11086, %v11082
    %v11151 = vpack.c.b16 %v11091, %v11087
    %v11152 = vpack.c.b16 %v11092, %v11088
    %v11153 = vpack.c.b16 %v11093, %v11089
    %v11154 = vpack.c.b16 %v11094, %v11090
    %v11155 = vpack.c.b16 %v11099, %v11095
    %v11156 = vpack.c.b16 %v11100, %v11096
    %v11157 = vpack.c.b16 %v11101, %v11097
    %v11158 = vpack.c.b16 %v11102, %v11098
    %v11216 = vsel %vm10419, %v10017, 0
    %11218 = vmatprep.subr.bf16.mxu0 %v11132
    %11219 = vmatpush1.bf16.msra.mxu0 %v11131
    %11220 = vmatprep.subr.bf16.mxu0 %v11128
    %11221 = vmatpush1.bf16.msra.mxu0 %v11127
    %11222 = vmatprep.subr.bf16.mxu0 %v11124
    %11223 = vmatpush1.bf16.msra.mxu0 %v11123
    %11224 = vmatprep.subr.bf16.mxu0 %v11120
    %11225 = vmatpush1.bf16.msra.mxu0 %v11119
    %11226 = vmatprep.subr.bf16.mxu0 %v11116
    %11227 = vmatpush1.bf16.msra.mxu0 %v11115
    %11228 = vmatprep.subr.bf16.mxu0 %v11112
    %11229 = vmatpush1.bf16.msra.mxu0 %v11111
    %11230 = vmatprep.subr.bf16.mxu0 %v11108
    %11231 = vmatpush1.bf16.msra.mxu0 %v11107
    %11232 = vmatprep.subr.bf16.mxu0 %v11104
    %11233 = vmatpush1.bf16.msra.mxu0 %v11103
    %11234 = vmatprep.subr.bf16.mxu0 0
    %11235 = vmatpush2.bf16.msra.mxu0 0
    %11236 = vmatprep.subr.bf16.mxu0 0
    %11237 = vmatpush2.bf16.msra.mxu0 0
    %11238 = vmatprep.subr.bf16.mxu0 %v11156
    %11239 = vmatpush2.bf16.msra.mxu0 %v11155
    %11240 = vmatprep.subr.bf16.mxu0 %v11152
    %11241 = vmatpush2.bf16.msra.mxu0 %v11151
    %11242 = vmatprep.subr.bf16.mxu0 %v11148
    %11243 = vmatpush2.bf16.msra.mxu0 %v11147
    %11244 = vmatprep.subr.bf16.mxu0 %v11144
    %11245 = vmatpush2.bf16.msra.mxu0 %v11143
    %11246 = vmatprep.subr.bf16.mxu0 %v11140
    %11247 = vmatpush2.bf16.msra.mxu0 %v11139
    %11248 = vmatprep.subr.bf16.mxu0 %v11136
    %11249 = vmatpush2.bf16.msra.mxu0 %v11135
    %11250 = vmatprep.mubr.bf16.mxu0 %v11216
    %11251 = vmatmul.mubr.bf16.gmra.mxu0 %v10016
    %v11252 = vpop.f32.mrf.mxu0
    %v11253 = vadd.f32 0.0, %v11252
    %v11254 = vpop.f32.mrf.mxu0
    %v11255 = vadd.f32 0.0, %v11254
    %v11256 = vpop.f32.mrf.mxu0
    %v11257 = vadd.f32 0.0, %v11256
    %v11258 = vpop.f32.mrf.mxu0
    %v11259 = vadd.f32 0.0, %v11258
    %11260 = vdwg.mxu0
    %11261 = vmatprep.subr.bf16.mxu0 %v11134
    %11262 = vmatpush1.bf16.msra.mxu0 %v11133
    %11263 = vmatprep.subr.bf16.mxu0 %v11130
    %11264 = vmatpush1.bf16.msra.mxu0 %v11129
    %11265 = vmatprep.subr.bf16.mxu0 %v11126
    %11266 = vmatpush1.bf16.msra.mxu0 %v11125
    %11267 = vmatprep.subr.bf16.mxu0 %v11122
    %11268 = vmatpush1.bf16.msra.mxu0 %v11121
    %11269 = vmatprep.subr.bf16.mxu0 %v11118
    %11270 = vmatpush1.bf16.msra.mxu0 %v11117
    %11271 = vmatprep.subr.bf16.mxu0 %v11114
    %11272 = vmatpush1.bf16.msra.mxu0 %v11113
    %11273 = vmatprep.subr.bf16.mxu0 %v11110
    %11274 = vmatpush1.bf16.msra.mxu0 %v11109
    %11275 = vmatprep.subr.bf16.mxu0 %v11106
    %11276 = vmatpush1.bf16.msra.mxu0 %v11105
    %11277 = vmatprep.subr.bf16.mxu0 0
    %11278 = vmatpush2.bf16.msra.mxu0 0
    %11279 = vmatprep.subr.bf16.mxu0 0
    %11280 = vmatpush2.bf16.msra.mxu0 0
    %11281 = vmatprep.subr.bf16.mxu0 %v11158
    %11282 = vmatpush2.bf16.msra.mxu0 %v11157
    %11283 = vmatprep.subr.bf16.mxu0 %v11154
    %11284 = vmatpush2.bf16.msra.mxu0 %v11153
    %11285 = vmatprep.subr.bf16.mxu0 %v11150
    %11286 = vmatpush2.bf16.msra.mxu0 %v11149
    %11287 = vmatprep.subr.bf16.mxu0 %v11146
    %11288 = vmatpush2.bf16.msra.mxu0 %v11145
    %11289 = vmatprep.subr.bf16.mxu0 %v11142
    %11290 = vmatpush2.bf16.msra.mxu0 %v11141
    %11291 = vmatprep.subr.bf16.mxu0 %v11138
    %11292 = vmatpush2.bf16.msra.mxu0 %v11137
    %11293 = vmatprep.mubr.bf16.mxu0 %v11216
    %11294 = vmatmul.mubr.bf16.gmra.mxu0 %v10016
    %v11295 = vpop.f32.mrf.mxu0
    %v11296 = vadd.f32 0.0, %v11295
    %v11297 = vpop.f32.mrf.mxu0
    %v11298 = vadd.f32 0.0, %v11297
    %v11299 = vpop.f32.mrf.mxu0
    %v11300 = vadd.f32 0.0, %v11299
    %v11301 = vpop.f32.mrf.mxu0
    %v11302 = vadd.f32 0.0, %v11301
    %11303 = vdwg.mxu0
    %v11304 = vadd.f32 %v10827, %v11253
    %v11305 = vadd.f32 %v10829, %v11255
    %v11306 = vadd.f32 %v10870, %v11296
    %v11307 = vadd.f32 %v10872, %v11298
    %v11308 = vadd.f32 %v10831, %v11257
    %v11309 = vadd.f32 %v10833, %v11259
    %v11310 = vadd.f32 %v10874, %v11300
    %v11311 = vadd.f32 %v10876, %v11302
    %s11312 = scalar_lea.vmem [#allocation9], 1344
    %v11313 = vld [vmem:[%s11312] sm:$0xff]
    %v11314 = vld [vmem:[%s11312 + $0x8] sm:$0xff]
    %v11315 = vld [vmem:[%s11312 + $0x10] sm:$0xff]
    %v11316 = vld [vmem:[%s11312 + $0x18] sm:$0xff]
    %v11317 = vld [vmem:[%s11312 + $0x20] sm:$0xff]
    %v11318 = vld [vmem:[%s11312 + $0x28] sm:$0xff]
    %v11319 = vld [vmem:[%s11312 + $0x30] sm:$0xff]
    %v11320 = vld [vmem:[%s11312 + $0x38] sm:$0xff]
    %v11321 = vld [vmem:[%s11312 + $0x40] sm:$0xff]
    %v11322 = vld [vmem:[%s11312 + $0x48] sm:$0xff]
    %v11323 = vld [vmem:[%s11312 + $0x50] sm:$0xff]
    %v11324 = vld [vmem:[%s11312 + $0x58] sm:$0xff]
    %v11325 = vld [vmem:[%s11312 + $0x60] sm:$0xff]
    %v11326 = vld [vmem:[%s11312 + $0x68] sm:$0xff]
    %v11327 = vld [vmem:[%s11312 + $0x70] sm:$0xff]
    %v11328 = vld [vmem:[%s11312 + $0x78] sm:$0xff]
    %v11329 = vld [vmem:[%s11312 + $0x80] sm:$0xff]
    %v11330 = vld [vmem:[%s11312 + $0x88] sm:$0xff]
    %v11331 = vld [vmem:[%s11312 + $0x90] sm:$0xff]
    %v11332 = vld [vmem:[%s11312 + $0x98] sm:$0xff]
    %v11333 = vld [vmem:[%s11312 + $0xa0] sm:$0xff]
    %v11334 = vld [vmem:[%s11312 + $0xa8] sm:$0xff]
    %v11335 = vld [vmem:[%s11312 + $0xb0] sm:$0xff]
    %v11336 = vld [vmem:[%s11312 + $0xb8] sm:$0xff]
    %v11337 = vld [vmem:[%s11312 + $0xc0] sm:$0xff]
    %v11338 = vld [vmem:[%s11312 + $0xc8] sm:$0xff]
    %v11339 = vld [vmem:[%s11312 + $0xd0] sm:$0xff]
    %v11340 = vld [vmem:[%s11312 + $0xd8] sm:$0xff]
    %v11341 = vld [vmem:[%s11312 + $0xe0] sm:$0xff]
    %v11342 = vld [vmem:[%s11312 + $0xe8] sm:$0xff]
    %v11343 = vld [vmem:[%s11312 + $0xf0] sm:$0xff]
    %v11344 = vld [vmem:[%s11312 + $0xf8] sm:$0xff]
    %v11345 = vld [vmem:[%s11312 + $0x100] sm:$0xff]
    %v11346 = vld [vmem:[%s11312 + $0x108] sm:$0xff]
    %v11347 = vld [vmem:[%s11312 + $0x110] sm:$0xff]
    %v11348 = vld [vmem:[%s11312 + $0x118] sm:$0xff]
    %v11349 = vld [vmem:[%s11312 + $0x120] sm:$0xff]
    %v11350 = vld [vmem:[%s11312 + $0x128] sm:$0xff]
    %v11351 = vld [vmem:[%s11312 + $0x130] sm:$0xff]
    %v11352 = vld [vmem:[%s11312 + $0x138] sm:$0xff]
    %v11353 = vld [vmem:[%s11312 + $0x140] sm:$0xff]
    %v11354 = vld [vmem:[%s11312 + $0x148] sm:$0xff]
    %v11355 = vld [vmem:[%s11312 + $0x150] sm:$0xff]
    %v11356 = vld [vmem:[%s11312 + $0x158] sm:$0xff]
    %v11357 = vld [vmem:[%s11312 + $0x160] sm:$0xff]
    %v11358 = vld [vmem:[%s11312 + $0x168] sm:$0xff]
    %v11359 = vld [vmem:[%s11312 + $0x170] sm:$0xff]
    %v11360 = vld [vmem:[%s11312 + $0x178] sm:$0xff]
    %v11361 = vld [vmem:[%s11312 + $0x180] sm:$0xff]
    %v11362 = vld [vmem:[%s11312 + $0x188] sm:$0xff]
    %v11363 = vld [vmem:[%s11312 + $0x190] sm:$0xff]
    %v11364 = vld [vmem:[%s11312 + $0x198] sm:$0xff]
    %v11365 = vld [vmem:[%s11312 + $0x1a0] sm:$0xff]
    %v11366 = vld [vmem:[%s11312 + $0x1a8] sm:$0xff]
    %v11367 = vld [vmem:[%s11312 + $0x1b0] sm:$0xff]
    %v11368 = vld [vmem:[%s11312 + $0x1b8] sm:$0xff]
    %v11425 = vunpack.c.l.b16 %v11313
    %v11426 = vunpack.c.h.b16 %v11313
    %v11427 = vunpack.c.l.b16 %v11314
    %v11428 = vunpack.c.h.b16 %v11314
    %v11429 = vunpack.c.l.b16 %v11315
    %v11430 = vunpack.c.h.b16 %v11315
    %v11431 = vunpack.c.l.b16 %v11316
    %v11432 = vunpack.c.h.b16 %v11316
    %v11433 = vunpack.c.l.b16 %v11317
    %v11434 = vunpack.c.h.b16 %v11317
    %v11435 = vunpack.c.l.b16 %v11318
    %v11436 = vunpack.c.h.b16 %v11318
    %v11437 = vunpack.c.l.b16 %v11319
    %v11438 = vunpack.c.h.b16 %v11319
    %v11439 = vunpack.c.l.b16 %v11320
    %v11440 = vunpack.c.h.b16 %v11320
    %v11441 = vunpack.c.l.b16 %v11321
    %v11442 = vunpack.c.h.b16 %v11321
    %v11443 = vunpack.c.l.b16 %v11322
    %v11444 = vunpack.c.h.b16 %v11322
    %v11445 = vunpack.c.l.b16 %v11323
    %v11446 = vunpack.c.h.b16 %v11323
    %v11447 = vunpack.c.l.b16 %v11324
    %v11448 = vunpack.c.h.b16 %v11324
    %v11449 = vunpack.c.l.b16 %v11325
    %v11450 = vunpack.c.h.b16 %v11325
    %v11451 = vunpack.c.l.b16 %v11326
    %v11452 = vunpack.c.h.b16 %v11326
    %v11453 = vunpack.c.l.b16 %v11327
    %v11454 = vunpack.c.h.b16 %v11327
    %v11455 = vunpack.c.l.b16 %v11328
    %v11456 = vunpack.c.h.b16 %v11328
    %v11457 = vunpack.c.l.b16 %v11329
    %v11458 = vunpack.c.h.b16 %v11329
    %v11459 = vunpack.c.l.b16 %v11330
    %v11460 = vunpack.c.h.b16 %v11330
    %v11461 = vunpack.c.l.b16 %v11331
    %v11462 = vunpack.c.h.b16 %v11331
    %v11463 = vunpack.c.l.b16 %v11332
    %v11464 = vunpack.c.h.b16 %v11332
    %v11465 = vunpack.c.l.b16 %v11333
    %v11466 = vunpack.c.h.b16 %v11333
    %v11467 = vunpack.c.l.b16 %v11334
    %v11468 = vunpack.c.h.b16 %v11334
    %v11469 = vunpack.c.l.b16 %v11335
    %v11470 = vunpack.c.h.b16 %v11335
    %v11471 = vunpack.c.l.b16 %v11336
    %v11472 = vunpack.c.h.b16 %v11336
    %v11473 = vunpack.c.l.b16 %v11337
    %v11474 = vunpack.c.h.b16 %v11337
    %v11475 = vunpack.c.l.b16 %v11338
    %v11476 = vunpack.c.h.b16 %v11338
    %v11477 = vunpack.c.l.b16 %v11339
    %v11478 = vunpack.c.h.b16 %v11339
    %v11479 = vunpack.c.l.b16 %v11340
    %v11480 = vunpack.c.h.b16 %v11340
    %v11481 = vunpack.c.l.b16 %v11341
    %v11482 = vunpack.c.h.b16 %v11341
    %v11483 = vunpack.c.l.b16 %v11342
    %v11484 = vunpack.c.h.b16 %v11342
    %v11485 = vunpack.c.l.b16 %v11343
    %v11486 = vunpack.c.h.b16 %v11343
    %v11487 = vunpack.c.l.b16 %v11344
    %v11488 = vunpack.c.h.b16 %v11344
    %v11489 = vunpack.c.l.b16 %v11345
    %v11490 = vunpack.c.h.b16 %v11345
    %v11491 = vunpack.c.l.b16 %v11346
    %v11492 = vunpack.c.h.b16 %v11346
    %v11493 = vunpack.c.l.b16 %v11347
    %v11494 = vunpack.c.h.b16 %v11347
    %v11495 = vunpack.c.l.b16 %v11348
    %v11496 = vunpack.c.h.b16 %v11348
    %v11497 = vunpack.c.l.b16 %v11349
    %v11498 = vunpack.c.h.b16 %v11349
    %v11499 = vunpack.c.l.b16 %v11350
    %v11500 = vunpack.c.h.b16 %v11350
    %v11501 = vunpack.c.l.b16 %v11351
    %v11502 = vunpack.c.h.b16 %v11351
    %v11503 = vunpack.c.l.b16 %v11352
    %v11504 = vunpack.c.h.b16 %v11352
    %v11505 = vunpack.c.l.b16 %v11353
    %v11506 = vunpack.c.h.b16 %v11353
    %v11507 = vunpack.c.l.b16 %v11354
    %v11508 = vunpack.c.h.b16 %v11354
    %v11509 = vunpack.c.l.b16 %v11355
    %v11510 = vunpack.c.h.b16 %v11355
    %v11511 = vunpack.c.l.b16 %v11356
    %v11512 = vunpack.c.h.b16 %v11356
    %v11513 = vunpack.c.l.b16 %v11357
    %v11514 = vunpack.c.h.b16 %v11357
    %v11515 = vunpack.c.l.b16 %v11358
    %v11516 = vunpack.c.h.b16 %v11358
    %v11517 = vunpack.c.l.b16 %v11359
    %v11518 = vunpack.c.h.b16 %v11359
    %v11519 = vunpack.c.l.b16 %v11360
    %v11520 = vunpack.c.h.b16 %v11360
    %v11521 = vunpack.c.l.b16 %v11361
    %v11522 = vunpack.c.h.b16 %v11361
    %v11523 = vunpack.c.l.b16 %v11362
    %v11524 = vunpack.c.h.b16 %v11362
    %v11525 = vunpack.c.l.b16 %v11363
    %v11526 = vunpack.c.h.b16 %v11363
    %v11527 = vunpack.c.l.b16 %v11364
    %v11528 = vunpack.c.h.b16 %v11364
    %v11529 = vunpack.c.l.b16 %v11365
    %v11530 = vunpack.c.h.b16 %v11365
    %v11531 = vunpack.c.l.b16 %v11366
    %v11532 = vunpack.c.h.b16 %v11366
    %v11533 = vunpack.c.l.b16 %v11367
    %v11534 = vunpack.c.h.b16 %v11367
    %v11535 = vunpack.c.l.b16 %v11368
    %v11536 = vunpack.c.h.b16 %v11368
    %v11537 = vpack.c.b16 %v11429, %v11425
    %v11538 = vpack.c.b16 %v11430, %v11426
    %v11539 = vpack.c.b16 %v11431, %v11427
    %v11540 = vpack.c.b16 %v11432, %v11428
    %v11541 = vpack.c.b16 %v11437, %v11433
    %v11542 = vpack.c.b16 %v11438, %v11434
    %v11543 = vpack.c.b16 %v11439, %v11435
    %v11544 = vpack.c.b16 %v11440, %v11436
    %v11545 = vpack.c.b16 %v11445, %v11441
    %v11546 = vpack.c.b16 %v11446, %v11442
    %v11547 = vpack.c.b16 %v11447, %v11443
    %v11548 = vpack.c.b16 %v11448, %v11444
    %v11549 = vpack.c.b16 %v11453, %v11449
    %v11550 = vpack.c.b16 %v11454, %v11450
    %v11551 = vpack.c.b16 %v11455, %v11451
    %v11552 = vpack.c.b16 %v11456, %v11452
    %v11553 = vpack.c.b16 %v11461, %v11457
    %v11554 = vpack.c.b16 %v11462, %v11458
    %v11555 = vpack.c.b16 %v11463, %v11459
    %v11556 = vpack.c.b16 %v11464, %v11460
    %v11557 = vpack.c.b16 %v11469, %v11465
    %v11558 = vpack.c.b16 %v11470, %v11466
    %v11559 = vpack.c.b16 %v11471, %v11467
    %v11560 = vpack.c.b16 %v11472, %v11468
    %v11561 = vpack.c.b16 %v11477, %v11473
    %v11562 = vpack.c.b16 %v11478, %v11474
    %v11563 = vpack.c.b16 %v11479, %v11475
    %v11564 = vpack.c.b16 %v11480, %v11476
    %v11565 = vpack.c.b16 %v11485, %v11481
    %v11566 = vpack.c.b16 %v11486, %v11482
    %v11567 = vpack.c.b16 %v11487, %v11483
    %v11568 = vpack.c.b16 %v11488, %v11484
    %v11569 = vpack.c.b16 %v11493, %v11489
    %v11570 = vpack.c.b16 %v11494, %v11490
    %v11571 = vpack.c.b16 %v11495, %v11491
    %v11572 = vpack.c.b16 %v11496, %v11492
    %v11573 = vpack.c.b16 %v11501, %v11497
    %v11574 = vpack.c.b16 %v11502, %v11498
    %v11575 = vpack.c.b16 %v11503, %v11499
    %v11576 = vpack.c.b16 %v11504, %v11500
    %v11577 = vpack.c.b16 %v11509, %v11505
    %v11578 = vpack.c.b16 %v11510, %v11506
    %v11579 = vpack.c.b16 %v11511, %v11507
    %v11580 = vpack.c.b16 %v11512, %v11508
    %v11581 = vpack.c.b16 %v11517, %v11513
    %v11582 = vpack.c.b16 %v11518, %v11514
    %v11583 = vpack.c.b16 %v11519, %v11515
    %v11584 = vpack.c.b16 %v11520, %v11516
    %v11585 = vpack.c.b16 %v11525, %v11521
    %v11586 = vpack.c.b16 %v11526, %v11522
    %v11587 = vpack.c.b16 %v11527, %v11523
    %v11588 = vpack.c.b16 %v11528, %v11524
    %v11589 = vpack.c.b16 %v11533, %v11529
    %v11590 = vpack.c.b16 %v11534, %v11530
    %v11591 = vpack.c.b16 %v11535, %v11531
    %v11592 = vpack.c.b16 %v11536, %v11532
    %v11650 = vsel %vm10419, %v10019, 0
    %11652 = vmatprep.subr.bf16.mxu0 %v11566
    %11653 = vmatpush1.bf16.msra.mxu0 %v11565
    %11654 = vmatprep.subr.bf16.mxu0 %v11562
    %11655 = vmatpush1.bf16.msra.mxu0 %v11561
    %11656 = vmatprep.subr.bf16.mxu0 %v11558
    %11657 = vmatpush1.bf16.msra.mxu0 %v11557
    %11658 = vmatprep.subr.bf16.mxu0 %v11554
    %11659 = vmatpush1.bf16.msra.mxu0 %v11553
    %11660 = vmatprep.subr.bf16.mxu0 %v11550
    %11661 = vmatpush1.bf16.msra.mxu0 %v11549
    %11662 = vmatprep.subr.bf16.mxu0 %v11546
    %11663 = vmatpush1.bf16.msra.mxu0 %v11545
    %11664 = vmatprep.subr.bf16.mxu0 %v11542
    %11665 = vmatpush1.bf16.msra.mxu0 %v11541
    %11666 = vmatprep.subr.bf16.mxu0 %v11538
    %11667 = vmatpush1.bf16.msra.mxu0 %v11537
    %11668 = vmatprep.subr.bf16.mxu0 0
    %11669 = vmatpush2.bf16.msra.mxu0 0
    %11670 = vmatprep.subr.bf16.mxu0 0
    %11671 = vmatpush2.bf16.msra.mxu0 0
    %11672 = vmatprep.subr.bf16.mxu0 %v11590
    %11673 = vmatpush2.bf16.msra.mxu0 %v11589
    %11674 = vmatprep.subr.bf16.mxu0 %v11586
    %11675 = vmatpush2.bf16.msra.mxu0 %v11585
    %11676 = vmatprep.subr.bf16.mxu0 %v11582
    %11677 = vmatpush2.bf16.msra.mxu0 %v11581
    %11678 = vmatprep.subr.bf16.mxu0 %v11578
    %11679 = vmatpush2.bf16.msra.mxu0 %v11577
    %11680 = vmatprep.subr.bf16.mxu0 %v11574
    %11681 = vmatpush2.bf16.msra.mxu0 %v11573
    %11682 = vmatprep.subr.bf16.mxu0 %v11570
    %11683 = vmatpush2.bf16.msra.mxu0 %v11569
    %11684 = vmatprep.mubr.bf16.mxu0 %v11650
    %11685 = vmatmul.mubr.bf16.gmra.mxu0 %v10018
    %v11686 = vpop.f32.mrf.mxu0
    %v11687 = vadd.f32 0.0, %v11686
    %v11688 = vpop.f32.mrf.mxu0
    %v11689 = vadd.f32 0.0, %v11688
    %v11690 = vpop.f32.mrf.mxu0
    %v11691 = vadd.f32 0.0, %v11690
    %v11692 = vpop.f32.mrf.mxu0
    %v11693 = vadd.f32 0.0, %v11692
    %11694 = vdwg.mxu0
    %11695 = vmatprep.subr.bf16.mxu0 %v11568
    %11696 = vmatpush1.bf16.msra.mxu0 %v11567
    %11697 = vmatprep.subr.bf16.mxu0 %v11564
    %11698 = vmatpush1.bf16.msra.mxu0 %v11563
    %11699 = vmatprep.subr.bf16.mxu0 %v11560
    %11700 = vmatpush1.bf16.msra.mxu0 %v11559
    %11701 = vmatprep.subr.bf16.mxu0 %v11556
    %11702 = vmatpush1.bf16.msra.mxu0 %v11555
    %11703 = vmatprep.subr.bf16.mxu0 %v11552
    %11704 = vmatpush1.bf16.msra.mxu0 %v11551
    %11705 = vmatprep.subr.bf16.mxu0 %v11548
    %11706 = vmatpush1.bf16.msra.mxu0 %v11547
    %11707 = vmatprep.subr.bf16.mxu0 %v11544
    %11708 = vmatpush1.bf16.msra.mxu0 %v11543
    %11709 = vmatprep.subr.bf16.mxu0 %v11540
    %11710 = vmatpush1.bf16.msra.mxu0 %v11539
    %11711 = vmatprep.subr.bf16.mxu0 0
    %11712 = vmatpush2.bf16.msra.mxu0 0
    %11713 = vmatprep.subr.bf16.mxu0 0
    %11714 = vmatpush2.bf16.msra.mxu0 0
    %11715 = vmatprep.subr.bf16.mxu0 %v11592
    %11716 = vmatpush2.bf16.msra.mxu0 %v11591
    %11717 = vmatprep.subr.bf16.mxu0 %v11588
    %11718 = vmatpush2.bf16.msra.mxu0 %v11587
    %11719 = vmatprep.subr.bf16.mxu0 %v11584
    %11720 = vmatpush2.bf16.msra.mxu0 %v11583
    %11721 = vmatprep.subr.bf16.mxu0 %v11580
    %11722 = vmatpush2.bf16.msra.mxu0 %v11579
    %11723 = vmatprep.subr.bf16.mxu0 %v11576
    %11724 = vmatpush2.bf16.msra.mxu0 %v11575
    %11725 = vmatprep.subr.bf16.mxu0 %v11572
    %11726 = vmatpush2.bf16.msra.mxu0 %v11571
    %11727 = vmatprep.mubr.bf16.mxu0 %v11650
    %11728 = vmatmul.mubr.bf16.gmra.mxu0 %v10018
    %v11729 = vpop.f32.mrf.mxu0
    %v11730 = vadd.f32 0.0, %v11729
    %v11731 = vpop.f32.mrf.mxu0
    %v11732 = vadd.f32 0.0, %v11731
    %v11733 = vpop.f32.mrf.mxu0
    %v11734 = vadd.f32 0.0, %v11733
    %v11735 = vpop.f32.mrf.mxu0
    %v11736 = vadd.f32 0.0, %v11735
    %11737 = vdwg.mxu0
    %v11738 = vadd.f32 %v11304, %v11687
    %v11739 = vadd.f32 %v11305, %v11689
    %v11740 = vadd.f32 %v11306, %v11730
    %v11741 = vadd.f32 %v11307, %v11732
    %v11742 = vadd.f32 %v11308, %v11691
    %v11743 = vadd.f32 %v11309, %v11693
    %v11744 = vadd.f32 %v11310, %v11734
    %v11745 = vadd.f32 %v11311, %v11736
    %s11746 = scalar_lea.vmem [#allocation9], 1792
    %v11747 = vld [vmem:[%s11746] sm:$0xff]
    %v11748 = vld [vmem:[%s11746 + $0x8] sm:$0xff]
    %v11749 = vld [vmem:[%s11746 + $0x10] sm:$0xff]
    %v11750 = vld [vmem:[%s11746 + $0x18] sm:$0xff]
    %v11751 = vld [vmem:[%s11746 + $0x20] sm:$0xff]
    %v11752 = vld [vmem:[%s11746 + $0x28] sm:$0xff]
    %v11753 = vld [vmem:[%s11746 + $0x30] sm:$0xff]
    %v11754 = vld [vmem:[%s11746 + $0x38] sm:$0xff]
    %v11755 = vld [vmem:[%s11746 + $0x40] sm:$0xff]
    %v11756 = vld [vmem:[%s11746 + $0x48] sm:$0xff]
    %v11757 = vld [vmem:[%s11746 + $0x50] sm:$0xff]
    %v11758 = vld [vmem:[%s11746 + $0x58] sm:$0xff]
    %v11759 = vld [vmem:[%s11746 + $0x60] sm:$0xff]
    %v11760 = vld [vmem:[%s11746 + $0x68] sm:$0xff]
    %v11761 = vld [vmem:[%s11746 + $0x70] sm:$0xff]
    %v11762 = vld [vmem:[%s11746 + $0x78] sm:$0xff]
    %v11763 = vld [vmem:[%s11746 + $0x80] sm:$0xff]
    %v11764 = vld [vmem:[%s11746 + $0x88] sm:$0xff]
    %v11765 = vld [vmem:[%s11746 + $0x90] sm:$0xff]
    %v11766 = vld [vmem:[%s11746 + $0x98] sm:$0xff]
    %v11767 = vld [vmem:[%s11746 + $0xa0] sm:$0xff]
    %v11768 = vld [vmem:[%s11746 + $0xa8] sm:$0xff]
    %v11769 = vld [vmem:[%s11746 + $0xb0] sm:$0xff]
    %v11770 = vld [vmem:[%s11746 + $0xb8] sm:$0xff]
    %v11771 = vld [vmem:[%s11746 + $0xc0] sm:$0xff]
    %v11772 = vld [vmem:[%s11746 + $0xc8] sm:$0xff]
    %v11773 = vld [vmem:[%s11746 + $0xd0] sm:$0xff]
    %v11774 = vld [vmem:[%s11746 + $0xd8] sm:$0xff]
    %v11775 = vld [vmem:[%s11746 + $0xe0] sm:$0xff]
    %v11776 = vld [vmem:[%s11746 + $0xe8] sm:$0xff]
    %v11777 = vld [vmem:[%s11746 + $0xf0] sm:$0xff]
    %v11778 = vld [vmem:[%s11746 + $0xf8] sm:$0xff]
    %v11779 = vld [vmem:[%s11746 + $0x100] sm:$0xff]
    %v11780 = vld [vmem:[%s11746 + $0x108] sm:$0xff]
    %v11781 = vld [vmem:[%s11746 + $0x110] sm:$0xff]
    %v11782 = vld [vmem:[%s11746 + $0x118] sm:$0xff]
    %v11783 = vld [vmem:[%s11746 + $0x120] sm:$0xff]
    %v11784 = vld [vmem:[%s11746 + $0x128] sm:$0xff]
    %v11785 = vld [vmem:[%s11746 + $0x130] sm:$0xff]
    %v11786 = vld [vmem:[%s11746 + $0x138] sm:$0xff]
    %v11787 = vld [vmem:[%s11746 + $0x140] sm:$0xff]
    %v11788 = vld [vmem:[%s11746 + $0x148] sm:$0xff]
    %v11789 = vld [vmem:[%s11746 + $0x150] sm:$0xff]
    %v11790 = vld [vmem:[%s11746 + $0x158] sm:$0xff]
    %v11791 = vld [vmem:[%s11746 + $0x160] sm:$0xff]
    %v11792 = vld [vmem:[%s11746 + $0x168] sm:$0xff]
    %v11793 = vld [vmem:[%s11746 + $0x170] sm:$0xff]
    %v11794 = vld [vmem:[%s11746 + $0x178] sm:$0xff]
    %v11795 = vld [vmem:[%s11746 + $0x180] sm:$0xff]
    %v11796 = vld [vmem:[%s11746 + $0x188] sm:$0xff]
    %v11797 = vld [vmem:[%s11746 + $0x190] sm:$0xff]
    %v11798 = vld [vmem:[%s11746 + $0x198] sm:$0xff]
    %v11799 = vld [vmem:[%s11746 + $0x1a0] sm:$0xff]
    %v11800 = vld [vmem:[%s11746 + $0x1a8] sm:$0xff]
    %v11801 = vld [vmem:[%s11746 + $0x1b0] sm:$0xff]
    %v11802 = vld [vmem:[%s11746 + $0x1b8] sm:$0xff]
    %v11859 = vunpack.c.l.b16 %v11747
    %v11860 = vunpack.c.h.b16 %v11747
    %v11861 = vunpack.c.l.b16 %v11748
    %v11862 = vunpack.c.h.b16 %v11748
    %v11863 = vunpack.c.l.b16 %v11749
    %v11864 = vunpack.c.h.b16 %v11749
    %v11865 = vunpack.c.l.b16 %v11750
    %v11866 = vunpack.c.h.b16 %v11750
    %v11867 = vunpack.c.l.b16 %v11751
    %v11868 = vunpack.c.h.b16 %v11751
    %v11869 = vunpack.c.l.b16 %v11752
    %v11870 = vunpack.c.h.b16 %v11752
    %v11871 = vunpack.c.l.b16 %v11753
    %v11872 = vunpack.c.h.b16 %v11753
    %v11873 = vunpack.c.l.b16 %v11754
    %v11874 = vunpack.c.h.b16 %v11754
    %v11875 = vunpack.c.l.b16 %v11755
    %v11876 = vunpack.c.h.b16 %v11755
    %v11877 = vunpack.c.l.b16 %v11756
    %v11878 = vunpack.c.h.b16 %v11756
    %v11879 = vunpack.c.l.b16 %v11757
    %v11880 = vunpack.c.h.b16 %v11757
    %v11881 = vunpack.c.l.b16 %v11758
    %v11882 = vunpack.c.h.b16 %v11758
    %v11883 = vunpack.c.l.b16 %v11759
    %v11884 = vunpack.c.h.b16 %v11759
    %v11885 = vunpack.c.l.b16 %v11760
    %v11886 = vunpack.c.h.b16 %v11760
    %v11887 = vunpack.c.l.b16 %v11761
    %v11888 = vunpack.c.h.b16 %v11761
    %v11889 = vunpack.c.l.b16 %v11762
    %v11890 = vunpack.c.h.b16 %v11762
    %v11891 = vunpack.c.l.b16 %v11763
    %v11892 = vunpack.c.h.b16 %v11763
    %v11893 = vunpack.c.l.b16 %v11764
    %v11894 = vunpack.c.h.b16 %v11764
    %v11895 = vunpack.c.l.b16 %v11765
    %v11896 = vunpack.c.h.b16 %v11765
    %v11897 = vunpack.c.l.b16 %v11766
    %v11898 = vunpack.c.h.b16 %v11766
    %v11899 = vunpack.c.l.b16 %v11767
    %v11900 = vunpack.c.h.b16 %v11767
    %v11901 = vunpack.c.l.b16 %v11768
    %v11902 = vunpack.c.h.b16 %v11768
    %v11903 = vunpack.c.l.b16 %v11769
    %v11904 = vunpack.c.h.b16 %v11769
    %v11905 = vunpack.c.l.b16 %v11770
    %v11906 = vunpack.c.h.b16 %v11770
    %v11907 = vunpack.c.l.b16 %v11771
    %v11908 = vunpack.c.h.b16 %v11771
    %v11909 = vunpack.c.l.b16 %v11772
    %v11910 = vunpack.c.h.b16 %v11772
    %v11911 = vunpack.c.l.b16 %v11773
    %v11912 = vunpack.c.h.b16 %v11773
    %v11913 = vunpack.c.l.b16 %v11774
    %v11914 = vunpack.c.h.b16 %v11774
    %v11915 = vunpack.c.l.b16 %v11775
    %v11916 = vunpack.c.h.b16 %v11775
    %v11917 = vunpack.c.l.b16 %v11776
    %v11918 = vunpack.c.h.b16 %v11776
    %v11919 = vunpack.c.l.b16 %v11777
    %v11920 = vunpack.c.h.b16 %v11777
    %v11921 = vunpack.c.l.b16 %v11778
    %v11922 = vunpack.c.h.b16 %v11778
    %v11923 = vunpack.c.l.b16 %v11779
    %v11924 = vunpack.c.h.b16 %v11779
    %v11925 = vunpack.c.l.b16 %v11780
    %v11926 = vunpack.c.h.b16 %v11780
    %v11927 = vunpack.c.l.b16 %v11781
    %v11928 = vunpack.c.h.b16 %v11781
    %v11929 = vunpack.c.l.b16 %v11782
    %v11930 = vunpack.c.h.b16 %v11782
    %v11931 = vunpack.c.l.b16 %v11783
    %v11932 = vunpack.c.h.b16 %v11783
    %v11933 = vunpack.c.l.b16 %v11784
    %v11934 = vunpack.c.h.b16 %v11784
    %v11935 = vunpack.c.l.b16 %v11785
    %v11936 = vunpack.c.h.b16 %v11785
    %v11937 = vunpack.c.l.b16 %v11786
    %v11938 = vunpack.c.h.b16 %v11786
    %v11939 = vunpack.c.l.b16 %v11787
    %v11940 = vunpack.c.h.b16 %v11787
    %v11941 = vunpack.c.l.b16 %v11788
    %v11942 = vunpack.c.h.b16 %v11788
    %v11943 = vunpack.c.l.b16 %v11789
    %v11944 = vunpack.c.h.b16 %v11789
    %v11945 = vunpack.c.l.b16 %v11790
    %v11946 = vunpack.c.h.b16 %v11790
    %v11947 = vunpack.c.l.b16 %v11791
    %v11948 = vunpack.c.h.b16 %v11791
    %v11949 = vunpack.c.l.b16 %v11792
    %v11950 = vunpack.c.h.b16 %v11792
    %v11951 = vunpack.c.l.b16 %v11793
    %v11952 = vunpack.c.h.b16 %v11793
    %v11953 = vunpack.c.l.b16 %v11794
    %v11954 = vunpack.c.h.b16 %v11794
    %v11955 = vunpack.c.l.b16 %v11795
    %v11956 = vunpack.c.h.b16 %v11795
    %v11957 = vunpack.c.l.b16 %v11796
    %v11958 = vunpack.c.h.b16 %v11796
    %v11959 = vunpack.c.l.b16 %v11797
    %v11960 = vunpack.c.h.b16 %v11797
    %v11961 = vunpack.c.l.b16 %v11798
    %v11962 = vunpack.c.h.b16 %v11798
    %v11963 = vunpack.c.l.b16 %v11799
    %v11964 = vunpack.c.h.b16 %v11799
    %v11965 = vunpack.c.l.b16 %v11800
    %v11966 = vunpack.c.h.b16 %v11800
    %v11967 = vunpack.c.l.b16 %v11801
    %v11968 = vunpack.c.h.b16 %v11801
    %v11969 = vunpack.c.l.b16 %v11802
    %v11970 = vunpack.c.h.b16 %v11802
    %v11971 = vpack.c.b16 %v11863, %v11859
    %v11972 = vpack.c.b16 %v11864, %v11860
    %v11973 = vpack.c.b16 %v11865, %v11861
    %v11974 = vpack.c.b16 %v11866, %v11862
    %v11975 = vpack.c.b16 %v11871, %v11867
    %v11976 = vpack.c.b16 %v11872, %v11868
    %v11977 = vpack.c.b16 %v11873, %v11869
    %v11978 = vpack.c.b16 %v11874, %v11870
    %v11979 = vpack.c.b16 %v11879, %v11875
    %v11980 = vpack.c.b16 %v11880, %v11876
    %v11981 = vpack.c.b16 %v11881, %v11877
    %v11982 = vpack.c.b16 %v11882, %v11878
    %v11983 = vpack.c.b16 %v11887, %v11883
    %v11984 = vpack.c.b16 %v11888, %v11884
    %v11985 = vpack.c.b16 %v11889, %v11885
    %v11986 = vpack.c.b16 %v11890, %v11886
    %v11987 = vpack.c.b16 %v11895, %v11891
    %v11988 = vpack.c.b16 %v11896, %v11892
    %v11989 = vpack.c.b16 %v11897, %v11893
    %v11990 = vpack.c.b16 %v11898, %v11894
    %v11991 = vpack.c.b16 %v11903, %v11899
    %v11992 = vpack.c.b16 %v11904, %v11900
    %v11993 = vpack.c.b16 %v11905, %v11901
    %v11994 = vpack.c.b16 %v11906, %v11902
    %v11995 = vpack.c.b16 %v11911, %v11907
    %v11996 = vpack.c.b16 %v11912, %v11908
    %v11997 = vpack.c.b16 %v11913, %v11909
    %v11998 = vpack.c.b16 %v11914, %v11910
    %v11999 = vpack.c.b16 %v11919, %v11915
    %v12000 = vpack.c.b16 %v11920, %v11916
    %v12001 = vpack.c.b16 %v11921, %v11917
    %v12002 = vpack.c.b16 %v11922, %v11918
    %v12003 = vpack.c.b16 %v11927, %v11923
    %v12004 = vpack.c.b16 %v11928, %v11924
    %v12005 = vpack.c.b16 %v11929, %v11925
    %v12006 = vpack.c.b16 %v11930, %v11926
    %v12007 = vpack.c.b16 %v11935, %v11931
    %v12008 = vpack.c.b16 %v11936, %v11932
    %v12009 = vpack.c.b16 %v11937, %v11933
    %v12010 = vpack.c.b16 %v11938, %v11934
    %v12011 = vpack.c.b16 %v11943, %v11939
    %v12012 = vpack.c.b16 %v11944, %v11940
    %v12013 = vpack.c.b16 %v11945, %v11941
    %v12014 = vpack.c.b16 %v11946, %v11942
    %v12015 = vpack.c.b16 %v11951, %v11947
    %v12016 = vpack.c.b16 %v11952, %v11948
    %v12017 = vpack.c.b16 %v11953, %v11949
    %v12018 = vpack.c.b16 %v11954, %v11950
    %v12019 = vpack.c.b16 %v11959, %v11955
    %v12020 = vpack.c.b16 %v11960, %v11956
    %v12021 = vpack.c.b16 %v11961, %v11957
    %v12022 = vpack.c.b16 %v11962, %v11958
    %v12023 = vpack.c.b16 %v11967, %v11963
    %v12024 = vpack.c.b16 %v11968, %v11964
    %v12025 = vpack.c.b16 %v11969, %v11965
    %v12026 = vpack.c.b16 %v11970, %v11966
    %v12084 = vsel %vm10419, %v10021, 0
    %12086 = vmatprep.subr.bf16.mxu0 %v12000
    %12087 = vmatpush1.bf16.msra.mxu0 %v11999
    %12088 = vmatprep.subr.bf16.mxu0 %v11996
    %12089 = vmatpush1.bf16.msra.mxu0 %v11995
    %12090 = vmatprep.subr.bf16.mxu0 %v11992
    %12091 = vmatpush1.bf16.msra.mxu0 %v11991
    %12092 = vmatprep.subr.bf16.mxu0 %v11988
    %12093 = vmatpush1.bf16.msra.mxu0 %v11987
    %12094 = vmatprep.subr.bf16.mxu0 %v11984
    %12095 = vmatpush1.bf16.msra.mxu0 %v11983
    %12096 = vmatprep.subr.bf16.mxu0 %v11980
    %12097 = vmatpush1.bf16.msra.mxu0 %v11979
    %12098 = vmatprep.subr.bf16.mxu0 %v11976
    %12099 = vmatpush1.bf16.msra.mxu0 %v11975
    %12100 = vmatprep.subr.bf16.mxu0 %v11972
    %12101 = vmatpush1.bf16.msra.mxu0 %v11971
    %12102 = vmatprep.subr.bf16.mxu0 0
    %12103 = vmatpush2.bf16.msra.mxu0 0
    %12104 = vmatprep.subr.bf16.mxu0 0
    %12105 = vmatpush2.bf16.msra.mxu0 0
    %12106 = vmatprep.subr.bf16.mxu0 %v12024
    %12107 = vmatpush2.bf16.msra.mxu0 %v12023
    %12108 = vmatprep.subr.bf16.mxu0 %v12020
    %12109 = vmatpush2.bf16.msra.mxu0 %v12019
    %12110 = vmatprep.subr.bf16.mxu0 %v12016
    %12111 = vmatpush2.bf16.msra.mxu0 %v12015
    %12112 = vmatprep.subr.bf16.mxu0 %v12012
    %12113 = vmatpush2.bf16.msra.mxu0 %v12011
    %12114 = vmatprep.subr.bf16.mxu0 %v12008
    %12115 = vmatpush2.bf16.msra.mxu0 %v12007
    %12116 = vmatprep.subr.bf16.mxu0 %v12004
    %12117 = vmatpush2.bf16.msra.mxu0 %v12003
    %12118 = vmatprep.mubr.bf16.mxu0 %v12084
    %12119 = vmatmul.mubr.bf16.gmra.mxu0 %v10020
    %v12120 = vpop.f32.mrf.mxu0
    %v12121 = vadd.f32 0.0, %v12120
    %v12122 = vpop.f32.mrf.mxu0
    %v12123 = vadd.f32 0.0, %v12122
    %v12124 = vpop.f32.mrf.mxu0
    %v12125 = vadd.f32 0.0, %v12124
    %v12126 = vpop.f32.mrf.mxu0
    %v12127 = vadd.f32 0.0, %v12126
    %12128 = vdwg.mxu0
    %12129 = vmatprep.subr.bf16.mxu0 %v12002
    %12130 = vmatpush1.bf16.msra.mxu0 %v12001
    %12131 = vmatprep.subr.bf16.mxu0 %v11998
    %12132 = vmatpush1.bf16.msra.mxu0 %v11997
    %12133 = vmatprep.subr.bf16.mxu0 %v11994
    %12134 = vmatpush1.bf16.msra.mxu0 %v11993
    %12135 = vmatprep.subr.bf16.mxu0 %v11990
    %12136 = vmatpush1.bf16.msra.mxu0 %v11989
    %12137 = vmatprep.subr.bf16.mxu0 %v11986
    %12138 = vmatpush1.bf16.msra.mxu0 %v11985
    %12139 = vmatprep.subr.bf16.mxu0 %v11982
    %12140 = vmatpush1.bf16.msra.mxu0 %v11981
    %12141 = vmatprep.subr.bf16.mxu0 %v11978
    %12142 = vmatpush1.bf16.msra.mxu0 %v11977
    %12143 = vmatprep.subr.bf16.mxu0 %v11974
    %12144 = vmatpush1.bf16.msra.mxu0 %v11973
    %12145 = vmatprep.subr.bf16.mxu0 0
    %12146 = vmatpush2.bf16.msra.mxu0 0
    %12147 = vmatprep.subr.bf16.mxu0 0
    %12148 = vmatpush2.bf16.msra.mxu0 0
    %12149 = vmatprep.subr.bf16.mxu0 %v12026
    %12150 = vmatpush2.bf16.msra.mxu0 %v12025
    %12151 = vmatprep.subr.bf16.mxu0 %v12022
    %12152 = vmatpush2.bf16.msra.mxu0 %v12021
    %12153 = vmatprep.subr.bf16.mxu0 %v12018
    %12154 = vmatpush2.bf16.msra.mxu0 %v12017
    %12155 = vmatprep.subr.bf16.mxu0 %v12014
    %12156 = vmatpush2.bf16.msra.mxu0 %v12013
    %12157 = vmatprep.subr.bf16.mxu0 %v12010
    %12158 = vmatpush2.bf16.msra.mxu0 %v12009
    %12159 = vmatprep.subr.bf16.mxu0 %v12006
    %12160 = vmatpush2.bf16.msra.mxu0 %v12005
    %12161 = vmatprep.mubr.bf16.mxu0 %v12084
    %12162 = vmatmul.mubr.bf16.gmra.mxu0 %v10020
    %v12163 = vpop.f32.mrf.mxu0
    %v12164 = vadd.f32 0.0, %v12163
    %v12165 = vpop.f32.mrf.mxu0
    %v12166 = vadd.f32 0.0, %v12165
    %v12167 = vpop.f32.mrf.mxu0
    %v12168 = vadd.f32 0.0, %v12167
    %v12169 = vpop.f32.mrf.mxu0
    %v12170 = vadd.f32 0.0, %v12169
    %12171 = vdwg.mxu0
    %v12172 = vadd.f32 %v11738, %v12121
    %v12173 = vadd.f32 %v11739, %v12123
    %v12174 = vadd.f32 %v11740, %v12164
    %v12175 = vadd.f32 %v11741, %v12166
    %v12176 = vadd.f32 %v11742, %v12125
    %v12177 = vadd.f32 %v11743, %v12127
    %v12178 = vadd.f32 %v11744, %v12168
    %v12179 = vadd.f32 %v11745, %v12170
    %s12180 = scalar_lea.vmem [#allocation9], 2240
    %v12181 = vld [vmem:[%s12180] sm:$0xff]
    %v12182 = vld [vmem:[%s12180 + $0x8] sm:$0xff]
    %v12183 = vld [vmem:[%s12180 + $0x10] sm:$0xff]
    %v12184 = vld [vmem:[%s12180 + $0x18] sm:$0xff]
    %v12185 = vld [vmem:[%s12180 + $0x20] sm:$0xff]
    %v12186 = vld [vmem:[%s12180 + $0x28] sm:$0xff]
    %v12187 = vld [vmem:[%s12180 + $0x30] sm:$0xff]
    %v12188 = vld [vmem:[%s12180 + $0x38] sm:$0xff]
    %v12189 = vld [vmem:[%s12180 + $0x40] sm:$0xff]
    %v12190 = vld [vmem:[%s12180 + $0x48] sm:$0xff]
    %v12191 = vld [vmem:[%s12180 + $0x50] sm:$0xff]
    %v12192 = vld [vmem:[%s12180 + $0x58] sm:$0xff]
    %v12193 = vld [vmem:[%s12180 + $0x60] sm:$0xff]
    %v12194 = vld [vmem:[%s12180 + $0x68] sm:$0xff]
    %v12195 = vld [vmem:[%s12180 + $0x70] sm:$0xff]
    %v12196 = vld [vmem:[%s12180 + $0x78] sm:$0xff]
    %v12197 = vld [vmem:[%s12180 + $0x80] sm:$0xff]
    %v12198 = vld [vmem:[%s12180 + $0x88] sm:$0xff]
    %v12199 = vld [vmem:[%s12180 + $0x90] sm:$0xff]
    %v12200 = vld [vmem:[%s12180 + $0x98] sm:$0xff]
    %v12201 = vld [vmem:[%s12180 + $0xa0] sm:$0xff]
    %v12202 = vld [vmem:[%s12180 + $0xa8] sm:$0xff]
    %v12203 = vld [vmem:[%s12180 + $0xb0] sm:$0xff]
    %v12204 = vld [vmem:[%s12180 + $0xb8] sm:$0xff]
    %v12205 = vld [vmem:[%s12180 + $0xc0] sm:$0xff]
    %v12206 = vld [vmem:[%s12180 + $0xc8] sm:$0xff]
    %v12207 = vld [vmem:[%s12180 + $0xd0] sm:$0xff]
    %v12208 = vld [vmem:[%s12180 + $0xd8] sm:$0xff]
    %v12209 = vld [vmem:[%s12180 + $0xe0] sm:$0xff]
    %v12210 = vld [vmem:[%s12180 + $0xe8] sm:$0xff]
    %v12211 = vld [vmem:[%s12180 + $0xf0] sm:$0xff]
    %v12212 = vld [vmem:[%s12180 + $0xf8] sm:$0xff]
    %v12213 = vld [vmem:[%s12180 + $0x100] sm:$0xff]
    %v12214 = vld [vmem:[%s12180 + $0x108] sm:$0xff]
    %v12215 = vld [vmem:[%s12180 + $0x110] sm:$0xff]
    %v12216 = vld [vmem:[%s12180 + $0x118] sm:$0xff]
    %v12217 = vld [vmem:[%s12180 + $0x120] sm:$0xff]
    %v12218 = vld [vmem:[%s12180 + $0x128] sm:$0xff]
    %v12219 = vld [vmem:[%s12180 + $0x130] sm:$0xff]
    %v12220 = vld [vmem:[%s12180 + $0x138] sm:$0xff]
    %v12221 = vld [vmem:[%s12180 + $0x140] sm:$0xff]
    %v12222 = vld [vmem:[%s12180 + $0x148] sm:$0xff]
    %v12223 = vld [vmem:[%s12180 + $0x150] sm:$0xff]
    %v12224 = vld [vmem:[%s12180 + $0x158] sm:$0xff]
    %v12225 = vld [vmem:[%s12180 + $0x160] sm:$0xff]
    %v12226 = vld [vmem:[%s12180 + $0x168] sm:$0xff]
    %v12227 = vld [vmem:[%s12180 + $0x170] sm:$0xff]
    %v12228 = vld [vmem:[%s12180 + $0x178] sm:$0xff]
    %v12229 = vld [vmem:[%s12180 + $0x180] sm:$0xff]
    %v12230 = vld [vmem:[%s12180 + $0x188] sm:$0xff]
    %v12231 = vld [vmem:[%s12180 + $0x190] sm:$0xff]
    %v12232 = vld [vmem:[%s12180 + $0x198] sm:$0xff]
    %v12233 = vld [vmem:[%s12180 + $0x1a0] sm:$0xff]
    %v12234 = vld [vmem:[%s12180 + $0x1a8] sm:$0xff]
    %v12235 = vld [vmem:[%s12180 + $0x1b0] sm:$0xff]
    %v12236 = vld [vmem:[%s12180 + $0x1b8] sm:$0xff]
    %v12293 = vunpack.c.l.b16 %v12181
    %v12294 = vunpack.c.h.b16 %v12181
    %v12295 = vunpack.c.l.b16 %v12182
    %v12296 = vunpack.c.h.b16 %v12182
    %v12297 = vunpack.c.l.b16 %v12183
    %v12298 = vunpack.c.h.b16 %v12183
    %v12299 = vunpack.c.l.b16 %v12184
    %v12300 = vunpack.c.h.b16 %v12184
    %v12301 = vunpack.c.l.b16 %v12185
    %v12302 = vunpack.c.h.b16 %v12185
    %v12303 = vunpack.c.l.b16 %v12186
    %v12304 = vunpack.c.h.b16 %v12186
    %v12305 = vunpack.c.l.b16 %v12187
    %v12306 = vunpack.c.h.b16 %v12187
    %v12307 = vunpack.c.l.b16 %v12188
    %v12308 = vunpack.c.h.b16 %v12188
    %v12309 = vunpack.c.l.b16 %v12189
    %v12310 = vunpack.c.h.b16 %v12189
    %v12311 = vunpack.c.l.b16 %v12190
    %v12312 = vunpack.c.h.b16 %v12190
    %v12313 = vunpack.c.l.b16 %v12191
    %v12314 = vunpack.c.h.b16 %v12191
    %v12315 = vunpack.c.l.b16 %v12192
    %v12316 = vunpack.c.h.b16 %v12192
    %v12317 = vunpack.c.l.b16 %v12193
    %v12318 = vunpack.c.h.b16 %v12193
    %v12319 = vunpack.c.l.b16 %v12194
    %v12320 = vunpack.c.h.b16 %v12194
    %v12321 = vunpack.c.l.b16 %v12195
    %v12322 = vunpack.c.h.b16 %v12195
    %v12323 = vunpack.c.l.b16 %v12196
    %v12324 = vunpack.c.h.b16 %v12196
    %v12325 = vunpack.c.l.b16 %v12197
    %v12326 = vunpack.c.h.b16 %v12197
    %v12327 = vunpack.c.l.b16 %v12198
    %v12328 = vunpack.c.h.b16 %v12198
    %v12329 = vunpack.c.l.b16 %v12199
    %v12330 = vunpack.c.h.b16 %v12199
    %v12331 = vunpack.c.l.b16 %v12200
    %v12332 = vunpack.c.h.b16 %v12200
    %v12333 = vunpack.c.l.b16 %v12201
    %v12334 = vunpack.c.h.b16 %v12201
    %v12335 = vunpack.c.l.b16 %v12202
    %v12336 = vunpack.c.h.b16 %v12202
    %v12337 = vunpack.c.l.b16 %v12203
    %v12338 = vunpack.c.h.b16 %v12203
    %v12339 = vunpack.c.l.b16 %v12204
    %v12340 = vunpack.c.h.b16 %v12204
    %v12341 = vunpack.c.l.b16 %v12205
    %v12342 = vunpack.c.h.b16 %v12205
    %v12343 = vunpack.c.l.b16 %v12206
    %v12344 = vunpack.c.h.b16 %v12206
    %v12345 = vunpack.c.l.b16 %v12207
    %v12346 = vunpack.c.h.b16 %v12207
    %v12347 = vunpack.c.l.b16 %v12208
    %v12348 = vunpack.c.h.b16 %v12208
    %v12349 = vunpack.c.l.b16 %v12209
    %v12350 = vunpack.c.h.b16 %v12209
    %v12351 = vunpack.c.l.b16 %v12210
    %v12352 = vunpack.c.h.b16 %v12210
    %v12353 = vunpack.c.l.b16 %v12211
    %v12354 = vunpack.c.h.b16 %v12211
    %v12355 = vunpack.c.l.b16 %v12212
    %v12356 = vunpack.c.h.b16 %v12212
    %v12357 = vunpack.c.l.b16 %v12213
    %v12358 = vunpack.c.h.b16 %v12213
    %v12359 = vunpack.c.l.b16 %v12214
    %v12360 = vunpack.c.h.b16 %v12214
    %v12361 = vunpack.c.l.b16 %v12215
    %v12362 = vunpack.c.h.b16 %v12215
    %v12363 = vunpack.c.l.b16 %v12216
    %v12364 = vunpack.c.h.b16 %v12216
    %v12365 = vunpack.c.l.b16 %v12217
    %v12366 = vunpack.c.h.b16 %v12217
    %v12367 = vunpack.c.l.b16 %v12218
    %v12368 = vunpack.c.h.b16 %v12218
    %v12369 = vunpack.c.l.b16 %v12219
    %v12370 = vunpack.c.h.b16 %v12219
    %v12371 = vunpack.c.l.b16 %v12220
    %v12372 = vunpack.c.h.b16 %v12220
    %v12373 = vunpack.c.l.b16 %v12221
    %v12374 = vunpack.c.h.b16 %v12221
    %v12375 = vunpack.c.l.b16 %v12222
    %v12376 = vunpack.c.h.b16 %v12222
    %v12377 = vunpack.c.l.b16 %v12223
    %v12378 = vunpack.c.h.b16 %v12223
    %v12379 = vunpack.c.l.b16 %v12224
    %v12380 = vunpack.c.h.b16 %v12224
    %v12381 = vunpack.c.l.b16 %v12225
    %v12382 = vunpack.c.h.b16 %v12225
    %v12383 = vunpack.c.l.b16 %v12226
    %v12384 = vunpack.c.h.b16 %v12226
    %v12385 = vunpack.c.l.b16 %v12227
    %v12386 = vunpack.c.h.b16 %v12227
    %v12387 = vunpack.c.l.b16 %v12228
    %v12388 = vunpack.c.h.b16 %v12228
    %v12389 = vunpack.c.l.b16 %v12229
    %v12390 = vunpack.c.h.b16 %v12229
    %v12391 = vunpack.c.l.b16 %v12230
    %v12392 = vunpack.c.h.b16 %v12230
    %v12393 = vunpack.c.l.b16 %v12231
    %v12394 = vunpack.c.h.b16 %v12231
    %v12395 = vunpack.c.l.b16 %v12232
    %v12396 = vunpack.c.h.b16 %v12232
    %v12397 = vunpack.c.l.b16 %v12233
    %v12398 = vunpack.c.h.b16 %v12233
    %v12399 = vunpack.c.l.b16 %v12234
    %v12400 = vunpack.c.h.b16 %v12234
    %v12401 = vunpack.c.l.b16 %v12235
    %v12402 = vunpack.c.h.b16 %v12235
    %v12403 = vunpack.c.l.b16 %v12236
    %v12404 = vunpack.c.h.b16 %v12236
    %v12405 = vpack.c.b16 %v12297, %v12293
    %v12406 = vpack.c.b16 %v12298, %v12294
    %v12407 = vpack.c.b16 %v12299, %v12295
    %v12408 = vpack.c.b16 %v12300, %v12296
    %v12409 = vpack.c.b16 %v12305, %v12301
    %v12410 = vpack.c.b16 %v12306, %v12302
    %v12411 = vpack.c.b16 %v12307, %v12303
    %v12412 = vpack.c.b16 %v12308, %v12304
    %v12413 = vpack.c.b16 %v12313, %v12309
    %v12414 = vpack.c.b16 %v12314, %v12310
    %v12415 = vpack.c.b16 %v12315, %v12311
    %v12416 = vpack.c.b16 %v12316, %v12312
    %v12417 = vpack.c.b16 %v12321, %v12317
    %v12418 = vpack.c.b16 %v12322, %v12318
    %v12419 = vpack.c.b16 %v12323, %v12319
    %v12420 = vpack.c.b16 %v12324, %v12320
    %v12421 = vpack.c.b16 %v12329, %v12325
    %v12422 = vpack.c.b16 %v12330, %v12326
    %v12423 = vpack.c.b16 %v12331, %v12327
    %v12424 = vpack.c.b16 %v12332, %v12328
    %v12425 = vpack.c.b16 %v12337, %v12333
    %v12426 = vpack.c.b16 %v12338, %v12334
    %v12427 = vpack.c.b16 %v12339, %v12335
    %v12428 = vpack.c.b16 %v12340, %v12336
    %v12429 = vpack.c.b16 %v12345, %v12341
    %v12430 = vpack.c.b16 %v12346, %v12342
    %v12431 = vpack.c.b16 %v12347, %v12343
    %v12432 = vpack.c.b16 %v12348, %v12344
    %v12433 = vpack.c.b16 %v12353, %v12349
    %v12434 = vpack.c.b16 %v12354, %v12350
    %v12435 = vpack.c.b16 %v12355, %v12351
    %v12436 = vpack.c.b16 %v12356, %v12352
    %v12437 = vpack.c.b16 %v12361, %v12357
    %v12438 = vpack.c.b16 %v12362, %v12358
    %v12439 = vpack.c.b16 %v12363, %v12359
    %v12440 = vpack.c.b16 %v12364, %v12360
    %v12441 = vpack.c.b16 %v12369, %v12365
    %v12442 = vpack.c.b16 %v12370, %v12366
    %v12443 = vpack.c.b16 %v12371, %v12367
    %v12444 = vpack.c.b16 %v12372, %v12368
    %v12445 = vpack.c.b16 %v12377, %v12373
    %v12446 = vpack.c.b16 %v12378, %v12374
    %v12447 = vpack.c.b16 %v12379, %v12375
    %v12448 = vpack.c.b16 %v12380, %v12376
    %v12449 = vpack.c.b16 %v12385, %v12381
    %v12450 = vpack.c.b16 %v12386, %v12382
    %v12451 = vpack.c.b16 %v12387, %v12383
    %v12452 = vpack.c.b16 %v12388, %v12384
    %v12453 = vpack.c.b16 %v12393, %v12389
    %v12454 = vpack.c.b16 %v12394, %v12390
    %v12455 = vpack.c.b16 %v12395, %v12391
    %v12456 = vpack.c.b16 %v12396, %v12392
    %v12457 = vpack.c.b16 %v12401, %v12397
    %v12458 = vpack.c.b16 %v12402, %v12398
    %v12459 = vpack.c.b16 %v12403, %v12399
    %v12460 = vpack.c.b16 %v12404, %v12400
    %v12518 = vsel %vm10419, %v10023, 0
    %12520 = vmatprep.subr.bf16.mxu0 %v12434
    %12521 = vmatpush1.bf16.msra.mxu0 %v12433
    %12522 = vmatprep.subr.bf16.mxu0 %v12430
    %12523 = vmatpush1.bf16.msra.mxu0 %v12429
    %12524 = vmatprep.subr.bf16.mxu0 %v12426
    %12525 = vmatpush1.bf16.msra.mxu0 %v12425
    %12526 = vmatprep.subr.bf16.mxu0 %v12422
    %12527 = vmatpush1.bf16.msra.mxu0 %v12421
    %12528 = vmatprep.subr.bf16.mxu0 %v12418
    %12529 = vmatpush1.bf16.msra.mxu0 %v12417
    %12530 = vmatprep.subr.bf16.mxu0 %v12414
    %12531 = vmatpush1.bf16.msra.mxu0 %v12413
    %12532 = vmatprep.subr.bf16.mxu0 %v12410
    %12533 = vmatpush1.bf16.msra.mxu0 %v12409
    %12534 = vmatprep.subr.bf16.mxu0 %v12406
    %12535 = vmatpush1.bf16.msra.mxu0 %v12405
    %12536 = vmatprep.subr.bf16.mxu0 0
    %12537 = vmatpush2.bf16.msra.mxu0 0
    %12538 = vmatprep.subr.bf16.mxu0 0
    %12539 = vmatpush2.bf16.msra.mxu0 0
    %12540 = vmatprep.subr.bf16.mxu0 %v12458
    %12541 = vmatpush2.bf16.msra.mxu0 %v12457
    %12542 = vmatprep.subr.bf16.mxu0 %v12454
    %12543 = vmatpush2.bf16.msra.mxu0 %v12453
    %12544 = vmatprep.subr.bf16.mxu0 %v12450
    %12545 = vmatpush2.bf16.msra.mxu0 %v12449
    %12546 = vmatprep.subr.bf16.mxu0 %v12446
    %12547 = vmatpush2.bf16.msra.mxu0 %v12445
    %12548 = vmatprep.subr.bf16.mxu0 %v12442
    %12549 = vmatpush2.bf16.msra.mxu0 %v12441
    %12550 = vmatprep.subr.bf16.mxu0 %v12438
    %12551 = vmatpush2.bf16.msra.mxu0 %v12437
    %12552 = vmatprep.mubr.bf16.mxu0 %v12518
    %12553 = vmatmul.mubr.bf16.gmra.mxu0 %v10022
    %v12554 = vpop.f32.mrf.mxu0
    %v12555 = vadd.f32 0.0, %v12554
    %v12556 = vpop.f32.mrf.mxu0
    %v12557 = vadd.f32 0.0, %v12556
    %v12558 = vpop.f32.mrf.mxu0
    %v12559 = vadd.f32 0.0, %v12558
    %v12560 = vpop.f32.mrf.mxu0
    %v12561 = vadd.f32 0.0, %v12560
    %12562 = vdwg.mxu0
    %12563 = vmatprep.subr.bf16.mxu0 %v12436
    %12564 = vmatpush1.bf16.msra.mxu0 %v12435
    %12565 = vmatprep.subr.bf16.mxu0 %v12432
    %12566 = vmatpush1.bf16.msra.mxu0 %v12431
    %12567 = vmatprep.subr.bf16.mxu0 %v12428
    %12568 = vmatpush1.bf16.msra.mxu0 %v12427
    %12569 = vmatprep.subr.bf16.mxu0 %v12424
    %12570 = vmatpush1.bf16.msra.mxu0 %v12423
    %12571 = vmatprep.subr.bf16.mxu0 %v12420
    %12572 = vmatpush1.bf16.msra.mxu0 %v12419
    %12573 = vmatprep.subr.bf16.mxu0 %v12416
    %12574 = vmatpush1.bf16.msra.mxu0 %v12415
    %12575 = vmatprep.subr.bf16.mxu0 %v12412
    %12576 = vmatpush1.bf16.msra.mxu0 %v12411
    %12577 = vmatprep.subr.bf16.mxu0 %v12408
    %12578 = vmatpush1.bf16.msra.mxu0 %v12407
    %12579 = vmatprep.subr.bf16.mxu0 0
    %12580 = vmatpush2.bf16.msra.mxu0 0
    %12581 = vmatprep.subr.bf16.mxu0 0
    %12582 = vmatpush2.bf16.msra.mxu0 0
    %12583 = vmatprep.subr.bf16.mxu0 %v12460
    %12584 = vmatpush2.bf16.msra.mxu0 %v12459
    %12585 = vmatprep.subr.bf16.mxu0 %v12456
    %12586 = vmatpush2.bf16.msra.mxu0 %v12455
    %12587 = vmatprep.subr.bf16.mxu0 %v12452
    %12588 = vmatpush2.bf16.msra.mxu0 %v12451
    %12589 = vmatprep.subr.bf16.mxu0 %v12448
    %12590 = vmatpush2.bf16.msra.mxu0 %v12447
    %12591 = vmatprep.subr.bf16.mxu0 %v12444
    %12592 = vmatpush2.bf16.msra.mxu0 %v12443
    %12593 = vmatprep.subr.bf16.mxu0 %v12440
    %12594 = vmatpush2.bf16.msra.mxu0 %v12439
    %12595 = vmatprep.mubr.bf16.mxu0 %v12518
    %12596 = vmatmul.mubr.bf16.gmra.mxu0 %v10022
    %v12597 = vpop.f32.mrf.mxu0
    %v12598 = vadd.f32 0.0, %v12597
    %v12599 = vpop.f32.mrf.mxu0
    %v12600 = vadd.f32 0.0, %v12599
    %v12601 = vpop.f32.mrf.mxu0
    %v12602 = vadd.f32 0.0, %v12601
    %v12603 = vpop.f32.mrf.mxu0
    %v12604 = vadd.f32 0.0, %v12603
    %12605 = vdwg.mxu0
    %v12606 = vadd.f32 %v12172, %v12555
    %v12607 = vadd.f32 %v12173, %v12557
    %v12608 = vadd.f32 %v12174, %v12598
    %v12609 = vadd.f32 %v12175, %v12600
    %v12610 = vadd.f32 %v12176, %v12559
    %v12611 = vadd.f32 %v12177, %v12561
    %v12612 = vadd.f32 %v12178, %v12602
    %v12613 = vadd.f32 %v12179, %v12604
    %s12614 = scalar_lea.vmem [#allocation9], 2688
    %v12615 = vld [vmem:[%s12614] sm:$0xff]
    %v12616 = vld [vmem:[%s12614 + $0x8] sm:$0xff]
    %v12617 = vld [vmem:[%s12614 + $0x10] sm:$0xff]
    %v12618 = vld [vmem:[%s12614 + $0x18] sm:$0xff]
    %v12619 = vld [vmem:[%s12614 + $0x20] sm:$0xff]
    %v12620 = vld [vmem:[%s12614 + $0x28] sm:$0xff]
    %v12621 = vld [vmem:[%s12614 + $0x30] sm:$0xff]
    %v12622 = vld [vmem:[%s12614 + $0x38] sm:$0xff]
    %v12623 = vld [vmem:[%s12614 + $0x40] sm:$0xff]
    %v12624 = vld [vmem:[%s12614 + $0x48] sm:$0xff]
    %v12625 = vld [vmem:[%s12614 + $0x50] sm:$0xff]
    %v12626 = vld [vmem:[%s12614 + $0x58] sm:$0xff]
    %v12627 = vld [vmem:[%s12614 + $0x60] sm:$0xff]
    %v12628 = vld [vmem:[%s12614 + $0x68] sm:$0xff]
    %v12629 = vld [vmem:[%s12614 + $0x70] sm:$0xff]
    %v12630 = vld [vmem:[%s12614 + $0x78] sm:$0xff]
    %v12631 = vld [vmem:[%s12614 + $0x80] sm:$0xff]
    %v12632 = vld [vmem:[%s12614 + $0x88] sm:$0xff]
    %v12633 = vld [vmem:[%s12614 + $0x90] sm:$0xff]
    %v12634 = vld [vmem:[%s12614 + $0x98] sm:$0xff]
    %v12635 = vld [vmem:[%s12614 + $0xa0] sm:$0xff]
    %v12636 = vld [vmem:[%s12614 + $0xa8] sm:$0xff]
    %v12637 = vld [vmem:[%s12614 + $0xb0] sm:$0xff]
    %v12638 = vld [vmem:[%s12614 + $0xb8] sm:$0xff]
    %v12639 = vld [vmem:[%s12614 + $0xc0] sm:$0xff]
    %v12640 = vld [vmem:[%s12614 + $0xc8] sm:$0xff]
    %v12641 = vld [vmem:[%s12614 + $0xd0] sm:$0xff]
    %v12642 = vld [vmem:[%s12614 + $0xd8] sm:$0xff]
    %v12643 = vld [vmem:[%s12614 + $0xe0] sm:$0xff]
    %v12644 = vld [vmem:[%s12614 + $0xe8] sm:$0xff]
    %v12645 = vld [vmem:[%s12614 + $0xf0] sm:$0xff]
    %v12646 = vld [vmem:[%s12614 + $0xf8] sm:$0xff]
    %v12647 = vld [vmem:[%s12614 + $0x100] sm:$0xff]
    %v12648 = vld [vmem:[%s12614 + $0x108] sm:$0xff]
    %v12649 = vld [vmem:[%s12614 + $0x110] sm:$0xff]
    %v12650 = vld [vmem:[%s12614 + $0x118] sm:$0xff]
    %v12651 = vld [vmem:[%s12614 + $0x120] sm:$0xff]
    %v12652 = vld [vmem:[%s12614 + $0x128] sm:$0xff]
    %v12653 = vld [vmem:[%s12614 + $0x130] sm:$0xff]
    %v12654 = vld [vmem:[%s12614 + $0x138] sm:$0xff]
    %v12655 = vld [vmem:[%s12614 + $0x140] sm:$0xff]
    %v12656 = vld [vmem:[%s12614 + $0x148] sm:$0xff]
    %v12657 = vld [vmem:[%s12614 + $0x150] sm:$0xff]
    %v12658 = vld [vmem:[%s12614 + $0x158] sm:$0xff]
    %v12659 = vld [vmem:[%s12614 + $0x160] sm:$0xff]
    %v12660 = vld [vmem:[%s12614 + $0x168] sm:$0xff]
    %v12661 = vld [vmem:[%s12614 + $0x170] sm:$0xff]
    %v12662 = vld [vmem:[%s12614 + $0x178] sm:$0xff]
    %v12663 = vld [vmem:[%s12614 + $0x180] sm:$0xff]
    %v12664 = vld [vmem:[%s12614 + $0x188] sm:$0xff]
    %v12665 = vld [vmem:[%s12614 + $0x190] sm:$0xff]
    %v12666 = vld [vmem:[%s12614 + $0x198] sm:$0xff]
    %v12667 = vld [vmem:[%s12614 + $0x1a0] sm:$0xff]
    %v12668 = vld [vmem:[%s12614 + $0x1a8] sm:$0xff]
    %v12669 = vld [vmem:[%s12614 + $0x1b0] sm:$0xff]
    %v12670 = vld [vmem:[%s12614 + $0x1b8] sm:$0xff]
    %v12727 = vunpack.c.l.b16 %v12615
    %v12728 = vunpack.c.h.b16 %v12615
    %v12729 = vunpack.c.l.b16 %v12616
    %v12730 = vunpack.c.h.b16 %v12616
    %v12731 = vunpack.c.l.b16 %v12617
    %v12732 = vunpack.c.h.b16 %v12617
    %v12733 = vunpack.c.l.b16 %v12618
    %v12734 = vunpack.c.h.b16 %v12618
    %v12735 = vunpack.c.l.b16 %v12619
    %v12736 = vunpack.c.h.b16 %v12619
    %v12737 = vunpack.c.l.b16 %v12620
    %v12738 = vunpack.c.h.b16 %v12620
    %v12739 = vunpack.c.l.b16 %v12621
    %v12740 = vunpack.c.h.b16 %v12621
    %v12741 = vunpack.c.l.b16 %v12622
    %v12742 = vunpack.c.h.b16 %v12622
    %v12743 = vunpack.c.l.b16 %v12623
    %v12744 = vunpack.c.h.b16 %v12623
    %v12745 = vunpack.c.l.b16 %v12624
    %v12746 = vunpack.c.h.b16 %v12624
    %v12747 = vunpack.c.l.b16 %v12625
    %v12748 = vunpack.c.h.b16 %v12625
    %v12749 = vunpack.c.l.b16 %v12626
    %v12750 = vunpack.c.h.b16 %v12626
    %v12751 = vunpack.c.l.b16 %v12627
    %v12752 = vunpack.c.h.b16 %v12627
    %v12753 = vunpack.c.l.b16 %v12628
    %v12754 = vunpack.c.h.b16 %v12628
    %v12755 = vunpack.c.l.b16 %v12629
    %v12756 = vunpack.c.h.b16 %v12629
    %v12757 = vunpack.c.l.b16 %v12630
    %v12758 = vunpack.c.h.b16 %v12630
    %v12759 = vunpack.c.l.b16 %v12631
    %v12760 = vunpack.c.h.b16 %v12631
    %v12761 = vunpack.c.l.b16 %v12632
    %v12762 = vunpack.c.h.b16 %v12632
    %v12763 = vunpack.c.l.b16 %v12633
    %v12764 = vunpack.c.h.b16 %v12633
    %v12765 = vunpack.c.l.b16 %v12634
    %v12766 = vunpack.c.h.b16 %v12634
    %v12767 = vunpack.c.l.b16 %v12635
    %v12768 = vunpack.c.h.b16 %v12635
    %v12769 = vunpack.c.l.b16 %v12636
    %v12770 = vunpack.c.h.b16 %v12636
    %v12771 = vunpack.c.l.b16 %v12637
    %v12772 = vunpack.c.h.b16 %v12637
    %v12773 = vunpack.c.l.b16 %v12638
    %v12774 = vunpack.c.h.b16 %v12638
    %v12775 = vunpack.c.l.b16 %v12639
    %v12776 = vunpack.c.h.b16 %v12639
    %v12777 = vunpack.c.l.b16 %v12640
    %v12778 = vunpack.c.h.b16 %v12640
    %v12779 = vunpack.c.l.b16 %v12641
    %v12780 = vunpack.c.h.b16 %v12641
    %v12781 = vunpack.c.l.b16 %v12642
    %v12782 = vunpack.c.h.b16 %v12642
    %v12783 = vunpack.c.l.b16 %v12643
    %v12784 = vunpack.c.h.b16 %v12643
    %v12785 = vunpack.c.l.b16 %v12644
    %v12786 = vunpack.c.h.b16 %v12644
    %v12787 = vunpack.c.l.b16 %v12645
    %v12788 = vunpack.c.h.b16 %v12645
    %v12789 = vunpack.c.l.b16 %v12646
    %v12790 = vunpack.c.h.b16 %v12646
    %v12791 = vunpack.c.l.b16 %v12647
    %v12792 = vunpack.c.h.b16 %v12647
    %v12793 = vunpack.c.l.b16 %v12648
    %v12794 = vunpack.c.h.b16 %v12648
    %v12795 = vunpack.c.l.b16 %v12649
    %v12796 = vunpack.c.h.b16 %v12649
    %v12797 = vunpack.c.l.b16 %v12650
    %v12798 = vunpack.c.h.b16 %v12650
    %v12799 = vunpack.c.l.b16 %v12651
    %v12800 = vunpack.c.h.b16 %v12651
    %v12801 = vunpack.c.l.b16 %v12652
    %v12802 = vunpack.c.h.b16 %v12652
    %v12803 = vunpack.c.l.b16 %v12653
    %v12804 = vunpack.c.h.b16 %v12653
    %v12805 = vunpack.c.l.b16 %v12654
    %v12806 = vunpack.c.h.b16 %v12654
    %v12807 = vunpack.c.l.b16 %v12655
    %v12808 = vunpack.c.h.b16 %v12655
    %v12809 = vunpack.c.l.b16 %v12656
    %v12810 = vunpack.c.h.b16 %v12656
    %v12811 = vunpack.c.l.b16 %v12657
    %v12812 = vunpack.c.h.b16 %v12657
    %v12813 = vunpack.c.l.b16 %v12658
    %v12814 = vunpack.c.h.b16 %v12658
    %v12815 = vunpack.c.l.b16 %v12659
    %v12816 = vunpack.c.h.b16 %v12659
    %v12817 = vunpack.c.l.b16 %v12660
    %v12818 = vunpack.c.h.b16 %v12660
    %v12819 = vunpack.c.l.b16 %v12661
    %v12820 = vunpack.c.h.b16 %v12661
    %v12821 = vunpack.c.l.b16 %v12662
    %v12822 = vunpack.c.h.b16 %v12662
    %v12823 = vunpack.c.l.b16 %v12663
    %v12824 = vunpack.c.h.b16 %v12663
    %v12825 = vunpack.c.l.b16 %v12664
    %v12826 = vunpack.c.h.b16 %v12664
    %v12827 = vunpack.c.l.b16 %v12665
    %v12828 = vunpack.c.h.b16 %v12665
    %v12829 = vunpack.c.l.b16 %v12666
    %v12830 = vunpack.c.h.b16 %v12666
    %v12831 = vunpack.c.l.b16 %v12667
    %v12832 = vunpack.c.h.b16 %v12667
    %v12833 = vunpack.c.l.b16 %v12668
    %v12834 = vunpack.c.h.b16 %v12668
    %v12835 = vunpack.c.l.b16 %v12669
    %v12836 = vunpack.c.h.b16 %v12669
    %v12837 = vunpack.c.l.b16 %v12670
    %v12838 = vunpack.c.h.b16 %v12670
    %v12839 = vpack.c.b16 %v12731, %v12727
    %v12840 = vpack.c.b16 %v12732, %v12728
    %v12841 = vpack.c.b16 %v12733, %v12729
    %v12842 = vpack.c.b16 %v12734, %v12730
    %v12843 = vpack.c.b16 %v12739, %v12735
    %v12844 = vpack.c.b16 %v12740, %v12736
    %v12845 = vpack.c.b16 %v12741, %v12737
    %v12846 = vpack.c.b16 %v12742, %v12738
    %v12847 = vpack.c.b16 %v12747, %v12743
    %v12848 = vpack.c.b16 %v12748, %v12744
    %v12849 = vpack.c.b16 %v12749, %v12745
    %v12850 = vpack.c.b16 %v12750, %v12746
    %v12851 = vpack.c.b16 %v12755, %v12751
    %v12852 = vpack.c.b16 %v12756, %v12752
    %v12853 = vpack.c.b16 %v12757, %v12753
    %v12854 = vpack.c.b16 %v12758, %v12754
    %v12855 = vpack.c.b16 %v12763, %v12759
    %v12856 = vpack.c.b16 %v12764, %v12760
    %v12857 = vpack.c.b16 %v12765, %v12761
    %v12858 = vpack.c.b16 %v12766, %v12762
    %v12859 = vpack.c.b16 %v12771, %v12767
    %v12860 = vpack.c.b16 %v12772, %v12768
    %v12861 = vpack.c.b16 %v12773, %v12769
    %v12862 = vpack.c.b16 %v12774, %v12770
    %v12863 = vpack.c.b16 %v12779, %v12775
    %v12864 = vpack.c.b16 %v12780, %v12776
    %v12865 = vpack.c.b16 %v12781, %v12777
    %v12866 = vpack.c.b16 %v12782, %v12778
    %v12867 = vpack.c.b16 %v12787, %v12783
    %v12868 = vpack.c.b16 %v12788, %v12784
    %v12869 = vpack.c.b16 %v12789, %v12785
    %v12870 = vpack.c.b16 %v12790, %v12786
    %v12871 = vpack.c.b16 %v12795, %v12791
    %v12872 = vpack.c.b16 %v12796, %v12792
    %v12873 = vpack.c.b16 %v12797, %v12793
    %v12874 = vpack.c.b16 %v12798, %v12794
    %v12875 = vpack.c.b16 %v12803, %v12799
    %v12876 = vpack.c.b16 %v12804, %v12800
    %v12877 = vpack.c.b16 %v12805, %v12801
    %v12878 = vpack.c.b16 %v12806, %v12802
    %v12879 = vpack.c.b16 %v12811, %v12807
    %v12880 = vpack.c.b16 %v12812, %v12808
    %v12881 = vpack.c.b16 %v12813, %v12809
    %v12882 = vpack.c.b16 %v12814, %v12810
    %v12883 = vpack.c.b16 %v12819, %v12815
    %v12884 = vpack.c.b16 %v12820, %v12816
    %v12885 = vpack.c.b16 %v12821, %v12817
    %v12886 = vpack.c.b16 %v12822, %v12818
    %v12887 = vpack.c.b16 %v12827, %v12823
    %v12888 = vpack.c.b16 %v12828, %v12824
    %v12889 = vpack.c.b16 %v12829, %v12825
    %v12890 = vpack.c.b16 %v12830, %v12826
    %v12891 = vpack.c.b16 %v12835, %v12831
    %v12892 = vpack.c.b16 %v12836, %v12832
    %v12893 = vpack.c.b16 %v12837, %v12833
    %v12894 = vpack.c.b16 %v12838, %v12834
    %v12952 = vsel %vm10419, %v10025, 0
    %12954 = vmatprep.subr.bf16.mxu0 %v12868
    %12955 = vmatpush1.bf16.msra.mxu0 %v12867
    %12956 = vmatprep.subr.bf16.mxu0 %v12864
    %12957 = vmatpush1.bf16.msra.mxu0 %v12863
    %12958 = vmatprep.subr.bf16.mxu0 %v12860
    %12959 = vmatpush1.bf16.msra.mxu0 %v12859
    %12960 = vmatprep.subr.bf16.mxu0 %v12856
    %12961 = vmatpush1.bf16.msra.mxu0 %v12855
    %12962 = vmatprep.subr.bf16.mxu0 %v12852
    %12963 = vmatpush1.bf16.msra.mxu0 %v12851
    %12964 = vmatprep.subr.bf16.mxu0 %v12848
    %12965 = vmatpush1.bf16.msra.mxu0 %v12847
    %12966 = vmatprep.subr.bf16.mxu0 %v12844
    %12967 = vmatpush1.bf16.msra.mxu0 %v12843
    %12968 = vmatprep.subr.bf16.mxu0 %v12840
    %12969 = vmatpush1.bf16.msra.mxu0 %v12839
    %12970 = vmatprep.subr.bf16.mxu0 0
    %12971 = vmatpush2.bf16.msra.mxu0 0
    %12972 = vmatprep.subr.bf16.mxu0 0
    %12973 = vmatpush2.bf16.msra.mxu0 0
    %12974 = vmatprep.subr.bf16.mxu0 %v12892
    %12975 = vmatpush2.bf16.msra.mxu0 %v12891
    %12976 = vmatprep.subr.bf16.mxu0 %v12888
    %12977 = vmatpush2.bf16.msra.mxu0 %v12887
    %12978 = vmatprep.subr.bf16.mxu0 %v12884
    %12979 = vmatpush2.bf16.msra.mxu0 %v12883
    %12980 = vmatprep.subr.bf16.mxu0 %v12880
    %12981 = vmatpush2.bf16.msra.mxu0 %v12879
    %12982 = vmatprep.subr.bf16.mxu0 %v12876
    %12983 = vmatpush2.bf16.msra.mxu0 %v12875
    %12984 = vmatprep.subr.bf16.mxu0 %v12872
    %12985 = vmatpush2.bf16.msra.mxu0 %v12871
    %12986 = vmatprep.mubr.bf16.mxu0 %v12952
    %12987 = vmatmul.mubr.bf16.gmra.mxu0 %v10024
    %v12988 = vpop.f32.mrf.mxu0
    %v12989 = vadd.f32 0.0, %v12988
    %v12990 = vpop.f32.mrf.mxu0
    %v12991 = vadd.f32 0.0, %v12990
    %v12992 = vpop.f32.mrf.mxu0
    %v12993 = vadd.f32 0.0, %v12992
    %v12994 = vpop.f32.mrf.mxu0
    %v12995 = vadd.f32 0.0, %v12994
    %12996 = vdwg.mxu0
    %12997 = vmatprep.subr.bf16.mxu0 %v12870
    %12998 = vmatpush1.bf16.msra.mxu0 %v12869
    %12999 = vmatprep.subr.bf16.mxu0 %v12866
    %13000 = vmatpush1.bf16.msra.mxu0 %v12865
    %13001 = vmatprep.subr.bf16.mxu0 %v12862
    %13002 = vmatpush1.bf16.msra.mxu0 %v12861
    %13003 = vmatprep.subr.bf16.mxu0 %v12858
    %13004 = vmatpush1.bf16.msra.mxu0 %v12857
    %13005 = vmatprep.subr.bf16.mxu0 %v12854
    %13006 = vmatpush1.bf16.msra.mxu0 %v12853
    %13007 = vmatprep.subr.bf16.mxu0 %v12850
    %13008 = vmatpush1.bf16.msra.mxu0 %v12849
    %13009 = vmatprep.subr.bf16.mxu0 %v12846
    %13010 = vmatpush1.bf16.msra.mxu0 %v12845
    %13011 = vmatprep.subr.bf16.mxu0 %v12842
    %13012 = vmatpush1.bf16.msra.mxu0 %v12841
    %13013 = vmatprep.subr.bf16.mxu0 0
    %13014 = vmatpush2.bf16.msra.mxu0 0
    %13015 = vmatprep.subr.bf16.mxu0 0
    %13016 = vmatpush2.bf16.msra.mxu0 0
    %13017 = vmatprep.subr.bf16.mxu0 %v12894
    %13018 = vmatpush2.bf16.msra.mxu0 %v12893
    %13019 = vmatprep.subr.bf16.mxu0 %v12890
    %13020 = vmatpush2.bf16.msra.mxu0 %v12889
    %13021 = vmatprep.subr.bf16.mxu0 %v12886
    %13022 = vmatpush2.bf16.msra.mxu0 %v12885
    %13023 = vmatprep.subr.bf16.mxu0 %v12882
    %13024 = vmatpush2.bf16.msra.mxu0 %v12881
    %13025 = vmatprep.subr.bf16.mxu0 %v12878
    %13026 = vmatpush2.bf16.msra.mxu0 %v12877
    %13027 = vmatprep.subr.bf16.mxu0 %v12874
    %13028 = vmatpush2.bf16.msra.mxu0 %v12873
    %13029 = vmatprep.mubr.bf16.mxu0 %v12952
    %13030 = vmatmul.mubr.bf16.gmra.mxu0 %v10024
    %v13031 = vpop.f32.mrf.mxu0
    %v13032 = vadd.f32 0.0, %v13031
    %v13033 = vpop.f32.mrf.mxu0
    %v13034 = vadd.f32 0.0, %v13033
    %v13035 = vpop.f32.mrf.mxu0
    %v13036 = vadd.f32 0.0, %v13035
    %v13037 = vpop.f32.mrf.mxu0
    %v13038 = vadd.f32 0.0, %v13037
    %13039 = vdwg.mxu0
    %v13040 = vadd.f32 %v12606, %v12989
    %v13041 = vadd.f32 %v12607, %v12991
    %v13042 = vadd.f32 %v12608, %v13032
    %v13043 = vadd.f32 %v12609, %v13034
    %v13044 = vadd.f32 %v12610, %v12993
    %v13045 = vadd.f32 %v12611, %v12995
    %v13046 = vadd.f32 %v12612, %v13036
    %v13047 = vadd.f32 %v12613, %v13038
    %v13048 = vld [vmem:[#allocation10] sm:$0xf]
    %v13050 = vlaneseq
    %v13051 = vshrl.u32 %v13050, 7
    %v13052 = vsub.s32 0, %v13051
    %v13053 = vrot.slane %v13048, %v13052
    %v13054 = vlaneseq
    %v13055 = vshrl.u32 %v13054, 7
    %v13056 = vsub.s32 1, %v13055
    %v13057 = vrot.slane %v13048, %v13056
    %v13058 = vlaneseq
    %v13059 = vshrl.u32 %v13058, 7
    %v13060 = vsub.s32 2, %v13059
    %v13061 = vrot.slane %v13048, %v13060
    %v13062 = vlaneseq
    %v13063 = vshrl.u32 %v13062, 7
    %v13064 = vsub.s32 3, %v13063
    %v13065 = vrot.slane %v13048, %v13064
    %v13070 = vadd.f32 %v13040, %v13053
    %v13071 = vadd.f32 %v13041, %v13057
    %v13072 = vadd.f32 %v13042, %v13061
    %v13073 = vadd.f32 %v13043, %v13065
    %v13074 = vadd.f32 %v13044, %v13053
    %v13075 = vadd.f32 %v13045, %v13057
    %v13076 = vadd.f32 %v13046, %v13061
    %v13077 = vadd.f32 %v13047, %v13065
    %v13078 = vmax.f32 %v13070, 0.0
    %v13079 = vmax.f32 %v13071, 0.0
    %v13080 = vmax.f32 %v13072, 0.0
    %v13081 = vmax.f32 %v13073, 0.0
    %v13082 = vmax.f32 %v13074, 0.0
    %v13083 = vmax.f32 %v13075, 0.0
    %v13084 = vmax.f32 %v13076, 0.0
    %v13085 = vmax.f32 %v13077, 0.0
    %v13086 = vpack.c.bf16 %v13082, %v13078
    %v13087 = vpack.c.bf16 %v13083, %v13079
    %v13088 = vpack.c.bf16 %v13084, %v13080
    %v13089 = vpack.c.bf16 %v13085, %v13081
    %v13090 = vld [vmem:[%s7] sm:$0xf]
    %v13091 = vld [vmem:[%s7 + $0x4] sm:$0xf]
    %v13092 = vld [vmem:[%s7 + $0x8] sm:$0xf]
    %v13093 = vld [vmem:[%s7 + $0xc] sm:$0xf]
    %v13094 = vld [vmem:[%s7 + $0x10] sm:$0xf]
    %v13095 = vld [vmem:[%s7 + $0x14] sm:$0xf]
    %v13096 = vld [vmem:[%s7 + $0x18] sm:$0xf]
    %v13097 = vld [vmem:[%s7 + $0x1c] sm:$0xf]
    %v13098 = vld [vmem:[%s7 + $0x20] sm:$0xf]
    %v13099 = vld [vmem:[%s7 + $0x24] sm:$0xf]
    %v13100 = vld [vmem:[%s7 + $0x28] sm:$0xf]
    %v13101 = vld [vmem:[%s7 + $0x2c] sm:$0xf]
    %v13102 = vld [vmem:[%s7 + $0x30] sm:$0xf]
    %v13103 = vld [vmem:[%s7 + $0x34] sm:$0xf]
    %v13104 = vld [vmem:[%s7 + $0x38] sm:$0xf]
    %v13105 = vld [vmem:[%s7 + $0x3c] sm:$0xf]
    %v13106 = vld [vmem:[%s7 + $0x40] sm:$0xf]
    %v13107 = vld [vmem:[%s7 + $0x44] sm:$0xf]
    %v13108 = vld [vmem:[%s7 + $0x48] sm:$0xf]
    %v13109 = vld [vmem:[%s7 + $0x4c] sm:$0xf]
    %v13110 = vld [vmem:[%s7 + $0x50] sm:$0xf]
    %v13111 = vld [vmem:[%s7 + $0x54] sm:$0xf]
    %v13112 = vld [vmem:[%s7 + $0x58] sm:$0xf]
    %v13113 = vld [vmem:[%s7 + $0x5c] sm:$0xf]
    %v13114 = vld [vmem:[%s7 + $0x60] sm:$0xf]
    %v13115 = vld [vmem:[%s7 + $0x64] sm:$0xf]
    %v13116 = vld [vmem:[%s7 + $0x68] sm:$0xf]
    %v13117 = vld [vmem:[%s7 + $0x6c] sm:$0xf]
    %v13118 = vld [vmem:[%s7 + $0x70] sm:$0xf]
    %v13119 = vld [vmem:[%s7 + $0x74] sm:$0xf]
    %v13120 = vld [vmem:[%s7 + $0x78] sm:$0xf]
    %v13121 = vld [vmem:[%s7 + $0x7c] sm:$0xf]
    %v13122 = vld [vmem:[%s7 + $0x80] sm:$0xf]
    %v13123 = vld [vmem:[%s7 + $0x84] sm:$0xf]
    %v13124 = vld [vmem:[%s7 + $0x88] sm:$0xf]
    %v13125 = vld [vmem:[%s7 + $0x8c] sm:$0xf]
    %v13126 = vld [vmem:[%s7 + $0x90] sm:$0xf]
    %v13127 = vld [vmem:[%s7 + $0x94] sm:$0xf]
    %v13128 = vld [vmem:[%s7 + $0x98] sm:$0xf]
    %v13129 = vld [vmem:[%s7 + $0x9c] sm:$0xf]
    %v13130 = vld [vmem:[%s7 + $0xa0] sm:$0xf]
    %v13131 = vld [vmem:[%s7 + $0xa4] sm:$0xf]
    %v13132 = vld [vmem:[%s7 + $0xa8] sm:$0xf]
    %v13133 = vld [vmem:[%s7 + $0xac] sm:$0xf]
    %v13134 = vld [vmem:[%s7 + $0xb0] sm:$0xf]
    %v13135 = vld [vmem:[%s7 + $0xb4] sm:$0xf]
    %v13136 = vld [vmem:[%s7 + $0xb8] sm:$0xf]
    %v13137 = vld [vmem:[%s7 + $0xbc] sm:$0xf]
    %v13138 = vld [vmem:[%s7 + $0xc0] sm:$0xf]
    %v13139 = vld [vmem:[%s7 + $0xc4] sm:$0xf]
    %v13140 = vld [vmem:[%s7 + $0xc8] sm:$0xf]
    %v13141 = vld [vmem:[%s7 + $0xcc] sm:$0xf]
    %v13142 = vld [vmem:[%s7 + $0xd0] sm:$0xf]
    %v13143 = vld [vmem:[%s7 + $0xd4] sm:$0xf]
    %v13144 = vld [vmem:[%s7 + $0xd8] sm:$0xf]
    %v13145 = vld [vmem:[%s7 + $0xdc] sm:$0xf]
    %v13146 = vld [vmem:[%s7 + $0xe0] sm:$0xf]
    %v13147 = vld [vmem:[%s7 + $0xe4] sm:$0xf]
    %v13148 = vld [vmem:[%s7 + $0xe8] sm:$0xf]
    %v13149 = vld [vmem:[%s7 + $0xec] sm:$0xf]
    %v13150 = vld [vmem:[%s7 + $0xf0] sm:$0xf]
    %v13151 = vld [vmem:[%s7 + $0xf4] sm:$0xf]
    %v13152 = vld [vmem:[%s7 + $0xf8] sm:$0xf]
    %v13153 = vld [vmem:[%s7 + $0xfc] sm:$0xf]
    %v13154 = vld [vmem:[#allocation12] sm:$0x1]
    %v13156 = vlaneseq
    %v13157 = vshrl.u32 %v13156, 7
    %v13158 = vsub.s32 0, %v13157
    %v13159 = vrot.slane %v13154, %v13158
    %v13225 = vunpack.c.l.b16 %v13090
    %v13226 = vunpack.c.l.b16 %v13091
    %v13227 = vunpack.c.l.b16 %v13092
    %v13228 = vunpack.c.l.b16 %v13093
    %v13229 = vunpack.c.l.b16 %v13094
    %v13230 = vunpack.c.l.b16 %v13095
    %v13231 = vunpack.c.l.b16 %v13096
    %v13232 = vunpack.c.l.b16 %v13097
    %v13233 = vunpack.c.l.b16 %v13098
    %v13234 = vunpack.c.l.b16 %v13099
    %v13235 = vunpack.c.l.b16 %v13100
    %v13236 = vunpack.c.l.b16 %v13101
    %v13237 = vunpack.c.l.b16 %v13102
    %v13238 = vunpack.c.l.b16 %v13103
    %v13239 = vunpack.c.l.b16 %v13104
    %v13240 = vunpack.c.l.b16 %v13105
    %v13241 = vunpack.c.l.b16 %v13106
    %v13242 = vunpack.c.l.b16 %v13107
    %v13243 = vunpack.c.l.b16 %v13108
    %v13244 = vunpack.c.l.b16 %v13109
    %v13245 = vunpack.c.l.b16 %v13110
    %v13246 = vunpack.c.l.b16 %v13111
    %v13247 = vunpack.c.l.b16 %v13112
    %v13248 = vunpack.c.l.b16 %v13113
    %v13249 = vunpack.c.l.b16 %v13114
    %v13250 = vunpack.c.l.b16 %v13115
    %v13251 = vunpack.c.l.b16 %v13116
    %v13252 = vunpack.c.l.b16 %v13117
    %v13253 = vunpack.c.l.b16 %v13118
    %v13254 = vunpack.c.l.b16 %v13119
    %v13255 = vunpack.c.l.b16 %v13120
    %v13256 = vunpack.c.l.b16 %v13121
    %v13257 = vunpack.c.l.b16 %v13122
    %v13258 = vunpack.c.l.b16 %v13123
    %v13259 = vunpack.c.l.b16 %v13124
    %v13260 = vunpack.c.l.b16 %v13125
    %v13261 = vunpack.c.l.b16 %v13126
    %v13262 = vunpack.c.l.b16 %v13127
    %v13263 = vunpack.c.l.b16 %v13128
    %v13264 = vunpack.c.l.b16 %v13129
    %v13265 = vunpack.c.l.b16 %v13130
    %v13266 = vunpack.c.l.b16 %v13131
    %v13267 = vunpack.c.l.b16 %v13132
    %v13268 = vunpack.c.l.b16 %v13133
    %v13269 = vunpack.c.l.b16 %v13134
    %v13270 = vunpack.c.l.b16 %v13135
    %v13271 = vunpack.c.l.b16 %v13136
    %v13272 = vunpack.c.l.b16 %v13137
    %v13273 = vunpack.c.l.b16 %v13138
    %v13274 = vunpack.c.l.b16 %v13139
    %v13275 = vunpack.c.l.b16 %v13140
    %v13276 = vunpack.c.l.b16 %v13141
    %v13277 = vunpack.c.l.b16 %v13142
    %v13278 = vunpack.c.l.b16 %v13143
    %v13279 = vunpack.c.l.b16 %v13144
    %v13280 = vunpack.c.l.b16 %v13145
    %v13281 = vunpack.c.l.b16 %v13146
    %v13282 = vunpack.c.l.b16 %v13147
    %v13283 = vunpack.c.l.b16 %v13148
    %v13284 = vunpack.c.l.b16 %v13149
    %v13285 = vunpack.c.l.b16 %v13150
    %v13286 = vunpack.c.l.b16 %v13151
    %v13287 = vunpack.c.l.b16 %v13152
    %v13288 = vunpack.c.l.b16 %v13153
    %v13289 = vpack.c.b16 %v13226, %v13225
    %v13290 = vpack.c.b16 %v13228, %v13227
    %v13291 = vpack.c.b16 %v13230, %v13229
    %v13292 = vpack.c.b16 %v13232, %v13231
    %v13293 = vpack.c.b16 %v13234, %v13233
    %v13294 = vpack.c.b16 %v13236, %v13235
    %v13295 = vpack.c.b16 %v13238, %v13237
    %v13296 = vpack.c.b16 %v13240, %v13239
    %v13297 = vpack.c.b16 %v13242, %v13241
    %v13298 = vpack.c.b16 %v13244, %v13243
    %v13299 = vpack.c.b16 %v13246, %v13245
    %v13300 = vpack.c.b16 %v13248, %v13247
    %v13301 = vpack.c.b16 %v13250, %v13249
    %v13302 = vpack.c.b16 %v13252, %v13251
    %v13303 = vpack.c.b16 %v13254, %v13253
    %v13304 = vpack.c.b16 %v13256, %v13255
    %v13305 = vpack.c.b16 %v13258, %v13257
    %v13306 = vpack.c.b16 %v13260, %v13259
    %v13307 = vpack.c.b16 %v13262, %v13261
    %v13308 = vpack.c.b16 %v13264, %v13263
    %v13309 = vpack.c.b16 %v13266, %v13265
    %v13310 = vpack.c.b16 %v13268, %v13267
    %v13311 = vpack.c.b16 %v13270, %v13269
    %v13312 = vpack.c.b16 %v13272, %v13271
    %v13313 = vpack.c.b16 %v13274, %v13273
    %v13314 = vpack.c.b16 %v13276, %v13275
    %v13315 = vpack.c.b16 %v13278, %v13277
    %v13316 = vpack.c.b16 %v13280, %v13279
    %v13317 = vpack.c.b16 %v13282, %v13281
    %v13318 = vpack.c.b16 %v13284, %v13283
    %v13319 = vpack.c.b16 %v13286, %v13285
    %v13320 = vpack.c.b16 %v13288, %v13287
    %13353 = vmatprep.subr.bf16.mxu0 0
    %13354 = vmatpush1.bf16.msra.mxu0 %v13296
    %13355 = vmatprep.subr.bf16.mxu0 0
    %13356 = vmatpush1.bf16.msra.mxu0 %v13295
    %13357 = vmatprep.subr.bf16.mxu0 0
    %13358 = vmatpush1.bf16.msra.mxu0 %v13294
    %13359 = vmatprep.subr.bf16.mxu0 0
    %13360 = vmatpush1.bf16.msra.mxu0 %v13293
    %13361 = vmatprep.subr.bf16.mxu0 0
    %13362 = vmatpush1.bf16.msra.mxu0 %v13292
    %13363 = vmatprep.subr.bf16.mxu0 0
    %13364 = vmatpush1.bf16.msra.mxu0 %v13291
    %13365 = vmatprep.subr.bf16.mxu0 0
    %13366 = vmatpush1.bf16.msra.mxu0 %v13290
    %13367 = vmatprep.subr.bf16.mxu0 0
    %13368 = vmatpush1.bf16.msra.mxu0 %v13289
    %13369 = vmatprep.subr.bf16.mxu0 0
    %13370 = vmatpush2.bf16.msra.mxu0 %v13304
    %13371 = vmatprep.subr.bf16.mxu0 0
    %13372 = vmatpush2.bf16.msra.mxu0 %v13303
    %13373 = vmatprep.subr.bf16.mxu0 0
    %13374 = vmatpush2.bf16.msra.mxu0 %v13302
    %13375 = vmatprep.subr.bf16.mxu0 0
    %13376 = vmatpush2.bf16.msra.mxu0 %v13301
    %13377 = vmatprep.subr.bf16.mxu0 0
    %13378 = vmatpush2.bf16.msra.mxu0 %v13300
    %13379 = vmatprep.subr.bf16.mxu0 0
    %13380 = vmatpush2.bf16.msra.mxu0 %v13299
    %13381 = vmatprep.subr.bf16.mxu0 0
    %13382 = vmatpush2.bf16.msra.mxu0 %v13298
    %13383 = vmatprep.subr.bf16.mxu0 0
    %13384 = vmatpush2.bf16.msra.mxu0 %v13297
    %13385 = vmatprep.mubr.bf16.mxu0 %v13087
    %13386 = vmatmul.mubr.bf16.gmra.mxu0 %v13086
    %v13387 = vpop.f32.mrf.mxu0
    %v13388 = vadd.f32 %v13159, %v13387
    %v13389 = vpop.f32.mrf.mxu0
    %v13390 = vpop.f32.mrf.mxu0
    %v13391 = vadd.f32 %v13159, %v13390
    %v13392 = vpop.f32.mrf.mxu0
    %13393 = vdwg.mxu0
    %13394 = vmatprep.subr.bf16.mxu0 0
    %13395 = vmatpush1.bf16.msra.mxu0 %v13312
    %13396 = vmatprep.subr.bf16.mxu0 0
    %13397 = vmatpush1.bf16.msra.mxu0 %v13311
    %13398 = vmatprep.subr.bf16.mxu0 0
    %13399 = vmatpush1.bf16.msra.mxu0 %v13310
    %13400 = vmatprep.subr.bf16.mxu0 0
    %13401 = vmatpush1.bf16.msra.mxu0 %v13309
    %13402 = vmatprep.subr.bf16.mxu0 0
    %13403 = vmatpush1.bf16.msra.mxu0 %v13308
    %13404 = vmatprep.subr.bf16.mxu0 0
    %13405 = vmatpush1.bf16.msra.mxu0 %v13307
    %13406 = vmatprep.subr.bf16.mxu0 0
    %13407 = vmatpush1.bf16.msra.mxu0 %v13306
    %13408 = vmatprep.subr.bf16.mxu0 0
    %13409 = vmatpush1.bf16.msra.mxu0 %v13305
    %13410 = vmatprep.subr.bf16.mxu0 0
    %13411 = vmatpush2.bf16.msra.mxu0 %v13320
    %13412 = vmatprep.subr.bf16.mxu0 0
    %13413 = vmatpush2.bf16.msra.mxu0 %v13319
    %13414 = vmatprep.subr.bf16.mxu0 0
    %13415 = vmatpush2.bf16.msra.mxu0 %v13318
    %13416 = vmatprep.subr.bf16.mxu0 0
    %13417 = vmatpush2.bf16.msra.mxu0 %v13317
    %13418 = vmatprep.subr.bf16.mxu0 0
    %13419 = vmatpush2.bf16.msra.mxu0 %v13316
    %13420 = vmatprep.subr.bf16.mxu0 0
    %13421 = vmatpush2.bf16.msra.mxu0 %v13315
    %13422 = vmatprep.subr.bf16.mxu0 0
    %13423 = vmatpush2.bf16.msra.mxu0 %v13314
    %13424 = vmatprep.subr.bf16.mxu0 0
    %13425 = vmatpush2.bf16.msra.mxu0 %v13313
    %13426 = vmatprep.mubr.bf16.mxu0 %v13089
    %13427 = vmatmul.mubr.bf16.gmra.mxu0 %v13088
    %v13428 = vpop.f32.mrf.mxu0
    %v13429 = vadd.f32 %v13388, %v13428
    %v13430 = vpop.f32.mrf.mxu0
    %v13431 = vpop.f32.mrf.mxu0
    %v13432 = vadd.f32 %v13391, %v13431
    %v13433 = vpop.f32.mrf.mxu0
    %13434 = vdwg.mxu0
    %vm13435 = vcmask 80896
    %v13436 = vsel %vm13435, %v13429, -inf
    %13437 = vmax.xlane.f32.xlu0 %v13436
    %v13438 = vpop.xlane.xlu0 %13437
    %v13439 = vsel %vm13435, %v13432, -inf
    %13440 = vmax.xlane.f32.xlu0 %v13439
    %v13441 = vpop.xlane.xlu0 %13440
    %v13442 = vsub.f32 %v13429, %v13438
    %v13443 = vsub.f32 %v13432, %v13441
    %v13444 = vmul.f32 %v13442, 1.442695
    %v13445 = vpow.pop %v13444
    %v13446 = vmul.f32 %v13443, 1.442695
    %v13447 = vpow.pop %v13446
    %v13448 = vsel %vm13435, %v13445, 0.0
    %13449 = vadd.xlane.f32.xlu0 %v13448
    %v13450 = vpop.xlane.xlu0 %13449
    %v13451 = vsel %vm13435, %v13447, 0.0
    %13452 = vadd.xlane.f32.xlu0 %v13451
    %v13453 = vpop.xlane.xlu0 %13452
    %v13454 = vlog2.pop %v13450
    %v13455 = vmul.f32 %v13454, 0.6931472
    %v13456 = vlog2.pop %v13453
    %v13457 = vmul.f32 %v13456, 0.6931472
    %v13458 = vadd.f32 %v13455, %v13438
    %v13459 = vadd.f32 %v13457, %v13441
    %v13460 = vsub.f32 %v13429, %v13458
    %v13461 = vsub.f32 %v13432, %v13459
    %13462 = vst.msk [vmem:[%s9] sm:$0xff] %vm13435, %v13460
    %13463 = vst.msk [vmem:[%s9 + $0x8] sm:$0xff] %vm13435, %v13461
    // Predicated region
    $region66: #{cnn_forward.1} parent=1 // pred_check
      _
    $region67: #{cnn_forward.1} parent=1 // pred_check_branch
      %13465 = sbr.rel (0) target = $region69
    $region68: #{cnn_forward.1} parent=1 // pred_region
      _
    $region69: #{cnn_forward.1} parent=1 // pred_fallthru
      _
    // Predicated region
    $region70: #{cnn_forward.1} parent=1 // pred_check
      _
    $region71: #{cnn_forward.1} parent=1 // pred_check_branch
      %13467 = sbr.rel (0) target = $region73
    $region72: #{cnn_forward.1} parent=1 // pred_region
      _
    $region73: #{cnn_forward.1} parent=1 // pred_fallthru
      _
    %13468 = vsyncpa [#allocation3], 1
    %13469 = vsyncpa [#allocation5], 1
    %13470 = vsyncpa [#allocation8], 1
    %13471 = vsyncpa [#allocation11], 1

</llo_original>
